<compile_context>
chip_gen: v5e
topology: v5e:2x2
jax: 0.10.0
libtpu: 0.0.40
codegen_flags: <defaults>
</compile_context>

<pallas_src>
import jax
import jax.numpy as jnp
from jax.experimental import pallas as pl
from jax.experimental.pallas import tpu as pltpu

NB_CONV = 8  # images per grid step in the conv kernel (~150 KiB VMEM / image)


# ----------------------------------------------------------------------------
# Kernel A: conv1 + ReLU + pool + conv2 + ReLU + pool  (NB images per grid step)
# ----------------------------------------------------------------------------
def _conv_pool_kernel(p_ref, w1_ref, b1_ref, w2_ref, b2_ref, feat_ref,
                      p1f_ref, pool1_ref, im2col_ref, hp2_ref):
    nb = p_ref.shape[0]

    @pl.loop(0, nb)                                 # per-image: bounds live ranges
    def _per_image(img):
        # conv1: one (576,32)@(32,32) MXU matmul; patch rows are quadrant-major.
        y1 = jnp.dot(p_ref[img], w1_ref[...], preferred_element_type=jnp.float32)
        y1 = jnp.maximum(y1 + b1_ref[...], 0.0)                     # (576,32) f32

        # 2x2 max-pool #1: vreg-aligned reshape + 3 VPU maxes over the quadrants.
        q = y1.reshape(4, 144, 32)
        p1 = jnp.maximum(jnp.maximum(q[0], q[1]), jnp.maximum(q[2], q[3]))
        p1f_ref[...] = p1                            # (144,32), row = oh2*12 + ow2

        # Repack the flat 12x12 map into a (12,12,32) scratch for 2-D windowing.
        for r in range(12):
            pool1_ref[r] = p1f_ref[pl.ds(r * 12, 12), :]

        # conv2 im2col: 25 5x5 windows -> one (64,800) slab of the batched
        # im2col; taps grouped by 4 so every store starts on a 128-lane boundary.
        row0 = pl.multiple_of(img * 64, 64)
        for g in range(7):
            taps = list(range(g * 4, min(g * 4 + 4, 25)))
            cols = [pool1_ref[pl.ds(t // 5, 8), pl.ds(t % 5, 8), :]
                    .reshape(64, 32).astype(jnp.bfloat16) for t in taps]
            block = cols[0] if len(cols) == 1 else jnp.concatenate(cols, axis=1)
            im2col_ref[pl.ds(row0, 64), pl.ds(g * 128, 32 * len(taps))] = block

    # conv2: ONE batched K=800 MXU matmul over all nb images.
    y2 = jnp.dot(im2col_ref[...], w2_ref[...], preferred_element_type=jnp.float32)
    y2 = jnp.maximum(y2 + b2_ref[...], 0.0)                         # (nb*64, 64)

    # 2x2 max-pool #2, step 1 (row pairs): vreg-aligned reshape + VPU max.
    y2r = y2.reshape(nb * 4, 2, 8, 64)
    hp2_ref[...] = jnp.maximum(y2r[:, 0], y2r[:, 1]).reshape(nb, 32, 64)

    # Step 2 (col pairs) fused with the flatten into lane-dense (nb, 1024) bf16.
    for p in range(16):
        r, c = p // 4, p % 4
        a = hp2_ref[:, r * 8 + 2 * c, :]                            # (nb, 64)
        b = hp2_ref[:, r * 8 + 2 * c + 1, :]
        feat_ref[:, pl.ds(p * 64, 64)] = jnp.maximum(a, b).astype(jnp.bfloat16)


def conv_block(patches, params, nb=NB_CONV):
    B = patches.shape[0]
    assert B % nb == 0
    return pl.pallas_call(
        _conv_pool_kernel,
        out_shape=jax.ShapeDtypeStruct((B, 1024), jnp.bfloat16),
        grid=(B // nb,),
        in_specs=[
            pl.BlockSpec((nb, 576, 32), lambda b: (b, 0, 0)),   # conv1 im2col patches
            pl.BlockSpec((32, 32), lambda b: (0, 0)),           # conv1 w (resident)
            pl.BlockSpec((1, 32), lambda b: (0, 0)),            # conv1 b
            pl.BlockSpec((800, 64), lambda b: (0, 0)),          # conv2 w (resident)
            pl.BlockSpec((1, 64), lambda b: (0, 0)),            # conv2 b
        ],
        out_specs=pl.BlockSpec((nb, 1024), lambda b: (b, 0)),
        scratch_shapes=[
            pltpu.VMEM((144, 32), jnp.float32),        # flat pooled conv1 map (1 img)
            pltpu.VMEM((12, 12, 32), jnp.float32),     # 12x12 pooled map (2-D windows)
            pltpu.VMEM((nb * 64, 800), jnp.bfloat16),  # batched conv2 im2col
            pltpu.VMEM((nb, 32, 64), jnp.float32),     # row-pooled conv2 output
        ],
        compiler_params=pltpu.CompilerParams(
            dimension_semantics=("parallel",),
            vmem_limit_bytes=32 * 1024 * 1024),
    )(patches, params["conv1_w"], params["conv1_b"],
      params["conv2_w"], params["conv2_b"])


# ----------------------------------------------------------------------------
# Kernel B: fc1 + ReLU + folded(fc2,fc3) + log_softmax  (batch-blocked grid)
# ----------------------------------------------------------------------------
def _fc_kernel(feat_ref, w1_ref, b1_ref, w23_ref, b23_ref, o_ref):
    h = jnp.dot(feat_ref[...], w1_ref[...], preferred_element_type=jnp.float32)
    h = jnp.maximum(h + b1_ref[...], 0.0)                           # (bb, 512) f32
    logits = jnp.dot(h.astype(jnp.bfloat16), w23_ref[...],
                     preferred_element_type=jnp.float32) + b23_ref[...]   # (bb, 128)

    # masked, numerically-stable log_softmax over the 10 real classes
    col = jax.lax.broadcasted_iota(jnp.int32, logits.shape, 1)
    valid = col < 10
    z = jnp.where(valid, logits, -1e30)
    m = jnp.max(z, axis=-1, keepdims=True)
    e = jnp.where(valid, jnp.exp(z - m), 0.0)
    lse = m + jnp.log(jnp.sum(e, axis=-1, keepdims=True))
    o_ref[...] = logits - lse           # lane-dense (bb,128); wrapper slices [:, :10]


def fc_block(feat, params):
    B = feat.shape[0]
    assert B % 8 == 0
    bb = next(c for c in (512, 256, 128, 64, 32, 16, 8) if B % c == 0)
    return pl.pallas_call(
        _fc_kernel,
        out_shape=jax.ShapeDtypeStruct((B, 128), jnp.float32),
        grid=(B // bb,),
        in_specs=[
            pl.BlockSpec((bb, 1024), lambda i: (i, 0)),         # features
            pl.BlockSpec((1024, 512), lambda i: (0, 0)),        # fc1 w (resident)
            pl.BlockSpec((1, 512), lambda i: (0, 0)),           # fc1 b
            pl.BlockSpec((512, 128), lambda i: (0, 0)),         # folded fc2@fc3 w
            pl.BlockSpec((1, 128), lambda i: (0, 0)),           # folded bias
        ],
        out_specs=pl.BlockSpec((bb, 128), lambda i: (i, 0)),
        compiler_params=pltpu.CompilerParams(
            dimension_semantics=("parallel",),
            vmem_limit_bytes=32 * 1024 * 1024),
    )(feat, params["fc1_w"], params["fc1_b"], params["fc23_w"], params["fc23_b"])


# ----------------------------------------------------------------------------
# JAX-side glue: conv1 patch extraction (dense 576 rows/img, quadrant-major)
# ----------------------------------------------------------------------------
def build_conv1_patches(x):
    """x: (B,28,28) f32 -> (B,576,32) bf16; row = q*144 + oh2*12 + ow2, col = tap."""
    B = x.shape[0]
    taps = jnp.stack([x[:, i:i + 24, j:j + 24] for i in range(5) for j in range(5)],
                     axis=-1)                                   # (B,24,24,25)
    taps = jnp.pad(taps, ((0, 0), (0, 0), (0, 0), (0, 7)))      # taps 25 -> 32
    t = taps.reshape(B, 12, 2, 12, 2, 32)                       # (B,oh2,a,ow2,b,tap)
    t = t.transpose(0, 2, 4, 1, 3, 5)                           # (B,a,b,oh2,ow2,tap)
    return t.reshape(B, 576, 32).astype(jnp.bfloat16)


# ----------------------------------------------------------------------------
# Parameters (deterministic, synthetic — shapes from the nn.Module __init__)
# ----------------------------------------------------------------------------
def init_params(key):
    ks = jax.random.split(key, 10)

    def uni(k, shape, fan_in):
        bound = 1.0 / jnp.sqrt(jnp.float32(fan_in))
        return jax.random.uniform(k, shape, jnp.float32, -bound, bound)

    # conv1: (tap=25, out=20) padded to (32, 32)
    w1 = jnp.pad(uni(ks[0], (25, 20), 25), ((0, 7), (0, 12)))
    b1 = jnp.pad(uni(ks[1], (20,), 25), (0, 12)).reshape(1, 32)
    # conv2: (tap=25, in=20->32, out=50->64) -> flattened (800, 64), row = tap*32+cin
    w2 = jnp.pad(uni(ks[2], (25, 20, 50), 500), ((0, 0), (0, 12), (0, 14)))
    w2 = w2.reshape(800, 64)
    b2 = jnp.pad(uni(ks[3], (50,), 500), (0, 14)).reshape(1, 64)
    # fc1: (position=16, channel=50->64, out=512) -> (1024, 512), row = pos*64+ch
    fw1 = jnp.pad(uni(ks[4], (16, 50, 512), 800), ((0, 0), (0, 14), (0, 0)))
    fw1 = fw1.reshape(1024, 512)
    fb1 = uni(ks[5], (512,), 800).reshape(1, 512)
    # fc2 (512->16) and fc3 (16->10) folded exactly (no nonlinearity between them)
    fw2 = uni(ks[6], (512, 16), 512)
    fb2 = uni(ks[7], (16,), 512)
    fw3 = uni(ks[8], (16, 10), 16)
    fb3 = uni(ks[9], (10,), 16)
    w23 = jnp.pad(fw2 @ fw3, ((0, 0), (0, 118)))            # (512, 128)
    b23 = jnp.pad(fb2 @ fw3 + fb3, (0, 118)).reshape(1, 128)

    return {
        "conv1_w": w1.astype(jnp.bfloat16), "conv1_b": b1,
        "conv2_w": w2.astype(jnp.bfloat16), "conv2_b": b2,
        "fc1_w": fw1.astype(jnp.bfloat16), "fc1_b": fb1,
        "fc23_w": w23.astype(jnp.bfloat16), "fc23_b": b23,
    }


# ----------------------------------------------------------------------------
# Forward pass (mirrors Net.forward)
# ----------------------------------------------------------------------------
@jax.jit
def net_forward(x_nchw, params):
    B = x_nchw.shape[0]
    x = x_nchw.reshape(B, 28, 28).astype(jnp.float32)    # single input channel
    b_pad = ((B + NB_CONV - 1) // NB_CONV) * NB_CONV      # pad batch to the conv block
    if b_pad != B:
        x = jnp.pad(x, ((0, b_pad - B), (0, 0), (0, 0)))
    patches = build_conv1_patches(x)                     # (b_pad, 576, 32) bf16
    feat = conv_block(patches, params)                   # (b_pad, 1024) bf16
    logp = fc_block(feat, params)                        # (b_pad, 128) f32
    return logp[:B, :10]                                 # (B, 10) log-probs


if __name__ == "__main__":
    key = jax.random.PRNGKey(0)
    k_x, k_p = jax.random.split(key)

    # Input shape implied by the module: 1-channel 28x28 (4*4*50 flatten).
    x = jax.random.normal(k_x, (2, 1, 28, 28), dtype=jnp.float32)
    params = init_params(k_p)

    out = jax.block_until_ready(net_forward(x, params))

    assert out.shape == (2, 10), out.shape
    assert bool(jnp.all(jnp.isfinite(out)))
    row_sums = jnp.exp(out).sum(axis=-1)
    assert bool(jnp.allclose(row_sums, 1.0, atol=1e-4)), row_sums

    print("KERNEL_OK")
</pallas_src>

<mosaic_0001>
module attributes {stable_mosaic.version = 11 : i64} {
  func.func @_conv_pool_kernel(%arg0: i32, %arg1: memref<8x576x32xbf16, #tpu.memory_space<vmem>>, %arg2: memref<32x32xbf16, #tpu.memory_space<vmem>>, %arg3: memref<1x32xf32, #tpu.memory_space<vmem>>, %arg4: memref<800x64xbf16, #tpu.memory_space<vmem>>, %arg5: memref<1x64xf32, #tpu.memory_space<vmem>>, %arg6: memref<8x1024xbf16, #tpu.memory_space<vmem>>, %arg7: memref<144x32xf32, #tpu.memory_space<vmem>>, %arg8: memref<12x12x32xf32, #tpu.memory_space<vmem>>, %arg9: memref<512x800xbf16, #tpu.memory_space<vmem>>, %arg10: memref<8x32x64xf32, #tpu.memory_space<vmem>>) attributes {dimension_semantics = [#tpu.dimension_semantics<parallel>], iteration_bounds = array<i64: 1>, scalar_prefetch = 0 : i64, scratch_operands = 4 : i64, tpu.core_type = #tpu.core_type<tc>, window_params = [{transform_indices = @transform_0, window_bounds = array<i64: 8, 576, 32>}, {pipeline_mode = #tpu.pipeline_mode<synchronous>, transform_indices = @transform_1, window_bounds = array<i64: 32, 32>}, {pipeline_mode = #tpu.pipeline_mode<synchronous>, transform_indices = @transform_2, window_bounds = array<i64: 1, 32>}, {pipeline_mode = #tpu.pipeline_mode<synchronous>, transform_indices = @transform_3, window_bounds = array<i64: 800, 64>}, {pipeline_mode = #tpu.pipeline_mode<synchronous>, transform_indices = @transform_4, window_bounds = array<i64: 1, 64>}, {transform_indices = @transform_5, window_bounds = array<i64: 8, 1024>}]} {
    %c0_i32 = arith.constant 0 : i32
    %c8_i32 = arith.constant 8 : i32
    %0 = arith.addi %c0_i32, %c8_i32 : i32
    %c1_i32 = arith.constant 1 : i32
    scf.for %arg11 = %c0_i32 to %0 step %c1_i32  : i32 {
      %c1_i32_92 = arith.constant 1 : i32
      %129 = arith.muli %arg11, %c1_i32_92 : i32
      %c0_i32_93 = arith.constant 0 : i32
      %130 = arith.addi %c0_i32_93, %129 : i32
      %131 = arith.index_cast %130 : i32 to index
      %c0_94 = arith.constant 0 : index
      %c0_95 = arith.constant 0 : index
      %132 = vector.load %arg1[%131, %c0_94, %c0_95] : memref<8x576x32xbf16, #tpu.memory_space<vmem>>, vector<1x576x32xbf16>
      %133 = vector.shape_cast %132 : vector<1x576x32xbf16> to vector<576x32xbf16>
      %c0_96 = arith.constant 0 : index
      %c0_97 = arith.constant 0 : index
      %134 = vector.load %arg2[%c0_96, %c0_97] : memref<32x32xbf16, #tpu.memory_space<vmem>>, vector<32x32xbf16>
      %cst_98 = arith.constant dense<0.000000e+00> : vector<576x32xf32>
      %135 = tpu.matmul %133, %134, %cst_98 {dimension_numbers = #tpu.dot_dimension_numbers<[1], [0], [0], [1], [0, 0, 1, 1], [], []>} : vector<576x32xbf16>, vector<32x32xbf16>, vector<576x32xf32> -> vector<576x32xf32>
      %c0_99 = arith.constant 0 : index
      %c0_100 = arith.constant 0 : index
      %136 = vector.load %arg3[%c0_99, %c0_100] : memref<1x32xf32, #tpu.memory_space<vmem>>, vector<1x32xf32>
      %137 = vector.broadcast %136 : vector<1x32xf32> to vector<576x32xf32>
      %138 = arith.addf %135, %137 : vector<576x32xf32>
      %cst_101 = arith.constant 0.000000e+00 : f32
      %139 = vector.broadcast %cst_101 : f32 to vector<576x32xf32>
      %140 = arith.maximumf %138, %139 : vector<576x32xf32>
      %141 = vector.shape_cast %140 : vector<576x32xf32> to vector<4x144x32xf32>
      %142 = vector.extract_strided_slice %141 {offsets = [0, 0, 0], sizes = [1, 144, 32], strides = [1, 1, 1]} : vector<4x144x32xf32> to vector<1x144x32xf32>
      %143 = vector.shape_cast %142 : vector<1x144x32xf32> to vector<144x32xf32>
      %144 = vector.extract_strided_slice %141 {offsets = [1, 0, 0], sizes = [1, 144, 32], strides = [1, 1, 1]} : vector<4x144x32xf32> to vector<1x144x32xf32>
      %145 = vector.shape_cast %144 : vector<1x144x32xf32> to vector<144x32xf32>
      %146 = arith.maximumf %143, %145 : vector<144x32xf32>
      %147 = vector.extract_strided_slice %141 {offsets = [2, 0, 0], sizes = [1, 144, 32], strides = [1, 1, 1]} : vector<4x144x32xf32> to vector<1x144x32xf32>
      %148 = vector.shape_cast %147 : vector<1x144x32xf32> to vector<144x32xf32>
      %149 = vector.extract_strided_slice %141 {offsets = [3, 0, 0], sizes = [1, 144, 32], strides = [1, 1, 1]} : vector<4x144x32xf32> to vector<1x144x32xf32>
      %150 = vector.shape_cast %149 : vector<1x144x32xf32> to vector<144x32xf32>
      %151 = arith.maximumf %148, %150 : vector<144x32xf32>
      %152 = arith.maximumf %146, %151 : vector<144x32xf32>
      %c0_102 = arith.constant 0 : index
      %c0_103 = arith.constant 0 : index
      %153 = vector.load %arg7[%c0_102, %c0_103] : memref<144x32xf32, #tpu.memory_space<vmem>>, vector<144x32xf32>
      tpu.vector_store %arg7[%c0_102, %c0_103], %152 {strides = array<i32>} : memref<144x32xf32, #tpu.memory_space<vmem>>, vector<144x32xf32>,
      %c0_104 = arith.constant 0 : index
      %c0_105 = arith.constant 0 : index
      %154 = vector.load %arg7[%c0_104, %c0_105] : memref<144x32xf32, #tpu.memory_space<vmem>>, vector<12x32xf32>
      %c0_106 = arith.constant 0 : index
      %c0_107 = arith.constant 0 : index
      %c0_108 = arith.constant 0 : index
      %155 = vector.load %arg8[%c0_106, %c0_107, %c0_108] : memref<12x12x32xf32, #tpu.memory_space<vmem>>, vector<1x12x32xf32>
      %156 = vector.shape_cast %155 : vector<1x12x32xf32> to vector<12x32xf32>
      %157 = vector.shape_cast %154 : vector<12x32xf32> to vector<1x12x32xf32>
      tpu.vector_store %arg8[%c0_106, %c0_107, %c0_108], %157 {strides = array<i32>} : memref<12x12x32xf32, #tpu.memory_space<vmem>>, vector<1x12x32xf32>,
      %c12_109 = arith.constant 12 : index
      %c0_110 = arith.constant 0 : index
      %158 = vector.load %arg7[%c12_109, %c0_110] : memref<144x32xf32, #tpu.memory_space<vmem>>, vector<12x32xf32>
      %c1_111 = arith.constant 1 : index
      %c0_112 = arith.constant 0 : index
      %c0_113 = arith.constant 0 : index
      %159 = vector.load %arg8[%c1_111, %c0_112, %c0_113] : memref<12x12x32xf32, #tpu.memory_space<vmem>>, vector<1x12x32xf32>
      %160 = vector.shape_cast %159 : vector<1x12x32xf32> to vector<12x32xf32>
      %161 = vector.shape_cast %158 : vector<12x32xf32> to vector<1x12x32xf32>
      tpu.vector_store %arg8[%c1_111, %c0_112, %c0_113], %161 {strides = array<i32>} : memref<12x12x32xf32, #tpu.memory_space<vmem>>, vector<1x12x32xf32>,
      %c24_114 = arith.constant 24 : index
      %c0_115 = arith.constant 0 : index
      %162 = vector.load %arg7[%c24_114, %c0_115] : memref<144x32xf32, #tpu.memory_space<vmem>>, vector<12x32xf32>
      %c2_116 = arith.constant 2 : index
      %c0_117 = arith.constant 0 : index
      %c0_118 = arith.constant 0 : index
      %163 = vector.load %arg8[%c2_116, %c0_117, %c0_118] : memref<12x12x32xf32, #tpu.memory_space<vmem>>, vector<1x12x32xf32>
      %164 = vector.shape_cast %163 : vector<1x12x32xf32> to vector<12x32xf32>
      %165 = vector.shape_cast %162 : vector<12x32xf32> to vector<1x12x32xf32>
      tpu.vector_store %arg8[%c2_116, %c0_117, %c0_118], %165 {strides = array<i32>} : memref<12x12x32xf32, #tpu.memory_space<vmem>>, vector<1x12x32xf32>,
      %c36 = arith.constant 36 : index
      %c0_119 = arith.constant 0 : index
      %166 = vector.load %arg7[%c36, %c0_119] : memref<144x32xf32, #tpu.memory_space<vmem>>, vector<12x32xf32>
      %c3_120 = arith.constant 3 : index
      %c0_121 = arith.constant 0 : index
      %c0_122 = arith.constant 0 : index
      %167 = vector.load %arg8[%c3_120, %c0_121, %c0_122] : memref<12x12x32xf32, #tpu.memory_space<vmem>>, vector<1x12x32xf32>
      %168 = vector.shape_cast %167 : vector<1x12x32xf32> to vector<12x32xf32>
      %169 = vector.shape_cast %166 : vector<12x32xf32> to vector<1x12x32xf32>
      tpu.vector_store %arg8[%c3_120, %c0_121, %c0_122], %169 {strides = array<i32>} : memref<12x12x32xf32, #tpu.memory_space<vmem>>, vector<1x12x32xf32>,
      %c48 = arith.constant 48 : index
      %c0_123 = arith.constant 0 : index
      %170 = vector.load %arg7[%c48, %c0_123] : memref<144x32xf32, #tpu.memory_space<vmem>>, vector<12x32xf32>
      %c4_124 = arith.constant 4 : index
      %c0_125 = arith.constant 0 : index
      %c0_126 = arith.constant 0 : index
      %171 = vector.load %arg8[%c4_124, %c0_125, %c0_126] : memref<12x12x32xf32, #tpu.memory_space<vmem>>, vector<1x12x32xf32>
      %172 = vector.shape_cast %171 : vector<1x12x32xf32> to vector<12x32xf32>
      %173 = vector.shape_cast %170 : vector<12x32xf32> to vector<1x12x32xf32>
      tpu.vector_store %arg8[%c4_124, %c0_125, %c0_126], %173 {strides = array<i32>} : memref<12x12x32xf32, #tpu.memory_space<vmem>>, vector<1x12x32xf32>,
      %c60 = arith.constant 60 : index
      %c0_127 = arith.constant 0 : index
      %174 = vector.load %arg7[%c60, %c0_127] : memref<144x32xf32, #tpu.memory_space<vmem>>, vector<12x32xf32>
      %c5_128 = arith.constant 5 : index
      %c0_129 = arith.constant 0 : index
      %c0_130 = arith.constant 0 : index
      %175 = vector.load %arg8[%c5_128, %c0_129, %c0_130] : memref<12x12x32xf32, #tpu.memory_space<vmem>>, vector<1x12x32xf32>
      %176 = vector.shape_cast %175 : vector<1x12x32xf32> to vector<12x32xf32>
      %177 = vector.shape_cast %174 : vector<12x32xf32> to vector<1x12x32xf32>
      tpu.vector_store %arg8[%c5_128, %c0_129, %c0_130], %177 {strides = array<i32>} : memref<12x12x32xf32, #tpu.memory_space<vmem>>, vector<1x12x32xf32>,
      %c72 = arith.constant 72 : index
      %c0_131 = arith.constant 0 : index
      %178 = vector.load %arg7[%c72, %c0_131] : memref<144x32xf32, #tpu.memory_space<vmem>>, vector<12x32xf32>
      %c6_132 = arith.constant 6 : index
      %c0_133 = arith.constant 0 : index
      %c0_134 = arith.constant 0 : index
      %179 = vector.load %arg8[%c6_132, %c0_133, %c0_134] : memref<12x12x32xf32, #tpu.memory_space<vmem>>, vector<1x12x32xf32>
      %180 = vector.shape_cast %179 : vector<1x12x32xf32> to vector<12x32xf32>
      %181 = vector.shape_cast %178 : vector<12x32xf32> to vector<1x12x32xf32>
      tpu.vector_store %arg8[%c6_132, %c0_133, %c0_134], %181 {strides = array<i32>} : memref<12x12x32xf32, #tpu.memory_space<vmem>>, vector<1x12x32xf32>,
      %c84 = arith.constant 84 : index
      %c0_135 = arith.constant 0 : index
      %182 = vector.load %arg7[%c84, %c0_135] : memref<144x32xf32, #tpu.memory_space<vmem>>, vector<12x32xf32>
      %c7_136 = arith.constant 7 : index
      %c0_137 = arith.constant 0 : index
      %c0_138 = arith.constant 0 : index
      %183 = vector.load %arg8[%c7_136, %c0_137, %c0_138] : memref<12x12x32xf32, #tpu.memory_space<vmem>>, vector<1x12x32xf32>
      %184 = vector.shape_cast %183 : vector<1x12x32xf32> to vector<12x32xf32>
      %185 = vector.shape_cast %182 : vector<12x32xf32> to vector<1x12x32xf32>
      tpu.vector_store %arg8[%c7_136, %c0_137, %c0_138], %185 {strides = array<i32>} : memref<12x12x32xf32, #tpu.memory_space<vmem>>, vector<1x12x32xf32>,
      %c96 = arith.constant 96 : index
      %c0_139 = arith.constant 0 : index
      %186 = vector.load %arg7[%c96, %c0_139] : memref<144x32xf32, #tpu.memory_space<vmem>>, vector<12x32xf32>
      %c8_140 = arith.constant 8 : index
      %c0_141 = arith.constant 0 : index
      %c0_142 = arith.constant 0 : index
      %187 = vector.load %arg8[%c8_140, %c0_141, %c0_142] : memref<12x12x32xf32, #tpu.memory_space<vmem>>, vector<1x12x32xf32>
      %188 = vector.shape_cast %187 : vector<1x12x32xf32> to vector<12x32xf32>
      %189 = vector.shape_cast %186 : vector<12x32xf32> to vector<1x12x32xf32>
      tpu.vector_store %arg8[%c8_140, %c0_141, %c0_142], %189 {strides = array<i32>} : memref<12x12x32xf32, #tpu.memory_space<vmem>>, vector<1x12x32xf32>,
      %c108 = arith.constant 108 : index
      %c0_143 = arith.constant 0 : index
      %190 = vector.load %arg7[%c108, %c0_143] : memref<144x32xf32, #tpu.memory_space<vmem>>, vector<12x32xf32>
      %c9_144 = arith.constant 9 : index
      %c0_145 = arith.constant 0 : index
      %c0_146 = arith.constant 0 : index
      %191 = vector.load %arg8[%c9_144, %c0_145, %c0_146] : memref<12x12x32xf32, #tpu.memory_space<vmem>>, vector<1x12x32xf32>
      %192 = vector.shape_cast %191 : vector<1x12x32xf32> to vector<12x32xf32>
      %193 = vector.shape_cast %190 : vector<12x32xf32> to vector<1x12x32xf32>
      tpu.vector_store %arg8[%c9_144, %c0_145, %c0_146], %193 {strides = array<i32>} : memref<12x12x32xf32, #tpu.memory_space<vmem>>, vector<1x12x32xf32>,
      %c120 = arith.constant 120 : index
      %c0_147 = arith.constant 0 : index
      %194 = vector.load %arg7[%c120, %c0_147] : memref<144x32xf32, #tpu.memory_space<vmem>>, vector<12x32xf32>
      %c10_148 = arith.constant 10 : index
      %c0_149 = arith.constant 0 : index
      %c0_150 = arith.constant 0 : index
      %195 = vector.load %arg8[%c10_148, %c0_149, %c0_150] : memref<12x12x32xf32, #tpu.memory_space<vmem>>, vector<1x12x32xf32>
      %196 = vector.shape_cast %195 : vector<1x12x32xf32> to vector<12x32xf32>
      %197 = vector.shape_cast %194 : vector<12x32xf32> to vector<1x12x32xf32>
      tpu.vector_store %arg8[%c10_148, %c0_149, %c0_150], %197 {strides = array<i32>} : memref<12x12x32xf32, #tpu.memory_space<vmem>>, vector<1x12x32xf32>,
      %c132 = arith.constant 132 : index
      %c0_151 = arith.constant 0 : index
      %198 = vector.load %arg7[%c132, %c0_151] : memref<144x32xf32, #tpu.memory_space<vmem>>, vector<12x32xf32>
      %c11_152 = arith.constant 11 : index
      %c0_153 = arith.constant 0 : index
      %c0_154 = arith.constant 0 : index
      %199 = vector.load %arg8[%c11_152, %c0_153, %c0_154] : memref<12x12x32xf32, #tpu.memory_space<vmem>>, vector<1x12x32xf32>
      %200 = vector.shape_cast %199 : vector<1x12x32xf32> to vector<12x32xf32>
      %201 = vector.shape_cast %198 : vector<12x32xf32> to vector<1x12x32xf32>
      tpu.vector_store %arg8[%c11_152, %c0_153, %c0_154], %201 {strides = array<i32>} : memref<12x12x32xf32, #tpu.memory_space<vmem>>, vector<1x12x32xf32>,
      %c64_i32 = arith.constant 64 : i32
      %202 = arith.muli %130, %c64_i32 : i32
      %203 = tpu.assume_multiple %202, 64 : i32
      %c0_155 = arith.constant 0 : index
      %c0_156 = arith.constant 0 : index
      %c0_157 = arith.constant 0 : index
      %204 = vector.load %arg8[%c0_155, %c0_156, %c0_157] : memref<12x12x32xf32, #tpu.memory_space<vmem>>, vector<8x8x32xf32>
      %205 = vector.shape_cast %204 : vector<8x8x32xf32> to vector<64x32xf32>
      %206 = arith.truncf %205 : vector<64x32xf32> to vector<64x32xbf16>
      %c0_158 = arith.constant 0 : index
      %c1_159 = arith.constant 1 : index
      %c0_160 = arith.constant 0 : index
      %207 = vector.load %arg8[%c0_158, %c1_159, %c0_160] : memref<12x12x32xf32, #tpu.memory_space<vmem>>, vector<8x8x32xf32>
      %208 = vector.shape_cast %207 : vector<8x8x32xf32> to vector<64x32xf32>
      %209 = arith.truncf %208 : vector<64x32xf32> to vector<64x32xbf16>
      %c0_161 = arith.constant 0 : index
      %c2_162 = arith.constant 2 : index
      %c0_163 = arith.constant 0 : index
      %210 = vector.load %arg8[%c0_161, %c2_162, %c0_163] : memref<12x12x32xf32, #tpu.memory_space<vmem>>, vector<8x8x32xf32>
      %211 = vector.shape_cast %210 : vector<8x8x32xf32> to vector<64x32xf32>
      %212 = arith.truncf %211 : vector<64x32xf32> to vector<64x32xbf16>
      %c0_164 = arith.constant 0 : index
      %c3_165 = arith.constant 3 : index
      %c0_166 = arith.constant 0 : index
      %213 = vector.load %arg8[%c0_164, %c3_165, %c0_166] : memref<12x12x32xf32, #tpu.memory_space<vmem>>, vector<8x8x32xf32>
      %214 = vector.shape_cast %213 : vector<8x8x32xf32> to vector<64x32xf32>
      %215 = arith.truncf %214 : vector<64x32xf32> to vector<64x32xbf16>
      %216 = tpu.concatenate %206, %209, %212, %215 in 1 : vector<64x32xbf16>, vector<64x32xbf16>, vector<64x32xbf16>, vector<64x32xbf16> -> vector<64x128xbf16>
      %217 = arith.index_cast %203 : i32 to index
      %c0_167 = arith.constant 0 : index
      %218 = vector.load %arg9[%217, %c0_167] : memref<512x800xbf16, #tpu.memory_space<vmem>>, vector<64x128xbf16>
      tpu.vector_store %arg9[%217, %c0_167], %216 {strides = array<i32>} : memref<512x800xbf16, #tpu.memory_space<vmem>>, vector<64x128xbf16>,
      %c0_168 = arith.constant 0 : index
      %c4_169 = arith.constant 4 : index
      %c0_170 = arith.constant 0 : index
      %219 = vector.load %arg8[%c0_168, %c4_169, %c0_170] : memref<12x12x32xf32, #tpu.memory_space<vmem>>, vector<8x8x32xf32>
      %220 = vector.shape_cast %219 : vector<8x8x32xf32> to vector<64x32xf32>
      %221 = arith.truncf %220 : vector<64x32xf32> to vector<64x32xbf16>
      %c1_171 = arith.constant 1 : index
      %c0_172 = arith.constant 0 : index
      %c0_173 = arith.constant 0 : index
      %222 = vector.load %arg8[%c1_171, %c0_172, %c0_173] : memref<12x12x32xf32, #tpu.memory_space<vmem>>, vector<8x8x32xf32>
      %223 = vector.shape_cast %222 : vector<8x8x32xf32> to vector<64x32xf32>
      %224 = arith.truncf %223 : vector<64x32xf32> to vector<64x32xbf16>
      %c1_174 = arith.constant 1 : index
      %c1_175 = arith.constant 1 : index
      %c0_176 = arith.constant 0 : index
      %225 = vector.load %arg8[%c1_174, %c1_175, %c0_176] : memref<12x12x32xf32, #tpu.memory_space<vmem>>, vector<8x8x32xf32>
      %226 = vector.shape_cast %225 : vector<8x8x32xf32> to vector<64x32xf32>
      %227 = arith.truncf %226 : vector<64x32xf32> to vector<64x32xbf16>
      %c1_177 = arith.constant 1 : index
      %c2_178 = arith.constant 2 : index
      %c0_179 = arith.constant 0 : index
      %228 = vector.load %arg8[%c1_177, %c2_178, %c0_179] : memref<12x12x32xf32, #tpu.memory_space<vmem>>, vector<8x8x32xf32>
      %229 = vector.shape_cast %228 : vector<8x8x32xf32> to vector<64x32xf32>
      %230 = arith.truncf %229 : vector<64x32xf32> to vector<64x32xbf16>
      %231 = tpu.concatenate %221, %224, %227, %230 in 1 : vector<64x32xbf16>, vector<64x32xbf16>, vector<64x32xbf16>, vector<64x32xbf16> -> vector<64x128xbf16>
      %232 = arith.index_cast %203 : i32 to index
      %c128_180 = arith.constant 128 : index
      %233 = vector.load %arg9[%232, %c128_180] : memref<512x800xbf16, #tpu.memory_space<vmem>>, vector<64x128xbf16>
      tpu.vector_store %arg9[%232, %c128_180], %231 {strides = array<i32>} : memref<512x800xbf16, #tpu.memory_space<vmem>>, vector<64x128xbf16>,
      %c1_181 = arith.constant 1 : index
      %c3_182 = arith.constant 3 : index
      %c0_183 = arith.constant 0 : index
      %234 = vector.load %arg8[%c1_181, %c3_182, %c0_183] : memref<12x12x32xf32, #tpu.memory_space<vmem>>, vector<8x8x32xf32>
      %235 = vector.shape_cast %234 : vector<8x8x32xf32> to vector<64x32xf32>
      %236 = arith.truncf %235 : vector<64x32xf32> to vector<64x32xbf16>
      %c1_184 = arith.constant 1 : index
      %c4_185 = arith.constant 4 : index
      %c0_186 = arith.constant 0 : index
      %237 = vector.load %arg8[%c1_184, %c4_185, %c0_186] : memref<12x12x32xf32, #tpu.memory_space<vmem>>, vector<8x8x32xf32>
      %238 = vector.shape_cast %237 : vector<8x8x32xf32> to vector<64x32xf32>
      %239 = arith.truncf %238 : vector<64x32xf32> to vector<64x32xbf16>
      %c2_187 = arith.constant 2 : index
      %c0_188 = arith.constant 0 : index
      %c0_189 = arith.constant 0 : index
      %240 = vector.load %arg8[%c2_187, %c0_188, %c0_189] : memref<12x12x32xf32, #tpu.memory_space<vmem>>, vector<8x8x32xf32>
      %241 = vector.shape_cast %240 : vector<8x8x32xf32> to vector<64x32xf32>
      %242 = arith.truncf %241 : vector<64x32xf32> to vector<64x32xbf16>
      %c2_190 = arith.constant 2 : index
      %c1_191 = arith.constant 1 : index
      %c0_192 = arith.constant 0 : index
      %243 = vector.load %arg8[%c2_190, %c1_191, %c0_192] : memref<12x12x32xf32, #tpu.memory_space<vmem>>, vector<8x8x32xf32>
      %244 = vector.shape_cast %243 : vector<8x8x32xf32> to vector<64x32xf32>
      %245 = arith.truncf %244 : vector<64x32xf32> to vector<64x32xbf16>
      %246 = tpu.concatenate %236, %239, %242, %245 in 1 : vector<64x32xbf16>, vector<64x32xbf16>, vector<64x32xbf16>, vector<64x32xbf16> -> vector<64x128xbf16>
      %247 = arith.index_cast %203 : i32 to index
      %c256_193 = arith.constant 256 : index
      %248 = vector.load %arg9[%247, %c256_193] : memref<512x800xbf16, #tpu.memory_space<vmem>>, vector<64x128xbf16>
      tpu.vector_store %arg9[%247, %c256_193], %246 {strides = array<i32>} : memref<512x800xbf16, #tpu.memory_space<vmem>>, vector<64x128xbf16>,
      %c2_194 = arith.constant 2 : index
      %c2_195 = arith.constant 2 : index
      %c0_196 = arith.constant 0 : index
      %249 = vector.load %arg8[%c2_194, %c2_195, %c0_196] : memref<12x12x32xf32, #tpu.memory_space<vmem>>, vector<8x8x32xf32>
      %250 = vector.shape_cast %249 : vector<8x8x32xf32> to vector<64x32xf32>
      %251 = arith.truncf %250 : vector<64x32xf32> to vector<64x32xbf16>
      %c2_197 = arith.constant 2 : index
      %c3_198 = arith.constant 3 : index
      %c0_199 = arith.constant 0 : index
      %252 = vector.load %arg8[%c2_197, %c3_198, %c0_199] : memref<12x12x32xf32, #tpu.memory_space<vmem>>, vector<8x8x32xf32>
      %253 = vector.shape_cast %252 : vector<8x8x32xf32> to vector<64x32xf32>
      %254 = arith.truncf %253 : vector<64x32xf32> to vector<64x32xbf16>
      %c2_200 = arith.constant 2 : index
      %c4_201 = arith.constant 4 : index
      %c0_202 = arith.constant 0 : index
      %255 = vector.load %arg8[%c2_200, %c4_201, %c0_202] : memref<12x12x32xf32, #tpu.memory_space<vmem>>, vector<8x8x32xf32>
      %256 = vector.shape_cast %255 : vector<8x8x32xf32> to vector<64x32xf32>
      %257 = arith.truncf %256 : vector<64x32xf32> to vector<64x32xbf16>
      %c3_203 = arith.constant 3 : index
      %c0_204 = arith.constant 0 : index
      %c0_205 = arith.constant 0 : index
      %258 = vector.load %arg8[%c3_203, %c0_204, %c0_205] : memref<12x12x32xf32, #tpu.memory_space<vmem>>, vector<8x8x32xf32>
      %259 = vector.shape_cast %258 : vector<8x8x32xf32> to vector<64x32xf32>
      %260 = arith.truncf %259 : vector<64x32xf32> to vector<64x32xbf16>
      %261 = tpu.concatenate %251, %254, %257, %260 in 1 : vector<64x32xbf16>, vector<64x32xbf16>, vector<64x32xbf16>, vector<64x32xbf16> -> vector<64x128xbf16>
      %262 = arith.index_cast %203 : i32 to index
      %c384_206 = arith.constant 384 : index
      %263 = vector.load %arg9[%262, %c384_206] : memref<512x800xbf16, #tpu.memory_space<vmem>>, vector<64x128xbf16>
      tpu.vector_store %arg9[%262, %c384_206], %261 {strides = array<i32>} : memref<512x800xbf16, #tpu.memory_space<vmem>>, vector<64x128xbf16>,
      %c3_207 = arith.constant 3 : index
      %c1_208 = arith.constant 1 : index
      %c0_209 = arith.constant 0 : index
      %264 = vector.load %arg8[%c3_207, %c1_208, %c0_209] : memref<12x12x32xf32, #tpu.memory_space<vmem>>, vector<8x8x32xf32>
      %265 = vector.shape_cast %264 : vector<8x8x32xf32> to vector<64x32xf32>
      %266 = arith.truncf %265 : vector<64x32xf32> to vector<64x32xbf16>
      %c3_210 = arith.constant 3 : index
      %c2_211 = arith.constant 2 : index
      %c0_212 = arith.constant 0 : index
      %267 = vector.load %arg8[%c3_210, %c2_211, %c0_212] : memref<12x12x32xf32, #tpu.memory_space<vmem>>, vector<8x8x32xf32>
      %268 = vector.shape_cast %267 : vector<8x8x32xf32> to vector<64x32xf32>
      %269 = arith.truncf %268 : vector<64x32xf32> to vector<64x32xbf16>
      %c3_213 = arith.constant 3 : index
      %c3_214 = arith.constant 3 : index
      %c0_215 = arith.constant 0 : index
      %270 = vector.load %arg8[%c3_213, %c3_214, %c0_215] : memref<12x12x32xf32, #tpu.memory_space<vmem>>, vector<8x8x32xf32>
      %271 = vector.shape_cast %270 : vector<8x8x32xf32> to vector<64x32xf32>
      %272 = arith.truncf %271 : vector<64x32xf32> to vector<64x32xbf16>
      %c3_216 = arith.constant 3 : index
      %c4_217 = arith.constant 4 : index
      %c0_218 = arith.constant 0 : index
      %273 = vector.load %arg8[%c3_216, %c4_217, %c0_218] : memref<12x12x32xf32, #tpu.memory_space<vmem>>, vector<8x8x32xf32>
      %274 = vector.shape_cast %273 : vector<8x8x32xf32> to vector<64x32xf32>
      %275 = arith.truncf %274 : vector<64x32xf32> to vector<64x32xbf16>
      %276 = tpu.concatenate %266, %269, %272, %275 in 1 : vector<64x32xbf16>, vector<64x32xbf16>, vector<64x32xbf16>, vector<64x32xbf16> -> vector<64x128xbf16>
      %277 = arith.index_cast %203 : i32 to index
      %c512_219 = arith.constant 512 : index
      %278 = vector.load %arg9[%277, %c512_219] : memref<512x800xbf16, #tpu.memory_space<vmem>>, vector<64x128xbf16>
      tpu.vector_store %arg9[%277, %c512_219], %276 {strides = array<i32>} : memref<512x800xbf16, #tpu.memory_space<vmem>>, vector<64x128xbf16>,
      %c4_220 = arith.constant 4 : index
      %c0_221 = arith.constant 0 : index
      %c0_222 = arith.constant 0 : index
      %279 = vector.load %arg8[%c4_220, %c0_221, %c0_222] : memref<12x12x32xf32, #tpu.memory_space<vmem>>, vector<8x8x32xf32>
      %280 = vector.shape_cast %279 : vector<8x8x32xf32> to vector<64x32xf32>
      %281 = arith.truncf %280 : vector<64x32xf32> to vector<64x32xbf16>
      %c4_223 = arith.constant 4 : index
      %c1_224 = arith.constant 1 : index
      %c0_225 = arith.constant 0 : index
      %282 = vector.load %arg8[%c4_223, %c1_224, %c0_225] : memref<12x12x32xf32, #tpu.memory_space<vmem>>, vector<8x8x32xf32>
      %283 = vector.shape_cast %282 : vector<8x8x32xf32> to vector<64x32xf32>
      %284 = arith.truncf %283 : vector<64x32xf32> to vector<64x32xbf16>
      %c4_226 = arith.constant 4 : index
      %c2_227 = arith.constant 2 : index
      %c0_228 = arith.constant 0 : index
      %285 = vector.load %arg8[%c4_226, %c2_227, %c0_228] : memref<12x12x32xf32, #tpu.memory_space<vmem>>, vector<8x8x32xf32>
      %286 = vector.shape_cast %285 : vector<8x8x32xf32> to vector<64x32xf32>
      %287 = arith.truncf %286 : vector<64x32xf32> to vector<64x32xbf16>
      %c4_229 = arith.constant 4 : index
      %c3_230 = arith.constant 3 : index
      %c0_231 = arith.constant 0 : index
      %288 = vector.load %arg8[%c4_229, %c3_230, %c0_231] : memref<12x12x32xf32, #tpu.memory_space<vmem>>, vector<8x8x32xf32>
      %289 = vector.shape_cast %288 : vector<8x8x32xf32> to vector<64x32xf32>
      %290 = arith.truncf %289 : vector<64x32xf32> to vector<64x32xbf16>
      %291 = tpu.concatenate %281, %284, %287, %290 in 1 : vector<64x32xbf16>, vector<64x32xbf16>, vector<64x32xbf16>, vector<64x32xbf16> -> vector<64x128xbf16>
      %292 = arith.index_cast %203 : i32 to index
      %c640_232 = arith.constant 640 : index
      %293 = vector.load %arg9[%292, %c640_232] : memref<512x800xbf16, #tpu.memory_space<vmem>>, vector<64x128xbf16>
      tpu.vector_store %arg9[%292, %c640_232], %291 {strides = array<i32>} : memref<512x800xbf16, #tpu.memory_space<vmem>>, vector<64x128xbf16>,
      %c4_233 = arith.constant 4 : index
      %c4_234 = arith.constant 4 : index
      %c0_235 = arith.constant 0 : index
      %294 = vector.load %arg8[%c4_233, %c4_234, %c0_235] : memref<12x12x32xf32, #tpu.memory_space<vmem>>, vector<8x8x32xf32>
      %295 = vector.shape_cast %294 : vector<8x8x32xf32> to vector<64x32xf32>
      %296 = arith.truncf %295 : vector<64x32xf32> to vector<64x32xbf16>
      %297 = arith.index_cast %203 : i32 to index
      %c768_236 = arith.constant 768 : index
      %298 = vector.load %arg9[%297, %c768_236] : memref<512x800xbf16, #tpu.memory_space<vmem>>, vector<64x32xbf16>
      tpu.vector_store %arg9[%297, %c768_236], %296 {strides = array<i32>} : memref<512x800xbf16, #tpu.memory_space<vmem>>, vector<64x32xbf16>,
    }
    %c8_i32_0 = arith.constant 8 : i32
    %c0 = arith.constant 0 : index
    %c0_1 = arith.constant 0 : index
    %1 = vector.load %arg9[%c0, %c0_1] : memref<512x800xbf16, #tpu.memory_space<vmem>>, vector<512x800xbf16>
    %c0_2 = arith.constant 0 : index
    %c0_3 = arith.constant 0 : index
    %2 = vector.load %arg4[%c0_2, %c0_3] : memref<800x64xbf16, #tpu.memory_space<vmem>>, vector<800x64xbf16>
    %cst = arith.constant dense<0.000000e+00> : vector<512x64xf32>
    %3 = tpu.matmul %1, %2, %cst {dimension_numbers = #tpu.dot_dimension_numbers<[1], [0], [0], [1], [0, 0, 1, 1], [], []>} : vector<512x800xbf16>, vector<800x64xbf16>, vector<512x64xf32> -> vector<512x64xf32>
    %c0_4 = arith.constant 0 : index
    %c0_5 = arith.constant 0 : index
    %4 = vector.load %arg5[%c0_4, %c0_5] : memref<1x64xf32, #tpu.memory_space<vmem>>, vector<1x64xf32>
    %5 = vector.broadcast %4 : vector<1x64xf32> to vector<512x64xf32>
    %6 = arith.addf %3, %5 : vector<512x64xf32>
    %cst_6 = arith.constant 0.000000e+00 : f32
    %7 = vector.broadcast %cst_6 : f32 to vector<512x64xf32>
    %8 = arith.maximumf %6, %7 : vector<512x64xf32>
    %9 = vector.shape_cast %8 : vector<512x64xf32> to vector<32x2x8x64xf32>
    %10 = vector.extract_strided_slice %9 {offsets = [0, 0, 0, 0], sizes = [32, 1, 8, 64], strides = [1, 1, 1, 1]} : vector<32x2x8x64xf32> to vector<32x1x8x64xf32>
    %11 = vector.shape_cast %10 : vector<32x1x8x64xf32> to vector<32x8x64xf32>
    %12 = vector.extract_strided_slice %9 {offsets = [0, 1, 0, 0], sizes = [32, 1, 8, 64], strides = [1, 1, 1, 1]} : vector<32x2x8x64xf32> to vector<32x1x8x64xf32>
    %13 = vector.shape_cast %12 : vector<32x1x8x64xf32> to vector<32x8x64xf32>
    %14 = arith.maximumf %11, %13 : vector<32x8x64xf32>
    %15 = vector.shape_cast %14 : vector<32x8x64xf32> to vector<8x32x64xf32>
    %c0_7 = arith.constant 0 : index
    %c0_8 = arith.constant 0 : index
    %c0_9 = arith.constant 0 : index
    %16 = vector.load %arg10[%c0_7, %c0_8, %c0_9] : memref<8x32x64xf32, #tpu.memory_space<vmem>>, vector<8x32x64xf32>
    tpu.vector_store %arg10[%c0_7, %c0_8, %c0_9], %15 {strides = array<i32>} : memref<8x32x64xf32, #tpu.memory_space<vmem>>, vector<8x32x64xf32>,
    %c0_10 = arith.constant 0 : index
    %c0_11 = arith.constant 0 : index
    %c0_12 = arith.constant 0 : index
    %17 = vector.load %arg10[%c0_10, %c0_11, %c0_12] : memref<8x32x64xf32, #tpu.memory_space<vmem>>, vector<8x1x64xf32>
    %18 = vector.shape_cast %17 : vector<8x1x64xf32> to vector<8x64xf32>
    %c0_13 = arith.constant 0 : index
    %c1 = arith.constant 1 : index
    %c0_14 = arith.constant 0 : index
    %19 = vector.load %arg10[%c0_13, %c1, %c0_14] : memref<8x32x64xf32, #tpu.memory_space<vmem>>, vector<8x1x64xf32>
    %20 = vector.shape_cast %19 : vector<8x1x64xf32> to vector<8x64xf32>
    %21 = arith.maximumf %18, %20 : vector<8x64xf32>
    %22 = arith.truncf %21 : vector<8x64xf32> to vector<8x64xbf16>
    %c0_15 = arith.constant 0 : index
    %c0_16 = arith.constant 0 : index
    %23 = vector.load %arg6[%c0_15, %c0_16] : memref<8x1024xbf16, #tpu.memory_space<vmem>>, vector<8x64xbf16>
    tpu.vector_store %arg6[%c0_15, %c0_16], %22 {strides = array<i32>} : memref<8x1024xbf16, #tpu.memory_space<vmem>>, vector<8x64xbf16>,
    %c0_17 = arith.constant 0 : index
    %c2 = arith.constant 2 : index
    %c0_18 = arith.constant 0 : index
    %24 = vector.load %arg10[%c0_17, %c2, %c0_18] : memref<8x32x64xf32, #tpu.memory_space<vmem>>, vector<8x1x64xf32>
    %25 = vector.shape_cast %24 : vector<8x1x64xf32> to vector<8x64xf32>
    %c0_19 = arith.constant 0 : index
    %c3 = arith.constant 3 : index
    %c0_20 = arith.constant 0 : index
    %26 = vector.load %arg10[%c0_19, %c3, %c0_20] : memref<8x32x64xf32, #tpu.memory_space<vmem>>, vector<8x1x64xf32>
    %27 = vector.shape_cast %26 : vector<8x1x64xf32> to vector<8x64xf32>
    %28 = arith.maximumf %25, %27 : vector<8x64xf32>
    %29 = arith.truncf %28 : vector<8x64xf32> to vector<8x64xbf16>
    %c0_21 = arith.constant 0 : index
    %c64 = arith.constant 64 : index
    %30 = vector.load %arg6[%c0_21, %c64] : memref<8x1024xbf16, #tpu.memory_space<vmem>>, vector<8x64xbf16>
    tpu.vector_store %arg6[%c0_21, %c64], %29 {strides = array<i32>} : memref<8x1024xbf16, #tpu.memory_space<vmem>>, vector<8x64xbf16>,
    %c0_22 = arith.constant 0 : index
    %c4 = arith.constant 4 : index
    %c0_23 = arith.constant 0 : index
    %31 = vector.load %arg10[%c0_22, %c4, %c0_23] : memref<8x32x64xf32, #tpu.memory_space<vmem>>, vector<8x1x64xf32>
    %32 = vector.shape_cast %31 : vector<8x1x64xf32> to vector<8x64xf32>
    %c0_24 = arith.constant 0 : index
    %c5 = arith.constant 5 : index
    %c0_25 = arith.constant 0 : index
    %33 = vector.load %arg10[%c0_24, %c5, %c0_25] : memref<8x32x64xf32, #tpu.memory_space<vmem>>, vector<8x1x64xf32>
    %34 = vector.shape_cast %33 : vector<8x1x64xf32> to vector<8x64xf32>
    %35 = arith.maximumf %32, %34 : vector<8x64xf32>
    %36 = arith.truncf %35 : vector<8x64xf32> to vector<8x64xbf16>
    %c0_26 = arith.constant 0 : index
    %c128 = arith.constant 128 : index
    %37 = vector.load %arg6[%c0_26, %c128] : memref<8x1024xbf16, #tpu.memory_space<vmem>>, vector<8x64xbf16>
    tpu.vector_store %arg6[%c0_26, %c128], %36 {strides = array<i32>} : memref<8x1024xbf16, #tpu.memory_space<vmem>>, vector<8x64xbf16>,
    %c0_27 = arith.constant 0 : index
    %c6 = arith.constant 6 : index
    %c0_28 = arith.constant 0 : index
    %38 = vector.load %arg10[%c0_27, %c6, %c0_28] : memref<8x32x64xf32, #tpu.memory_space<vmem>>, vector<8x1x64xf32>
    %39 = vector.shape_cast %38 : vector<8x1x64xf32> to vector<8x64xf32>
    %c0_29 = arith.constant 0 : index
    %c7 = arith.constant 7 : index
    %c0_30 = arith.constant 0 : index
    %40 = vector.load %arg10[%c0_29, %c7, %c0_30] : memref<8x32x64xf32, #tpu.memory_space<vmem>>, vector<8x1x64xf32>
    %41 = vector.shape_cast %40 : vector<8x1x64xf32> to vector<8x64xf32>
    %42 = arith.maximumf %39, %41 : vector<8x64xf32>
    %43 = arith.truncf %42 : vector<8x64xf32> to vector<8x64xbf16>
    %c0_31 = arith.constant 0 : index
    %c192 = arith.constant 192 : index
    %44 = vector.load %arg6[%c0_31, %c192] : memref<8x1024xbf16, #tpu.memory_space<vmem>>, vector<8x64xbf16>
    tpu.vector_store %arg6[%c0_31, %c192], %43 {strides = array<i32>} : memref<8x1024xbf16, #tpu.memory_space<vmem>>, vector<8x64xbf16>,
    %c0_32 = arith.constant 0 : index
    %c8 = arith.constant 8 : index
    %c0_33 = arith.constant 0 : index
    %45 = vector.load %arg10[%c0_32, %c8, %c0_33] : memref<8x32x64xf32, #tpu.memory_space<vmem>>, vector<8x1x64xf32>
    %46 = vector.shape_cast %45 : vector<8x1x64xf32> to vector<8x64xf32>
    %c0_34 = arith.constant 0 : index
    %c9 = arith.constant 9 : index
    %c0_35 = arith.constant 0 : index
    %47 = vector.load %arg10[%c0_34, %c9, %c0_35] : memref<8x32x64xf32, #tpu.memory_space<vmem>>, vector<8x1x64xf32>
    %48 = vector.shape_cast %47 : vector<8x1x64xf32> to vector<8x64xf32>
    %49 = arith.maximumf %46, %48 : vector<8x64xf32>
    %50 = arith.truncf %49 : vector<8x64xf32> to vector<8x64xbf16>
    %c0_36 = arith.constant 0 : index
    %c256 = arith.constant 256 : index
    %51 = vector.load %arg6[%c0_36, %c256] : memref<8x1024xbf16, #tpu.memory_space<vmem>>, vector<8x64xbf16>
    tpu.vector_store %arg6[%c0_36, %c256], %50 {strides = array<i32>} : memref<8x1024xbf16, #tpu.memory_space<vmem>>, vector<8x64xbf16>,
    %c0_37 = arith.constant 0 : index
    %c10 = arith.constant 10 : index
    %c0_38 = arith.constant 0 : index
    %52 = vector.load %arg10[%c0_37, %c10, %c0_38] : memref<8x32x64xf32, #tpu.memory_space<vmem>>, vector<8x1x64xf32>
    %53 = vector.shape_cast %52 : vector<8x1x64xf32> to vector<8x64xf32>
    %c0_39 = arith.constant 0 : index
    %c11 = arith.constant 11 : index
    %c0_40 = arith.constant 0 : index
    %54 = vector.load %arg10[%c0_39, %c11, %c0_40] : memref<8x32x64xf32, #tpu.memory_space<vmem>>, vector<8x1x64xf32>
    %55 = vector.shape_cast %54 : vector<8x1x64xf32> to vector<8x64xf32>
    %56 = arith.maximumf %53, %55 : vector<8x64xf32>
    %57 = arith.truncf %56 : vector<8x64xf32> to vector<8x64xbf16>
    %c0_41 = arith.constant 0 : index
    %c320 = arith.constant 320 : index
    %58 = vector.load %arg6[%c0_41, %c320] : memref<8x1024xbf16, #tpu.memory_space<vmem>>, vector<8x64xbf16>
    tpu.vector_store %arg6[%c0_41, %c320], %57 {strides = array<i32>} : memref<8x1024xbf16, #tpu.memory_space<vmem>>, vector<8x64xbf16>,
    %c0_42 = arith.constant 0 : index
    %c12 = arith.constant 12 : index
    %c0_43 = arith.constant 0 : index
    %59 = vector.load %arg10[%c0_42, %c12, %c0_43] : memref<8x32x64xf32, #tpu.memory_space<vmem>>, vector<8x1x64xf32>
    %60 = vector.shape_cast %59 : vector<8x1x64xf32> to vector<8x64xf32>
    %c0_44 = arith.constant 0 : index
    %c13 = arith.constant 13 : index
    %c0_45 = arith.constant 0 : index
    %61 = vector.load %arg10[%c0_44, %c13, %c0_45] : memref<8x32x64xf32, #tpu.memory_space<vmem>>, vector<8x1x64xf32>
    %62 = vector.shape_cast %61 : vector<8x1x64xf32> to vector<8x64xf32>
    %63 = arith.maximumf %60, %62 : vector<8x64xf32>
    %64 = arith.truncf %63 : vector<8x64xf32> to vector<8x64xbf16>
    %c0_46 = arith.constant 0 : index
    %c384 = arith.constant 384 : index
    %65 = vector.load %arg6[%c0_46, %c384] : memref<8x1024xbf16, #tpu.memory_space<vmem>>, vector<8x64xbf16>
    tpu.vector_store %arg6[%c0_46, %c384], %64 {strides = array<i32>} : memref<8x1024xbf16, #tpu.memory_space<vmem>>, vector<8x64xbf16>,
    %c0_47 = arith.constant 0 : index
    %c14 = arith.constant 14 : index
    %c0_48 = arith.constant 0 : index
    %66 = vector.load %arg10[%c0_47, %c14, %c0_48] : memref<8x32x64xf32, #tpu.memory_space<vmem>>, vector<8x1x64xf32>
    %67 = vector.shape_cast %66 : vector<8x1x64xf32> to vector<8x64xf32>
    %c0_49 = arith.constant 0 : index
    %c15 = arith.constant 15 : index
    %c0_50 = arith.constant 0 : index
    %68 = vector.load %arg10[%c0_49, %c15, %c0_50] : memref<8x32x64xf32, #tpu.memory_space<vmem>>, vector<8x1x64xf32>
    %69 = vector.shape_cast %68 : vector<8x1x64xf32> to vector<8x64xf32>
    %70 = arith.maximumf %67, %69 : vector<8x64xf32>
    %71 = arith.truncf %70 : vector<8x64xf32> to vector<8x64xbf16>
    %c0_51 = arith.constant 0 : index
    %c448 = arith.constant 448 : index
    %72 = vector.load %arg6[%c0_51, %c448] : memref<8x1024xbf16, #tpu.memory_space<vmem>>, vector<8x64xbf16>
    tpu.vector_store %arg6[%c0_51, %c448], %71 {strides = array<i32>} : memref<8x1024xbf16, #tpu.memory_space<vmem>>, vector<8x64xbf16>,
    %c0_52 = arith.constant 0 : index
    %c16 = arith.constant 16 : index
    %c0_53 = arith.constant 0 : index
    %73 = vector.load %arg10[%c0_52, %c16, %c0_53] : memref<8x32x64xf32, #tpu.memory_space<vmem>>, vector<8x1x64xf32>
    %74 = vector.shape_cast %73 : vector<8x1x64xf32> to vector<8x64xf32>
    %c0_54 = arith.constant 0 : index
    %c17 = arith.constant 17 : index
    %c0_55 = arith.constant 0 : index
    %75 = vector.load %arg10[%c0_54, %c17, %c0_55] : memref<8x32x64xf32, #tpu.memory_space<vmem>>, vector<8x1x64xf32>
    %76 = vector.shape_cast %75 : vector<8x1x64xf32> to vector<8x64xf32>
    %77 = arith.maximumf %74, %76 : vector<8x64xf32>
    %78 = arith.truncf %77 : vector<8x64xf32> to vector<8x64xbf16>
    %c0_56 = arith.constant 0 : index
    %c512 = arith.constant 512 : index
    %79 = vector.load %arg6[%c0_56, %c512] : memref<8x1024xbf16, #tpu.memory_space<vmem>>, vector<8x64xbf16>
    tpu.vector_store %arg6[%c0_56, %c512], %78 {strides = array<i32>} : memref<8x1024xbf16, #tpu.memory_space<vmem>>, vector<8x64xbf16>,
    %c0_57 = arith.constant 0 : index
    %c18 = arith.constant 18 : index
    %c0_58 = arith.constant 0 : index
    %80 = vector.load %arg10[%c0_57, %c18, %c0_58] : memref<8x32x64xf32, #tpu.memory_space<vmem>>, vector<8x1x64xf32>
    %81 = vector.shape_cast %80 : vector<8x1x64xf32> to vector<8x64xf32>
    %c0_59 = arith.constant 0 : index
    %c19 = arith.constant 19 : index
    %c0_60 = arith.constant 0 : index
    %82 = vector.load %arg10[%c0_59, %c19, %c0_60] : memref<8x32x64xf32, #tpu.memory_space<vmem>>, vector<8x1x64xf32>
    %83 = vector.shape_cast %82 : vector<8x1x64xf32> to vector<8x64xf32>
    %84 = arith.maximumf %81, %83 : vector<8x64xf32>
    %85 = arith.truncf %84 : vector<8x64xf32> to vector<8x64xbf16>
    %c0_61 = arith.constant 0 : index
    %c576 = arith.constant 576 : index
    %86 = vector.load %arg6[%c0_61, %c576] : memref<8x1024xbf16, #tpu.memory_space<vmem>>, vector<8x64xbf16>
    tpu.vector_store %arg6[%c0_61, %c576], %85 {strides = array<i32>} : memref<8x1024xbf16, #tpu.memory_space<vmem>>, vector<8x64xbf16>,
    %c0_62 = arith.constant 0 : index
    %c20 = arith.constant 20 : index
    %c0_63 = arith.constant 0 : index
    %87 = vector.load %arg10[%c0_62, %c20, %c0_63] : memref<8x32x64xf32, #tpu.memory_space<vmem>>, vector<8x1x64xf32>
    %88 = vector.shape_cast %87 : vector<8x1x64xf32> to vector<8x64xf32>
    %c0_64 = arith.constant 0 : index
    %c21 = arith.constant 21 : index
    %c0_65 = arith.constant 0 : index
    %89 = vector.load %arg10[%c0_64, %c21, %c0_65] : memref<8x32x64xf32, #tpu.memory_space<vmem>>, vector<8x1x64xf32>
    %90 = vector.shape_cast %89 : vector<8x1x64xf32> to vector<8x64xf32>
    %91 = arith.maximumf %88, %90 : vector<8x64xf32>
    %92 = arith.truncf %91 : vector<8x64xf32> to vector<8x64xbf16>
    %c0_66 = arith.constant 0 : index
    %c640 = arith.constant 640 : index
    %93 = vector.load %arg6[%c0_66, %c640] : memref<8x1024xbf16, #tpu.memory_space<vmem>>, vector<8x64xbf16>
    tpu.vector_store %arg6[%c0_66, %c640], %92 {strides = array<i32>} : memref<8x1024xbf16, #tpu.memory_space<vmem>>, vector<8x64xbf16>,
    %c0_67 = arith.constant 0 : index
    %c22 = arith.constant 22 : index
    %c0_68 = arith.constant 0 : index
    %94 = vector.load %arg10[%c0_67, %c22, %c0_68] : memref<8x32x64xf32, #tpu.memory_space<vmem>>, vector<8x1x64xf32>
    %95 = vector.shape_cast %94 : vector<8x1x64xf32> to vector<8x64xf32>
    %c0_69 = arith.constant 0 : index
    %c23 = arith.constant 23 : index
    %c0_70 = arith.constant 0 : index
    %96 = vector.load %arg10[%c0_69, %c23, %c0_70] : memref<8x32x64xf32, #tpu.memory_space<vmem>>, vector<8x1x64xf32>
    %97 = vector.shape_cast %96 : vector<8x1x64xf32> to vector<8x64xf32>
    %98 = arith.maximumf %95, %97 : vector<8x64xf32>
    %99 = arith.truncf %98 : vector<8x64xf32> to vector<8x64xbf16>
    %c0_71 = arith.constant 0 : index
    %c704 = arith.constant 704 : index
    %100 = vector.load %arg6[%c0_71, %c704] : memref<8x1024xbf16, #tpu.memory_space<vmem>>, vector<8x64xbf16>
    tpu.vector_store %arg6[%c0_71, %c704], %99 {strides = array<i32>} : memref<8x1024xbf16, #tpu.memory_space<vmem>>, vector<8x64xbf16>,
    %c0_72 = arith.constant 0 : index
    %c24 = arith.constant 24 : index
    %c0_73 = arith.constant 0 : index
    %101 = vector.load %arg10[%c0_72, %c24, %c0_73] : memref<8x32x64xf32, #tpu.memory_space<vmem>>, vector<8x1x64xf32>
    %102 = vector.shape_cast %101 : vector<8x1x64xf32> to vector<8x64xf32>
    %c0_74 = arith.constant 0 : index
    %c25 = arith.constant 25 : index
    %c0_75 = arith.constant 0 : index
    %103 = vector.load %arg10[%c0_74, %c25, %c0_75] : memref<8x32x64xf32, #tpu.memory_space<vmem>>, vector<8x1x64xf32>
    %104 = vector.shape_cast %103 : vector<8x1x64xf32> to vector<8x64xf32>
    %105 = arith.maximumf %102, %104 : vector<8x64xf32>
    %106 = arith.truncf %105 : vector<8x64xf32> to vector<8x64xbf16>
    %c0_76 = arith.constant 0 : index
    %c768 = arith.constant 768 : index
    %107 = vector.load %arg6[%c0_76, %c768] : memref<8x1024xbf16, #tpu.memory_space<vmem>>, vector<8x64xbf16>
    tpu.vector_store %arg6[%c0_76, %c768], %106 {strides = array<i32>} : memref<8x1024xbf16, #tpu.memory_space<vmem>>, vector<8x64xbf16>,
    %c0_77 = arith.constant 0 : index
    %c26 = arith.constant 26 : index
    %c0_78 = arith.constant 0 : index
    %108 = vector.load %arg10[%c0_77, %c26, %c0_78] : memref<8x32x64xf32, #tpu.memory_space<vmem>>, vector<8x1x64xf32>
    %109 = vector.shape_cast %108 : vector<8x1x64xf32> to vector<8x64xf32>
    %c0_79 = arith.constant 0 : index
    %c27 = arith.constant 27 : index
    %c0_80 = arith.constant 0 : index
    %110 = vector.load %arg10[%c0_79, %c27, %c0_80] : memref<8x32x64xf32, #tpu.memory_space<vmem>>, vector<8x1x64xf32>
    %111 = vector.shape_cast %110 : vector<8x1x64xf32> to vector<8x64xf32>
    %112 = arith.maximumf %109, %111 : vector<8x64xf32>
    %113 = arith.truncf %112 : vector<8x64xf32> to vector<8x64xbf16>
    %c0_81 = arith.constant 0 : index
    %c832 = arith.constant 832 : index
    %114 = vector.load %arg6[%c0_81, %c832] : memref<8x1024xbf16, #tpu.memory_space<vmem>>, vector<8x64xbf16>
    tpu.vector_store %arg6[%c0_81, %c832], %113 {strides = array<i32>} : memref<8x1024xbf16, #tpu.memory_space<vmem>>, vector<8x64xbf16>,
    %c0_82 = arith.constant 0 : index
    %c28 = arith.constant 28 : index
    %c0_83 = arith.constant 0 : index
    %115 = vector.load %arg10[%c0_82, %c28, %c0_83] : memref<8x32x64xf32, #tpu.memory_space<vmem>>, vector<8x1x64xf32>
    %116 = vector.shape_cast %115 : vector<8x1x64xf32> to vector<8x64xf32>
    %c0_84 = arith.constant 0 : index
    %c29 = arith.constant 29 : index
    %c0_85 = arith.constant 0 : index
    %117 = vector.load %arg10[%c0_84, %c29, %c0_85] : memref<8x32x64xf32, #tpu.memory_space<vmem>>, vector<8x1x64xf32>
    %118 = vector.shape_cast %117 : vector<8x1x64xf32> to vector<8x64xf32>
    %119 = arith.maximumf %116, %118 : vector<8x64xf32>
    %120 = arith.truncf %119 : vector<8x64xf32> to vector<8x64xbf16>
    %c0_86 = arith.constant 0 : index
    %c896 = arith.constant 896 : index
    %121 = vector.load %arg6[%c0_86, %c896] : memref<8x1024xbf16, #tpu.memory_space<vmem>>, vector<8x64xbf16>
    tpu.vector_store %arg6[%c0_86, %c896], %120 {strides = array<i32>} : memref<8x1024xbf16, #tpu.memory_space<vmem>>, vector<8x64xbf16>,
    %c0_87 = arith.constant 0 : index
    %c30 = arith.constant 30 : index
    %c0_88 = arith.constant 0 : index
    %122 = vector.load %arg10[%c0_87, %c30, %c0_88] : memref<8x32x64xf32, #tpu.memory_space<vmem>>, vector<8x1x64xf32>
    %123 = vector.shape_cast %122 : vector<8x1x64xf32> to vector<8x64xf32>
    %c0_89 = arith.constant 0 : index
    %c31 = arith.constant 31 : index
    %c0_90 = arith.constant 0 : index
    %124 = vector.load %arg10[%c0_89, %c31, %c0_90] : memref<8x32x64xf32, #tpu.memory_space<vmem>>, vector<8x1x64xf32>
    %125 = vector.shape_cast %124 : vector<8x1x64xf32> to vector<8x64xf32>
    %126 = arith.maximumf %123, %125 : vector<8x64xf32>
    %127 = arith.truncf %126 : vector<8x64xf32> to vector<8x64xbf16>
    %c0_91 = arith.constant 0 : index
    %c960 = arith.constant 960 : index
    %128 = vector.load %arg6[%c0_91, %c960] : memref<8x1024xbf16, #tpu.memory_space<vmem>>, vector<8x64xbf16>
    tpu.vector_store %arg6[%c0_91, %c960], %127 {strides = array<i32>} : memref<8x1024xbf16, #tpu.memory_space<vmem>>, vector<8x64xbf16>,
    return
  }
  func.func @transform_0(%arg0: i32) -> (i32, i32, i32) {
    %c0_i32 = arith.constant 0 : i32
    %c0_i32_0 = arith.constant 0 : i32
    %c0_i32_1 = arith.constant 0 : i32
    return %arg0, %c0_i32, %c0_i32_0 : i32, i32, i32
  }
  func.func @transform_1(%arg0: i32) -> (i32, i32) {
    %c0_i32 = arith.constant 0 : i32
    %c0_i32_0 = arith.constant 0 : i32
    %c0_i32_1 = arith.constant 0 : i32
    return %c0_i32, %c0_i32_0 : i32, i32
  }
  func.func @transform_2(%arg0: i32) -> (i32, i32) {
    %c0_i32 = arith.constant 0 : i32
    %c0_i32_0 = arith.constant 0 : i32
    %c0_i32_1 = arith.constant 0 : i32
    return %c0_i32, %c0_i32_0 : i32, i32
  }
  func.func @transform_3(%arg0: i32) -> (i32, i32) {
    %c0_i32 = arith.constant 0 : i32
    %c0_i32_0 = arith.constant 0 : i32
    %c0_i32_1 = arith.constant 0 : i32
    return %c0_i32, %c0_i32_0 : i32, i32
  }
  func.func @transform_4(%arg0: i32) -> (i32, i32) {
    %c0_i32 = arith.constant 0 : i32
    %c0_i32_0 = arith.constant 0 : i32
    %c0_i32_1 = arith.constant 0 : i32
    return %c0_i32, %c0_i32_0 : i32, i32
  }
  func.func @transform_5(%arg0: i32) -> (i32, i32) {
    %c0_i32 = arith.constant 0 : i32
    %c0_i32_0 = arith.constant 0 : i32
    return %arg0, %c0_i32 : i32, i32
  }
}

module attributes {stable_mosaic.version = 11 : i64} {
  func.func @_fc_kernel(%arg0: i32, %arg1: memref<8x1024xbf16, #tpu.memory_space<vmem>>, %arg2: memref<1024x512xbf16, #tpu.memory_space<vmem>>, %arg3: memref<1x512xf32, #tpu.memory_space<vmem>>, %arg4: memref<512x128xbf16, #tpu.memory_space<vmem>>, %arg5: memref<1x128xf32, #tpu.memory_space<vmem>>, %arg6: memref<8x128xf32, #tpu.memory_space<vmem>>) attributes {dimension_semantics = [#tpu.dimension_semantics<parallel>], iteration_bounds = array<i64: 1>, scalar_prefetch = 0 : i64, scratch_operands = 0 : i64, tpu.core_type = #tpu.core_type<tc>, window_params = [{transform_indices = @transform_0, window_bounds = array<i64: 8, 1024>}, {pipeline_mode = #tpu.pipeline_mode<synchronous>, transform_indices = @transform_1, window_bounds = array<i64: 1024, 512>}, {pipeline_mode = #tpu.pipeline_mode<synchronous>, transform_indices = @transform_2, window_bounds = array<i64: 1, 512>}, {pipeline_mode = #tpu.pipeline_mode<synchronous>, transform_indices = @transform_3, window_bounds = array<i64: 512, 128>}, {pipeline_mode = #tpu.pipeline_mode<synchronous>, transform_indices = @transform_4, window_bounds = array<i64: 1, 128>}, {transform_indices = @transform_5, window_bounds = array<i64: 8, 128>}]} {
    %c0 = arith.constant 0 : index
    %c0_0 = arith.constant 0 : index
    %0 = vector.load %arg1[%c0, %c0_0] : memref<8x1024xbf16, #tpu.memory_space<vmem>>, vector<8x1024xbf16>
    %c0_1 = arith.constant 0 : index
    %c0_2 = arith.constant 0 : index
    %1 = vector.load %arg2[%c0_1, %c0_2] : memref<1024x512xbf16, #tpu.memory_space<vmem>>, vector<1024x512xbf16>
    %cst = arith.constant dense<0.000000e+00> : vector<8x512xf32>
    %2 = tpu.matmul %0, %1, %cst {dimension_numbers = #tpu.dot_dimension_numbers<[1], [0], [0], [1], [0, 0, 1, 1], [], []>} : vector<8x1024xbf16>, vector<1024x512xbf16>, vector<8x512xf32> -> vector<8x512xf32>
    %c0_3 = arith.constant 0 : index
    %c0_4 = arith.constant 0 : index
    %3 = vector.load %arg3[%c0_3, %c0_4] : memref<1x512xf32, #tpu.memory_space<vmem>>, vector<1x512xf32>
    %4 = vector.broadcast %3 : vector<1x512xf32> to vector<8x512xf32>
    %5 = arith.addf %2, %4 : vector<8x512xf32>
    %cst_5 = arith.constant 0.000000e+00 : f32
    %6 = vector.broadcast %cst_5 : f32 to vector<8x512xf32>
    %7 = arith.maximumf %5, %6 : vector<8x512xf32>
    %8 = arith.truncf %7 : vector<8x512xf32> to vector<8x512xbf16>
    %c0_6 = arith.constant 0 : index
    %c0_7 = arith.constant 0 : index
    %9 = vector.load %arg4[%c0_6, %c0_7] : memref<512x128xbf16, #tpu.memory_space<vmem>>, vector<512x128xbf16>
    %cst_8 = arith.constant dense<0.000000e+00> : vector<8x128xf32>
    %10 = tpu.matmul %8, %9, %cst_8 {dimension_numbers = #tpu.dot_dimension_numbers<[1], [0], [0], [1], [0, 0, 1, 1], [], []>} : vector<8x512xbf16>, vector<512x128xbf16>, vector<8x128xf32> -> vector<8x128xf32>
    %c0_9 = arith.constant 0 : index
    %c0_10 = arith.constant 0 : index
    %11 = vector.load %arg5[%c0_9, %c0_10] : memref<1x128xf32, #tpu.memory_space<vmem>>, vector<1x128xf32>
    %12 = vector.broadcast %11 : vector<1x128xf32> to vector<8x128xf32>
    %13 = arith.addf %10, %12 : vector<8x128xf32>
    %14 = tpu.iota {dimensions = array<i32: 1>} : vector<8x128xi32>
    %c10_i32 = arith.constant 10 : i32
    %15 = vector.broadcast %c10_i32 : i32 to vector<8x128xi32>
    %16 = arith.cmpi slt, %14, %15 : vector<8x128xi32>
    %cst_11 = arith.constant -1.000000e+30 : f32
    %17 = vector.broadcast %cst_11 : f32 to vector<8x128xf32>
    %18 = arith.select %16, %13, %17 : vector<8x128xi1>, vector<8x128xf32>
    %cst_12 = arith.constant dense<0xFF800000> : vector<8xf32>
    %19 = vector.multi_reduction <maximumf>, %18, %cst_12 [1] : vector<8x128xf32> to vector<8xf32>
    %20 = vector.shape_cast %19 : vector<8xf32> to vector<8x1xf32>
    %21 = vector.broadcast %20 : vector<8x1xf32> to vector<8x128xf32>
    %22 = arith.subf %18, %21 : vector<8x128xf32>
    %23 = math.exp %22 : vector<8x128xf32>
    %cst_13 = arith.constant 0.000000e+00 : f32
    %24 = vector.broadcast %cst_13 : f32 to vector<8x128xf32>
    %25 = arith.select %16, %23, %24 : vector<8x128xi1>, vector<8x128xf32>
    %cst_14 = arith.constant dense<0.000000e+00> : vector<8xf32>
    %26 = vector.multi_reduction <add>, %25, %cst_14 [1] : vector<8x128xf32> to vector<8xf32>
    %27 = vector.shape_cast %26 : vector<8xf32> to vector<8x1xf32>
    %28 = math.log %27 : vector<8x1xf32>
    %29 = arith.addf %20, %28 : vector<8x1xf32>
    %30 = vector.broadcast %29 : vector<8x1xf32> to vector<8x128xf32>
    %31 = arith.subf %13, %30 : vector<8x128xf32>
    %c0_15 = arith.constant 0 : index
    %c0_16 = arith.constant 0 : index
    %32 = vector.load %arg6[%c0_15, %c0_16] : memref<8x128xf32, #tpu.memory_space<vmem>>, vector<8x128xf32>
    tpu.vector_store %arg6[%c0_15, %c0_16], %31 {strides = array<i32>} : memref<8x128xf32, #tpu.memory_space<vmem>>, vector<8x128xf32>,
    return
  }
  func.func @transform_0(%arg0: i32) -> (i32, i32) {
    %c0_i32 = arith.constant 0 : i32
    %c0_i32_0 = arith.constant 0 : i32
    return %arg0, %c0_i32 : i32, i32
  }
  func.func @transform_1(%arg0: i32) -> (i32, i32) {
    %c0_i32 = arith.constant 0 : i32
    %c0_i32_0 = arith.constant 0 : i32
    %c0_i32_1 = arith.constant 0 : i32
    return %c0_i32, %c0_i32_0 : i32, i32
  }
  func.func @transform_2(%arg0: i32) -> (i32, i32) {
    %c0_i32 = arith.constant 0 : i32
    %c0_i32_0 = arith.constant 0 : i32
    %c0_i32_1 = arith.constant 0 : i32
    return %c0_i32, %c0_i32_0 : i32, i32
  }
  func.func @transform_3(%arg0: i32) -> (i32, i32) {
    %c0_i32 = arith.constant 0 : i32
    %c0_i32_0 = arith.constant 0 : i32
    %c0_i32_1 = arith.constant 0 : i32
    return %c0_i32, %c0_i32_0 : i32, i32
  }
  func.func @transform_4(%arg0: i32) -> (i32, i32) {
    %c0_i32 = arith.constant 0 : i32
    %c0_i32_0 = arith.constant 0 : i32
    %c0_i32_1 = arith.constant 0 : i32
    return %c0_i32, %c0_i32_0 : i32, i32
  }
  func.func @transform_5(%arg0: i32) -> (i32, i32) {
    %c0_i32 = arith.constant 0 : i32
    %c0_i32_0 = arith.constant 0 : i32
    return %arg0, %c0_i32 : i32, i32
  }
}

</mosaic_0001>

<llo_original>
// kernel: net_forward.3
$region0: #{net_forward.3}
  #allocation0 [shape = 'u32[]', space=smem, size = 0x4, offset = 0x4, fixed_abs, tag = 'smem constant byte address 0x4 - core index']
  #allocation1 [shape = 'u32[72,128]{1,0:T(1,128)}', space=vmem, size = 0x9000, scoped, tag = 'internal scratch']
  %s0 = inlined_call_operand.vmem [shape: bf16[8,1024], index: 0, kind: input, shape index: {}]
  %s1 = inlined_call_operand.vmem [shape: bf16[1024,512], index: 1, kind: input, shape index: {}]
  %s2 = inlined_call_operand.vmem [shape: f32[1,512], index: 2, kind: input, shape index: {}]
  %s3 = inlined_call_operand.vmem [shape: bf16[512,128], index: 3, kind: input, shape index: {}]
  %s4 = inlined_call_operand.vmem [shape: f32[1,128], index: 4, kind: input, shape index: {}]
  %s5 = inlined_call_operand.vmem [shape: f32[8,128], index: 5, kind: output, shape index: {}]
  %s6 = sld [smem:[#allocation0]]
  $region30: #{net_forward.3} parent=0
    _
  %s8 = ssub.s32 1, %s6
  %s9 = scalar_select 0, %s8, %s6
  // Predicated region
  $region2: #{net_forward.3} parent=0 // pred_check
    _
  $region3: #{net_forward.3} parent=0 // pred_check_branch
    %11 = sbr.rel (0) target = $region5
  $region4: #{net_forward.3} parent=0 // pred_region
    _
  $region5: #{net_forward.3} parent=0 // pred_fallthru
    _
  // Predicated region
  $region6: #{net_forward.3} parent=0 // pred_check
    _
  $region7: #{net_forward.3} parent=0 // pred_check_branch
    %13 = sbr.rel (0) target = $region9
  $region8: #{net_forward.3} parent=0 // pred_region
    _
  $region9: #{net_forward.3} parent=0 // pred_fallthru
    _
  // Predicated region
  $region10: #{net_forward.3} parent=0 // pred_check
    _
  $region11: #{net_forward.3} parent=0 // pred_check_branch
    %15 = sbr.rel (0) target = $region13
  $region12: #{net_forward.3} parent=0 // pred_region
    _
  $region13: #{net_forward.3} parent=0 // pred_fallthru
    _
  // Predicated region
  $region14: #{net_forward.3} parent=0 // pred_check
    _
  $region15: #{net_forward.3} parent=0 // pred_check_branch
    %17 = sbr.rel (0) target = $region17
  $region16: #{net_forward.3} parent=0 // pred_region
    _
  $region17: #{net_forward.3} parent=0 // pred_fallthru
    _
  // Predicated region
  $region18: #{net_forward.3} parent=0 // pred_check
    _
  $region19: #{net_forward.3} parent=0 // pred_check_branch
    %19 = sbr.rel (0) target = $region21
  $region20: #{net_forward.3} parent=0 // pred_region
    _
  $region21: #{net_forward.3} parent=0 // pred_fallthru
    _
  %v20 = vld [vmem:[%s0] sm:$0xff]
  %v21 = vld [vmem:[%s0 + $0x8] sm:$0xff]
  %v22 = vld [vmem:[%s0 + $0x10] sm:$0xff]
  %v23 = vld [vmem:[%s0 + $0x18] sm:$0xff]
  %v24 = vld [vmem:[%s1] sm:$0xff]
  %v25 = vld [vmem:[%s1 + $0x8] sm:$0xff]
  %v26 = vld [vmem:[%s1 + $0x10] sm:$0xff]
  %v27 = vld [vmem:[%s1 + $0x18] sm:$0xff]
  %v28 = vld [vmem:[%s1 + $0x20] sm:$0xff]
  %v29 = vld [vmem:[%s1 + $0x28] sm:$0xff]
  %v30 = vld [vmem:[%s1 + $0x30] sm:$0xff]
  %v31 = vld [vmem:[%s1 + $0x38] sm:$0xff]
  %v32 = vld [vmem:[%s1 + $0x40] sm:$0xff]
  %v33 = vld [vmem:[%s1 + $0x48] sm:$0xff]
  %v34 = vld [vmem:[%s1 + $0x50] sm:$0xff]
  %v35 = vld [vmem:[%s1 + $0x58] sm:$0xff]
  %v36 = vld [vmem:[%s1 + $0x60] sm:$0xff]
  %v37 = vld [vmem:[%s1 + $0x68] sm:$0xff]
  %v38 = vld [vmem:[%s1 + $0x70] sm:$0xff]
  %v39 = vld [vmem:[%s1 + $0x78] sm:$0xff]
  %v40 = vld [vmem:[%s1 + $0x80] sm:$0xff]
  %v41 = vld [vmem:[%s1 + $0x88] sm:$0xff]
  %v42 = vld [vmem:[%s1 + $0x90] sm:$0xff]
  %v43 = vld [vmem:[%s1 + $0x98] sm:$0xff]
  %v44 = vld [vmem:[%s1 + $0xa0] sm:$0xff]
  %v45 = vld [vmem:[%s1 + $0xa8] sm:$0xff]
  %v46 = vld [vmem:[%s1 + $0xb0] sm:$0xff]
  %v47 = vld [vmem:[%s1 + $0xb8] sm:$0xff]
  %v48 = vld [vmem:[%s1 + $0xc0] sm:$0xff]
  %v49 = vld [vmem:[%s1 + $0xc8] sm:$0xff]
  %v50 = vld [vmem:[%s1 + $0xd0] sm:$0xff]
  %v51 = vld [vmem:[%s1 + $0xd8] sm:$0xff]
  %v52 = vld [vmem:[%s1 + $0xe0] sm:$0xff]
  %v53 = vld [vmem:[%s1 + $0xe8] sm:$0xff]
  %v54 = vld [vmem:[%s1 + $0xf0] sm:$0xff]
  %v55 = vld [vmem:[%s1 + $0xf8] sm:$0xff]
  %v56 = vld [vmem:[%s1 + $0x100] sm:$0xff]
  %v57 = vld [vmem:[%s1 + $0x108] sm:$0xff]
  %v58 = vld [vmem:[%s1 + $0x110] sm:$0xff]
  %v59 = vld [vmem:[%s1 + $0x118] sm:$0xff]
  %v60 = vld [vmem:[%s1 + $0x120] sm:$0xff]
  %v61 = vld [vmem:[%s1 + $0x128] sm:$0xff]
  %v62 = vld [vmem:[%s1 + $0x130] sm:$0xff]
  %v63 = vld [vmem:[%s1 + $0x138] sm:$0xff]
  %v64 = vld [vmem:[%s1 + $0x140] sm:$0xff]
  %v65 = vld [vmem:[%s1 + $0x148] sm:$0xff]
  %v66 = vld [vmem:[%s1 + $0x150] sm:$0xff]
  %v67 = vld [vmem:[%s1 + $0x158] sm:$0xff]
  %v68 = vld [vmem:[%s1 + $0x160] sm:$0xff]
  %v69 = vld [vmem:[%s1 + $0x168] sm:$0xff]
  %v70 = vld [vmem:[%s1 + $0x170] sm:$0xff]
  %v71 = vld [vmem:[%s1 + $0x178] sm:$0xff]
  %v72 = vld [vmem:[%s1 + $0x180] sm:$0xff]
  %v73 = vld [vmem:[%s1 + $0x188] sm:$0xff]
  %v74 = vld [vmem:[%s1 + $0x190] sm:$0xff]
  %v75 = vld [vmem:[%s1 + $0x198] sm:$0xff]
  %v76 = vld [vmem:[%s1 + $0x1a0] sm:$0xff]
  %v77 = vld [vmem:[%s1 + $0x1a8] sm:$0xff]
  %v78 = vld [vmem:[%s1 + $0x1b0] sm:$0xff]
  %v79 = vld [vmem:[%s1 + $0x1b8] sm:$0xff]
  %v80 = vld [vmem:[%s1 + $0x1c0] sm:$0xff]
  %v81 = vld [vmem:[%s1 + $0x1c8] sm:$0xff]
  %v82 = vld [vmem:[%s1 + $0x1d0] sm:$0xff]
  %v83 = vld [vmem:[%s1 + $0x1d8] sm:$0xff]
  %v84 = vld [vmem:[%s1 + $0x1e0] sm:$0xff]
  %v85 = vld [vmem:[%s1 + $0x1e8] sm:$0xff]
  %v86 = vld [vmem:[%s1 + $0x1f0] sm:$0xff]
  %v87 = vld [vmem:[%s1 + $0x1f8] sm:$0xff]
  %v88 = vld [vmem:[%s1 + $0x200] sm:$0xff]
  %v89 = vld [vmem:[%s1 + $0x208] sm:$0xff]
  %v90 = vld [vmem:[%s1 + $0x210] sm:$0xff]
  %v91 = vld [vmem:[%s1 + $0x218] sm:$0xff]
  %v92 = vld [vmem:[%s1 + $0x220] sm:$0xff]
  %v93 = vld [vmem:[%s1 + $0x228] sm:$0xff]
  %v94 = vld [vmem:[%s1 + $0x230] sm:$0xff]
  %v95 = vld [vmem:[%s1 + $0x238] sm:$0xff]
  %v96 = vld [vmem:[%s1 + $0x240] sm:$0xff]
  %v97 = vld [vmem:[%s1 + $0x248] sm:$0xff]
  %v98 = vld [vmem:[%s1 + $0x250] sm:$0xff]
  %v99 = vld [vmem:[%s1 + $0x258] sm:$0xff]
  %v100 = vld [vmem:[%s1 + $0x260] sm:$0xff]
  %v101 = vld [vmem:[%s1 + $0x268] sm:$0xff]
  %v102 = vld [vmem:[%s1 + $0x270] sm:$0xff]
  %v103 = vld [vmem:[%s1 + $0x278] sm:$0xff]
  %v104 = vld [vmem:[%s1 + $0x280] sm:$0xff]
  %v105 = vld [vmem:[%s1 + $0x288] sm:$0xff]
  %v106 = vld [vmem:[%s1 + $0x290] sm:$0xff]
  %v107 = vld [vmem:[%s1 + $0x298] sm:$0xff]
  %v108 = vld [vmem:[%s1 + $0x2a0] sm:$0xff]
  %v109 = vld [vmem:[%s1 + $0x2a8] sm:$0xff]
  %v110 = vld [vmem:[%s1 + $0x2b0] sm:$0xff]
  %v111 = vld [vmem:[%s1 + $0x2b8] sm:$0xff]
  %v112 = vld [vmem:[%s1 + $0x2c0] sm:$0xff]
  %v113 = vld [vmem:[%s1 + $0x2c8] sm:$0xff]
  %v114 = vld [vmem:[%s1 + $0x2d0] sm:$0xff]
  %v115 = vld [vmem:[%s1 + $0x2d8] sm:$0xff]
  %v116 = vld [vmem:[%s1 + $0x2e0] sm:$0xff]
  %v117 = vld [vmem:[%s1 + $0x2e8] sm:$0xff]
  %v118 = vld [vmem:[%s1 + $0x2f0] sm:$0xff]
  %v119 = vld [vmem:[%s1 + $0x2f8] sm:$0xff]
  %v120 = vld [vmem:[%s1 + $0x300] sm:$0xff]
  %v121 = vld [vmem:[%s1 + $0x308] sm:$0xff]
  %v122 = vld [vmem:[%s1 + $0x310] sm:$0xff]
  %v123 = vld [vmem:[%s1 + $0x318] sm:$0xff]
  %v124 = vld [vmem:[%s1 + $0x320] sm:$0xff]
  %v125 = vld [vmem:[%s1 + $0x328] sm:$0xff]
  %v126 = vld [vmem:[%s1 + $0x330] sm:$0xff]
  %v127 = vld [vmem:[%s1 + $0x338] sm:$0xff]
  %v128 = vld [vmem:[%s1 + $0x340] sm:$0xff]
  %v129 = vld [vmem:[%s1 + $0x348] sm:$0xff]
  %v130 = vld [vmem:[%s1 + $0x350] sm:$0xff]
  %v131 = vld [vmem:[%s1 + $0x358] sm:$0xff]
  %v132 = vld [vmem:[%s1 + $0x360] sm:$0xff]
  %v133 = vld [vmem:[%s1 + $0x368] sm:$0xff]
  %v134 = vld [vmem:[%s1 + $0x370] sm:$0xff]
  %v135 = vld [vmem:[%s1 + $0x378] sm:$0xff]
  %v136 = vld [vmem:[%s1 + $0x380] sm:$0xff]
  %v137 = vld [vmem:[%s1 + $0x388] sm:$0xff]
  %v138 = vld [vmem:[%s1 + $0x390] sm:$0xff]
  %v139 = vld [vmem:[%s1 + $0x398] sm:$0xff]
  %v140 = vld [vmem:[%s1 + $0x3a0] sm:$0xff]
  %v141 = vld [vmem:[%s1 + $0x3a8] sm:$0xff]
  %v142 = vld [vmem:[%s1 + $0x3b0] sm:$0xff]
  %v143 = vld [vmem:[%s1 + $0x3b8] sm:$0xff]
  %v144 = vld [vmem:[%s1 + $0x3c0] sm:$0xff]
  %v145 = vld [vmem:[%s1 + $0x3c8] sm:$0xff]
  %v146 = vld [vmem:[%s1 + $0x3d0] sm:$0xff]
  %v147 = vld [vmem:[%s1 + $0x3d8] sm:$0xff]
  %v148 = vld [vmem:[%s1 + $0x3e0] sm:$0xff]
  %v149 = vld [vmem:[%s1 + $0x3e8] sm:$0xff]
  %v150 = vld [vmem:[%s1 + $0x3f0] sm:$0xff]
  %v151 = vld [vmem:[%s1 + $0x3f8] sm:$0xff]
  %v152 = vld [vmem:[%s1 + $0x400] sm:$0xff]
  %v153 = vld [vmem:[%s1 + $0x408] sm:$0xff]
  %v154 = vld [vmem:[%s1 + $0x410] sm:$0xff]
  %v155 = vld [vmem:[%s1 + $0x418] sm:$0xff]
  %v156 = vld [vmem:[%s1 + $0x420] sm:$0xff]
  %v157 = vld [vmem:[%s1 + $0x428] sm:$0xff]
  %v158 = vld [vmem:[%s1 + $0x430] sm:$0xff]
  %v159 = vld [vmem:[%s1 + $0x438] sm:$0xff]
  %v160 = vld [vmem:[%s1 + $0x440] sm:$0xff]
  %v161 = vld [vmem:[%s1 + $0x448] sm:$0xff]
  %v162 = vld [vmem:[%s1 + $0x450] sm:$0xff]
  %v163 = vld [vmem:[%s1 + $0x458] sm:$0xff]
  %v164 = vld [vmem:[%s1 + $0x460] sm:$0xff]
  %v165 = vld [vmem:[%s1 + $0x468] sm:$0xff]
  %v166 = vld [vmem:[%s1 + $0x470] sm:$0xff]
  %v167 = vld [vmem:[%s1 + $0x478] sm:$0xff]
  %v168 = vld [vmem:[%s1 + $0x480] sm:$0xff]
  %v169 = vld [vmem:[%s1 + $0x488] sm:$0xff]
  %v170 = vld [vmem:[%s1 + $0x490] sm:$0xff]
  %v171 = vld [vmem:[%s1 + $0x498] sm:$0xff]
  %v172 = vld [vmem:[%s1 + $0x4a0] sm:$0xff]
  %v173 = vld [vmem:[%s1 + $0x4a8] sm:$0xff]
  %v174 = vld [vmem:[%s1 + $0x4b0] sm:$0xff]
  %v175 = vld [vmem:[%s1 + $0x4b8] sm:$0xff]
  %v176 = vld [vmem:[%s1 + $0x4c0] sm:$0xff]
  %v177 = vld [vmem:[%s1 + $0x4c8] sm:$0xff]
  %v178 = vld [vmem:[%s1 + $0x4d0] sm:$0xff]
  %v179 = vld [vmem:[%s1 + $0x4d8] sm:$0xff]
  %v180 = vld [vmem:[%s1 + $0x4e0] sm:$0xff]
  %v181 = vld [vmem:[%s1 + $0x4e8] sm:$0xff]
  %v182 = vld [vmem:[%s1 + $0x4f0] sm:$0xff]
  %v183 = vld [vmem:[%s1 + $0x4f8] sm:$0xff]
  %v184 = vld [vmem:[%s1 + $0x500] sm:$0xff]
  %v185 = vld [vmem:[%s1 + $0x508] sm:$0xff]
  %v186 = vld [vmem:[%s1 + $0x510] sm:$0xff]
  %v187 = vld [vmem:[%s1 + $0x518] sm:$0xff]
  %v188 = vld [vmem:[%s1 + $0x520] sm:$0xff]
  %v189 = vld [vmem:[%s1 + $0x528] sm:$0xff]
  %v190 = vld [vmem:[%s1 + $0x530] sm:$0xff]
  %v191 = vld [vmem:[%s1 + $0x538] sm:$0xff]
  %v192 = vld [vmem:[%s1 + $0x540] sm:$0xff]
  %v193 = vld [vmem:[%s1 + $0x548] sm:$0xff]
  %v194 = vld [vmem:[%s1 + $0x550] sm:$0xff]
  %v195 = vld [vmem:[%s1 + $0x558] sm:$0xff]
  %v196 = vld [vmem:[%s1 + $0x560] sm:$0xff]
  %v197 = vld [vmem:[%s1 + $0x568] sm:$0xff]
  %v198 = vld [vmem:[%s1 + $0x570] sm:$0xff]
  %v199 = vld [vmem:[%s1 + $0x578] sm:$0xff]
  %v200 = vld [vmem:[%s1 + $0x580] sm:$0xff]
  %v201 = vld [vmem:[%s1 + $0x588] sm:$0xff]
  %v202 = vld [vmem:[%s1 + $0x590] sm:$0xff]
  %v203 = vld [vmem:[%s1 + $0x598] sm:$0xff]
  %v204 = vld [vmem:[%s1 + $0x5a0] sm:$0xff]
  %v205 = vld [vmem:[%s1 + $0x5a8] sm:$0xff]
  %v206 = vld [vmem:[%s1 + $0x5b0] sm:$0xff]
  %v207 = vld [vmem:[%s1 + $0x5b8] sm:$0xff]
  %v208 = vld [vmem:[%s1 + $0x5c0] sm:$0xff]
  %v209 = vld [vmem:[%s1 + $0x5c8] sm:$0xff]
  %v210 = vld [vmem:[%s1 + $0x5d0] sm:$0xff]
  %v211 = vld [vmem:[%s1 + $0x5d8] sm:$0xff]
  %v212 = vld [vmem:[%s1 + $0x5e0] sm:$0xff]
  %v213 = vld [vmem:[%s1 + $0x5e8] sm:$0xff]
  %v214 = vld [vmem:[%s1 + $0x5f0] sm:$0xff]
  %v215 = vld [vmem:[%s1 + $0x5f8] sm:$0xff]
  %v216 = vld [vmem:[%s1 + $0x600] sm:$0xff]
  %v217 = vld [vmem:[%s1 + $0x608] sm:$0xff]
  %v218 = vld [vmem:[%s1 + $0x610] sm:$0xff]
  %v219 = vld [vmem:[%s1 + $0x618] sm:$0xff]
  %v220 = vld [vmem:[%s1 + $0x620] sm:$0xff]
  %v221 = vld [vmem:[%s1 + $0x628] sm:$0xff]
  %v222 = vld [vmem:[%s1 + $0x630] sm:$0xff]
  %v223 = vld [vmem:[%s1 + $0x638] sm:$0xff]
  %v224 = vld [vmem:[%s1 + $0x640] sm:$0xff]
  %v225 = vld [vmem:[%s1 + $0x648] sm:$0xff]
  %v226 = vld [vmem:[%s1 + $0x650] sm:$0xff]
  %v227 = vld [vmem:[%s1 + $0x658] sm:$0xff]
  %v228 = vld [vmem:[%s1 + $0x660] sm:$0xff]
  %v229 = vld [vmem:[%s1 + $0x668] sm:$0xff]
  %v230 = vld [vmem:[%s1 + $0x670] sm:$0xff]
  %v231 = vld [vmem:[%s1 + $0x678] sm:$0xff]
  %v232 = vld [vmem:[%s1 + $0x680] sm:$0xff]
  %v233 = vld [vmem:[%s1 + $0x688] sm:$0xff]
  %v234 = vld [vmem:[%s1 + $0x690] sm:$0xff]
  %v235 = vld [vmem:[%s1 + $0x698] sm:$0xff]
  %v236 = vld [vmem:[%s1 + $0x6a0] sm:$0xff]
  %v237 = vld [vmem:[%s1 + $0x6a8] sm:$0xff]
  %v238 = vld [vmem:[%s1 + $0x6b0] sm:$0xff]
  %v239 = vld [vmem:[%s1 + $0x6b8] sm:$0xff]
  %v240 = vld [vmem:[%s1 + $0x6c0] sm:$0xff]
  %v241 = vld [vmem:[%s1 + $0x6c8] sm:$0xff]
  %v242 = vld [vmem:[%s1 + $0x6d0] sm:$0xff]
  %v243 = vld [vmem:[%s1 + $0x6d8] sm:$0xff]
  %v244 = vld [vmem:[%s1 + $0x6e0] sm:$0xff]
  %v245 = vld [vmem:[%s1 + $0x6e8] sm:$0xff]
  %v246 = vld [vmem:[%s1 + $0x6f0] sm:$0xff]
  %v247 = vld [vmem:[%s1 + $0x6f8] sm:$0xff]
  %v248 = vld [vmem:[%s1 + $0x700] sm:$0xff]
  %v249 = vld [vmem:[%s1 + $0x708] sm:$0xff]
  %v250 = vld [vmem:[%s1 + $0x710] sm:$0xff]
  %v251 = vld [vmem:[%s1 + $0x718] sm:$0xff]
  %v252 = vld [vmem:[%s1 + $0x720] sm:$0xff]
  %v253 = vld [vmem:[%s1 + $0x728] sm:$0xff]
  %v254 = vld [vmem:[%s1 + $0x730] sm:$0xff]
  %v255 = vld [vmem:[%s1 + $0x738] sm:$0xff]
  %v256 = vld [vmem:[%s1 + $0x740] sm:$0xff]
  %v257 = vld [vmem:[%s1 + $0x748] sm:$0xff]
  %v258 = vld [vmem:[%s1 + $0x750] sm:$0xff]
  %v259 = vld [vmem:[%s1 + $0x758] sm:$0xff]
  %v260 = vld [vmem:[%s1 + $0x760] sm:$0xff]
  %v261 = vld [vmem:[%s1 + $0x768] sm:$0xff]
  %v262 = vld [vmem:[%s1 + $0x770] sm:$0xff]
  %v263 = vld [vmem:[%s1 + $0x778] sm:$0xff]
  %v264 = vld [vmem:[%s1 + $0x780] sm:$0xff]
  %v265 = vld [vmem:[%s1 + $0x788] sm:$0xff]
  %v266 = vld [vmem:[%s1 + $0x790] sm:$0xff]
  %v267 = vld [vmem:[%s1 + $0x798] sm:$0xff]
  %v268 = vld [vmem:[%s1 + $0x7a0] sm:$0xff]
  %v269 = vld [vmem:[%s1 + $0x7a8] sm:$0xff]
  %v270 = vld [vmem:[%s1 + $0x7b0] sm:$0xff]
  %v271 = vld [vmem:[%s1 + $0x7b8] sm:$0xff]
  %v272 = vld [vmem:[%s1 + $0x7c0] sm:$0xff]
  %v273 = vld [vmem:[%s1 + $0x7c8] sm:$0xff]
  %v274 = vld [vmem:[%s1 + $0x7d0] sm:$0xff]
  %v275 = vld [vmem:[%s1 + $0x7d8] sm:$0xff]
  %v276 = vld [vmem:[%s1 + $0x7e0] sm:$0xff]
  %v277 = vld [vmem:[%s1 + $0x7e8] sm:$0xff]
  %v278 = vld [vmem:[%s1 + $0x7f0] sm:$0xff]
  %v279 = vld [vmem:[%s1 + $0x7f8] sm:$0xff]
  %v280 = vld [vmem:[%s2] sm:$0xf]
  %v282 = vperm.slane %v280, 0
  %v283 = vperm.slane %v280, 1
  %v284 = vperm.slane %v280, 2
  %v285 = vperm.slane %v280, 3
  %v294 = vunpack.c.l.b16 %v20
  %v295 = vunpack.c.h.b16 %v20
  %v296 = vunpack.c.l.b16 %v21
  %v297 = vunpack.c.h.b16 %v21
  %v298 = vunpack.c.l.b16 %v22
  %v299 = vunpack.c.h.b16 %v22
  %v300 = vunpack.c.l.b16 %v23
  %v301 = vunpack.c.h.b16 %v23
  %v302 = vpack.c.b16 %v294, %v294
  %v303 = vpack.c.b16 %v295, %v295
  %v304 = vpack.c.b16 %v296, %v296
  %v305 = vpack.c.b16 %v297, %v297
  %v306 = vpack.c.b16 %v298, %v298
  %v307 = vpack.c.b16 %v299, %v299
  %v308 = vpack.c.b16 %v300, %v300
  %v309 = vpack.c.b16 %v301, %v301
  %v574 = vunpack.c.l.b16 %v24
  %v575 = vunpack.c.h.b16 %v24
  %v576 = vunpack.c.l.b16 %v25
  %v577 = vunpack.c.h.b16 %v25
  %v578 = vunpack.c.l.b16 %v26
  %v579 = vunpack.c.h.b16 %v26
  %v580 = vunpack.c.l.b16 %v27
  %v581 = vunpack.c.h.b16 %v27
  %v582 = vunpack.c.l.b16 %v28
  %v583 = vunpack.c.h.b16 %v28
  %v584 = vunpack.c.l.b16 %v29
  %v585 = vunpack.c.h.b16 %v29
  %v586 = vunpack.c.l.b16 %v30
  %v587 = vunpack.c.h.b16 %v30
  %v588 = vunpack.c.l.b16 %v31
  %v589 = vunpack.c.h.b16 %v31
  %v590 = vunpack.c.l.b16 %v32
  %v591 = vunpack.c.h.b16 %v32
  %v592 = vunpack.c.l.b16 %v33
  %v593 = vunpack.c.h.b16 %v33
  %v594 = vunpack.c.l.b16 %v34
  %v595 = vunpack.c.h.b16 %v34
  %v596 = vunpack.c.l.b16 %v35
  %v597 = vunpack.c.h.b16 %v35
  %v598 = vunpack.c.l.b16 %v36
  %v599 = vunpack.c.h.b16 %v36
  %v600 = vunpack.c.l.b16 %v37
  %v601 = vunpack.c.h.b16 %v37
  %v602 = vunpack.c.l.b16 %v38
  %v603 = vunpack.c.h.b16 %v38
  %v604 = vunpack.c.l.b16 %v39
  %v605 = vunpack.c.h.b16 %v39
  %v606 = vunpack.c.l.b16 %v40
  %v607 = vunpack.c.h.b16 %v40
  %v608 = vunpack.c.l.b16 %v41
  %v609 = vunpack.c.h.b16 %v41
  %v610 = vunpack.c.l.b16 %v42
  %v611 = vunpack.c.h.b16 %v42
  %v612 = vunpack.c.l.b16 %v43
  %v613 = vunpack.c.h.b16 %v43
  %v614 = vunpack.c.l.b16 %v44
  %v615 = vunpack.c.h.b16 %v44
  %v616 = vunpack.c.l.b16 %v45
  %v617 = vunpack.c.h.b16 %v45
  %v618 = vunpack.c.l.b16 %v46
  %v619 = vunpack.c.h.b16 %v46
  %v620 = vunpack.c.l.b16 %v47
  %v621 = vunpack.c.h.b16 %v47
  %v622 = vunpack.c.l.b16 %v48
  %v623 = vunpack.c.h.b16 %v48
  %v624 = vunpack.c.l.b16 %v49
  %v625 = vunpack.c.h.b16 %v49
  %v626 = vunpack.c.l.b16 %v50
  %v627 = vunpack.c.h.b16 %v50
  %v628 = vunpack.c.l.b16 %v51
  %v629 = vunpack.c.h.b16 %v51
  %v630 = vunpack.c.l.b16 %v52
  %v631 = vunpack.c.h.b16 %v52
  %v632 = vunpack.c.l.b16 %v53
  %v633 = vunpack.c.h.b16 %v53
  %v634 = vunpack.c.l.b16 %v54
  %v635 = vunpack.c.h.b16 %v54
  %v636 = vunpack.c.l.b16 %v55
  %v637 = vunpack.c.h.b16 %v55
  %v638 = vunpack.c.l.b16 %v56
  %v639 = vunpack.c.h.b16 %v56
  %v640 = vunpack.c.l.b16 %v57
  %v641 = vunpack.c.h.b16 %v57
  %v642 = vunpack.c.l.b16 %v58
  %v643 = vunpack.c.h.b16 %v58
  %v644 = vunpack.c.l.b16 %v59
  %v645 = vunpack.c.h.b16 %v59
  %v646 = vunpack.c.l.b16 %v60
  %v647 = vunpack.c.h.b16 %v60
  %v648 = vunpack.c.l.b16 %v61
  %v649 = vunpack.c.h.b16 %v61
  %v650 = vunpack.c.l.b16 %v62
  %v651 = vunpack.c.h.b16 %v62
  %v652 = vunpack.c.l.b16 %v63
  %v653 = vunpack.c.h.b16 %v63
  %v654 = vunpack.c.l.b16 %v64
  %v655 = vunpack.c.h.b16 %v64
  %v656 = vunpack.c.l.b16 %v65
  %v657 = vunpack.c.h.b16 %v65
  %v658 = vunpack.c.l.b16 %v66
  %v659 = vunpack.c.h.b16 %v66
  %v660 = vunpack.c.l.b16 %v67
  %v661 = vunpack.c.h.b16 %v67
  %v662 = vunpack.c.l.b16 %v68
  %v663 = vunpack.c.h.b16 %v68
  %v664 = vunpack.c.l.b16 %v69
  %v665 = vunpack.c.h.b16 %v69
  %v666 = vunpack.c.l.b16 %v70
  %v667 = vunpack.c.h.b16 %v70
  %v668 = vunpack.c.l.b16 %v71
  %v669 = vunpack.c.h.b16 %v71
  %v670 = vunpack.c.l.b16 %v72
  %v671 = vunpack.c.h.b16 %v72
  %v672 = vunpack.c.l.b16 %v73
  %v673 = vunpack.c.h.b16 %v73
  %v674 = vunpack.c.l.b16 %v74
  %v675 = vunpack.c.h.b16 %v74
  %v676 = vunpack.c.l.b16 %v75
  %v677 = vunpack.c.h.b16 %v75
  %v678 = vunpack.c.l.b16 %v76
  %v679 = vunpack.c.h.b16 %v76
  %v680 = vunpack.c.l.b16 %v77
  %v681 = vunpack.c.h.b16 %v77
  %v682 = vunpack.c.l.b16 %v78
  %v683 = vunpack.c.h.b16 %v78
  %v684 = vunpack.c.l.b16 %v79
  %v685 = vunpack.c.h.b16 %v79
  %v686 = vunpack.c.l.b16 %v80
  %v687 = vunpack.c.h.b16 %v80
  %v688 = vunpack.c.l.b16 %v81
  %v689 = vunpack.c.h.b16 %v81
  %v690 = vunpack.c.l.b16 %v82
  %v691 = vunpack.c.h.b16 %v82
  %v692 = vunpack.c.l.b16 %v83
  %v693 = vunpack.c.h.b16 %v83
  %v694 = vunpack.c.l.b16 %v84
  %v695 = vunpack.c.h.b16 %v84
  %v696 = vunpack.c.l.b16 %v85
  %v697 = vunpack.c.h.b16 %v85
  %v698 = vunpack.c.l.b16 %v86
  %v699 = vunpack.c.h.b16 %v86
  %v700 = vunpack.c.l.b16 %v87
  %v701 = vunpack.c.h.b16 %v87
  %v702 = vunpack.c.l.b16 %v88
  %v703 = vunpack.c.h.b16 %v88
  %v704 = vunpack.c.l.b16 %v89
  %v705 = vunpack.c.h.b16 %v89
  %v706 = vunpack.c.l.b16 %v90
  %v707 = vunpack.c.h.b16 %v90
  %v708 = vunpack.c.l.b16 %v91
  %v709 = vunpack.c.h.b16 %v91
  %v710 = vunpack.c.l.b16 %v92
  %v711 = vunpack.c.h.b16 %v92
  %v712 = vunpack.c.l.b16 %v93
  %v713 = vunpack.c.h.b16 %v93
  %v714 = vunpack.c.l.b16 %v94
  %v715 = vunpack.c.h.b16 %v94
  %v716 = vunpack.c.l.b16 %v95
  %v717 = vunpack.c.h.b16 %v95
  %v718 = vunpack.c.l.b16 %v96
  %v719 = vunpack.c.h.b16 %v96
  %v720 = vunpack.c.l.b16 %v97
  %v721 = vunpack.c.h.b16 %v97
  %v722 = vunpack.c.l.b16 %v98
  %v723 = vunpack.c.h.b16 %v98
  %v724 = vunpack.c.l.b16 %v99
  %v725 = vunpack.c.h.b16 %v99
  %v726 = vunpack.c.l.b16 %v100
  %v727 = vunpack.c.h.b16 %v100
  %v728 = vunpack.c.l.b16 %v101
  %v729 = vunpack.c.h.b16 %v101
  %v730 = vunpack.c.l.b16 %v102
  %v731 = vunpack.c.h.b16 %v102
  %v732 = vunpack.c.l.b16 %v103
  %v733 = vunpack.c.h.b16 %v103
  %v734 = vunpack.c.l.b16 %v104
  %v735 = vunpack.c.h.b16 %v104
  %v736 = vunpack.c.l.b16 %v105
  %v737 = vunpack.c.h.b16 %v105
  %v738 = vunpack.c.l.b16 %v106
  %v739 = vunpack.c.h.b16 %v106
  %v740 = vunpack.c.l.b16 %v107
  %v741 = vunpack.c.h.b16 %v107
  %v742 = vunpack.c.l.b16 %v108
  %v743 = vunpack.c.h.b16 %v108
  %v744 = vunpack.c.l.b16 %v109
  %v745 = vunpack.c.h.b16 %v109
  %v746 = vunpack.c.l.b16 %v110
  %v747 = vunpack.c.h.b16 %v110
  %v748 = vunpack.c.l.b16 %v111
  %v749 = vunpack.c.h.b16 %v111
  %v750 = vunpack.c.l.b16 %v112
  %v751 = vunpack.c.h.b16 %v112
  %v752 = vunpack.c.l.b16 %v113
  %v753 = vunpack.c.h.b16 %v113
  %v754 = vunpack.c.l.b16 %v114
  %v755 = vunpack.c.h.b16 %v114
  %v756 = vunpack.c.l.b16 %v115
  %v757 = vunpack.c.h.b16 %v115
  %v758 = vunpack.c.l.b16 %v116
  %v759 = vunpack.c.h.b16 %v116
  %v760 = vunpack.c.l.b16 %v117
  %v761 = vunpack.c.h.b16 %v117
  %v762 = vunpack.c.l.b16 %v118
  %v763 = vunpack.c.h.b16 %v118
  %v764 = vunpack.c.l.b16 %v119
  %v765 = vunpack.c.h.b16 %v119
  %v766 = vunpack.c.l.b16 %v120
  %v767 = vunpack.c.h.b16 %v120
  %v768 = vunpack.c.l.b16 %v121
  %v769 = vunpack.c.h.b16 %v121
  %v770 = vunpack.c.l.b16 %v122
  %v771 = vunpack.c.h.b16 %v122
  %v772 = vunpack.c.l.b16 %v123
  %v773 = vunpack.c.h.b16 %v123
  %v774 = vunpack.c.l.b16 %v124
  %v775 = vunpack.c.h.b16 %v124
  %v776 = vunpack.c.l.b16 %v125
  %v777 = vunpack.c.h.b16 %v125
  %v778 = vunpack.c.l.b16 %v126
  %v779 = vunpack.c.h.b16 %v126
  %v780 = vunpack.c.l.b16 %v127
  %v781 = vunpack.c.h.b16 %v127
  %v782 = vunpack.c.l.b16 %v128
  %v783 = vunpack.c.h.b16 %v128
  %v784 = vunpack.c.l.b16 %v129
  %v785 = vunpack.c.h.b16 %v129
  %v786 = vunpack.c.l.b16 %v130
  %v787 = vunpack.c.h.b16 %v130
  %v788 = vunpack.c.l.b16 %v131
  %v789 = vunpack.c.h.b16 %v131
  %v790 = vunpack.c.l.b16 %v132
  %v791 = vunpack.c.h.b16 %v132
  %v792 = vunpack.c.l.b16 %v133
  %v793 = vunpack.c.h.b16 %v133
  %v794 = vunpack.c.l.b16 %v134
  %v795 = vunpack.c.h.b16 %v134
  %v796 = vunpack.c.l.b16 %v135
  %v797 = vunpack.c.h.b16 %v135
  %v798 = vunpack.c.l.b16 %v136
  %v799 = vunpack.c.h.b16 %v136
  %v800 = vunpack.c.l.b16 %v137
  %v801 = vunpack.c.h.b16 %v137
  %v802 = vunpack.c.l.b16 %v138
  %v803 = vunpack.c.h.b16 %v138
  %v804 = vunpack.c.l.b16 %v139
  %v805 = vunpack.c.h.b16 %v139
  %v806 = vunpack.c.l.b16 %v140
  %v807 = vunpack.c.h.b16 %v140
  %v808 = vunpack.c.l.b16 %v141
  %v809 = vunpack.c.h.b16 %v141
  %v810 = vunpack.c.l.b16 %v142
  %v811 = vunpack.c.h.b16 %v142
  %v812 = vunpack.c.l.b16 %v143
  %v813 = vunpack.c.h.b16 %v143
  %v814 = vunpack.c.l.b16 %v144
  %v815 = vunpack.c.h.b16 %v144
  %v816 = vunpack.c.l.b16 %v145
  %v817 = vunpack.c.h.b16 %v145
  %v818 = vunpack.c.l.b16 %v146
  %v819 = vunpack.c.h.b16 %v146
  %v820 = vunpack.c.l.b16 %v147
  %v821 = vunpack.c.h.b16 %v147
  %v822 = vunpack.c.l.b16 %v148
  %v823 = vunpack.c.h.b16 %v148
  %v824 = vunpack.c.l.b16 %v149
  %v825 = vunpack.c.h.b16 %v149
  %v826 = vunpack.c.l.b16 %v150
  %v827 = vunpack.c.h.b16 %v150
  %v828 = vunpack.c.l.b16 %v151
  %v829 = vunpack.c.h.b16 %v151
  %v830 = vunpack.c.l.b16 %v152
  %v831 = vunpack.c.h.b16 %v152
  %v832 = vunpack.c.l.b16 %v153
  %v833 = vunpack.c.h.b16 %v153
  %v834 = vunpack.c.l.b16 %v154
  %v835 = vunpack.c.h.b16 %v154
  %v836 = vunpack.c.l.b16 %v155
  %v837 = vunpack.c.h.b16 %v155
  %v838 = vunpack.c.l.b16 %v156
  %v839 = vunpack.c.h.b16 %v156
  %v840 = vunpack.c.l.b16 %v157
  %v841 = vunpack.c.h.b16 %v157
  %v842 = vunpack.c.l.b16 %v158
  %v843 = vunpack.c.h.b16 %v158
  %v844 = vunpack.c.l.b16 %v159
  %v845 = vunpack.c.h.b16 %v159
  %v846 = vunpack.c.l.b16 %v160
  %v847 = vunpack.c.h.b16 %v160
  %v848 = vunpack.c.l.b16 %v161
  %v849 = vunpack.c.h.b16 %v161
  %v850 = vunpack.c.l.b16 %v162
  %v851 = vunpack.c.h.b16 %v162
  %v852 = vunpack.c.l.b16 %v163
  %v853 = vunpack.c.h.b16 %v163
  %v854 = vunpack.c.l.b16 %v164
  %v855 = vunpack.c.h.b16 %v164
  %v856 = vunpack.c.l.b16 %v165
  %v857 = vunpack.c.h.b16 %v165
  %v858 = vunpack.c.l.b16 %v166
  %v859 = vunpack.c.h.b16 %v166
  %v860 = vunpack.c.l.b16 %v167
  %v861 = vunpack.c.h.b16 %v167
  %v862 = vunpack.c.l.b16 %v168
  %v863 = vunpack.c.h.b16 %v168
  %v864 = vunpack.c.l.b16 %v169
  %v865 = vunpack.c.h.b16 %v169
  %v866 = vunpack.c.l.b16 %v170
  %v867 = vunpack.c.h.b16 %v170
  %v868 = vunpack.c.l.b16 %v171
  %v869 = vunpack.c.h.b16 %v171
  %v870 = vunpack.c.l.b16 %v172
  %v871 = vunpack.c.h.b16 %v172
  %v872 = vunpack.c.l.b16 %v173
  %v873 = vunpack.c.h.b16 %v173
  %v874 = vunpack.c.l.b16 %v174
  %v875 = vunpack.c.h.b16 %v174
  %v876 = vunpack.c.l.b16 %v175
  %v877 = vunpack.c.h.b16 %v175
  %v878 = vunpack.c.l.b16 %v176
  %v879 = vunpack.c.h.b16 %v176
  %v880 = vunpack.c.l.b16 %v177
  %v881 = vunpack.c.h.b16 %v177
  %v882 = vunpack.c.l.b16 %v178
  %v883 = vunpack.c.h.b16 %v178
  %v884 = vunpack.c.l.b16 %v179
  %v885 = vunpack.c.h.b16 %v179
  %v886 = vunpack.c.l.b16 %v180
  %v887 = vunpack.c.h.b16 %v180
  %v888 = vunpack.c.l.b16 %v181
  %v889 = vunpack.c.h.b16 %v181
  %v890 = vunpack.c.l.b16 %v182
  %v891 = vunpack.c.h.b16 %v182
  %v892 = vunpack.c.l.b16 %v183
  %v893 = vunpack.c.h.b16 %v183
  %v894 = vunpack.c.l.b16 %v184
  %v895 = vunpack.c.h.b16 %v184
  %v896 = vunpack.c.l.b16 %v185
  %v897 = vunpack.c.h.b16 %v185
  %v898 = vunpack.c.l.b16 %v186
  %v899 = vunpack.c.h.b16 %v186
  %v900 = vunpack.c.l.b16 %v187
  %v901 = vunpack.c.h.b16 %v187
  %v902 = vunpack.c.l.b16 %v188
  %v903 = vunpack.c.h.b16 %v188
  %v904 = vunpack.c.l.b16 %v189
  %v905 = vunpack.c.h.b16 %v189
  %v906 = vunpack.c.l.b16 %v190
  %v907 = vunpack.c.h.b16 %v190
  %v908 = vunpack.c.l.b16 %v191
  %v909 = vunpack.c.h.b16 %v191
  %v910 = vunpack.c.l.b16 %v192
  %v911 = vunpack.c.h.b16 %v192
  %v912 = vunpack.c.l.b16 %v193
  %v913 = vunpack.c.h.b16 %v193
  %v914 = vunpack.c.l.b16 %v194
  %v915 = vunpack.c.h.b16 %v194
  %v916 = vunpack.c.l.b16 %v195
  %v917 = vunpack.c.h.b16 %v195
  %v918 = vunpack.c.l.b16 %v196
  %v919 = vunpack.c.h.b16 %v196
  %v920 = vunpack.c.l.b16 %v197
  %v921 = vunpack.c.h.b16 %v197
  %v922 = vunpack.c.l.b16 %v198
  %v923 = vunpack.c.h.b16 %v198
  %v924 = vunpack.c.l.b16 %v199
  %v925 = vunpack.c.h.b16 %v199
  %v926 = vunpack.c.l.b16 %v200
  %v927 = vunpack.c.h.b16 %v200
  %v928 = vunpack.c.l.b16 %v201
  %v929 = vunpack.c.h.b16 %v201
  %v930 = vunpack.c.l.b16 %v202
  %v931 = vunpack.c.h.b16 %v202
  %v932 = vunpack.c.l.b16 %v203
  %v933 = vunpack.c.h.b16 %v203
  %v934 = vunpack.c.l.b16 %v204
  %v935 = vunpack.c.h.b16 %v204
  %v936 = vunpack.c.l.b16 %v205
  %v937 = vunpack.c.h.b16 %v205
  %v938 = vunpack.c.l.b16 %v206
  %v939 = vunpack.c.h.b16 %v206
  %v940 = vunpack.c.l.b16 %v207
  %v941 = vunpack.c.h.b16 %v207
  %v942 = vunpack.c.l.b16 %v208
  %v943 = vunpack.c.h.b16 %v208
  %v944 = vunpack.c.l.b16 %v209
  %v945 = vunpack.c.h.b16 %v209
  %v946 = vunpack.c.l.b16 %v210
  %v947 = vunpack.c.h.b16 %v210
  %v948 = vunpack.c.l.b16 %v211
  %v949 = vunpack.c.h.b16 %v211
  %v950 = vunpack.c.l.b16 %v212
  %v951 = vunpack.c.h.b16 %v212
  %v952 = vunpack.c.l.b16 %v213
  %v953 = vunpack.c.h.b16 %v213
  %v954 = vunpack.c.l.b16 %v214
  %v955 = vunpack.c.h.b16 %v214
  %v956 = vunpack.c.l.b16 %v215
  %v957 = vunpack.c.h.b16 %v215
  %v958 = vunpack.c.l.b16 %v216
  %v959 = vunpack.c.h.b16 %v216
  %v960 = vunpack.c.l.b16 %v217
  %v961 = vunpack.c.h.b16 %v217
  %v962 = vunpack.c.l.b16 %v218
  %v963 = vunpack.c.h.b16 %v218
  %v964 = vunpack.c.l.b16 %v219
  %v965 = vunpack.c.h.b16 %v219
  %v966 = vunpack.c.l.b16 %v220
  %v967 = vunpack.c.h.b16 %v220
  %v968 = vunpack.c.l.b16 %v221
  %v969 = vunpack.c.h.b16 %v221
  %v970 = vunpack.c.l.b16 %v222
  %v971 = vunpack.c.h.b16 %v222
  %v972 = vunpack.c.l.b16 %v223
  %v973 = vunpack.c.h.b16 %v223
  %v974 = vunpack.c.l.b16 %v224
  %v975 = vunpack.c.h.b16 %v224
  %v976 = vunpack.c.l.b16 %v225
  %v977 = vunpack.c.h.b16 %v225
  %v978 = vunpack.c.l.b16 %v226
  %v979 = vunpack.c.h.b16 %v226
  %v980 = vunpack.c.l.b16 %v227
  %v981 = vunpack.c.h.b16 %v227
  %v982 = vunpack.c.l.b16 %v228
  %v983 = vunpack.c.h.b16 %v228
  %v984 = vunpack.c.l.b16 %v229
  %v985 = vunpack.c.h.b16 %v229
  %v986 = vunpack.c.l.b16 %v230
  %v987 = vunpack.c.h.b16 %v230
  %v988 = vunpack.c.l.b16 %v231
  %v989 = vunpack.c.h.b16 %v231
  %v990 = vunpack.c.l.b16 %v232
  %v991 = vunpack.c.h.b16 %v232
  %v992 = vunpack.c.l.b16 %v233
  %v993 = vunpack.c.h.b16 %v233
  %v994 = vunpack.c.l.b16 %v234
  %v995 = vunpack.c.h.b16 %v234
  %v996 = vunpack.c.l.b16 %v235
  %v997 = vunpack.c.h.b16 %v235
  %v998 = vunpack.c.l.b16 %v236
  %v999 = vunpack.c.h.b16 %v236
  %v1000 = vunpack.c.l.b16 %v237
  %v1001 = vunpack.c.h.b16 %v237
  %v1002 = vunpack.c.l.b16 %v238
  %v1003 = vunpack.c.h.b16 %v238
  %v1004 = vunpack.c.l.b16 %v239
  %v1005 = vunpack.c.h.b16 %v239
  %v1006 = vunpack.c.l.b16 %v240
  %v1007 = vunpack.c.h.b16 %v240
  %v1008 = vunpack.c.l.b16 %v241
  %v1009 = vunpack.c.h.b16 %v241
  %v1010 = vunpack.c.l.b16 %v242
  %v1011 = vunpack.c.h.b16 %v242
  %v1012 = vunpack.c.l.b16 %v243
  %v1013 = vunpack.c.h.b16 %v243
  %v1014 = vunpack.c.l.b16 %v244
  %v1015 = vunpack.c.h.b16 %v244
  %v1016 = vunpack.c.l.b16 %v245
  %v1017 = vunpack.c.h.b16 %v245
  %v1018 = vunpack.c.l.b16 %v246
  %v1019 = vunpack.c.h.b16 %v246
  %v1020 = vunpack.c.l.b16 %v247
  %v1021 = vunpack.c.h.b16 %v247
  %v1022 = vunpack.c.l.b16 %v248
  %v1023 = vunpack.c.h.b16 %v248
  %v1024 = vunpack.c.l.b16 %v249
  %v1025 = vunpack.c.h.b16 %v249
  %v1026 = vunpack.c.l.b16 %v250
  %v1027 = vunpack.c.h.b16 %v250
  %v1028 = vunpack.c.l.b16 %v251
  %v1029 = vunpack.c.h.b16 %v251
  %v1030 = vunpack.c.l.b16 %v252
  %v1031 = vunpack.c.h.b16 %v252
  %v1032 = vunpack.c.l.b16 %v253
  %v1033 = vunpack.c.h.b16 %v253
  %v1034 = vunpack.c.l.b16 %v254
  %v1035 = vunpack.c.h.b16 %v254
  %v1036 = vunpack.c.l.b16 %v255
  %v1037 = vunpack.c.h.b16 %v255
  %v1038 = vunpack.c.l.b16 %v256
  %v1039 = vunpack.c.h.b16 %v256
  %v1040 = vunpack.c.l.b16 %v257
  %v1041 = vunpack.c.h.b16 %v257
  %v1042 = vunpack.c.l.b16 %v258
  %v1043 = vunpack.c.h.b16 %v258
  %v1044 = vunpack.c.l.b16 %v259
  %v1045 = vunpack.c.h.b16 %v259
  %v1046 = vunpack.c.l.b16 %v260
  %v1047 = vunpack.c.h.b16 %v260
  %v1048 = vunpack.c.l.b16 %v261
  %v1049 = vunpack.c.h.b16 %v261
  %v1050 = vunpack.c.l.b16 %v262
  %v1051 = vunpack.c.h.b16 %v262
  %v1052 = vunpack.c.l.b16 %v263
  %v1053 = vunpack.c.h.b16 %v263
  %v1054 = vunpack.c.l.b16 %v264
  %v1055 = vunpack.c.h.b16 %v264
  %v1056 = vunpack.c.l.b16 %v265
  %v1057 = vunpack.c.h.b16 %v265
  %v1058 = vunpack.c.l.b16 %v266
  %v1059 = vunpack.c.h.b16 %v266
  %v1060 = vunpack.c.l.b16 %v267
  %v1061 = vunpack.c.h.b16 %v267
  %v1062 = vunpack.c.l.b16 %v268
  %v1063 = vunpack.c.h.b16 %v268
  %v1064 = vunpack.c.l.b16 %v269
  %v1065 = vunpack.c.h.b16 %v269
  %v1066 = vunpack.c.l.b16 %v270
  %v1067 = vunpack.c.h.b16 %v270
  %v1068 = vunpack.c.l.b16 %v271
  %v1069 = vunpack.c.h.b16 %v271
  %v1070 = vunpack.c.l.b16 %v272
  %v1071 = vunpack.c.h.b16 %v272
  %v1072 = vunpack.c.l.b16 %v273
  %v1073 = vunpack.c.h.b16 %v273
  %v1074 = vunpack.c.l.b16 %v274
  %v1075 = vunpack.c.h.b16 %v274
  %v1076 = vunpack.c.l.b16 %v275
  %v1077 = vunpack.c.h.b16 %v275
  %v1078 = vunpack.c.l.b16 %v276
  %v1079 = vunpack.c.h.b16 %v276
  %v1080 = vunpack.c.l.b16 %v277
  %v1081 = vunpack.c.h.b16 %v277
  %v1082 = vunpack.c.l.b16 %v278
  %v1083 = vunpack.c.h.b16 %v278
  %v1084 = vunpack.c.l.b16 %v279
  %v1085 = vunpack.c.h.b16 %v279
  %v1086 = vpack.c.b16 %v578, %v574
  %v1087 = vpack.c.b16 %v579, %v575
  %v1088 = vpack.c.b16 %v580, %v576
  %v1089 = vpack.c.b16 %v581, %v577
  %v1090 = vpack.c.b16 %v586, %v582
  %v1091 = vpack.c.b16 %v587, %v583
  %v1092 = vpack.c.b16 %v588, %v584
  %v1093 = vpack.c.b16 %v589, %v585
  %v1094 = vpack.c.b16 %v594, %v590
  %v1095 = vpack.c.b16 %v595, %v591
  %v1096 = vpack.c.b16 %v596, %v592
  %v1097 = vpack.c.b16 %v597, %v593
  %v1098 = vpack.c.b16 %v602, %v598
  %v1099 = vpack.c.b16 %v603, %v599
  %v1100 = vpack.c.b16 %v604, %v600
  %v1101 = vpack.c.b16 %v605, %v601
  %v1102 = vpack.c.b16 %v610, %v606
  %v1103 = vpack.c.b16 %v611, %v607
  %v1104 = vpack.c.b16 %v612, %v608
  %v1105 = vpack.c.b16 %v613, %v609
  %v1106 = vpack.c.b16 %v618, %v614
  %v1107 = vpack.c.b16 %v619, %v615
  %v1108 = vpack.c.b16 %v620, %v616
  %v1109 = vpack.c.b16 %v621, %v617
  %v1110 = vpack.c.b16 %v626, %v622
  %v1111 = vpack.c.b16 %v627, %v623
  %v1112 = vpack.c.b16 %v628, %v624
  %v1113 = vpack.c.b16 %v629, %v625
  %v1114 = vpack.c.b16 %v634, %v630
  %v1115 = vpack.c.b16 %v635, %v631
  %v1116 = vpack.c.b16 %v636, %v632
  %v1117 = vpack.c.b16 %v637, %v633
  %v1118 = vpack.c.b16 %v642, %v638
  %v1119 = vpack.c.b16 %v643, %v639
  %v1120 = vpack.c.b16 %v644, %v640
  %v1121 = vpack.c.b16 %v645, %v641
  %v1122 = vpack.c.b16 %v650, %v646
  %v1123 = vpack.c.b16 %v651, %v647
  %v1124 = vpack.c.b16 %v652, %v648
  %v1125 = vpack.c.b16 %v653, %v649
  %v1126 = vpack.c.b16 %v658, %v654
  %v1127 = vpack.c.b16 %v659, %v655
  %v1128 = vpack.c.b16 %v660, %v656
  %v1129 = vpack.c.b16 %v661, %v657
  %v1130 = vpack.c.b16 %v666, %v662
  %v1131 = vpack.c.b16 %v667, %v663
  %v1132 = vpack.c.b16 %v668, %v664
  %v1133 = vpack.c.b16 %v669, %v665
  %v1134 = vpack.c.b16 %v674, %v670
  %v1135 = vpack.c.b16 %v675, %v671
  %v1136 = vpack.c.b16 %v676, %v672
  %v1137 = vpack.c.b16 %v677, %v673
  %v1138 = vpack.c.b16 %v682, %v678
  %v1139 = vpack.c.b16 %v683, %v679
  %v1140 = vpack.c.b16 %v684, %v680
  %v1141 = vpack.c.b16 %v685, %v681
  %v1142 = vpack.c.b16 %v690, %v686
  %v1143 = vpack.c.b16 %v691, %v687
  %v1144 = vpack.c.b16 %v692, %v688
  %v1145 = vpack.c.b16 %v693, %v689
  %v1146 = vpack.c.b16 %v698, %v694
  %v1147 = vpack.c.b16 %v699, %v695
  %v1148 = vpack.c.b16 %v700, %v696
  %v1149 = vpack.c.b16 %v701, %v697
  %v1150 = vpack.c.b16 %v706, %v702
  %v1151 = vpack.c.b16 %v707, %v703
  %v1152 = vpack.c.b16 %v708, %v704
  %v1153 = vpack.c.b16 %v709, %v705
  %v1154 = vpack.c.b16 %v714, %v710
  %v1155 = vpack.c.b16 %v715, %v711
  %v1156 = vpack.c.b16 %v716, %v712
  %v1157 = vpack.c.b16 %v717, %v713
  %v1158 = vpack.c.b16 %v722, %v718
  %v1159 = vpack.c.b16 %v723, %v719
  %v1160 = vpack.c.b16 %v724, %v720
  %v1161 = vpack.c.b16 %v725, %v721
  %v1162 = vpack.c.b16 %v730, %v726
  %v1163 = vpack.c.b16 %v731, %v727
  %v1164 = vpack.c.b16 %v732, %v728
  %v1165 = vpack.c.b16 %v733, %v729
  %v1166 = vpack.c.b16 %v738, %v734
  %v1167 = vpack.c.b16 %v739, %v735
  %v1168 = vpack.c.b16 %v740, %v736
  %v1169 = vpack.c.b16 %v741, %v737
  %v1170 = vpack.c.b16 %v746, %v742
  %v1171 = vpack.c.b16 %v747, %v743
  %v1172 = vpack.c.b16 %v748, %v744
  %v1173 = vpack.c.b16 %v749, %v745
  %v1174 = vpack.c.b16 %v754, %v750
  %v1175 = vpack.c.b16 %v755, %v751
  %v1176 = vpack.c.b16 %v756, %v752
  %v1177 = vpack.c.b16 %v757, %v753
  %v1178 = vpack.c.b16 %v762, %v758
  %v1179 = vpack.c.b16 %v763, %v759
  %v1180 = vpack.c.b16 %v764, %v760
  %v1181 = vpack.c.b16 %v765, %v761
  %v1182 = vpack.c.b16 %v770, %v766
  %v1183 = vpack.c.b16 %v771, %v767
  %v1184 = vpack.c.b16 %v772, %v768
  %v1185 = vpack.c.b16 %v773, %v769
  %v1186 = vpack.c.b16 %v778, %v774
  %v1187 = vpack.c.b16 %v779, %v775
  %v1188 = vpack.c.b16 %v780, %v776
  %v1189 = vpack.c.b16 %v781, %v777
  %v1190 = vpack.c.b16 %v786, %v782
  %v1191 = vpack.c.b16 %v787, %v783
  %v1192 = vpack.c.b16 %v788, %v784
  %v1193 = vpack.c.b16 %v789, %v785
  %v1194 = vpack.c.b16 %v794, %v790
  %v1195 = vpack.c.b16 %v795, %v791
  %v1196 = vpack.c.b16 %v796, %v792
  %v1197 = vpack.c.b16 %v797, %v793
  %v1198 = vpack.c.b16 %v802, %v798
  %v1199 = vpack.c.b16 %v803, %v799
  %v1200 = vpack.c.b16 %v804, %v800
  %v1201 = vpack.c.b16 %v805, %v801
  %v1202 = vpack.c.b16 %v810, %v806
  %v1203 = vpack.c.b16 %v811, %v807
  %v1204 = vpack.c.b16 %v812, %v808
  %v1205 = vpack.c.b16 %v813, %v809
  %v1206 = vpack.c.b16 %v818, %v814
  %v1207 = vpack.c.b16 %v819, %v815
  %v1208 = vpack.c.b16 %v820, %v816
  %v1209 = vpack.c.b16 %v821, %v817
  %v1210 = vpack.c.b16 %v826, %v822
  %v1211 = vpack.c.b16 %v827, %v823
  %v1212 = vpack.c.b16 %v828, %v824
  %v1213 = vpack.c.b16 %v829, %v825
  %v1214 = vpack.c.b16 %v834, %v830
  %v1215 = vpack.c.b16 %v835, %v831
  %v1216 = vpack.c.b16 %v836, %v832
  %v1217 = vpack.c.b16 %v837, %v833
  %v1218 = vpack.c.b16 %v842, %v838
  %v1219 = vpack.c.b16 %v843, %v839
  %v1220 = vpack.c.b16 %v844, %v840
  %v1221 = vpack.c.b16 %v845, %v841
  %v1222 = vpack.c.b16 %v850, %v846
  %v1223 = vpack.c.b16 %v851, %v847
  %v1224 = vpack.c.b16 %v852, %v848
  %v1225 = vpack.c.b16 %v853, %v849
  %v1226 = vpack.c.b16 %v858, %v854
  %v1227 = vpack.c.b16 %v859, %v855
  %v1228 = vpack.c.b16 %v860, %v856
  %v1229 = vpack.c.b16 %v861, %v857
  %v1230 = vpack.c.b16 %v866, %v862
  %v1231 = vpack.c.b16 %v867, %v863
  %v1232 = vpack.c.b16 %v868, %v864
  %v1233 = vpack.c.b16 %v869, %v865
  %v1234 = vpack.c.b16 %v874, %v870
  %v1235 = vpack.c.b16 %v875, %v871
  %v1236 = vpack.c.b16 %v876, %v872
  %v1237 = vpack.c.b16 %v877, %v873
  %v1238 = vpack.c.b16 %v882, %v878
  %v1239 = vpack.c.b16 %v883, %v879
  %v1240 = vpack.c.b16 %v884, %v880
  %v1241 = vpack.c.b16 %v885, %v881
  %v1242 = vpack.c.b16 %v890, %v886
  %v1243 = vpack.c.b16 %v891, %v887
  %v1244 = vpack.c.b16 %v892, %v888
  %v1245 = vpack.c.b16 %v893, %v889
  %v1246 = vpack.c.b16 %v898, %v894
  %v1247 = vpack.c.b16 %v899, %v895
  %v1248 = vpack.c.b16 %v900, %v896
  %v1249 = vpack.c.b16 %v901, %v897
  %v1250 = vpack.c.b16 %v906, %v902
  %v1251 = vpack.c.b16 %v907, %v903
  %v1252 = vpack.c.b16 %v908, %v904
  %v1253 = vpack.c.b16 %v909, %v905
  %v1254 = vpack.c.b16 %v914, %v910
  %v1255 = vpack.c.b16 %v915, %v911
  %v1256 = vpack.c.b16 %v916, %v912
  %v1257 = vpack.c.b16 %v917, %v913
  %v1258 = vpack.c.b16 %v922, %v918
  %v1259 = vpack.c.b16 %v923, %v919
  %v1260 = vpack.c.b16 %v924, %v920
  %v1261 = vpack.c.b16 %v925, %v921
  %v1262 = vpack.c.b16 %v930, %v926
  %v1263 = vpack.c.b16 %v931, %v927
  %v1264 = vpack.c.b16 %v932, %v928
  %v1265 = vpack.c.b16 %v933, %v929
  %v1266 = vpack.c.b16 %v938, %v934
  %v1267 = vpack.c.b16 %v939, %v935
  %v1268 = vpack.c.b16 %v940, %v936
  %v1269 = vpack.c.b16 %v941, %v937
  %v1270 = vpack.c.b16 %v946, %v942
  %v1271 = vpack.c.b16 %v947, %v943
  %v1272 = vpack.c.b16 %v948, %v944
  %v1273 = vpack.c.b16 %v949, %v945
  %v1274 = vpack.c.b16 %v954, %v950
  %v1275 = vpack.c.b16 %v955, %v951
  %v1276 = vpack.c.b16 %v956, %v952
  %v1277 = vpack.c.b16 %v957, %v953
  %v1278 = vpack.c.b16 %v962, %v958
  %v1279 = vpack.c.b16 %v963, %v959
  %v1280 = vpack.c.b16 %v964, %v960
  %v1281 = vpack.c.b16 %v965, %v961
  %v1282 = vpack.c.b16 %v970, %v966
  %v1283 = vpack.c.b16 %v971, %v967
  %v1284 = vpack.c.b16 %v972, %v968
  %v1285 = vpack.c.b16 %v973, %v969
  %v1286 = vpack.c.b16 %v978, %v974
  %v1287 = vpack.c.b16 %v979, %v975
  %v1288 = vpack.c.b16 %v980, %v976
  %v1289 = vpack.c.b16 %v981, %v977
  %v1290 = vpack.c.b16 %v986, %v982
  %v1291 = vpack.c.b16 %v987, %v983
  %v1292 = vpack.c.b16 %v988, %v984
  %v1293 = vpack.c.b16 %v989, %v985
  %v1294 = vpack.c.b16 %v994, %v990
  %v1295 = vpack.c.b16 %v995, %v991
  %v1296 = vpack.c.b16 %v996, %v992
  %v1297 = vpack.c.b16 %v997, %v993
  %v1298 = vpack.c.b16 %v1002, %v998
  %v1299 = vpack.c.b16 %v1003, %v999
  %v1300 = vpack.c.b16 %v1004, %v1000
  %v1301 = vpack.c.b16 %v1005, %v1001
  %v1302 = vpack.c.b16 %v1010, %v1006
  %v1303 = vpack.c.b16 %v1011, %v1007
  %v1304 = vpack.c.b16 %v1012, %v1008
  %v1305 = vpack.c.b16 %v1013, %v1009
  %v1306 = vpack.c.b16 %v1018, %v1014
  %v1307 = vpack.c.b16 %v1019, %v1015
  %v1308 = vpack.c.b16 %v1020, %v1016
  %v1309 = vpack.c.b16 %v1021, %v1017
  %v1310 = vpack.c.b16 %v1026, %v1022
  %v1311 = vpack.c.b16 %v1027, %v1023
  %v1312 = vpack.c.b16 %v1028, %v1024
  %v1313 = vpack.c.b16 %v1029, %v1025
  %v1314 = vpack.c.b16 %v1034, %v1030
  %v1315 = vpack.c.b16 %v1035, %v1031
  %v1316 = vpack.c.b16 %v1036, %v1032
  %v1317 = vpack.c.b16 %v1037, %v1033
  %v1318 = vpack.c.b16 %v1042, %v1038
  %v1319 = vpack.c.b16 %v1043, %v1039
  %v1320 = vpack.c.b16 %v1044, %v1040
  %v1321 = vpack.c.b16 %v1045, %v1041
  %v1322 = vpack.c.b16 %v1050, %v1046
  %v1323 = vpack.c.b16 %v1051, %v1047
  %v1324 = vpack.c.b16 %v1052, %v1048
  %v1325 = vpack.c.b16 %v1053, %v1049
  %v1326 = vpack.c.b16 %v1058, %v1054
  %v1327 = vpack.c.b16 %v1059, %v1055
  %v1328 = vpack.c.b16 %v1060, %v1056
  %v1329 = vpack.c.b16 %v1061, %v1057
  %v1330 = vpack.c.b16 %v1066, %v1062
  %v1331 = vpack.c.b16 %v1067, %v1063
  %v1332 = vpack.c.b16 %v1068, %v1064
  %v1333 = vpack.c.b16 %v1069, %v1065
  %v1334 = vpack.c.b16 %v1074, %v1070
  %v1335 = vpack.c.b16 %v1075, %v1071
  %v1336 = vpack.c.b16 %v1076, %v1072
  %v1337 = vpack.c.b16 %v1077, %v1073
  %v1338 = vpack.c.b16 %v1082, %v1078
  %v1339 = vpack.c.b16 %v1083, %v1079
  %v1340 = vpack.c.b16 %v1084, %v1080
  %v1341 = vpack.c.b16 %v1085, %v1081
  %1598 = vmatpush.bf16.msra.mxu0 %v1114
  %1599 = vmatpush.bf16.msra.mxu0 %v1110
  %1600 = vmatpush.bf16.msra.mxu0 %v1106
  %1601 = vmatpush.bf16.msra.mxu0 %v1102
  %1602 = vmatpush.bf16.msra.mxu0 %v1098
  %1603 = vmatpush.bf16.msra.mxu0 %v1094
  %1604 = vmatpush.bf16.msra.mxu0 %v1090
  %1605 = vmatpush.bf16.msra.mxu0 %v1086
  %1606 = vmatmul.bf16.gmra.mxu0 %v302
  %v1607 = vpop.f32.mrf.mxu0
  %v1608 = vadd.f32 %v282, %v1607
  %v1609 = vpop.f32.mrf.mxu0
  %1610 = vdwg.mxu0
  %1611 = vmatpush.bf16.msra.mxu0 %v1146
  %1612 = vmatpush.bf16.msra.mxu0 %v1142
  %1613 = vmatpush.bf16.msra.mxu0 %v1138
  %1614 = vmatpush.bf16.msra.mxu0 %v1134
  %1615 = vmatpush.bf16.msra.mxu0 %v1130
  %1616 = vmatpush.bf16.msra.mxu0 %v1126
  %1617 = vmatpush.bf16.msra.mxu0 %v1122
  %1618 = vmatpush.bf16.msra.mxu0 %v1118
  %1619 = vmatmul.bf16.gmra.mxu0 %v303
  %v1620 = vpop.f32.mrf.mxu0
  %v1621 = vadd.f32 %v1608, %v1620
  %v1622 = vpop.f32.mrf.mxu0
  %1623 = vdwg.mxu0
  %1624 = vmatpush.bf16.msra.mxu0 %v1178
  %1625 = vmatpush.bf16.msra.mxu0 %v1174
  %1626 = vmatpush.bf16.msra.mxu0 %v1170
  %1627 = vmatpush.bf16.msra.mxu0 %v1166
  %1628 = vmatpush.bf16.msra.mxu0 %v1162
  %1629 = vmatpush.bf16.msra.mxu0 %v1158
  %1630 = vmatpush.bf16.msra.mxu0 %v1154
  %1631 = vmatpush.bf16.msra.mxu0 %v1150
  %1632 = vmatmul.bf16.gmra.mxu0 %v304
  %v1633 = vpop.f32.mrf.mxu0
  %v1634 = vadd.f32 %v1621, %v1633
  %v1635 = vpop.f32.mrf.mxu0
  %1636 = vdwg.mxu0
  %1637 = vmatpush.bf16.msra.mxu0 %v1210
  %1638 = vmatpush.bf16.msra.mxu0 %v1206
  %1639 = vmatpush.bf16.msra.mxu0 %v1202
  %1640 = vmatpush.bf16.msra.mxu0 %v1198
  %1641 = vmatpush.bf16.msra.mxu0 %v1194
  %1642 = vmatpush.bf16.msra.mxu0 %v1190
  %1643 = vmatpush.bf16.msra.mxu0 %v1186
  %1644 = vmatpush.bf16.msra.mxu0 %v1182
  %1645 = vmatmul.bf16.gmra.mxu0 %v305
  %v1646 = vpop.f32.mrf.mxu0
  %v1647 = vadd.f32 %v1634, %v1646
  %v1648 = vpop.f32.mrf.mxu0
  %1649 = vdwg.mxu0
  %1650 = vmatpush.bf16.msra.mxu0 %v1242
  %1651 = vmatpush.bf16.msra.mxu0 %v1238
  %1652 = vmatpush.bf16.msra.mxu0 %v1234
  %1653 = vmatpush.bf16.msra.mxu0 %v1230
  %1654 = vmatpush.bf16.msra.mxu0 %v1226
  %1655 = vmatpush.bf16.msra.mxu0 %v1222
  %1656 = vmatpush.bf16.msra.mxu0 %v1218
  %1657 = vmatpush.bf16.msra.mxu0 %v1214
  %1658 = vmatmul.bf16.gmra.mxu0 %v306
  %v1659 = vpop.f32.mrf.mxu0
  %v1660 = vadd.f32 %v1647, %v1659
  %v1661 = vpop.f32.mrf.mxu0
  %1662 = vdwg.mxu0
  %1663 = vmatpush.bf16.msra.mxu0 %v1274
  %1664 = vmatpush.bf16.msra.mxu0 %v1270
  %1665 = vmatpush.bf16.msra.mxu0 %v1266
  %1666 = vmatpush.bf16.msra.mxu0 %v1262
  %1667 = vmatpush.bf16.msra.mxu0 %v1258
  %1668 = vmatpush.bf16.msra.mxu0 %v1254
  %1669 = vmatpush.bf16.msra.mxu0 %v1250
  %1670 = vmatpush.bf16.msra.mxu0 %v1246
  %1671 = vmatmul.bf16.gmra.mxu0 %v307
  %v1672 = vpop.f32.mrf.mxu0
  %v1673 = vadd.f32 %v1660, %v1672
  %v1674 = vpop.f32.mrf.mxu0
  %1675 = vdwg.mxu0
  %1676 = vmatpush.bf16.msra.mxu0 %v1306
  %1677 = vmatpush.bf16.msra.mxu0 %v1302
  %1678 = vmatpush.bf16.msra.mxu0 %v1298
  %1679 = vmatpush.bf16.msra.mxu0 %v1294
  %1680 = vmatpush.bf16.msra.mxu0 %v1290
  %1681 = vmatpush.bf16.msra.mxu0 %v1286
  %1682 = vmatpush.bf16.msra.mxu0 %v1282
  %1683 = vmatpush.bf16.msra.mxu0 %v1278
  %1684 = vmatmul.bf16.gmra.mxu0 %v308
  %v1685 = vpop.f32.mrf.mxu0
  %v1686 = vadd.f32 %v1673, %v1685
  %v1687 = vpop.f32.mrf.mxu0
  %1688 = vdwg.mxu0
  %1689 = vmatpush.bf16.msra.mxu0 %v1338
  %1690 = vmatpush.bf16.msra.mxu0 %v1334
  %1691 = vmatpush.bf16.msra.mxu0 %v1330
  %1692 = vmatpush.bf16.msra.mxu0 %v1326
  %1693 = vmatpush.bf16.msra.mxu0 %v1322
  %1694 = vmatpush.bf16.msra.mxu0 %v1318
  %1695 = vmatpush.bf16.msra.mxu0 %v1314
  %1696 = vmatpush.bf16.msra.mxu0 %v1310
  %1697 = vmatmul.bf16.gmra.mxu0 %v309
  %v1698 = vpop.f32.mrf.mxu0
  %v1699 = vadd.f32 %v1686, %v1698
  %v1700 = vpop.f32.mrf.mxu0
  %1701 = vdwg.mxu0
  %1702 = vmatpush.bf16.msra.mxu0 %v1115
  %1703 = vmatpush.bf16.msra.mxu0 %v1111
  %1704 = vmatpush.bf16.msra.mxu0 %v1107
  %1705 = vmatpush.bf16.msra.mxu0 %v1103
  %1706 = vmatpush.bf16.msra.mxu0 %v1099
  %1707 = vmatpush.bf16.msra.mxu0 %v1095
  %1708 = vmatpush.bf16.msra.mxu0 %v1091
  %1709 = vmatpush.bf16.msra.mxu0 %v1087
  %1710 = vmatmul.bf16.gmra.mxu0 %v302
  %v1711 = vpop.f32.mrf.mxu0
  %v1712 = vadd.f32 %v283, %v1711
  %v1713 = vpop.f32.mrf.mxu0
  %1714 = vdwg.mxu0
  %1715 = vmatpush.bf16.msra.mxu0 %v1147
  %1716 = vmatpush.bf16.msra.mxu0 %v1143
  %1717 = vmatpush.bf16.msra.mxu0 %v1139
  %1718 = vmatpush.bf16.msra.mxu0 %v1135
  %1719 = vmatpush.bf16.msra.mxu0 %v1131
  %1720 = vmatpush.bf16.msra.mxu0 %v1127
  %1721 = vmatpush.bf16.msra.mxu0 %v1123
  %1722 = vmatpush.bf16.msra.mxu0 %v1119
  %1723 = vmatmul.bf16.gmra.mxu0 %v303
  %v1724 = vpop.f32.mrf.mxu0
  %v1725 = vadd.f32 %v1712, %v1724
  %v1726 = vpop.f32.mrf.mxu0
  %1727 = vdwg.mxu0
  %1728 = vmatpush.bf16.msra.mxu0 %v1179
  %1729 = vmatpush.bf16.msra.mxu0 %v1175
  %1730 = vmatpush.bf16.msra.mxu0 %v1171
  %1731 = vmatpush.bf16.msra.mxu0 %v1167
  %1732 = vmatpush.bf16.msra.mxu0 %v1163
  %1733 = vmatpush.bf16.msra.mxu0 %v1159
  %1734 = vmatpush.bf16.msra.mxu0 %v1155
  %1735 = vmatpush.bf16.msra.mxu0 %v1151
  %1736 = vmatmul.bf16.gmra.mxu0 %v304
  %v1737 = vpop.f32.mrf.mxu0
  %v1738 = vadd.f32 %v1725, %v1737
  %v1739 = vpop.f32.mrf.mxu0
  %1740 = vdwg.mxu0
  %1741 = vmatpush.bf16.msra.mxu0 %v1211
  %1742 = vmatpush.bf16.msra.mxu0 %v1207
  %1743 = vmatpush.bf16.msra.mxu0 %v1203
  %1744 = vmatpush.bf16.msra.mxu0 %v1199
  %1745 = vmatpush.bf16.msra.mxu0 %v1195
  %1746 = vmatpush.bf16.msra.mxu0 %v1191
  %1747 = vmatpush.bf16.msra.mxu0 %v1187
  %1748 = vmatpush.bf16.msra.mxu0 %v1183
  %1749 = vmatmul.bf16.gmra.mxu0 %v305
  %v1750 = vpop.f32.mrf.mxu0
  %v1751 = vadd.f32 %v1738, %v1750
  %v1752 = vpop.f32.mrf.mxu0
  %1753 = vdwg.mxu0
  %1754 = vmatpush.bf16.msra.mxu0 %v1243
  %1755 = vmatpush.bf16.msra.mxu0 %v1239
  %1756 = vmatpush.bf16.msra.mxu0 %v1235
  %1757 = vmatpush.bf16.msra.mxu0 %v1231
  %1758 = vmatpush.bf16.msra.mxu0 %v1227
  %1759 = vmatpush.bf16.msra.mxu0 %v1223
  %1760 = vmatpush.bf16.msra.mxu0 %v1219
  %1761 = vmatpush.bf16.msra.mxu0 %v1215
  %1762 = vmatmul.bf16.gmra.mxu0 %v306
  %v1763 = vpop.f32.mrf.mxu0
  %v1764 = vadd.f32 %v1751, %v1763
  %v1765 = vpop.f32.mrf.mxu0
  %1766 = vdwg.mxu0
  %1767 = vmatpush.bf16.msra.mxu0 %v1275
  %1768 = vmatpush.bf16.msra.mxu0 %v1271
  %1769 = vmatpush.bf16.msra.mxu0 %v1267
  %1770 = vmatpush.bf16.msra.mxu0 %v1263
  %1771 = vmatpush.bf16.msra.mxu0 %v1259
  %1772 = vmatpush.bf16.msra.mxu0 %v1255
  %1773 = vmatpush.bf16.msra.mxu0 %v1251
  %1774 = vmatpush.bf16.msra.mxu0 %v1247
  %1775 = vmatmul.bf16.gmra.mxu0 %v307
  %v1776 = vpop.f32.mrf.mxu0
  %v1777 = vadd.f32 %v1764, %v1776
  %v1778 = vpop.f32.mrf.mxu0
  %1779 = vdwg.mxu0
  %1780 = vmatpush.bf16.msra.mxu0 %v1307
  %1781 = vmatpush.bf16.msra.mxu0 %v1303
  %1782 = vmatpush.bf16.msra.mxu0 %v1299
  %1783 = vmatpush.bf16.msra.mxu0 %v1295
  %1784 = vmatpush.bf16.msra.mxu0 %v1291
  %1785 = vmatpush.bf16.msra.mxu0 %v1287
  %1786 = vmatpush.bf16.msra.mxu0 %v1283
  %1787 = vmatpush.bf16.msra.mxu0 %v1279
  %1788 = vmatmul.bf16.gmra.mxu0 %v308
  %v1789 = vpop.f32.mrf.mxu0
  %v1790 = vadd.f32 %v1777, %v1789
  %v1791 = vpop.f32.mrf.mxu0
  %1792 = vdwg.mxu0
  %1793 = vmatpush.bf16.msra.mxu0 %v1339
  %1794 = vmatpush.bf16.msra.mxu0 %v1335
  %1795 = vmatpush.bf16.msra.mxu0 %v1331
  %1796 = vmatpush.bf16.msra.mxu0 %v1327
  %1797 = vmatpush.bf16.msra.mxu0 %v1323
  %1798 = vmatpush.bf16.msra.mxu0 %v1319
  %1799 = vmatpush.bf16.msra.mxu0 %v1315
  %1800 = vmatpush.bf16.msra.mxu0 %v1311
  %1801 = vmatmul.bf16.gmra.mxu0 %v309
  %v1802 = vpop.f32.mrf.mxu0
  %v1803 = vadd.f32 %v1790, %v1802
  %v1804 = vpop.f32.mrf.mxu0
  %1805 = vdwg.mxu0
  %1806 = vmatpush.bf16.msra.mxu0 %v1116
  %1807 = vmatpush.bf16.msra.mxu0 %v1112
  %1808 = vmatpush.bf16.msra.mxu0 %v1108
  %1809 = vmatpush.bf16.msra.mxu0 %v1104
  %1810 = vmatpush.bf16.msra.mxu0 %v1100
  %1811 = vmatpush.bf16.msra.mxu0 %v1096
  %1812 = vmatpush.bf16.msra.mxu0 %v1092
  %1813 = vmatpush.bf16.msra.mxu0 %v1088
  %1814 = vmatmul.bf16.gmra.mxu0 %v302
  %v1815 = vpop.f32.mrf.mxu0
  %v1816 = vadd.f32 %v284, %v1815
  %v1817 = vpop.f32.mrf.mxu0
  %1818 = vdwg.mxu0
  %1819 = vmatpush.bf16.msra.mxu0 %v1148
  %1820 = vmatpush.bf16.msra.mxu0 %v1144
  %1821 = vmatpush.bf16.msra.mxu0 %v1140
  %1822 = vmatpush.bf16.msra.mxu0 %v1136
  %1823 = vmatpush.bf16.msra.mxu0 %v1132
  %1824 = vmatpush.bf16.msra.mxu0 %v1128
  %1825 = vmatpush.bf16.msra.mxu0 %v1124
  %1826 = vmatpush.bf16.msra.mxu0 %v1120
  %1827 = vmatmul.bf16.gmra.mxu0 %v303
  %v1828 = vpop.f32.mrf.mxu0
  %v1829 = vadd.f32 %v1816, %v1828
  %v1830 = vpop.f32.mrf.mxu0
  %1831 = vdwg.mxu0
  %1832 = vmatpush.bf16.msra.mxu0 %v1180
  %1833 = vmatpush.bf16.msra.mxu0 %v1176
  %1834 = vmatpush.bf16.msra.mxu0 %v1172
  %1835 = vmatpush.bf16.msra.mxu0 %v1168
  %1836 = vmatpush.bf16.msra.mxu0 %v1164
  %1837 = vmatpush.bf16.msra.mxu0 %v1160
  %1838 = vmatpush.bf16.msra.mxu0 %v1156
  %1839 = vmatpush.bf16.msra.mxu0 %v1152
  %1840 = vmatmul.bf16.gmra.mxu0 %v304
  %v1841 = vpop.f32.mrf.mxu0
  %v1842 = vadd.f32 %v1829, %v1841
  %v1843 = vpop.f32.mrf.mxu0
  %1844 = vdwg.mxu0
  %1845 = vmatpush.bf16.msra.mxu0 %v1212
  %1846 = vmatpush.bf16.msra.mxu0 %v1208
  %1847 = vmatpush.bf16.msra.mxu0 %v1204
  %1848 = vmatpush.bf16.msra.mxu0 %v1200
  %1849 = vmatpush.bf16.msra.mxu0 %v1196
  %1850 = vmatpush.bf16.msra.mxu0 %v1192
  %1851 = vmatpush.bf16.msra.mxu0 %v1188
  %1852 = vmatpush.bf16.msra.mxu0 %v1184
  %1853 = vmatmul.bf16.gmra.mxu0 %v305
  %v1854 = vpop.f32.mrf.mxu0
  %v1855 = vadd.f32 %v1842, %v1854
  %v1856 = vpop.f32.mrf.mxu0
  %1857 = vdwg.mxu0
  %1858 = vmatpush.bf16.msra.mxu0 %v1244
  %1859 = vmatpush.bf16.msra.mxu0 %v1240
  %1860 = vmatpush.bf16.msra.mxu0 %v1236
  %1861 = vmatpush.bf16.msra.mxu0 %v1232
  %1862 = vmatpush.bf16.msra.mxu0 %v1228
  %1863 = vmatpush.bf16.msra.mxu0 %v1224
  %1864 = vmatpush.bf16.msra.mxu0 %v1220
  %1865 = vmatpush.bf16.msra.mxu0 %v1216
  %1866 = vmatmul.bf16.gmra.mxu0 %v306
  %v1867 = vpop.f32.mrf.mxu0
  %v1868 = vadd.f32 %v1855, %v1867
  %v1869 = vpop.f32.mrf.mxu0
  %1870 = vdwg.mxu0
  %1871 = vmatpush.bf16.msra.mxu0 %v1276
  %1872 = vmatpush.bf16.msra.mxu0 %v1272
  %1873 = vmatpush.bf16.msra.mxu0 %v1268
  %1874 = vmatpush.bf16.msra.mxu0 %v1264
  %1875 = vmatpush.bf16.msra.mxu0 %v1260
  %1876 = vmatpush.bf16.msra.mxu0 %v1256
  %1877 = vmatpush.bf16.msra.mxu0 %v1252
  %1878 = vmatpush.bf16.msra.mxu0 %v1248
  %1879 = vmatmul.bf16.gmra.mxu0 %v307
  %v1880 = vpop.f32.mrf.mxu0
  %v1881 = vadd.f32 %v1868, %v1880
  %v1882 = vpop.f32.mrf.mxu0
  %1883 = vdwg.mxu0
  %1884 = vmatpush.bf16.msra.mxu0 %v1308
  %1885 = vmatpush.bf16.msra.mxu0 %v1304
  %1886 = vmatpush.bf16.msra.mxu0 %v1300
  %1887 = vmatpush.bf16.msra.mxu0 %v1296
  %1888 = vmatpush.bf16.msra.mxu0 %v1292
  %1889 = vmatpush.bf16.msra.mxu0 %v1288
  %1890 = vmatpush.bf16.msra.mxu0 %v1284
  %1891 = vmatpush.bf16.msra.mxu0 %v1280
  %1892 = vmatmul.bf16.gmra.mxu0 %v308
  %v1893 = vpop.f32.mrf.mxu0
  %v1894 = vadd.f32 %v1881, %v1893
  %v1895 = vpop.f32.mrf.mxu0
  %1896 = vdwg.mxu0
  %1897 = vmatpush.bf16.msra.mxu0 %v1340
  %1898 = vmatpush.bf16.msra.mxu0 %v1336
  %1899 = vmatpush.bf16.msra.mxu0 %v1332
  %1900 = vmatpush.bf16.msra.mxu0 %v1328
  %1901 = vmatpush.bf16.msra.mxu0 %v1324
  %1902 = vmatpush.bf16.msra.mxu0 %v1320
  %1903 = vmatpush.bf16.msra.mxu0 %v1316
  %1904 = vmatpush.bf16.msra.mxu0 %v1312
  %1905 = vmatmul.bf16.gmra.mxu0 %v309
  %v1906 = vpop.f32.mrf.mxu0
  %v1907 = vadd.f32 %v1894, %v1906
  %v1908 = vpop.f32.mrf.mxu0
  %1909 = vdwg.mxu0
  %1910 = vmatpush.bf16.msra.mxu0 %v1117
  %1911 = vmatpush.bf16.msra.mxu0 %v1113
  %1912 = vmatpush.bf16.msra.mxu0 %v1109
  %1913 = vmatpush.bf16.msra.mxu0 %v1105
  %1914 = vmatpush.bf16.msra.mxu0 %v1101
  %1915 = vmatpush.bf16.msra.mxu0 %v1097
  %1916 = vmatpush.bf16.msra.mxu0 %v1093
  %1917 = vmatpush.bf16.msra.mxu0 %v1089
  %1918 = vmatmul.bf16.gmra.mxu0 %v302
  %v1919 = vpop.f32.mrf.mxu0
  %v1920 = vadd.f32 %v285, %v1919
  %v1921 = vpop.f32.mrf.mxu0
  %1922 = vdwg.mxu0
  %1923 = vmatpush.bf16.msra.mxu0 %v1149
  %1924 = vmatpush.bf16.msra.mxu0 %v1145
  %1925 = vmatpush.bf16.msra.mxu0 %v1141
  %1926 = vmatpush.bf16.msra.mxu0 %v1137
  %1927 = vmatpush.bf16.msra.mxu0 %v1133
  %1928 = vmatpush.bf16.msra.mxu0 %v1129
  %1929 = vmatpush.bf16.msra.mxu0 %v1125
  %1930 = vmatpush.bf16.msra.mxu0 %v1121
  %1931 = vmatmul.bf16.gmra.mxu0 %v303
  %v1932 = vpop.f32.mrf.mxu0
  %v1933 = vadd.f32 %v1920, %v1932
  %v1934 = vpop.f32.mrf.mxu0
  %1935 = vdwg.mxu0
  %1936 = vmatpush.bf16.msra.mxu0 %v1181
  %1937 = vmatpush.bf16.msra.mxu0 %v1177
  %1938 = vmatpush.bf16.msra.mxu0 %v1173
  %1939 = vmatpush.bf16.msra.mxu0 %v1169
  %1940 = vmatpush.bf16.msra.mxu0 %v1165
  %1941 = vmatpush.bf16.msra.mxu0 %v1161
  %1942 = vmatpush.bf16.msra.mxu0 %v1157
  %1943 = vmatpush.bf16.msra.mxu0 %v1153
  %1944 = vmatmul.bf16.gmra.mxu0 %v304
  %v1945 = vpop.f32.mrf.mxu0
  %v1946 = vadd.f32 %v1933, %v1945
  %v1947 = vpop.f32.mrf.mxu0
  %1948 = vdwg.mxu0
  %1949 = vmatpush.bf16.msra.mxu0 %v1213
  %1950 = vmatpush.bf16.msra.mxu0 %v1209
  %1951 = vmatpush.bf16.msra.mxu0 %v1205
  %1952 = vmatpush.bf16.msra.mxu0 %v1201
  %1953 = vmatpush.bf16.msra.mxu0 %v1197
  %1954 = vmatpush.bf16.msra.mxu0 %v1193
  %1955 = vmatpush.bf16.msra.mxu0 %v1189
  %1956 = vmatpush.bf16.msra.mxu0 %v1185
  %1957 = vmatmul.bf16.gmra.mxu0 %v305
  %v1958 = vpop.f32.mrf.mxu0
  %v1959 = vadd.f32 %v1946, %v1958
  %v1960 = vpop.f32.mrf.mxu0
  %1961 = vdwg.mxu0
  %1962 = vmatpush.bf16.msra.mxu0 %v1245
  %1963 = vmatpush.bf16.msra.mxu0 %v1241
  %1964 = vmatpush.bf16.msra.mxu0 %v1237
  %1965 = vmatpush.bf16.msra.mxu0 %v1233
  %1966 = vmatpush.bf16.msra.mxu0 %v1229
  %1967 = vmatpush.bf16.msra.mxu0 %v1225
  %1968 = vmatpush.bf16.msra.mxu0 %v1221
  %1969 = vmatpush.bf16.msra.mxu0 %v1217
  %1970 = vmatmul.bf16.gmra.mxu0 %v306
  %v1971 = vpop.f32.mrf.mxu0
  %v1972 = vadd.f32 %v1959, %v1971
  %v1973 = vpop.f32.mrf.mxu0
  %1974 = vdwg.mxu0
  %1975 = vmatpush.bf16.msra.mxu0 %v1277
  %1976 = vmatpush.bf16.msra.mxu0 %v1273
  %1977 = vmatpush.bf16.msra.mxu0 %v1269
  %1978 = vmatpush.bf16.msra.mxu0 %v1265
  %1979 = vmatpush.bf16.msra.mxu0 %v1261
  %1980 = vmatpush.bf16.msra.mxu0 %v1257
  %1981 = vmatpush.bf16.msra.mxu0 %v1253
  %1982 = vmatpush.bf16.msra.mxu0 %v1249
  %1983 = vmatmul.bf16.gmra.mxu0 %v307
  %v1984 = vpop.f32.mrf.mxu0
  %v1985 = vadd.f32 %v1972, %v1984
  %v1986 = vpop.f32.mrf.mxu0
  %1987 = vdwg.mxu0
  %1988 = vmatpush.bf16.msra.mxu0 %v1309
  %1989 = vmatpush.bf16.msra.mxu0 %v1305
  %1990 = vmatpush.bf16.msra.mxu0 %v1301
  %1991 = vmatpush.bf16.msra.mxu0 %v1297
  %1992 = vmatpush.bf16.msra.mxu0 %v1293
  %1993 = vmatpush.bf16.msra.mxu0 %v1289
  %1994 = vmatpush.bf16.msra.mxu0 %v1285
  %1995 = vmatpush.bf16.msra.mxu0 %v1281
  %1996 = vmatmul.bf16.gmra.mxu0 %v308
  %v1997 = vpop.f32.mrf.mxu0
  %v1998 = vadd.f32 %v1985, %v1997
  %v1999 = vpop.f32.mrf.mxu0
  %2000 = vdwg.mxu0
  %2001 = vmatpush.bf16.msra.mxu0 %v1341
  %2002 = vmatpush.bf16.msra.mxu0 %v1337
  %2003 = vmatpush.bf16.msra.mxu0 %v1333
  %2004 = vmatpush.bf16.msra.mxu0 %v1329
  %2005 = vmatpush.bf16.msra.mxu0 %v1325
  %2006 = vmatpush.bf16.msra.mxu0 %v1321
  %2007 = vmatpush.bf16.msra.mxu0 %v1317
  %2008 = vmatpush.bf16.msra.mxu0 %v1313
  %2009 = vmatmul.bf16.gmra.mxu0 %v309
  %v2010 = vpop.f32.mrf.mxu0
  %v2011 = vadd.f32 %v1998, %v2010
  %v2012 = vpop.f32.mrf.mxu0
  %2013 = vdwg.mxu0
  %v2014 = vmax.f32 %v1699, 0.0
  %v2015 = vmax.f32 %v1803, 0.0
  %v2016 = vmax.f32 %v1907, 0.0
  %v2017 = vmax.f32 %v2011, 0.0
  %v2018 = vpack.c.bf16 %v2014, %v2014
  %v2019 = vpack.c.bf16 %v2015, %v2015
  %v2020 = vpack.c.bf16 %v2016, %v2016
  %v2021 = vpack.c.bf16 %v2017, %v2017
  %v2022 = vld [vmem:[%s3] sm:$0xf]
  %v2023 = vld [vmem:[%s3 + $0x4] sm:$0xf]
  %v2024 = vld [vmem:[%s3 + $0x8] sm:$0xf]
  %v2025 = vld [vmem:[%s3 + $0xc] sm:$0xf]
  %v2026 = vld [vmem:[%s3 + $0x10] sm:$0xf]
  %v2027 = vld [vmem:[%s3 + $0x14] sm:$0xf]
  %v2028 = vld [vmem:[%s3 + $0x18] sm:$0xf]
  %v2029 = vld [vmem:[%s3 + $0x1c] sm:$0xf]
  %v2030 = vld [vmem:[%s3 + $0x20] sm:$0xf]
  %v2031 = vld [vmem:[%s3 + $0x24] sm:$0xf]
  %v2032 = vld [vmem:[%s3 + $0x28] sm:$0xf]
  %v2033 = vld [vmem:[%s3 + $0x2c] sm:$0xf]
  %v2034 = vld [vmem:[%s3 + $0x30] sm:$0xf]
  %v2035 = vld [vmem:[%s3 + $0x34] sm:$0xf]
  %v2036 = vld [vmem:[%s3 + $0x38] sm:$0xf]
  %v2037 = vld [vmem:[%s3 + $0x3c] sm:$0xf]
  %v2038 = vld [vmem:[%s3 + $0x40] sm:$0xf]
  %v2039 = vld [vmem:[%s3 + $0x44] sm:$0xf]
  %v2040 = vld [vmem:[%s3 + $0x48] sm:$0xf]
  %v2041 = vld [vmem:[%s3 + $0x4c] sm:$0xf]
  %v2042 = vld [vmem:[%s3 + $0x50] sm:$0xf]
  %v2043 = vld [vmem:[%s3 + $0x54] sm:$0xf]
  %v2044 = vld [vmem:[%s3 + $0x58] sm:$0xf]
  %v2045 = vld [vmem:[%s3 + $0x5c] sm:$0xf]
  %v2046 = vld [vmem:[%s3 + $0x60] sm:$0xf]
  %v2047 = vld [vmem:[%s3 + $0x64] sm:$0xf]
  %v2048 = vld [vmem:[%s3 + $0x68] sm:$0xf]
  %v2049 = vld [vmem:[%s3 + $0x6c] sm:$0xf]
  %v2050 = vld [vmem:[%s3 + $0x70] sm:$0xf]
  %v2051 = vld [vmem:[%s3 + $0x74] sm:$0xf]
  %v2052 = vld [vmem:[%s3 + $0x78] sm:$0xf]
  %v2053 = vld [vmem:[%s3 + $0x7c] sm:$0xf]
  %v2054 = vld [vmem:[%s3 + $0x80] sm:$0xf]
  %v2055 = vld [vmem:[%s3 + $0x84] sm:$0xf]
  %v2056 = vld [vmem:[%s3 + $0x88] sm:$0xf]
  %v2057 = vld [vmem:[%s3 + $0x8c] sm:$0xf]
  %v2058 = vld [vmem:[%s3 + $0x90] sm:$0xf]
  %v2059 = vld [vmem:[%s3 + $0x94] sm:$0xf]
  %v2060 = vld [vmem:[%s3 + $0x98] sm:$0xf]
  %v2061 = vld [vmem:[%s3 + $0x9c] sm:$0xf]
  %v2062 = vld [vmem:[%s3 + $0xa0] sm:$0xf]
  %v2063 = vld [vmem:[%s3 + $0xa4] sm:$0xf]
  %v2064 = vld [vmem:[%s3 + $0xa8] sm:$0xf]
  %v2065 = vld [vmem:[%s3 + $0xac] sm:$0xf]
  %v2066 = vld [vmem:[%s3 + $0xb0] sm:$0xf]
  %v2067 = vld [vmem:[%s3 + $0xb4] sm:$0xf]
  %v2068 = vld [vmem:[%s3 + $0xb8] sm:$0xf]
  %v2069 = vld [vmem:[%s3 + $0xbc] sm:$0xf]
  %v2070 = vld [vmem:[%s3 + $0xc0] sm:$0xf]
  %v2071 = vld [vmem:[%s3 + $0xc4] sm:$0xf]
  %v2072 = vld [vmem:[%s3 + $0xc8] sm:$0xf]
  %v2073 = vld [vmem:[%s3 + $0xcc] sm:$0xf]
  %v2074 = vld [vmem:[%s3 + $0xd0] sm:$0xf]
  %v2075 = vld [vmem:[%s3 + $0xd4] sm:$0xf]
  %v2076 = vld [vmem:[%s3 + $0xd8] sm:$0xf]
  %v2077 = vld [vmem:[%s3 + $0xdc] sm:$0xf]
  %v2078 = vld [vmem:[%s3 + $0xe0] sm:$0xf]
  %v2079 = vld [vmem:[%s3 + $0xe4] sm:$0xf]
  %v2080 = vld [vmem:[%s3 + $0xe8] sm:$0xf]
  %v2081 = vld [vmem:[%s3 + $0xec] sm:$0xf]
  %v2082 = vld [vmem:[%s3 + $0xf0] sm:$0xf]
  %v2083 = vld [vmem:[%s3 + $0xf4] sm:$0xf]
  %v2084 = vld [vmem:[%s3 + $0xf8] sm:$0xf]
  %v2085 = vld [vmem:[%s3 + $0xfc] sm:$0xf]
  %v2086 = vld [vmem:[%s4] sm:$0x1]
  %v2088 = vperm.slane %v2086, 0
  %v2154 = vunpack.c.l.b16 %v2022
  %v2155 = vunpack.c.l.b16 %v2023
  %v2156 = vunpack.c.l.b16 %v2024
  %v2157 = vunpack.c.l.b16 %v2025
  %v2158 = vunpack.c.l.b16 %v2026
  %v2159 = vunpack.c.l.b16 %v2027
  %v2160 = vunpack.c.l.b16 %v2028
  %v2161 = vunpack.c.l.b16 %v2029
  %v2162 = vunpack.c.l.b16 %v2030
  %v2163 = vunpack.c.l.b16 %v2031
  %v2164 = vunpack.c.l.b16 %v2032
  %v2165 = vunpack.c.l.b16 %v2033
  %v2166 = vunpack.c.l.b16 %v2034
  %v2167 = vunpack.c.l.b16 %v2035
  %v2168 = vunpack.c.l.b16 %v2036
  %v2169 = vunpack.c.l.b16 %v2037
  %v2170 = vunpack.c.l.b16 %v2038
  %v2171 = vunpack.c.l.b16 %v2039
  %v2172 = vunpack.c.l.b16 %v2040
  %v2173 = vunpack.c.l.b16 %v2041
  %v2174 = vunpack.c.l.b16 %v2042
  %v2175 = vunpack.c.l.b16 %v2043
  %v2176 = vunpack.c.l.b16 %v2044
  %v2177 = vunpack.c.l.b16 %v2045
  %v2178 = vunpack.c.l.b16 %v2046
  %v2179 = vunpack.c.l.b16 %v2047
  %v2180 = vunpack.c.l.b16 %v2048
  %v2181 = vunpack.c.l.b16 %v2049
  %v2182 = vunpack.c.l.b16 %v2050
  %v2183 = vunpack.c.l.b16 %v2051
  %v2184 = vunpack.c.l.b16 %v2052
  %v2185 = vunpack.c.l.b16 %v2053
  %v2186 = vunpack.c.l.b16 %v2054
  %v2187 = vunpack.c.l.b16 %v2055
  %v2188 = vunpack.c.l.b16 %v2056
  %v2189 = vunpack.c.l.b16 %v2057
  %v2190 = vunpack.c.l.b16 %v2058
  %v2191 = vunpack.c.l.b16 %v2059
  %v2192 = vunpack.c.l.b16 %v2060
  %v2193 = vunpack.c.l.b16 %v2061
  %v2194 = vunpack.c.l.b16 %v2062
  %v2195 = vunpack.c.l.b16 %v2063
  %v2196 = vunpack.c.l.b16 %v2064
  %v2197 = vunpack.c.l.b16 %v2065
  %v2198 = vunpack.c.l.b16 %v2066
  %v2199 = vunpack.c.l.b16 %v2067
  %v2200 = vunpack.c.l.b16 %v2068
  %v2201 = vunpack.c.l.b16 %v2069
  %v2202 = vunpack.c.l.b16 %v2070
  %v2203 = vunpack.c.l.b16 %v2071
  %v2204 = vunpack.c.l.b16 %v2072
  %v2205 = vunpack.c.l.b16 %v2073
  %v2206 = vunpack.c.l.b16 %v2074
  %v2207 = vunpack.c.l.b16 %v2075
  %v2208 = vunpack.c.l.b16 %v2076
  %v2209 = vunpack.c.l.b16 %v2077
  %v2210 = vunpack.c.l.b16 %v2078
  %v2211 = vunpack.c.l.b16 %v2079
  %v2212 = vunpack.c.l.b16 %v2080
  %v2213 = vunpack.c.l.b16 %v2081
  %v2214 = vunpack.c.l.b16 %v2082
  %v2215 = vunpack.c.l.b16 %v2083
  %v2216 = vunpack.c.l.b16 %v2084
  %v2217 = vunpack.c.l.b16 %v2085
  %v2218 = vpack.c.b16 %v2155, %v2154
  %v2219 = vpack.c.b16 %v2157, %v2156
  %v2220 = vpack.c.b16 %v2159, %v2158
  %v2221 = vpack.c.b16 %v2161, %v2160
  %v2222 = vpack.c.b16 %v2163, %v2162
  %v2223 = vpack.c.b16 %v2165, %v2164
  %v2224 = vpack.c.b16 %v2167, %v2166
  %v2225 = vpack.c.b16 %v2169, %v2168
  %v2226 = vpack.c.b16 %v2171, %v2170
  %v2227 = vpack.c.b16 %v2173, %v2172
  %v2228 = vpack.c.b16 %v2175, %v2174
  %v2229 = vpack.c.b16 %v2177, %v2176
  %v2230 = vpack.c.b16 %v2179, %v2178
  %v2231 = vpack.c.b16 %v2181, %v2180
  %v2232 = vpack.c.b16 %v2183, %v2182
  %v2233 = vpack.c.b16 %v2185, %v2184
  %v2234 = vpack.c.b16 %v2187, %v2186
  %v2235 = vpack.c.b16 %v2189, %v2188
  %v2236 = vpack.c.b16 %v2191, %v2190
  %v2237 = vpack.c.b16 %v2193, %v2192
  %v2238 = vpack.c.b16 %v2195, %v2194
  %v2239 = vpack.c.b16 %v2197, %v2196
  %v2240 = vpack.c.b16 %v2199, %v2198
  %v2241 = vpack.c.b16 %v2201, %v2200
  %v2242 = vpack.c.b16 %v2203, %v2202
  %v2243 = vpack.c.b16 %v2205, %v2204
  %v2244 = vpack.c.b16 %v2207, %v2206
  %v2245 = vpack.c.b16 %v2209, %v2208
  %v2246 = vpack.c.b16 %v2211, %v2210
  %v2247 = vpack.c.b16 %v2213, %v2212
  %v2248 = vpack.c.b16 %v2215, %v2214
  %v2249 = vpack.c.b16 %v2217, %v2216
  %2282 = vmatpush.bf16.msra.mxu0 %v2225
  %2283 = vmatpush.bf16.msra.mxu0 %v2224
  %2284 = vmatpush.bf16.msra.mxu0 %v2223
  %2285 = vmatpush.bf16.msra.mxu0 %v2222
  %2286 = vmatpush.bf16.msra.mxu0 %v2221
  %2287 = vmatpush.bf16.msra.mxu0 %v2220
  %2288 = vmatpush.bf16.msra.mxu0 %v2219
  %2289 = vmatpush.bf16.msra.mxu0 %v2218
  %2290 = vmatmul.bf16.gmra.mxu0 %v2018
  %v2291 = vpop.f32.mrf.mxu0
  %v2292 = vadd.f32 %v2088, %v2291
  %v2293 = vpop.f32.mrf.mxu0
  %2294 = vdwg.mxu0
  %2295 = vmatpush.bf16.msra.mxu0 %v2233
  %2296 = vmatpush.bf16.msra.mxu0 %v2232
  %2297 = vmatpush.bf16.msra.mxu0 %v2231
  %2298 = vmatpush.bf16.msra.mxu0 %v2230
  %2299 = vmatpush.bf16.msra.mxu0 %v2229
  %2300 = vmatpush.bf16.msra.mxu0 %v2228
  %2301 = vmatpush.bf16.msra.mxu0 %v2227
  %2302 = vmatpush.bf16.msra.mxu0 %v2226
  %2303 = vmatmul.bf16.gmra.mxu0 %v2019
  %v2304 = vpop.f32.mrf.mxu0
  %v2305 = vadd.f32 %v2292, %v2304
  %v2306 = vpop.f32.mrf.mxu0
  %2307 = vdwg.mxu0
  %2308 = vmatpush.bf16.msra.mxu0 %v2241
  %2309 = vmatpush.bf16.msra.mxu0 %v2240
  %2310 = vmatpush.bf16.msra.mxu0 %v2239
  %2311 = vmatpush.bf16.msra.mxu0 %v2238
  %2312 = vmatpush.bf16.msra.mxu0 %v2237
  %2313 = vmatpush.bf16.msra.mxu0 %v2236
  %2314 = vmatpush.bf16.msra.mxu0 %v2235
  %2315 = vmatpush.bf16.msra.mxu0 %v2234
  %2316 = vmatmul.bf16.gmra.mxu0 %v2020
  %v2317 = vpop.f32.mrf.mxu0
  %v2318 = vadd.f32 %v2305, %v2317
  %v2319 = vpop.f32.mrf.mxu0
  %2320 = vdwg.mxu0
  %2321 = vmatpush.bf16.msra.mxu0 %v2249
  %2322 = vmatpush.bf16.msra.mxu0 %v2248
  %2323 = vmatpush.bf16.msra.mxu0 %v2247
  %2324 = vmatpush.bf16.msra.mxu0 %v2246
  %2325 = vmatpush.bf16.msra.mxu0 %v2245
  %2326 = vmatpush.bf16.msra.mxu0 %v2244
  %2327 = vmatpush.bf16.msra.mxu0 %v2243
  %2328 = vmatpush.bf16.msra.mxu0 %v2242
  %2329 = vmatmul.bf16.gmra.mxu0 %v2021
  %v2330 = vpop.f32.mrf.mxu0
  %v2331 = vadd.f32 %v2318, %v2330
  %v2332 = vpop.f32.mrf.mxu0
  %2333 = vdwg.mxu0
  %v2334 = vlaneseq
  %v2335 = vand.u32 %v2334, 127
  %vm2336 = vcmp.lt.s32.totalorder %v2335, 10
  %v2337 = vsel %vm2336, %v2331, -1e+30
  %2338 = vmax.xlane.f32.xlu0 %v2337
  %v2339 = vpop.xlane.xlu0 %2338
  %v2340 = vsub.f32 %v2337, %v2339
  %v2341 = vmul.f32 %v2340, 1.442695
  %v2342 = vpow.pop %v2341
  %v2343 = vsel %vm2336, %v2342, 0.0
  %2344 = vadd.xlane.f32.xlu0 %v2343
  %v2345 = vpop.xlane.xlu0 %2344
  %v2346 = vlog2.pop %v2345
  %v2347 = vmul.f32 %v2346, 0.6931472
  %v2348 = vadd.f32 %v2339, %v2347
  %v2349 = vsub.f32 %v2331, %v2348
  %2350 = vst [vmem:[%s5] sm:$0xff] %v2349
  // Predicated region
  $region22: #{net_forward.3} parent=0 // pred_check
    _
  $region23: #{net_forward.3} parent=0 // pred_check_branch
    %2352 = sbr.rel (0) target = $region25
  $region24: #{net_forward.3} parent=0 // pred_region
    _
  $region25: #{net_forward.3} parent=0 // pred_fallthru
    _
  // Predicated region
  $region26: #{net_forward.3} parent=0 // pred_check
    _
  $region27: #{net_forward.3} parent=0 // pred_check_branch
    %2354 = sbr.rel (0) target = $region29
  $region28: #{net_forward.3} parent=0 // pred_region
    _
  $region29: #{net_forward.3} parent=0 // pred_fallthru
    _

// kernel: net_forward.2
$region0: #{net_forward.2}
  #allocation0 [shape = 'u32[]', space=smem, size = 0x4, offset = 0x4, fixed_abs, tag = 'smem constant byte address 0x4 - core index']
  #allocation1 [shape = 'u32[72,128]{1,0:T(1,128)}', space=vmem, size = 0x9000, scoped, tag = 'internal scratch']
  #allocation2 [shape = 'f32[144,32]{1,0:T(8,128)}', space=vmem, size = 0x12000, scoped, tag = 'scratch operand']
  #allocation3 [shape = 'f32[12,12,32]{2,1,0:T(8,128)}', space=vmem, size = 0x18000, scoped, tag = 'scratch operand']
  #allocation4 [shape = 'bf16[512,800]{1,0:T(8,128)(2,1)}', space=vmem, size = 0xe0000, scoped, tag = 'scratch operand']
  #allocation5 [shape = 'f32[8,32,64]{2,1,0:T(8,128)}', space=vmem, size = 0x20000, scoped, tag = 'scratch operand']
  %s0 = inlined_call_operand.vmem [shape: bf16[8,576,32], index: 0, kind: input, shape index: {}]
  %s1 = inlined_call_operand.vmem [shape: bf16[32,32], index: 1, kind: input, shape index: {}]
  %s2 = inlined_call_operand.vmem [shape: f32[1,32], index: 2, kind: input, shape index: {}]
  %s3 = inlined_call_operand.vmem [shape: bf16[800,64], index: 3, kind: input, shape index: {}]
  %s4 = inlined_call_operand.vmem [shape: f32[1,64], index: 4, kind: input, shape index: {}]
  %s5 = inlined_call_operand.vmem [shape: bf16[8,1024], index: 5, kind: output, shape index: {}]
  %s6 = sld [smem:[#allocation0]]
  $region37: #{net_forward.2} parent=0
    _
  %s8 = ssub.s32 1, %s6
  %s9 = scalar_select 0, %s8, %s6
  // Predicated region
  $region2: #{net_forward.2} parent=0 // pred_check
    _
  $region3: #{net_forward.2} parent=0 // pred_check_branch
    %11 = sbr.rel (0) target = $region5
  $region4: #{net_forward.2} parent=0 // pred_region
    _
  $region5: #{net_forward.2} parent=0 // pred_fallthru
    _
  // Predicated region
  $region6: #{net_forward.2} parent=0 // pred_check
    _
  $region7: #{net_forward.2} parent=0 // pred_check_branch
    %13 = sbr.rel (0) target = $region9
  $region8: #{net_forward.2} parent=0 // pred_region
    _
  $region9: #{net_forward.2} parent=0 // pred_fallthru
    _
  // Predicated region
  $region10: #{net_forward.2} parent=0 // pred_check
    _
  $region11: #{net_forward.2} parent=0 // pred_check_branch
    %15 = sbr.rel (0) target = $region13
  $region12: #{net_forward.2} parent=0 // pred_region
    _
  $region13: #{net_forward.2} parent=0 // pred_fallthru
    _
  // Predicated region
  $region14: #{net_forward.2} parent=0 // pred_check
    _
  $region15: #{net_forward.2} parent=0 // pred_check_branch
    %17 = sbr.rel (0) target = $region17
  $region16: #{net_forward.2} parent=0 // pred_region
    _
  $region17: #{net_forward.2} parent=0 // pred_fallthru
    _
  // Predicated region
  $region18: #{net_forward.2} parent=0 // pred_check
    _
  $region19: #{net_forward.2} parent=0 // pred_check_branch
    %19 = sbr.rel (0) target = $region21
  $region20: #{net_forward.2} parent=0 // pred_region
    _
  $region21: #{net_forward.2} parent=0 // pred_fallthru
    _
  loop: start=0, step=1, limit=8
  $region22: #{net_forward.2} parent=0 // loop_pre_header
    _
  $region23: #{net_forward.2} parent=0 // loop_header
    %s22 = sphi 0, %s26
    %p23 = scmp.ge.s32.totalorder %s22, 8
  $region24: #{net_forward.2} parent=0 // loop_header_branch
    %25 = sbr.rel (%p23) target = $region28
  $region25: #{net_forward.2} parent=0 // loop_body
    %s27 = smul.u32 %s22, 72
    %s28 = smul.addr %s27, 4
    %s29 = scalar_lea.vmem %s0, %s28
    %v30 = vld [vmem:[%s29] sm:$0xf]
    %v31 = vld [vmem:[%s29 + $0x4] sm:$0xf]
    %v32 = vld [vmem:[%s29 + $0x8] sm:$0xf]
    %v33 = vld [vmem:[%s29 + $0xc] sm:$0xf]
    %v34 = vld [vmem:[%s29 + $0x10] sm:$0xf]
    %v35 = vld [vmem:[%s29 + $0x14] sm:$0xf]
    %v36 = vld [vmem:[%s29 + $0x18] sm:$0xf]
    %v37 = vld [vmem:[%s29 + $0x1c] sm:$0xf]
    %v38 = vld [vmem:[%s29 + $0x20] sm:$0xf]
    %v39 = vld [vmem:[%s29 + $0x24] sm:$0xf]
    %v40 = vld [vmem:[%s29 + $0x28] sm:$0xf]
    %v41 = vld [vmem:[%s29 + $0x2c] sm:$0xf]
    %v42 = vld [vmem:[%s29 + $0x30] sm:$0xf]
    %v43 = vld [vmem:[%s29 + $0x34] sm:$0xf]
    %v44 = vld [vmem:[%s29 + $0x38] sm:$0xf]
    %v45 = vld [vmem:[%s29 + $0x3c] sm:$0xf]
    %v46 = vld [vmem:[%s29 + $0x40] sm:$0xf]
    %v47 = vld [vmem:[%s29 + $0x44] sm:$0xf]
    %v48 = vld [vmem:[%s29 + $0x48] sm:$0xf]
    %v49 = vld [vmem:[%s29 + $0x4c] sm:$0xf]
    %v50 = vld [vmem:[%s29 + $0x50] sm:$0xf]
    %v51 = vld [vmem:[%s29 + $0x54] sm:$0xf]
    %v52 = vld [vmem:[%s29 + $0x58] sm:$0xf]
    %v53 = vld [vmem:[%s29 + $0x5c] sm:$0xf]
    %v54 = vld [vmem:[%s29 + $0x60] sm:$0xf]
    %v55 = vld [vmem:[%s29 + $0x64] sm:$0xf]
    %v56 = vld [vmem:[%s29 + $0x68] sm:$0xf]
    %v57 = vld [vmem:[%s29 + $0x6c] sm:$0xf]
    %v58 = vld [vmem:[%s29 + $0x70] sm:$0xf]
    %v59 = vld [vmem:[%s29 + $0x74] sm:$0xf]
    %v60 = vld [vmem:[%s29 + $0x78] sm:$0xf]
    %v61 = vld [vmem:[%s29 + $0x7c] sm:$0xf]
    %v62 = vld [vmem:[%s29 + $0x80] sm:$0xf]
    %v63 = vld [vmem:[%s29 + $0x84] sm:$0xf]
    %v64 = vld [vmem:[%s29 + $0x88] sm:$0xf]
    %v65 = vld [vmem:[%s29 + $0x8c] sm:$0xf]
    %v66 = vld [vmem:[%s29 + $0x90] sm:$0xf]
    %v67 = vld [vmem:[%s29 + $0x94] sm:$0xf]
    %v68 = vld [vmem:[%s29 + $0x98] sm:$0xf]
    %v69 = vld [vmem:[%s29 + $0x9c] sm:$0xf]
    %v70 = vld [vmem:[%s29 + $0xa0] sm:$0xf]
    %v71 = vld [vmem:[%s29 + $0xa4] sm:$0xf]
    %v72 = vld [vmem:[%s29 + $0xa8] sm:$0xf]
    %v73 = vld [vmem:[%s29 + $0xac] sm:$0xf]
    %v74 = vld [vmem:[%s29 + $0xb0] sm:$0xf]
    %v75 = vld [vmem:[%s29 + $0xb4] sm:$0xf]
    %v76 = vld [vmem:[%s29 + $0xb8] sm:$0xf]
    %v77 = vld [vmem:[%s29 + $0xbc] sm:$0xf]
    %v78 = vld [vmem:[%s29 + $0xc0] sm:$0xf]
    %v79 = vld [vmem:[%s29 + $0xc4] sm:$0xf]
    %v80 = vld [vmem:[%s29 + $0xc8] sm:$0xf]
    %v81 = vld [vmem:[%s29 + $0xcc] sm:$0xf]
    %v82 = vld [vmem:[%s29 + $0xd0] sm:$0xf]
    %v83 = vld [vmem:[%s29 + $0xd4] sm:$0xf]
    %v84 = vld [vmem:[%s29 + $0xd8] sm:$0xf]
    %v85 = vld [vmem:[%s29 + $0xdc] sm:$0xf]
    %v86 = vld [vmem:[%s29 + $0xe0] sm:$0xf]
    %v87 = vld [vmem:[%s29 + $0xe4] sm:$0xf]
    %v88 = vld [vmem:[%s29 + $0xe8] sm:$0xf]
    %v89 = vld [vmem:[%s29 + $0xec] sm:$0xf]
    %v90 = vld [vmem:[%s29 + $0xf0] sm:$0xf]
    %v91 = vld [vmem:[%s29 + $0xf4] sm:$0xf]
    %v92 = vld [vmem:[%s29 + $0xf8] sm:$0xf]
    %v93 = vld [vmem:[%s29 + $0xfc] sm:$0xf]
    %v94 = vld [vmem:[%s29 + $0x100] sm:$0xf]
    %v95 = vld [vmem:[%s29 + $0x104] sm:$0xf]
    %v96 = vld [vmem:[%s29 + $0x108] sm:$0xf]
    %v97 = vld [vmem:[%s29 + $0x10c] sm:$0xf]
    %v98 = vld [vmem:[%s29 + $0x110] sm:$0xf]
    %v99 = vld [vmem:[%s29 + $0x114] sm:$0xf]
    %v100 = vld [vmem:[%s29 + $0x118] sm:$0xf]
    %v101 = vld [vmem:[%s29 + $0x11c] sm:$0xf]
    %v102 = vld [vmem:[%s1] sm:$0xf]
    %v103 = vld [vmem:[%s1 + $0x4] sm:$0xf]
    %v104 = vld [vmem:[%s1 + $0x8] sm:$0xf]
    %v105 = vld [vmem:[%s1 + $0xc] sm:$0xf]
    %v106 = vld [vmem:[%s2] sm:$0x1]
    %v108 = vperm.slane %v106, 0
    %v182 = vunpack.c.l.b16 %v30
    %v183 = vunpack.c.l.b16 %v31
    %v184 = vunpack.c.l.b16 %v32
    %v185 = vunpack.c.l.b16 %v33
    %v186 = vunpack.c.l.b16 %v34
    %v187 = vunpack.c.l.b16 %v35
    %v188 = vunpack.c.l.b16 %v36
    %v189 = vunpack.c.l.b16 %v37
    %v190 = vunpack.c.l.b16 %v38
    %v191 = vunpack.c.l.b16 %v39
    %v192 = vunpack.c.l.b16 %v40
    %v193 = vunpack.c.l.b16 %v41
    %v194 = vunpack.c.l.b16 %v42
    %v195 = vunpack.c.l.b16 %v43
    %v196 = vunpack.c.l.b16 %v44
    %v197 = vunpack.c.l.b16 %v45
    %v198 = vunpack.c.l.b16 %v46
    %v199 = vunpack.c.l.b16 %v47
    %v200 = vunpack.c.l.b16 %v48
    %v201 = vunpack.c.l.b16 %v49
    %v202 = vunpack.c.l.b16 %v50
    %v203 = vunpack.c.l.b16 %v51
    %v204 = vunpack.c.l.b16 %v52
    %v205 = vunpack.c.l.b16 %v53
    %v206 = vunpack.c.l.b16 %v54
    %v207 = vunpack.c.l.b16 %v55
    %v208 = vunpack.c.l.b16 %v56
    %v209 = vunpack.c.l.b16 %v57
    %v210 = vunpack.c.l.b16 %v58
    %v211 = vunpack.c.l.b16 %v59
    %v212 = vunpack.c.l.b16 %v60
    %v213 = vunpack.c.l.b16 %v61
    %v214 = vunpack.c.l.b16 %v62
    %v215 = vunpack.c.l.b16 %v63
    %v216 = vunpack.c.l.b16 %v64
    %v217 = vunpack.c.l.b16 %v65
    %v218 = vunpack.c.l.b16 %v66
    %v219 = vunpack.c.l.b16 %v67
    %v220 = vunpack.c.l.b16 %v68
    %v221 = vunpack.c.l.b16 %v69
    %v222 = vunpack.c.l.b16 %v70
    %v223 = vunpack.c.l.b16 %v71
    %v224 = vunpack.c.l.b16 %v72
    %v225 = vunpack.c.l.b16 %v73
    %v226 = vunpack.c.l.b16 %v74
    %v227 = vunpack.c.l.b16 %v75
    %v228 = vunpack.c.l.b16 %v76
    %v229 = vunpack.c.l.b16 %v77
    %v230 = vunpack.c.l.b16 %v78
    %v231 = vunpack.c.l.b16 %v79
    %v232 = vunpack.c.l.b16 %v80
    %v233 = vunpack.c.l.b16 %v81
    %v234 = vunpack.c.l.b16 %v82
    %v235 = vunpack.c.l.b16 %v83
    %v236 = vunpack.c.l.b16 %v84
    %v237 = vunpack.c.l.b16 %v85
    %v238 = vunpack.c.l.b16 %v86
    %v239 = vunpack.c.l.b16 %v87
    %v240 = vunpack.c.l.b16 %v88
    %v241 = vunpack.c.l.b16 %v89
    %v242 = vunpack.c.l.b16 %v90
    %v243 = vunpack.c.l.b16 %v91
    %v244 = vunpack.c.l.b16 %v92
    %v245 = vunpack.c.l.b16 %v93
    %v246 = vunpack.c.l.b16 %v94
    %v247 = vunpack.c.l.b16 %v95
    %v248 = vunpack.c.l.b16 %v96
    %v249 = vunpack.c.l.b16 %v97
    %v250 = vunpack.c.l.b16 %v98
    %v251 = vunpack.c.l.b16 %v99
    %v252 = vunpack.c.l.b16 %v100
    %v253 = vunpack.c.l.b16 %v101
    %v254 = vpack.c.b16 %v183, %v182
    %v255 = vpack.c.b16 %v185, %v184
    %v256 = vpack.c.b16 %v187, %v186
    %v257 = vpack.c.b16 %v189, %v188
    %v258 = vpack.c.b16 %v191, %v190
    %v259 = vpack.c.b16 %v193, %v192
    %v260 = vpack.c.b16 %v195, %v194
    %v261 = vpack.c.b16 %v197, %v196
    %v262 = vpack.c.b16 %v199, %v198
    %v263 = vpack.c.b16 %v201, %v200
    %v264 = vpack.c.b16 %v203, %v202
    %v265 = vpack.c.b16 %v205, %v204
    %v266 = vpack.c.b16 %v207, %v206
    %v267 = vpack.c.b16 %v209, %v208
    %v268 = vpack.c.b16 %v211, %v210
    %v269 = vpack.c.b16 %v213, %v212
    %v270 = vpack.c.b16 %v215, %v214
    %v271 = vpack.c.b16 %v217, %v216
    %v272 = vpack.c.b16 %v219, %v218
    %v273 = vpack.c.b16 %v221, %v220
    %v274 = vpack.c.b16 %v223, %v222
    %v275 = vpack.c.b16 %v225, %v224
    %v276 = vpack.c.b16 %v227, %v226
    %v277 = vpack.c.b16 %v229, %v228
    %v278 = vpack.c.b16 %v231, %v230
    %v279 = vpack.c.b16 %v233, %v232
    %v280 = vpack.c.b16 %v235, %v234
    %v281 = vpack.c.b16 %v237, %v236
    %v282 = vpack.c.b16 %v239, %v238
    %v283 = vpack.c.b16 %v241, %v240
    %v284 = vpack.c.b16 %v243, %v242
    %v285 = vpack.c.b16 %v245, %v244
    %v286 = vpack.c.b16 %v247, %v246
    %v287 = vpack.c.b16 %v249, %v248
    %v288 = vpack.c.b16 %v251, %v250
    %v289 = vpack.c.b16 %v253, %v252
    %v294 = vunpack.c.l.b16 %v102
    %v295 = vunpack.c.l.b16 %v103
    %v296 = vunpack.c.l.b16 %v104
    %v297 = vunpack.c.l.b16 %v105
    %v298 = vpack.c.b16 %v295, %v294
    %v299 = vpack.c.b16 %v297, %v296
    %vm302 = vcmask 261120
    %v304 = vsel %vm302, %v254, 0
    %v307 = vsel %vm302, %v255, 0
    %v310 = vsel %vm302, %v256, 0
    %v313 = vsel %vm302, %v257, 0
    %v316 = vsel %vm302, %v258, 0
    %v319 = vsel %vm302, %v259, 0
    %v322 = vsel %vm302, %v260, 0
    %v325 = vsel %vm302, %v261, 0
    %v328 = vsel %vm302, %v262, 0
    %v331 = vsel %vm302, %v263, 0
    %v334 = vsel %vm302, %v264, 0
    %v337 = vsel %vm302, %v265, 0
    %v340 = vsel %vm302, %v266, 0
    %v343 = vsel %vm302, %v267, 0
    %v346 = vsel %vm302, %v268, 0
    %v349 = vsel %vm302, %v269, 0
    %v352 = vsel %vm302, %v270, 0
    %v355 = vsel %vm302, %v271, 0
    %v358 = vsel %vm302, %v272, 0
    %v361 = vsel %vm302, %v273, 0
    %v364 = vsel %vm302, %v274, 0
    %v367 = vsel %vm302, %v275, 0
    %v370 = vsel %vm302, %v276, 0
    %v373 = vsel %vm302, %v277, 0
    %v376 = vsel %vm302, %v278, 0
    %v379 = vsel %vm302, %v279, 0
    %v382 = vsel %vm302, %v280, 0
    %v385 = vsel %vm302, %v281, 0
    %v388 = vsel %vm302, %v282, 0
    %v391 = vsel %vm302, %v283, 0
    %v394 = vsel %vm302, %v284, 0
    %v397 = vsel %vm302, %v285, 0
    %v400 = vsel %vm302, %v286, 0
    %v403 = vsel %vm302, %v287, 0
    %v406 = vsel %vm302, %v288, 0
    %v409 = vsel %vm302, %v289, 0
    %411 = vmatpush.bf16.msra.mxu0 0
    %412 = vmatpush.bf16.msra.mxu0 0
    %413 = vmatpush.bf16.msra.mxu0 0
    %414 = vmatpush.bf16.msra.mxu0 0
    %415 = vmatpush.bf16.msra.mxu0 0
    %416 = vmatpush.bf16.msra.mxu0 0
    %417 = vmatpush.bf16.msra.mxu0 %v299
    %418 = vmatpush.bf16.msra.mxu0 %v298
    %419 = vmatmul.bf16.gmra.mxu0 %v304
    %v420 = vpop.f32.mrf.mxu0
    %v421 = vadd.f32 %v108, %v420
    %v422 = vpop.f32.mrf.mxu0
    %v423 = vadd.f32 %v108, %v422
    %424 = vmatmul.bf16.gmra.mxu0 %v307
    %v425 = vpop.f32.mrf.mxu0
    %v426 = vadd.f32 %v108, %v425
    %v427 = vpop.f32.mrf.mxu0
    %v428 = vadd.f32 %v108, %v427
    %429 = vmatmul.bf16.gmra.mxu0 %v310
    %v430 = vpop.f32.mrf.mxu0
    %v431 = vadd.f32 %v108, %v430
    %v432 = vpop.f32.mrf.mxu0
    %v433 = vadd.f32 %v108, %v432
    %434 = vmatmul.bf16.gmra.mxu0 %v313
    %v435 = vpop.f32.mrf.mxu0
    %v436 = vadd.f32 %v108, %v435
    %v437 = vpop.f32.mrf.mxu0
    %v438 = vadd.f32 %v108, %v437
    %439 = vmatmul.bf16.gmra.mxu0 %v316
    %v440 = vpop.f32.mrf.mxu0
    %v441 = vadd.f32 %v108, %v440
    %v442 = vpop.f32.mrf.mxu0
    %v443 = vadd.f32 %v108, %v442
    %444 = vmatmul.bf16.gmra.mxu0 %v319
    %v445 = vpop.f32.mrf.mxu0
    %v446 = vadd.f32 %v108, %v445
    %v447 = vpop.f32.mrf.mxu0
    %v448 = vadd.f32 %v108, %v447
    %449 = vmatmul.bf16.gmra.mxu0 %v322
    %v450 = vpop.f32.mrf.mxu0
    %v451 = vadd.f32 %v108, %v450
    %v452 = vpop.f32.mrf.mxu0
    %v453 = vadd.f32 %v108, %v452
    %454 = vmatmul.bf16.gmra.mxu0 %v325
    %v455 = vpop.f32.mrf.mxu0
    %v456 = vadd.f32 %v108, %v455
    %v457 = vpop.f32.mrf.mxu0
    %v458 = vadd.f32 %v108, %v457
    %459 = vmatmul.bf16.gmra.mxu0 %v328
    %v460 = vpop.f32.mrf.mxu0
    %v461 = vadd.f32 %v108, %v460
    %v462 = vpop.f32.mrf.mxu0
    %v463 = vadd.f32 %v108, %v462
    %464 = vmatmul.bf16.gmra.mxu0 %v331
    %v465 = vpop.f32.mrf.mxu0
    %v466 = vadd.f32 %v108, %v465
    %v467 = vpop.f32.mrf.mxu0
    %v468 = vadd.f32 %v108, %v467
    %469 = vmatmul.bf16.gmra.mxu0 %v334
    %v470 = vpop.f32.mrf.mxu0
    %v471 = vadd.f32 %v108, %v470
    %v472 = vpop.f32.mrf.mxu0
    %v473 = vadd.f32 %v108, %v472
    %474 = vmatmul.bf16.gmra.mxu0 %v337
    %v475 = vpop.f32.mrf.mxu0
    %v476 = vadd.f32 %v108, %v475
    %v477 = vpop.f32.mrf.mxu0
    %v478 = vadd.f32 %v108, %v477
    %479 = vmatmul.bf16.gmra.mxu0 %v340
    %v480 = vpop.f32.mrf.mxu0
    %v481 = vadd.f32 %v108, %v480
    %v482 = vpop.f32.mrf.mxu0
    %v483 = vadd.f32 %v108, %v482
    %484 = vmatmul.bf16.gmra.mxu0 %v343
    %v485 = vpop.f32.mrf.mxu0
    %v486 = vadd.f32 %v108, %v485
    %v487 = vpop.f32.mrf.mxu0
    %v488 = vadd.f32 %v108, %v487
    %489 = vmatmul.bf16.gmra.mxu0 %v346
    %v490 = vpop.f32.mrf.mxu0
    %v491 = vadd.f32 %v108, %v490
    %v492 = vpop.f32.mrf.mxu0
    %v493 = vadd.f32 %v108, %v492
    %494 = vmatmul.bf16.gmra.mxu0 %v349
    %v495 = vpop.f32.mrf.mxu0
    %v496 = vadd.f32 %v108, %v495
    %v497 = vpop.f32.mrf.mxu0
    %v498 = vadd.f32 %v108, %v497
    %499 = vmatmul.bf16.gmra.mxu0 %v352
    %v500 = vpop.f32.mrf.mxu0
    %v501 = vadd.f32 %v108, %v500
    %v502 = vpop.f32.mrf.mxu0
    %v503 = vadd.f32 %v108, %v502
    %504 = vmatmul.bf16.gmra.mxu0 %v355
    %v505 = vpop.f32.mrf.mxu0
    %v506 = vadd.f32 %v108, %v505
    %v507 = vpop.f32.mrf.mxu0
    %v508 = vadd.f32 %v108, %v507
    %509 = vmatmul.bf16.gmra.mxu0 %v358
    %v510 = vpop.f32.mrf.mxu0
    %v511 = vadd.f32 %v108, %v510
    %v512 = vpop.f32.mrf.mxu0
    %v513 = vadd.f32 %v108, %v512
    %514 = vmatmul.bf16.gmra.mxu0 %v361
    %v515 = vpop.f32.mrf.mxu0
    %v516 = vadd.f32 %v108, %v515
    %v517 = vpop.f32.mrf.mxu0
    %v518 = vadd.f32 %v108, %v517
    %519 = vmatmul.bf16.gmra.mxu0 %v364
    %v520 = vpop.f32.mrf.mxu0
    %v521 = vadd.f32 %v108, %v520
    %v522 = vpop.f32.mrf.mxu0
    %v523 = vadd.f32 %v108, %v522
    %524 = vmatmul.bf16.gmra.mxu0 %v367
    %v525 = vpop.f32.mrf.mxu0
    %v526 = vadd.f32 %v108, %v525
    %v527 = vpop.f32.mrf.mxu0
    %v528 = vadd.f32 %v108, %v527
    %529 = vmatmul.bf16.gmra.mxu0 %v370
    %v530 = vpop.f32.mrf.mxu0
    %v531 = vadd.f32 %v108, %v530
    %v532 = vpop.f32.mrf.mxu0
    %v533 = vadd.f32 %v108, %v532
    %534 = vmatmul.bf16.gmra.mxu0 %v373
    %v535 = vpop.f32.mrf.mxu0
    %v536 = vadd.f32 %v108, %v535
    %v537 = vpop.f32.mrf.mxu0
    %v538 = vadd.f32 %v108, %v537
    %539 = vmatmul.bf16.gmra.mxu0 %v376
    %v540 = vpop.f32.mrf.mxu0
    %v541 = vadd.f32 %v108, %v540
    %v542 = vpop.f32.mrf.mxu0
    %v543 = vadd.f32 %v108, %v542
    %544 = vmatmul.bf16.gmra.mxu0 %v379
    %v545 = vpop.f32.mrf.mxu0
    %v546 = vadd.f32 %v108, %v545
    %v547 = vpop.f32.mrf.mxu0
    %v548 = vadd.f32 %v108, %v547
    %549 = vmatmul.bf16.gmra.mxu0 %v382
    %v550 = vpop.f32.mrf.mxu0
    %v551 = vadd.f32 %v108, %v550
    %v552 = vpop.f32.mrf.mxu0
    %v553 = vadd.f32 %v108, %v552
    %554 = vmatmul.bf16.gmra.mxu0 %v385
    %v555 = vpop.f32.mrf.mxu0
    %v556 = vadd.f32 %v108, %v555
    %v557 = vpop.f32.mrf.mxu0
    %v558 = vadd.f32 %v108, %v557
    %559 = vmatmul.bf16.gmra.mxu0 %v388
    %v560 = vpop.f32.mrf.mxu0
    %v561 = vadd.f32 %v108, %v560
    %v562 = vpop.f32.mrf.mxu0
    %v563 = vadd.f32 %v108, %v562
    %564 = vmatmul.bf16.gmra.mxu0 %v391
    %v565 = vpop.f32.mrf.mxu0
    %v566 = vadd.f32 %v108, %v565
    %v567 = vpop.f32.mrf.mxu0
    %v568 = vadd.f32 %v108, %v567
    %569 = vmatmul.bf16.gmra.mxu0 %v394
    %v570 = vpop.f32.mrf.mxu0
    %v571 = vadd.f32 %v108, %v570
    %v572 = vpop.f32.mrf.mxu0
    %v573 = vadd.f32 %v108, %v572
    %574 = vmatmul.bf16.gmra.mxu0 %v397
    %v575 = vpop.f32.mrf.mxu0
    %v576 = vadd.f32 %v108, %v575
    %v577 = vpop.f32.mrf.mxu0
    %v578 = vadd.f32 %v108, %v577
    %579 = vmatmul.bf16.gmra.mxu0 %v400
    %v580 = vpop.f32.mrf.mxu0
    %v581 = vadd.f32 %v108, %v580
    %v582 = vpop.f32.mrf.mxu0
    %v583 = vadd.f32 %v108, %v582
    %584 = vmatmul.bf16.gmra.mxu0 %v403
    %v585 = vpop.f32.mrf.mxu0
    %v586 = vadd.f32 %v108, %v585
    %v587 = vpop.f32.mrf.mxu0
    %v588 = vadd.f32 %v108, %v587
    %589 = vmatmul.bf16.gmra.mxu0 %v406
    %v590 = vpop.f32.mrf.mxu0
    %v591 = vadd.f32 %v108, %v590
    %v592 = vpop.f32.mrf.mxu0
    %v593 = vadd.f32 %v108, %v592
    %594 = vmatmul.bf16.gmra.mxu0 %v409
    %v595 = vpop.f32.mrf.mxu0
    %v596 = vadd.f32 %v108, %v595
    %v597 = vpop.f32.mrf.mxu0
    %v598 = vadd.f32 %v108, %v597
    %599 = vdwg.mxu0
    %v600 = vmax.f32 %v421, 0.0
    %v601 = vmax.f32 %v423, 0.0
    %v602 = vmax.f32 %v426, 0.0
    %v603 = vmax.f32 %v428, 0.0
    %v604 = vmax.f32 %v431, 0.0
    %v605 = vmax.f32 %v433, 0.0
    %v606 = vmax.f32 %v436, 0.0
    %v607 = vmax.f32 %v438, 0.0
    %v608 = vmax.f32 %v441, 0.0
    %v609 = vmax.f32 %v443, 0.0
    %v610 = vmax.f32 %v446, 0.0
    %v611 = vmax.f32 %v448, 0.0
    %v612 = vmax.f32 %v451, 0.0
    %v613 = vmax.f32 %v453, 0.0
    %v614 = vmax.f32 %v456, 0.0
    %v615 = vmax.f32 %v458, 0.0
    %v616 = vmax.f32 %v461, 0.0
    %v617 = vmax.f32 %v463, 0.0
    %v618 = vmax.f32 %v466, 0.0
    %v619 = vmax.f32 %v468, 0.0
    %v620 = vmax.f32 %v471, 0.0
    %v621 = vmax.f32 %v473, 0.0
    %v622 = vmax.f32 %v476, 0.0
    %v623 = vmax.f32 %v478, 0.0
    %v624 = vmax.f32 %v481, 0.0
    %v625 = vmax.f32 %v483, 0.0
    %v626 = vmax.f32 %v486, 0.0
    %v627 = vmax.f32 %v488, 0.0
    %v628 = vmax.f32 %v491, 0.0
    %v629 = vmax.f32 %v493, 0.0
    %v630 = vmax.f32 %v496, 0.0
    %v631 = vmax.f32 %v498, 0.0
    %v632 = vmax.f32 %v501, 0.0
    %v633 = vmax.f32 %v503, 0.0
    %v634 = vmax.f32 %v506, 0.0
    %v635 = vmax.f32 %v508, 0.0
    %v636 = vmax.f32 %v511, 0.0
    %v637 = vmax.f32 %v513, 0.0
    %v638 = vmax.f32 %v516, 0.0
    %v639 = vmax.f32 %v518, 0.0
    %v640 = vmax.f32 %v521, 0.0
    %v641 = vmax.f32 %v523, 0.0
    %v642 = vmax.f32 %v526, 0.0
    %v643 = vmax.f32 %v528, 0.0
    %v644 = vmax.f32 %v531, 0.0
    %v645 = vmax.f32 %v533, 0.0
    %v646 = vmax.f32 %v536, 0.0
    %v647 = vmax.f32 %v538, 0.0
    %v648 = vmax.f32 %v541, 0.0
    %v649 = vmax.f32 %v543, 0.0
    %v650 = vmax.f32 %v546, 0.0
    %v651 = vmax.f32 %v548, 0.0
    %v652 = vmax.f32 %v551, 0.0
    %v653 = vmax.f32 %v553, 0.0
    %v654 = vmax.f32 %v556, 0.0
    %v655 = vmax.f32 %v558, 0.0
    %v656 = vmax.f32 %v561, 0.0
    %v657 = vmax.f32 %v563, 0.0
    %v658 = vmax.f32 %v566, 0.0
    %v659 = vmax.f32 %v568, 0.0
    %v660 = vmax.f32 %v571, 0.0
    %v661 = vmax.f32 %v573, 0.0
    %v662 = vmax.f32 %v576, 0.0
    %v663 = vmax.f32 %v578, 0.0
    %v664 = vmax.f32 %v581, 0.0
    %v665 = vmax.f32 %v583, 0.0
    %v666 = vmax.f32 %v586, 0.0
    %v667 = vmax.f32 %v588, 0.0
    %v668 = vmax.f32 %v591, 0.0
    %v669 = vmax.f32 %v593, 0.0
    %v670 = vmax.f32 %v596, 0.0
    %v671 = vmax.f32 %v598, 0.0
    %v672 = vmax.f32 %v600, %v618
    %v673 = vmax.f32 %v601, %v619
    %v674 = vmax.f32 %v602, %v620
    %v675 = vmax.f32 %v603, %v621
    %v676 = vmax.f32 %v604, %v622
    %v677 = vmax.f32 %v605, %v623
    %v678 = vmax.f32 %v606, %v624
    %v679 = vmax.f32 %v607, %v625
    %v680 = vmax.f32 %v608, %v626
    %v681 = vmax.f32 %v609, %v627
    %v682 = vmax.f32 %v610, %v628
    %v683 = vmax.f32 %v611, %v629
    %v684 = vmax.f32 %v612, %v630
    %v685 = vmax.f32 %v613, %v631
    %v686 = vmax.f32 %v614, %v632
    %v687 = vmax.f32 %v615, %v633
    %v688 = vmax.f32 %v616, %v634
    %v689 = vmax.f32 %v617, %v635
    %v690 = vmax.f32 %v636, %v654
    %v691 = vmax.f32 %v637, %v655
    %v692 = vmax.f32 %v638, %v656
    %v693 = vmax.f32 %v639, %v657
    %v694 = vmax.f32 %v640, %v658
    %v695 = vmax.f32 %v641, %v659
    %v696 = vmax.f32 %v642, %v660
    %v697 = vmax.f32 %v643, %v661
    %v698 = vmax.f32 %v644, %v662
    %v699 = vmax.f32 %v645, %v663
    %v700 = vmax.f32 %v646, %v664
    %v701 = vmax.f32 %v647, %v665
    %v702 = vmax.f32 %v648, %v666
    %v703 = vmax.f32 %v649, %v667
    %v704 = vmax.f32 %v650, %v668
    %v705 = vmax.f32 %v651, %v669
    %v706 = vmax.f32 %v652, %v670
    %v707 = vmax.f32 %v653, %v671
    %v708 = vmax.f32 %v672, %v690
    %v709 = vmax.f32 %v673, %v691
    %v710 = vmax.f32 %v674, %v692
    %v711 = vmax.f32 %v675, %v693
    %v712 = vmax.f32 %v676, %v694
    %v713 = vmax.f32 %v677, %v695
    %v714 = vmax.f32 %v678, %v696
    %v715 = vmax.f32 %v679, %v697
    %v716 = vmax.f32 %v680, %v698
    %v717 = vmax.f32 %v681, %v699
    %v718 = vmax.f32 %v682, %v700
    %v719 = vmax.f32 %v683, %v701
    %v720 = vmax.f32 %v684, %v702
    %v721 = vmax.f32 %v685, %v703
    %v722 = vmax.f32 %v686, %v704
    %v723 = vmax.f32 %v687, %v705
    %v724 = vmax.f32 %v688, %v706
    %v725 = vmax.f32 %v689, %v707
    %726 = vst.msk [vmem:[#allocation2] sm:$0xff] %vm302, %v708
    %727 = vst.msk [vmem:[#allocation2 + $0x8] sm:$0xff] %vm302, %v709
    %728 = vst.msk [vmem:[#allocation2 + $0x10] sm:$0xff] %vm302, %v710
    %729 = vst.msk [vmem:[#allocation2 + $0x18] sm:$0xff] %vm302, %v711
    %730 = vst.msk [vmem:[#allocation2 + $0x20] sm:$0xff] %vm302, %v712
    %731 = vst.msk [vmem:[#allocation2 + $0x28] sm:$0xff] %vm302, %v713
    %732 = vst.msk [vmem:[#allocation2 + $0x30] sm:$0xff] %vm302, %v714
    %733 = vst.msk [vmem:[#allocation2 + $0x38] sm:$0xff] %vm302, %v715
    %734 = vst.msk [vmem:[#allocation2 + $0x40] sm:$0xff] %vm302, %v716
    %735 = vst.msk [vmem:[#allocation2 + $0x48] sm:$0xff] %vm302, %v717
    %736 = vst.msk [vmem:[#allocation2 + $0x50] sm:$0xff] %vm302, %v718
    %737 = vst.msk [vmem:[#allocation2 + $0x58] sm:$0xff] %vm302, %v719
    %738 = vst.msk [vmem:[#allocation2 + $0x60] sm:$0xff] %vm302, %v720
    %739 = vst.msk [vmem:[#allocation2 + $0x68] sm:$0xff] %vm302, %v721
    %740 = vst.msk [vmem:[#allocation2 + $0x70] sm:$0xff] %vm302, %v722
    %741 = vst.msk [vmem:[#allocation2 + $0x78] sm:$0xff] %vm302, %v723
    %742 = vst.msk [vmem:[#allocation2 + $0x80] sm:$0xff] %vm302, %v724
    %743 = vst.msk [vmem:[#allocation2 + $0x88] sm:$0xff] %vm302, %v725
    %v744 = vld [vmem:[#allocation2] sm:$0xff]
    %v745 = vld [vmem:[#allocation2 + $0x8] sm:$0xf]
    %746 = vst.msk [vmem:[#allocation3] sm:$0xff] %vm302, %v744
    %vm747 = vcmask 257024
    %748 = vst.msk [vmem:[#allocation3 + $0x8] sm:$0xf] %vm747, %v745
    %v749 = vld [vmem:[#allocation2 + $0xc] sm:$0xff]
    %v750 = vld [vmem:[#allocation2 + $0x14] sm:$0xf]
    %s751 = scalar_lea.vmem [#allocation3], 16
    %752 = vst.msk [vmem:[%s751] sm:$0xff] %vm302, %v749
    %753 = vst.msk [vmem:[%s751 + $0x8] sm:$0xf] %vm747, %v750
    %v754 = vld [vmem:[#allocation2 + $0x18] sm:$0xff]
    %v755 = vld [vmem:[#allocation2 + $0x20] sm:$0xf]
    %s756 = scalar_lea.vmem [#allocation3], 32
    %757 = vst.msk [vmem:[%s756] sm:$0xff] %vm302, %v754
    %758 = vst.msk [vmem:[%s756 + $0x8] sm:$0xf] %vm747, %v755
    %v759 = vld [vmem:[#allocation2 + $0x24] sm:$0xff]
    %v760 = vld [vmem:[#allocation2 + $0x2c] sm:$0xf]
    %s761 = scalar_lea.vmem [#allocation3], 48
    %762 = vst.msk [vmem:[%s761] sm:$0xff] %vm302, %v759
    %763 = vst.msk [vmem:[%s761 + $0x8] sm:$0xf] %vm747, %v760
    %v764 = vld [vmem:[#allocation2 + $0x30] sm:$0xff]
    %v765 = vld [vmem:[#allocation2 + $0x38] sm:$0xf]
    %s766 = scalar_lea.vmem [#allocation3], 64
    %767 = vst.msk [vmem:[%s766] sm:$0xff] %vm302, %v764
    %768 = vst.msk [vmem:[%s766 + $0x8] sm:$0xf] %vm747, %v765
    %v769 = vld [vmem:[#allocation2 + $0x3c] sm:$0xff]
    %v770 = vld [vmem:[#allocation2 + $0x44] sm:$0xf]
    %s771 = scalar_lea.vmem [#allocation3], 80
    %772 = vst.msk [vmem:[%s771] sm:$0xff] %vm302, %v769
    %773 = vst.msk [vmem:[%s771 + $0x8] sm:$0xf] %vm747, %v770
    %v774 = vld [vmem:[#allocation2 + $0x48] sm:$0xff]
    %v775 = vld [vmem:[#allocation2 + $0x50] sm:$0xf]
    %s776 = scalar_lea.vmem [#allocation3], 96
    %777 = vst.msk [vmem:[%s776] sm:$0xff] %vm302, %v774
    %778 = vst.msk [vmem:[%s776 + $0x8] sm:$0xf] %vm747, %v775
    %v779 = vld [vmem:[#allocation2 + $0x54] sm:$0xff]
    %v780 = vld [vmem:[#allocation2 + $0x5c] sm:$0xf]
    %s781 = scalar_lea.vmem [#allocation3], 112
    %782 = vst.msk [vmem:[%s781] sm:$0xff] %vm302, %v779
    %783 = vst.msk [vmem:[%s781 + $0x8] sm:$0xf] %vm747, %v780
    %v784 = vld [vmem:[#allocation2 + $0x60] sm:$0xff]
    %v785 = vld [vmem:[#allocation2 + $0x68] sm:$0xf]
    %s786 = scalar_lea.vmem [#allocation3], 128
    %787 = vst.msk [vmem:[%s786] sm:$0xff] %vm302, %v784
    %788 = vst.msk [vmem:[%s786 + $0x8] sm:$0xf] %vm747, %v785
    %v789 = vld [vmem:[#allocation2 + $0x6c] sm:$0xff]
    %v790 = vld [vmem:[#allocation2 + $0x74] sm:$0xf]
    %s791 = scalar_lea.vmem [#allocation3], 144
    %792 = vst.msk [vmem:[%s791] sm:$0xff] %vm302, %v789
    %793 = vst.msk [vmem:[%s791 + $0x8] sm:$0xf] %vm747, %v790
    %v794 = vld [vmem:[#allocation2 + $0x78] sm:$0xff]
    %v795 = vld [vmem:[#allocation2 + $0x80] sm:$0xf]
    %s796 = scalar_lea.vmem [#allocation3], 160
    %797 = vst.msk [vmem:[%s796] sm:$0xff] %vm302, %v794
    %798 = vst.msk [vmem:[%s796 + $0x8] sm:$0xf] %vm747, %v795
    %v799 = vld [vmem:[#allocation2 + $0x84] sm:$0xff]
    %v800 = vld [vmem:[#allocation2 + $0x8c] sm:$0xf]
    %s801 = scalar_lea.vmem [#allocation3], 176
    %802 = vst.msk [vmem:[%s801] sm:$0xff] %vm302, %v799
    %803 = vst.msk [vmem:[%s801 + $0x8] sm:$0xf] %vm747, %v800
    %s804 = smul.u32 %s22, 64
    %v805 = vld [vmem:[#allocation3] sm:$0xff]
    %v806 = vld [vmem:[#allocation3 + $0x10] sm:$0xff]
    %v807 = vld [vmem:[#allocation3 + $0x20] sm:$0xff]
    %v808 = vld [vmem:[#allocation3 + $0x30] sm:$0xff]
    %v809 = vld [vmem:[#allocation3 + $0x40] sm:$0xff]
    %v810 = vld [vmem:[#allocation3 + $0x50] sm:$0xff]
    %v811 = vld [vmem:[#allocation3 + $0x60] sm:$0xff]
    %v812 = vld [vmem:[#allocation3 + $0x70] sm:$0xff]
    %v813 = vpack.c.bf16 %v805, %v805
    %v814 = vpack.c.bf16 %v806, %v806
    %v815 = vpack.c.bf16 %v807, %v807
    %v816 = vpack.c.bf16 %v808, %v808
    %v817 = vpack.c.bf16 %v809, %v809
    %v818 = vpack.c.bf16 %v810, %v810
    %v819 = vpack.c.bf16 %v811, %v811
    %v820 = vpack.c.bf16 %v812, %v812
    %v821 = vld [vmem:[#allocation3 + $0x1] sm:$0xff]
    %v822 = vld [vmem:[#allocation3 + $0x11] sm:$0xff]
    %v823 = vld [vmem:[#allocation3 + $0x21] sm:$0xff]
    %v824 = vld [vmem:[#allocation3 + $0x31] sm:$0xff]
    %v825 = vld [vmem:[#allocation3 + $0x41] sm:$0xff]
    %v826 = vld [vmem:[#allocation3 + $0x51] sm:$0xff]
    %v827 = vld [vmem:[#allocation3 + $0x61] sm:$0xff]
    %v828 = vld [vmem:[#allocation3 + $0x71] sm:$0xff]
    %v829 = vpack.c.bf16 %v821, %v821
    %v830 = vpack.c.bf16 %v822, %v822
    %v831 = vpack.c.bf16 %v823, %v823
    %v832 = vpack.c.bf16 %v824, %v824
    %v833 = vpack.c.bf16 %v825, %v825
    %v834 = vpack.c.bf16 %v826, %v826
    %v835 = vpack.c.bf16 %v827, %v827
    %v836 = vpack.c.bf16 %v828, %v828
    %v837 = vld [vmem:[#allocation3 + $0x2] sm:$0xff]
    %v838 = vld [vmem:[#allocation3 + $0x12] sm:$0xff]
    %v839 = vld [vmem:[#allocation3 + $0x22] sm:$0xff]
    %v840 = vld [vmem:[#allocation3 + $0x32] sm:$0xff]
    %v841 = vld [vmem:[#allocation3 + $0x42] sm:$0xff]
    %v842 = vld [vmem:[#allocation3 + $0x52] sm:$0xff]
    %v843 = vld [vmem:[#allocation3 + $0x62] sm:$0xff]
    %v844 = vld [vmem:[#allocation3 + $0x72] sm:$0xff]
    %v845 = vpack.c.bf16 %v837, %v837
    %v846 = vpack.c.bf16 %v838, %v838
    %v847 = vpack.c.bf16 %v839, %v839
    %v848 = vpack.c.bf16 %v840, %v840
    %v849 = vpack.c.bf16 %v841, %v841
    %v850 = vpack.c.bf16 %v842, %v842
    %v851 = vpack.c.bf16 %v843, %v843
    %v852 = vpack.c.bf16 %v844, %v844
    %v853 = vld [vmem:[#allocation3 + $0x3] sm:$0xff]
    %v854 = vld [vmem:[#allocation3 + $0x13] sm:$0xff]
    %v855 = vld [vmem:[#allocation3 + $0x23] sm:$0xff]
    %v856 = vld [vmem:[#allocation3 + $0x33] sm:$0xff]
    %v857 = vld [vmem:[#allocation3 + $0x43] sm:$0xff]
    %v858 = vld [vmem:[#allocation3 + $0x53] sm:$0xff]
    %v859 = vld [vmem:[#allocation3 + $0x63] sm:$0xff]
    %v860 = vld [vmem:[#allocation3 + $0x73] sm:$0xff]
    %v861 = vpack.c.bf16 %v853, %v853
    %v862 = vpack.c.bf16 %v854, %v854
    %v863 = vpack.c.bf16 %v855, %v855
    %v864 = vpack.c.bf16 %v856, %v856
    %v865 = vpack.c.bf16 %v857, %v857
    %v866 = vpack.c.bf16 %v858, %v858
    %v867 = vpack.c.bf16 %v859, %v859
    %v868 = vpack.c.bf16 %v860, %v860
    %v877 = vunpack.c.l.b16 %v813
    %v878 = vunpack.c.l.b16 %v814
    %v879 = vunpack.c.l.b16 %v815
    %v880 = vunpack.c.l.b16 %v816
    %v881 = vunpack.c.l.b16 %v817
    %v882 = vunpack.c.l.b16 %v818
    %v883 = vunpack.c.l.b16 %v819
    %v884 = vunpack.c.l.b16 %v820
    %v885 = vpack.c.b16 %v878, %v877
    %v886 = vpack.c.b16 %v880, %v879
    %v887 = vpack.c.b16 %v882, %v881
    %v888 = vpack.c.b16 %v884, %v883
    %v897 = vunpack.c.l.b16 %v829
    %v898 = vunpack.c.l.b16 %v830
    %v899 = vunpack.c.l.b16 %v831
    %v900 = vunpack.c.l.b16 %v832
    %v901 = vunpack.c.l.b16 %v833
    %v902 = vunpack.c.l.b16 %v834
    %v903 = vunpack.c.l.b16 %v835
    %v904 = vunpack.c.l.b16 %v836
    %v905 = vpack.c.b16 %v898, %v897
    %v906 = vpack.c.b16 %v900, %v899
    %v907 = vpack.c.b16 %v902, %v901
    %v908 = vpack.c.b16 %v904, %v903
    %909 = vrot.lane.b32.xlu0 %v905, 32
    %v910 = vpop.permute.xlu0 %909
    %911 = vrot.lane.b32.xlu0 %v906, 32
    %v912 = vpop.permute.xlu0 %911
    %913 = vrot.lane.b32.xlu0 %v907, 32
    %v914 = vpop.permute.xlu0 %913
    %915 = vrot.lane.b32.xlu0 %v908, 32
    %v916 = vpop.permute.xlu0 %915
    %v925 = vunpack.c.l.b16 %v845
    %v926 = vunpack.c.l.b16 %v846
    %v927 = vunpack.c.l.b16 %v847
    %v928 = vunpack.c.l.b16 %v848
    %v929 = vunpack.c.l.b16 %v849
    %v930 = vunpack.c.l.b16 %v850
    %v931 = vunpack.c.l.b16 %v851
    %v932 = vunpack.c.l.b16 %v852
    %v933 = vpack.c.b16 %v926, %v925
    %v934 = vpack.c.b16 %v928, %v927
    %v935 = vpack.c.b16 %v930, %v929
    %v936 = vpack.c.b16 %v932, %v931
    %937 = vrot.lane.b32.xlu0 %v933, 64
    %v938 = vpop.permute.xlu0 %937
    %939 = vrot.lane.b32.xlu0 %v934, 64
    %v940 = vpop.permute.xlu0 %939
    %941 = vrot.lane.b32.xlu0 %v935, 64
    %v942 = vpop.permute.xlu0 %941
    %943 = vrot.lane.b32.xlu0 %v936, 64
    %v944 = vpop.permute.xlu0 %943
    %v953 = vunpack.c.l.b16 %v861
    %v954 = vunpack.c.l.b16 %v862
    %v955 = vunpack.c.l.b16 %v863
    %v956 = vunpack.c.l.b16 %v864
    %v957 = vunpack.c.l.b16 %v865
    %v958 = vunpack.c.l.b16 %v866
    %v959 = vunpack.c.l.b16 %v867
    %v960 = vunpack.c.l.b16 %v868
    %v961 = vpack.c.b16 %v954, %v953
    %v962 = vpack.c.b16 %v956, %v955
    %v963 = vpack.c.b16 %v958, %v957
    %v964 = vpack.c.b16 %v960, %v959
    %965 = vrot.lane.b32.xlu0 %v961, 96
    %v966 = vpop.permute.xlu0 %965
    %967 = vrot.lane.b32.xlu0 %v962, 96
    %v968 = vpop.permute.xlu0 %967
    %969 = vrot.lane.b32.xlu0 %v963, 96
    %v970 = vpop.permute.xlu0 %969
    %971 = vrot.lane.b32.xlu0 %v964, 96
    %v972 = vpop.permute.xlu0 %971
    %v975 = vsel %vm302, %v885, %v910
    %v978 = vsel %vm302, %v886, %v912
    %v981 = vsel %vm302, %v887, %v914
    %v984 = vsel %vm302, %v888, %v916
    %vm985 = vcmask 523264
    %v987 = vsel %vm985, %v975, %v938
    %v989 = vsel %vm985, %v978, %v940
    %v991 = vsel %vm985, %v981, %v942
    %v993 = vsel %vm985, %v984, %v944
    %vm994 = vcmask 785408
    %v996 = vsel %vm994, %v987, %v966
    %v998 = vsel %vm994, %v989, %v968
    %v1000 = vsel %vm994, %v991, %v970
    %v1002 = vsel %vm994, %v993, %v972
    %v1007 = vunpack.c.l.b16 %v996
    %v1008 = vunpack.c.h.b16 %v996
    %v1009 = vunpack.c.l.b16 %v998
    %v1010 = vunpack.c.h.b16 %v998
    %v1011 = vunpack.c.l.b16 %v1000
    %v1012 = vunpack.c.h.b16 %v1000
    %v1013 = vunpack.c.l.b16 %v1002
    %v1014 = vunpack.c.h.b16 %v1002
    %v1015 = vpack.c.b16 %v1007, %v1007
    %v1016 = vpack.c.b16 %v1008, %v1008
    %v1017 = vpack.c.b16 %v1009, %v1009
    %v1018 = vpack.c.b16 %v1010, %v1010
    %v1019 = vpack.c.b16 %v1011, %v1011
    %v1020 = vpack.c.b16 %v1012, %v1012
    %v1021 = vpack.c.b16 %v1013, %v1013
    %v1022 = vpack.c.b16 %v1014, %v1014
    %s1031 = sshra.s32 %s804, 3
    %s1032 = sand.u32 %s804, 7
    %s1033 = smul.u32 %s1031, 7
    %s1034 = smul.addr %s1033, 4
    %s1035 = scalar_lea.vmem [#allocation4], %s1034
    %1036 = vst [vmem:[%s1035] sm:$0xf] %v1015
    %1037 = vst [vmem:[%s1035 + $0x1c] sm:$0xf] %v1016
    %1038 = vst [vmem:[%s1035 + $0x38] sm:$0xf] %v1017
    %1039 = vst [vmem:[%s1035 + $0x54] sm:$0xf] %v1018
    %1040 = vst [vmem:[%s1035 + $0x70] sm:$0xf] %v1019
    %1041 = vst [vmem:[%s1035 + $0x8c] sm:$0xf] %v1020
    %1042 = vst [vmem:[%s1035 + $0xa8] sm:$0xf] %v1021
    %1043 = vst [vmem:[%s1035 + $0xc4] sm:$0xf] %v1022
    %v1044 = vld [vmem:[#allocation3 + $0x4] sm:$0xff]
    %v1045 = vld [vmem:[#allocation3 + $0x14] sm:$0xff]
    %v1046 = vld [vmem:[#allocation3 + $0x24] sm:$0xff]
    %v1047 = vld [vmem:[#allocation3 + $0x34] sm:$0xff]
    %v1048 = vld [vmem:[#allocation3 + $0x44] sm:$0xff]
    %v1049 = vld [vmem:[#allocation3 + $0x54] sm:$0xff]
    %v1050 = vld [vmem:[#allocation3 + $0x64] sm:$0xff]
    %v1051 = vld [vmem:[#allocation3 + $0x74] sm:$0xff]
    %v1052 = vpack.c.bf16 %v1044, %v1044
    %v1053 = vpack.c.bf16 %v1045, %v1045
    %v1054 = vpack.c.bf16 %v1046, %v1046
    %v1055 = vpack.c.bf16 %v1047, %v1047
    %v1056 = vpack.c.bf16 %v1048, %v1048
    %v1057 = vpack.c.bf16 %v1049, %v1049
    %v1058 = vpack.c.bf16 %v1050, %v1050
    %v1059 = vpack.c.bf16 %v1051, %v1051
    %v1060 = vld [vmem:[%s751] sm:$0xff]
    %v1061 = vld [vmem:[%s751 + $0x10] sm:$0xff]
    %v1062 = vld [vmem:[%s751 + $0x20] sm:$0xff]
    %v1063 = vld [vmem:[%s751 + $0x30] sm:$0xff]
    %v1064 = vld [vmem:[%s751 + $0x40] sm:$0xff]
    %v1065 = vld [vmem:[%s751 + $0x50] sm:$0xff]
    %v1066 = vld [vmem:[%s751 + $0x60] sm:$0xff]
    %v1067 = vld [vmem:[%s751 + $0x70] sm:$0xff]
    %v1068 = vpack.c.bf16 %v1060, %v1060
    %v1069 = vpack.c.bf16 %v1061, %v1061
    %v1070 = vpack.c.bf16 %v1062, %v1062
    %v1071 = vpack.c.bf16 %v1063, %v1063
    %v1072 = vpack.c.bf16 %v1064, %v1064
    %v1073 = vpack.c.bf16 %v1065, %v1065
    %v1074 = vpack.c.bf16 %v1066, %v1066
    %v1075 = vpack.c.bf16 %v1067, %v1067
    %v1076 = vld [vmem:[%s751 + $0x1] sm:$0xff]
    %v1077 = vld [vmem:[%s751 + $0x11] sm:$0xff]
    %v1078 = vld [vmem:[%s751 + $0x21] sm:$0xff]
    %v1079 = vld [vmem:[%s751 + $0x31] sm:$0xff]
    %v1080 = vld [vmem:[%s751 + $0x41] sm:$0xff]
    %v1081 = vld [vmem:[%s751 + $0x51] sm:$0xff]
    %v1082 = vld [vmem:[%s751 + $0x61] sm:$0xff]
    %v1083 = vld [vmem:[%s751 + $0x71] sm:$0xff]
    %v1084 = vpack.c.bf16 %v1076, %v1076
    %v1085 = vpack.c.bf16 %v1077, %v1077
    %v1086 = vpack.c.bf16 %v1078, %v1078
    %v1087 = vpack.c.bf16 %v1079, %v1079
    %v1088 = vpack.c.bf16 %v1080, %v1080
    %v1089 = vpack.c.bf16 %v1081, %v1081
    %v1090 = vpack.c.bf16 %v1082, %v1082
    %v1091 = vpack.c.bf16 %v1083, %v1083
    %v1092 = vld [vmem:[%s751 + $0x2] sm:$0xff]
    %v1093 = vld [vmem:[%s751 + $0x12] sm:$0xff]
    %v1094 = vld [vmem:[%s751 + $0x22] sm:$0xff]
    %v1095 = vld [vmem:[%s751 + $0x32] sm:$0xff]
    %v1096 = vld [vmem:[%s751 + $0x42] sm:$0xff]
    %v1097 = vld [vmem:[%s751 + $0x52] sm:$0xff]
    %v1098 = vld [vmem:[%s751 + $0x62] sm:$0xff]
    %v1099 = vld [vmem:[%s751 + $0x72] sm:$0xff]
    %v1100 = vpack.c.bf16 %v1092, %v1092
    %v1101 = vpack.c.bf16 %v1093, %v1093
    %v1102 = vpack.c.bf16 %v1094, %v1094
    %v1103 = vpack.c.bf16 %v1095, %v1095
    %v1104 = vpack.c.bf16 %v1096, %v1096
    %v1105 = vpack.c.bf16 %v1097, %v1097
    %v1106 = vpack.c.bf16 %v1098, %v1098
    %v1107 = vpack.c.bf16 %v1099, %v1099
    %v1116 = vunpack.c.l.b16 %v1052
    %v1117 = vunpack.c.l.b16 %v1053
    %v1118 = vunpack.c.l.b16 %v1054
    %v1119 = vunpack.c.l.b16 %v1055
    %v1120 = vunpack.c.l.b16 %v1056
    %v1121 = vunpack.c.l.b16 %v1057
    %v1122 = vunpack.c.l.b16 %v1058
    %v1123 = vunpack.c.l.b16 %v1059
    %v1124 = vpack.c.b16 %v1117, %v1116
    %v1125 = vpack.c.b16 %v1119, %v1118
    %v1126 = vpack.c.b16 %v1121, %v1120
    %v1127 = vpack.c.b16 %v1123, %v1122
    %v1136 = vunpack.c.l.b16 %v1068
    %v1137 = vunpack.c.l.b16 %v1069
    %v1138 = vunpack.c.l.b16 %v1070
    %v1139 = vunpack.c.l.b16 %v1071
    %v1140 = vunpack.c.l.b16 %v1072
    %v1141 = vunpack.c.l.b16 %v1073
    %v1142 = vunpack.c.l.b16 %v1074
    %v1143 = vunpack.c.l.b16 %v1075
    %v1144 = vpack.c.b16 %v1137, %v1136
    %v1145 = vpack.c.b16 %v1139, %v1138
    %v1146 = vpack.c.b16 %v1141, %v1140
    %v1147 = vpack.c.b16 %v1143, %v1142
    %1148 = vrot.lane.b32.xlu0 %v1144, 32
    %v1149 = vpop.permute.xlu0 %1148
    %1150 = vrot.lane.b32.xlu0 %v1145, 32
    %v1151 = vpop.permute.xlu0 %1150
    %1152 = vrot.lane.b32.xlu0 %v1146, 32
    %v1153 = vpop.permute.xlu0 %1152
    %1154 = vrot.lane.b32.xlu0 %v1147, 32
    %v1155 = vpop.permute.xlu0 %1154
    %v1164 = vunpack.c.l.b16 %v1084
    %v1165 = vunpack.c.l.b16 %v1085
    %v1166 = vunpack.c.l.b16 %v1086
    %v1167 = vunpack.c.l.b16 %v1087
    %v1168 = vunpack.c.l.b16 %v1088
    %v1169 = vunpack.c.l.b16 %v1089
    %v1170 = vunpack.c.l.b16 %v1090
    %v1171 = vunpack.c.l.b16 %v1091
    %v1172 = vpack.c.b16 %v1165, %v1164
    %v1173 = vpack.c.b16 %v1167, %v1166
    %v1174 = vpack.c.b16 %v1169, %v1168
    %v1175 = vpack.c.b16 %v1171, %v1170
    %1176 = vrot.lane.b32.xlu0 %v1172, 64
    %v1177 = vpop.permute.xlu0 %1176
    %1178 = vrot.lane.b32.xlu0 %v1173, 64
    %v1179 = vpop.permute.xlu0 %1178
    %1180 = vrot.lane.b32.xlu0 %v1174, 64
    %v1181 = vpop.permute.xlu0 %1180
    %1182 = vrot.lane.b32.xlu0 %v1175, 64
    %v1183 = vpop.permute.xlu0 %1182
    %v1192 = vunpack.c.l.b16 %v1100
    %v1193 = vunpack.c.l.b16 %v1101
    %v1194 = vunpack.c.l.b16 %v1102
    %v1195 = vunpack.c.l.b16 %v1103
    %v1196 = vunpack.c.l.b16 %v1104
    %v1197 = vunpack.c.l.b16 %v1105
    %v1198 = vunpack.c.l.b16 %v1106
    %v1199 = vunpack.c.l.b16 %v1107
    %v1200 = vpack.c.b16 %v1193, %v1192
    %v1201 = vpack.c.b16 %v1195, %v1194
    %v1202 = vpack.c.b16 %v1197, %v1196
    %v1203 = vpack.c.b16 %v1199, %v1198
    %1204 = vrot.lane.b32.xlu0 %v1200, 96
    %v1205 = vpop.permute.xlu0 %1204
    %1206 = vrot.lane.b32.xlu0 %v1201, 96
    %v1207 = vpop.permute.xlu0 %1206
    %1208 = vrot.lane.b32.xlu0 %v1202, 96
    %v1209 = vpop.permute.xlu0 %1208
    %1210 = vrot.lane.b32.xlu0 %v1203, 96
    %v1211 = vpop.permute.xlu0 %1210
    %v1214 = vsel %vm302, %v1124, %v1149
    %v1217 = vsel %vm302, %v1125, %v1151
    %v1220 = vsel %vm302, %v1126, %v1153
    %v1223 = vsel %vm302, %v1127, %v1155
    %v1225 = vsel %vm985, %v1214, %v1177
    %v1227 = vsel %vm985, %v1217, %v1179
    %v1229 = vsel %vm985, %v1220, %v1181
    %v1231 = vsel %vm985, %v1223, %v1183
    %v1233 = vsel %vm994, %v1225, %v1205
    %v1235 = vsel %vm994, %v1227, %v1207
    %v1237 = vsel %vm994, %v1229, %v1209
    %v1239 = vsel %vm994, %v1231, %v1211
    %v1244 = vunpack.c.l.b16 %v1233
    %v1245 = vunpack.c.h.b16 %v1233
    %v1246 = vunpack.c.l.b16 %v1235
    %v1247 = vunpack.c.h.b16 %v1235
    %v1248 = vunpack.c.l.b16 %v1237
    %v1249 = vunpack.c.h.b16 %v1237
    %v1250 = vunpack.c.l.b16 %v1239
    %v1251 = vunpack.c.h.b16 %v1239
    %v1252 = vpack.c.b16 %v1244, %v1244
    %v1253 = vpack.c.b16 %v1245, %v1245
    %v1254 = vpack.c.b16 %v1246, %v1246
    %v1255 = vpack.c.b16 %v1247, %v1247
    %v1256 = vpack.c.b16 %v1248, %v1248
    %v1257 = vpack.c.b16 %v1249, %v1249
    %v1258 = vpack.c.b16 %v1250, %v1250
    %v1259 = vpack.c.b16 %v1251, %v1251
    %1268 = vst [vmem:[%s1035 + $0x4] sm:$0xf] %v1252
    %1269 = vst [vmem:[%s1035 + $0x20] sm:$0xf] %v1253
    %1270 = vst [vmem:[%s1035 + $0x3c] sm:$0xf] %v1254
    %1271 = vst [vmem:[%s1035 + $0x58] sm:$0xf] %v1255
    %1272 = vst [vmem:[%s1035 + $0x74] sm:$0xf] %v1256
    %1273 = vst [vmem:[%s1035 + $0x90] sm:$0xf] %v1257
    %1274 = vst [vmem:[%s1035 + $0xac] sm:$0xf] %v1258
    %1275 = vst [vmem:[%s1035 + $0xc8] sm:$0xf] %v1259
    %v1276 = vld [vmem:[%s751 + $0x3] sm:$0xff]
    %v1277 = vld [vmem:[%s751 + $0x13] sm:$0xff]
    %v1278 = vld [vmem:[%s751 + $0x23] sm:$0xff]
    %v1279 = vld [vmem:[%s751 + $0x33] sm:$0xff]
    %v1280 = vld [vmem:[%s751 + $0x43] sm:$0xff]
    %v1281 = vld [vmem:[%s751 + $0x53] sm:$0xff]
    %v1282 = vld [vmem:[%s751 + $0x63] sm:$0xff]
    %v1283 = vld [vmem:[%s751 + $0x73] sm:$0xff]
    %v1284 = vpack.c.bf16 %v1276, %v1276
    %v1285 = vpack.c.bf16 %v1277, %v1277
    %v1286 = vpack.c.bf16 %v1278, %v1278
    %v1287 = vpack.c.bf16 %v1279, %v1279
    %v1288 = vpack.c.bf16 %v1280, %v1280
    %v1289 = vpack.c.bf16 %v1281, %v1281
    %v1290 = vpack.c.bf16 %v1282, %v1282
    %v1291 = vpack.c.bf16 %v1283, %v1283
    %v1292 = vld [vmem:[%s751 + $0x4] sm:$0xff]
    %v1293 = vld [vmem:[%s751 + $0x14] sm:$0xff]
    %v1294 = vld [vmem:[%s751 + $0x24] sm:$0xff]
    %v1295 = vld [vmem:[%s751 + $0x34] sm:$0xff]
    %v1296 = vld [vmem:[%s751 + $0x44] sm:$0xff]
    %v1297 = vld [vmem:[%s751 + $0x54] sm:$0xff]
    %v1298 = vld [vmem:[%s751 + $0x64] sm:$0xff]
    %v1299 = vld [vmem:[%s751 + $0x74] sm:$0xff]
    %v1300 = vpack.c.bf16 %v1292, %v1292
    %v1301 = vpack.c.bf16 %v1293, %v1293
    %v1302 = vpack.c.bf16 %v1294, %v1294
    %v1303 = vpack.c.bf16 %v1295, %v1295
    %v1304 = vpack.c.bf16 %v1296, %v1296
    %v1305 = vpack.c.bf16 %v1297, %v1297
    %v1306 = vpack.c.bf16 %v1298, %v1298
    %v1307 = vpack.c.bf16 %v1299, %v1299
    %v1308 = vld [vmem:[%s756] sm:$0xff]
    %v1309 = vld [vmem:[%s756 + $0x10] sm:$0xff]
    %v1310 = vld [vmem:[%s756 + $0x20] sm:$0xff]
    %v1311 = vld [vmem:[%s756 + $0x30] sm:$0xff]
    %v1312 = vld [vmem:[%s756 + $0x40] sm:$0xff]
    %v1313 = vld [vmem:[%s756 + $0x50] sm:$0xff]
    %v1314 = vld [vmem:[%s756 + $0x60] sm:$0xff]
    %v1315 = vld [vmem:[%s756 + $0x70] sm:$0xff]
    %v1316 = vpack.c.bf16 %v1308, %v1308
    %v1317 = vpack.c.bf16 %v1309, %v1309
    %v1318 = vpack.c.bf16 %v1310, %v1310
    %v1319 = vpack.c.bf16 %v1311, %v1311
    %v1320 = vpack.c.bf16 %v1312, %v1312
    %v1321 = vpack.c.bf16 %v1313, %v1313
    %v1322 = vpack.c.bf16 %v1314, %v1314
    %v1323 = vpack.c.bf16 %v1315, %v1315
    %v1324 = vld [vmem:[%s756 + $0x1] sm:$0xff]
    %v1325 = vld [vmem:[%s756 + $0x11] sm:$0xff]
    %v1326 = vld [vmem:[%s756 + $0x21] sm:$0xff]
    %v1327 = vld [vmem:[%s756 + $0x31] sm:$0xff]
    %v1328 = vld [vmem:[%s756 + $0x41] sm:$0xff]
    %v1329 = vld [vmem:[%s756 + $0x51] sm:$0xff]
    %v1330 = vld [vmem:[%s756 + $0x61] sm:$0xff]
    %v1331 = vld [vmem:[%s756 + $0x71] sm:$0xff]
    %v1332 = vpack.c.bf16 %v1324, %v1324
    %v1333 = vpack.c.bf16 %v1325, %v1325
    %v1334 = vpack.c.bf16 %v1326, %v1326
    %v1335 = vpack.c.bf16 %v1327, %v1327
    %v1336 = vpack.c.bf16 %v1328, %v1328
    %v1337 = vpack.c.bf16 %v1329, %v1329
    %v1338 = vpack.c.bf16 %v1330, %v1330
    %v1339 = vpack.c.bf16 %v1331, %v1331
    %v1348 = vunpack.c.l.b16 %v1284
    %v1349 = vunpack.c.l.b16 %v1285
    %v1350 = vunpack.c.l.b16 %v1286
    %v1351 = vunpack.c.l.b16 %v1287
    %v1352 = vunpack.c.l.b16 %v1288
    %v1353 = vunpack.c.l.b16 %v1289
    %v1354 = vunpack.c.l.b16 %v1290
    %v1355 = vunpack.c.l.b16 %v1291
    %v1356 = vpack.c.b16 %v1349, %v1348
    %v1357 = vpack.c.b16 %v1351, %v1350
    %v1358 = vpack.c.b16 %v1353, %v1352
    %v1359 = vpack.c.b16 %v1355, %v1354
    %v1368 = vunpack.c.l.b16 %v1300
    %v1369 = vunpack.c.l.b16 %v1301
    %v1370 = vunpack.c.l.b16 %v1302
    %v1371 = vunpack.c.l.b16 %v1303
    %v1372 = vunpack.c.l.b16 %v1304
    %v1373 = vunpack.c.l.b16 %v1305
    %v1374 = vunpack.c.l.b16 %v1306
    %v1375 = vunpack.c.l.b16 %v1307
    %v1376 = vpack.c.b16 %v1369, %v1368
    %v1377 = vpack.c.b16 %v1371, %v1370
    %v1378 = vpack.c.b16 %v1373, %v1372
    %v1379 = vpack.c.b16 %v1375, %v1374
    %1380 = vrot.lane.b32.xlu0 %v1376, 32
    %v1381 = vpop.permute.xlu0 %1380
    %1382 = vrot.lane.b32.xlu0 %v1377, 32
    %v1383 = vpop.permute.xlu0 %1382
    %1384 = vrot.lane.b32.xlu0 %v1378, 32
    %v1385 = vpop.permute.xlu0 %1384
    %1386 = vrot.lane.b32.xlu0 %v1379, 32
    %v1387 = vpop.permute.xlu0 %1386
    %v1396 = vunpack.c.l.b16 %v1316
    %v1397 = vunpack.c.l.b16 %v1317
    %v1398 = vunpack.c.l.b16 %v1318
    %v1399 = vunpack.c.l.b16 %v1319
    %v1400 = vunpack.c.l.b16 %v1320
    %v1401 = vunpack.c.l.b16 %v1321
    %v1402 = vunpack.c.l.b16 %v1322
    %v1403 = vunpack.c.l.b16 %v1323
    %v1404 = vpack.c.b16 %v1397, %v1396
    %v1405 = vpack.c.b16 %v1399, %v1398
    %v1406 = vpack.c.b16 %v1401, %v1400
    %v1407 = vpack.c.b16 %v1403, %v1402
    %1408 = vrot.lane.b32.xlu0 %v1404, 64
    %v1409 = vpop.permute.xlu0 %1408
    %1410 = vrot.lane.b32.xlu0 %v1405, 64
    %v1411 = vpop.permute.xlu0 %1410
    %1412 = vrot.lane.b32.xlu0 %v1406, 64
    %v1413 = vpop.permute.xlu0 %1412
    %1414 = vrot.lane.b32.xlu0 %v1407, 64
    %v1415 = vpop.permute.xlu0 %1414
    %v1424 = vunpack.c.l.b16 %v1332
    %v1425 = vunpack.c.l.b16 %v1333
    %v1426 = vunpack.c.l.b16 %v1334
    %v1427 = vunpack.c.l.b16 %v1335
    %v1428 = vunpack.c.l.b16 %v1336
    %v1429 = vunpack.c.l.b16 %v1337
    %v1430 = vunpack.c.l.b16 %v1338
    %v1431 = vunpack.c.l.b16 %v1339
    %v1432 = vpack.c.b16 %v1425, %v1424
    %v1433 = vpack.c.b16 %v1427, %v1426
    %v1434 = vpack.c.b16 %v1429, %v1428
    %v1435 = vpack.c.b16 %v1431, %v1430
    %1436 = vrot.lane.b32.xlu0 %v1432, 96
    %v1437 = vpop.permute.xlu0 %1436
    %1438 = vrot.lane.b32.xlu0 %v1433, 96
    %v1439 = vpop.permute.xlu0 %1438
    %1440 = vrot.lane.b32.xlu0 %v1434, 96
    %v1441 = vpop.permute.xlu0 %1440
    %1442 = vrot.lane.b32.xlu0 %v1435, 96
    %v1443 = vpop.permute.xlu0 %1442
    %v1446 = vsel %vm302, %v1356, %v1381
    %v1449 = vsel %vm302, %v1357, %v1383
    %v1452 = vsel %vm302, %v1358, %v1385
    %v1455 = vsel %vm302, %v1359, %v1387
    %v1457 = vsel %vm985, %v1446, %v1409
    %v1459 = vsel %vm985, %v1449, %v1411
    %v1461 = vsel %vm985, %v1452, %v1413
    %v1463 = vsel %vm985, %v1455, %v1415
    %v1465 = vsel %vm994, %v1457, %v1437
    %v1467 = vsel %vm994, %v1459, %v1439
    %v1469 = vsel %vm994, %v1461, %v1441
    %v1471 = vsel %vm994, %v1463, %v1443
    %v1476 = vunpack.c.l.b16 %v1465
    %v1477 = vunpack.c.h.b16 %v1465
    %v1478 = vunpack.c.l.b16 %v1467
    %v1479 = vunpack.c.h.b16 %v1467
    %v1480 = vunpack.c.l.b16 %v1469
    %v1481 = vunpack.c.h.b16 %v1469
    %v1482 = vunpack.c.l.b16 %v1471
    %v1483 = vunpack.c.h.b16 %v1471
    %v1484 = vpack.c.b16 %v1476, %v1476
    %v1485 = vpack.c.b16 %v1477, %v1477
    %v1486 = vpack.c.b16 %v1478, %v1478
    %v1487 = vpack.c.b16 %v1479, %v1479
    %v1488 = vpack.c.b16 %v1480, %v1480
    %v1489 = vpack.c.b16 %v1481, %v1481
    %v1490 = vpack.c.b16 %v1482, %v1482
    %v1491 = vpack.c.b16 %v1483, %v1483
    %1500 = vst [vmem:[%s1035 + $0x8] sm:$0xf] %v1484
    %1501 = vst [vmem:[%s1035 + $0x24] sm:$0xf] %v1485
    %1502 = vst [vmem:[%s1035 + $0x40] sm:$0xf] %v1486
    %1503 = vst [vmem:[%s1035 + $0x5c] sm:$0xf] %v1487
    %1504 = vst [vmem:[%s1035 + $0x78] sm:$0xf] %v1488
    %1505 = vst [vmem:[%s1035 + $0x94] sm:$0xf] %v1489
    %1506 = vst [vmem:[%s1035 + $0xb0] sm:$0xf] %v1490
    %1507 = vst [vmem:[%s1035 + $0xcc] sm:$0xf] %v1491
    %v1508 = vld [vmem:[%s756 + $0x2] sm:$0xff]
    %v1509 = vld [vmem:[%s756 + $0x12] sm:$0xff]
    %v1510 = vld [vmem:[%s756 + $0x22] sm:$0xff]
    %v1511 = vld [vmem:[%s756 + $0x32] sm:$0xff]
    %v1512 = vld [vmem:[%s756 + $0x42] sm:$0xff]
    %v1513 = vld [vmem:[%s756 + $0x52] sm:$0xff]
    %v1514 = vld [vmem:[%s756 + $0x62] sm:$0xff]
    %v1515 = vld [vmem:[%s756 + $0x72] sm:$0xff]
    %v1516 = vpack.c.bf16 %v1508, %v1508
    %v1517 = vpack.c.bf16 %v1509, %v1509
    %v1518 = vpack.c.bf16 %v1510, %v1510
    %v1519 = vpack.c.bf16 %v1511, %v1511
    %v1520 = vpack.c.bf16 %v1512, %v1512
    %v1521 = vpack.c.bf16 %v1513, %v1513
    %v1522 = vpack.c.bf16 %v1514, %v1514
    %v1523 = vpack.c.bf16 %v1515, %v1515
    %v1524 = vld [vmem:[%s756 + $0x3] sm:$0xff]
    %v1525 = vld [vmem:[%s756 + $0x13] sm:$0xff]
    %v1526 = vld [vmem:[%s756 + $0x23] sm:$0xff]
    %v1527 = vld [vmem:[%s756 + $0x33] sm:$0xff]
    %v1528 = vld [vmem:[%s756 + $0x43] sm:$0xff]
    %v1529 = vld [vmem:[%s756 + $0x53] sm:$0xff]
    %v1530 = vld [vmem:[%s756 + $0x63] sm:$0xff]
    %v1531 = vld [vmem:[%s756 + $0x73] sm:$0xff]
    %v1532 = vpack.c.bf16 %v1524, %v1524
    %v1533 = vpack.c.bf16 %v1525, %v1525
    %v1534 = vpack.c.bf16 %v1526, %v1526
    %v1535 = vpack.c.bf16 %v1527, %v1527
    %v1536 = vpack.c.bf16 %v1528, %v1528
    %v1537 = vpack.c.bf16 %v1529, %v1529
    %v1538 = vpack.c.bf16 %v1530, %v1530
    %v1539 = vpack.c.bf16 %v1531, %v1531
    %v1540 = vld [vmem:[%s756 + $0x4] sm:$0xff]
    %v1541 = vld [vmem:[%s756 + $0x14] sm:$0xff]
    %v1542 = vld [vmem:[%s756 + $0x24] sm:$0xff]
    %v1543 = vld [vmem:[%s756 + $0x34] sm:$0xff]
    %v1544 = vld [vmem:[%s756 + $0x44] sm:$0xff]
    %v1545 = vld [vmem:[%s756 + $0x54] sm:$0xff]
    %v1546 = vld [vmem:[%s756 + $0x64] sm:$0xff]
    %v1547 = vld [vmem:[%s756 + $0x74] sm:$0xff]
    %v1548 = vpack.c.bf16 %v1540, %v1540
    %v1549 = vpack.c.bf16 %v1541, %v1541
    %v1550 = vpack.c.bf16 %v1542, %v1542
    %v1551 = vpack.c.bf16 %v1543, %v1543
    %v1552 = vpack.c.bf16 %v1544, %v1544
    %v1553 = vpack.c.bf16 %v1545, %v1545
    %v1554 = vpack.c.bf16 %v1546, %v1546
    %v1555 = vpack.c.bf16 %v1547, %v1547
    %v1556 = vld [vmem:[%s761] sm:$0xff]
    %v1557 = vld [vmem:[%s761 + $0x10] sm:$0xff]
    %v1558 = vld [vmem:[%s761 + $0x20] sm:$0xff]
    %v1559 = vld [vmem:[%s761 + $0x30] sm:$0xff]
    %v1560 = vld [vmem:[%s761 + $0x40] sm:$0xff]
    %v1561 = vld [vmem:[%s761 + $0x50] sm:$0xff]
    %v1562 = vld [vmem:[%s761 + $0x60] sm:$0xff]
    %v1563 = vld [vmem:[%s761 + $0x70] sm:$0xff]
    %v1564 = vpack.c.bf16 %v1556, %v1556
    %v1565 = vpack.c.bf16 %v1557, %v1557
    %v1566 = vpack.c.bf16 %v1558, %v1558
    %v1567 = vpack.c.bf16 %v1559, %v1559
    %v1568 = vpack.c.bf16 %v1560, %v1560
    %v1569 = vpack.c.bf16 %v1561, %v1561
    %v1570 = vpack.c.bf16 %v1562, %v1562
    %v1571 = vpack.c.bf16 %v1563, %v1563
    %v1580 = vunpack.c.l.b16 %v1516
    %v1581 = vunpack.c.l.b16 %v1517
    %v1582 = vunpack.c.l.b16 %v1518
    %v1583 = vunpack.c.l.b16 %v1519
    %v1584 = vunpack.c.l.b16 %v1520
    %v1585 = vunpack.c.l.b16 %v1521
    %v1586 = vunpack.c.l.b16 %v1522
    %v1587 = vunpack.c.l.b16 %v1523
    %v1588 = vpack.c.b16 %v1581, %v1580
    %v1589 = vpack.c.b16 %v1583, %v1582
    %v1590 = vpack.c.b16 %v1585, %v1584
    %v1591 = vpack.c.b16 %v1587, %v1586
    %v1600 = vunpack.c.l.b16 %v1532
    %v1601 = vunpack.c.l.b16 %v1533
    %v1602 = vunpack.c.l.b16 %v1534
    %v1603 = vunpack.c.l.b16 %v1535
    %v1604 = vunpack.c.l.b16 %v1536
    %v1605 = vunpack.c.l.b16 %v1537
    %v1606 = vunpack.c.l.b16 %v1538
    %v1607 = vunpack.c.l.b16 %v1539
    %v1608 = vpack.c.b16 %v1601, %v1600
    %v1609 = vpack.c.b16 %v1603, %v1602
    %v1610 = vpack.c.b16 %v1605, %v1604
    %v1611 = vpack.c.b16 %v1607, %v1606
    %1612 = vrot.lane.b32.xlu0 %v1608, 32
    %v1613 = vpop.permute.xlu0 %1612
    %1614 = vrot.lane.b32.xlu0 %v1609, 32
    %v1615 = vpop.permute.xlu0 %1614
    %1616 = vrot.lane.b32.xlu0 %v1610, 32
    %v1617 = vpop.permute.xlu0 %1616
    %1618 = vrot.lane.b32.xlu0 %v1611, 32
    %v1619 = vpop.permute.xlu0 %1618
    %v1628 = vunpack.c.l.b16 %v1548
    %v1629 = vunpack.c.l.b16 %v1549
    %v1630 = vunpack.c.l.b16 %v1550
    %v1631 = vunpack.c.l.b16 %v1551
    %v1632 = vunpack.c.l.b16 %v1552
    %v1633 = vunpack.c.l.b16 %v1553
    %v1634 = vunpack.c.l.b16 %v1554
    %v1635 = vunpack.c.l.b16 %v1555
    %v1636 = vpack.c.b16 %v1629, %v1628
    %v1637 = vpack.c.b16 %v1631, %v1630
    %v1638 = vpack.c.b16 %v1633, %v1632
    %v1639 = vpack.c.b16 %v1635, %v1634
    %1640 = vrot.lane.b32.xlu0 %v1636, 64
    %v1641 = vpop.permute.xlu0 %1640
    %1642 = vrot.lane.b32.xlu0 %v1637, 64
    %v1643 = vpop.permute.xlu0 %1642
    %1644 = vrot.lane.b32.xlu0 %v1638, 64
    %v1645 = vpop.permute.xlu0 %1644
    %1646 = vrot.lane.b32.xlu0 %v1639, 64
    %v1647 = vpop.permute.xlu0 %1646
    %v1656 = vunpack.c.l.b16 %v1564
    %v1657 = vunpack.c.l.b16 %v1565
    %v1658 = vunpack.c.l.b16 %v1566
    %v1659 = vunpack.c.l.b16 %v1567
    %v1660 = vunpack.c.l.b16 %v1568
    %v1661 = vunpack.c.l.b16 %v1569
    %v1662 = vunpack.c.l.b16 %v1570
    %v1663 = vunpack.c.l.b16 %v1571
    %v1664 = vpack.c.b16 %v1657, %v1656
    %v1665 = vpack.c.b16 %v1659, %v1658
    %v1666 = vpack.c.b16 %v1661, %v1660
    %v1667 = vpack.c.b16 %v1663, %v1662
    %1668 = vrot.lane.b32.xlu0 %v1664, 96
    %v1669 = vpop.permute.xlu0 %1668
    %1670 = vrot.lane.b32.xlu0 %v1665, 96
    %v1671 = vpop.permute.xlu0 %1670
    %1672 = vrot.lane.b32.xlu0 %v1666, 96
    %v1673 = vpop.permute.xlu0 %1672
    %1674 = vrot.lane.b32.xlu0 %v1667, 96
    %v1675 = vpop.permute.xlu0 %1674
    %v1678 = vsel %vm302, %v1588, %v1613
    %v1681 = vsel %vm302, %v1589, %v1615
    %v1684 = vsel %vm302, %v1590, %v1617
    %v1687 = vsel %vm302, %v1591, %v1619
    %v1689 = vsel %vm985, %v1678, %v1641
    %v1691 = vsel %vm985, %v1681, %v1643
    %v1693 = vsel %vm985, %v1684, %v1645
    %v1695 = vsel %vm985, %v1687, %v1647
    %v1697 = vsel %vm994, %v1689, %v1669
    %v1699 = vsel %vm994, %v1691, %v1671
    %v1701 = vsel %vm994, %v1693, %v1673
    %v1703 = vsel %vm994, %v1695, %v1675
    %v1708 = vunpack.c.l.b16 %v1697
    %v1709 = vunpack.c.h.b16 %v1697
    %v1710 = vunpack.c.l.b16 %v1699
    %v1711 = vunpack.c.h.b16 %v1699
    %v1712 = vunpack.c.l.b16 %v1701
    %v1713 = vunpack.c.h.b16 %v1701
    %v1714 = vunpack.c.l.b16 %v1703
    %v1715 = vunpack.c.h.b16 %v1703
    %v1716 = vpack.c.b16 %v1708, %v1708
    %v1717 = vpack.c.b16 %v1709, %v1709
    %v1718 = vpack.c.b16 %v1710, %v1710
    %v1719 = vpack.c.b16 %v1711, %v1711
    %v1720 = vpack.c.b16 %v1712, %v1712
    %v1721 = vpack.c.b16 %v1713, %v1713
    %v1722 = vpack.c.b16 %v1714, %v1714
    %v1723 = vpack.c.b16 %v1715, %v1715
    %1732 = vst [vmem:[%s1035 + $0xc] sm:$0xf] %v1716
    %1733 = vst [vmem:[%s1035 + $0x28] sm:$0xf] %v1717
    %1734 = vst [vmem:[%s1035 + $0x44] sm:$0xf] %v1718
    %1735 = vst [vmem:[%s1035 + $0x60] sm:$0xf] %v1719
    %1736 = vst [vmem:[%s1035 + $0x7c] sm:$0xf] %v1720
    %1737 = vst [vmem:[%s1035 + $0x98] sm:$0xf] %v1721
    %1738 = vst [vmem:[%s1035 + $0xb4] sm:$0xf] %v1722
    %1739 = vst [vmem:[%s1035 + $0xd0] sm:$0xf] %v1723
    %v1740 = vld [vmem:[%s761 + $0x1] sm:$0xff]
    %v1741 = vld [vmem:[%s761 + $0x11] sm:$0xff]
    %v1742 = vld [vmem:[%s761 + $0x21] sm:$0xff]
    %v1743 = vld [vmem:[%s761 + $0x31] sm:$0xff]
    %v1744 = vld [vmem:[%s761 + $0x41] sm:$0xff]
    %v1745 = vld [vmem:[%s761 + $0x51] sm:$0xff]
    %v1746 = vld [vmem:[%s761 + $0x61] sm:$0xff]
    %v1747 = vld [vmem:[%s761 + $0x71] sm:$0xff]
    %v1748 = vpack.c.bf16 %v1740, %v1740
    %v1749 = vpack.c.bf16 %v1741, %v1741
    %v1750 = vpack.c.bf16 %v1742, %v1742
    %v1751 = vpack.c.bf16 %v1743, %v1743
    %v1752 = vpack.c.bf16 %v1744, %v1744
    %v1753 = vpack.c.bf16 %v1745, %v1745
    %v1754 = vpack.c.bf16 %v1746, %v1746
    %v1755 = vpack.c.bf16 %v1747, %v1747
    %v1756 = vld [vmem:[%s761 + $0x2] sm:$0xff]
    %v1757 = vld [vmem:[%s761 + $0x12] sm:$0xff]
    %v1758 = vld [vmem:[%s761 + $0x22] sm:$0xff]
    %v1759 = vld [vmem:[%s761 + $0x32] sm:$0xff]
    %v1760 = vld [vmem:[%s761 + $0x42] sm:$0xff]
    %v1761 = vld [vmem:[%s761 + $0x52] sm:$0xff]
    %v1762 = vld [vmem:[%s761 + $0x62] sm:$0xff]
    %v1763 = vld [vmem:[%s761 + $0x72] sm:$0xff]
    %v1764 = vpack.c.bf16 %v1756, %v1756
    %v1765 = vpack.c.bf16 %v1757, %v1757
    %v1766 = vpack.c.bf16 %v1758, %v1758
    %v1767 = vpack.c.bf16 %v1759, %v1759
    %v1768 = vpack.c.bf16 %v1760, %v1760
    %v1769 = vpack.c.bf16 %v1761, %v1761
    %v1770 = vpack.c.bf16 %v1762, %v1762
    %v1771 = vpack.c.bf16 %v1763, %v1763
    %v1772 = vld [vmem:[%s761 + $0x3] sm:$0xff]
    %v1773 = vld [vmem:[%s761 + $0x13] sm:$0xff]
    %v1774 = vld [vmem:[%s761 + $0x23] sm:$0xff]
    %v1775 = vld [vmem:[%s761 + $0x33] sm:$0xff]
    %v1776 = vld [vmem:[%s761 + $0x43] sm:$0xff]
    %v1777 = vld [vmem:[%s761 + $0x53] sm:$0xff]
    %v1778 = vld [vmem:[%s761 + $0x63] sm:$0xff]
    %v1779 = vld [vmem:[%s761 + $0x73] sm:$0xff]
    %v1780 = vpack.c.bf16 %v1772, %v1772
    %v1781 = vpack.c.bf16 %v1773, %v1773
    %v1782 = vpack.c.bf16 %v1774, %v1774
    %v1783 = vpack.c.bf16 %v1775, %v1775
    %v1784 = vpack.c.bf16 %v1776, %v1776
    %v1785 = vpack.c.bf16 %v1777, %v1777
    %v1786 = vpack.c.bf16 %v1778, %v1778
    %v1787 = vpack.c.bf16 %v1779, %v1779
    %v1788 = vld [vmem:[%s761 + $0x4] sm:$0xff]
    %v1789 = vld [vmem:[%s761 + $0x14] sm:$0xff]
    %v1790 = vld [vmem:[%s761 + $0x24] sm:$0xff]
    %v1791 = vld [vmem:[%s761 + $0x34] sm:$0xff]
    %v1792 = vld [vmem:[%s761 + $0x44] sm:$0xff]
    %v1793 = vld [vmem:[%s761 + $0x54] sm:$0xff]
    %v1794 = vld [vmem:[%s761 + $0x64] sm:$0xff]
    %v1795 = vld [vmem:[%s761 + $0x74] sm:$0xff]
    %v1796 = vpack.c.bf16 %v1788, %v1788
    %v1797 = vpack.c.bf16 %v1789, %v1789
    %v1798 = vpack.c.bf16 %v1790, %v1790
    %v1799 = vpack.c.bf16 %v1791, %v1791
    %v1800 = vpack.c.bf16 %v1792, %v1792
    %v1801 = vpack.c.bf16 %v1793, %v1793
    %v1802 = vpack.c.bf16 %v1794, %v1794
    %v1803 = vpack.c.bf16 %v1795, %v1795
    %v1812 = vunpack.c.l.b16 %v1748
    %v1813 = vunpack.c.l.b16 %v1749
    %v1814 = vunpack.c.l.b16 %v1750
    %v1815 = vunpack.c.l.b16 %v1751
    %v1816 = vunpack.c.l.b16 %v1752
    %v1817 = vunpack.c.l.b16 %v1753
    %v1818 = vunpack.c.l.b16 %v1754
    %v1819 = vunpack.c.l.b16 %v1755
    %v1820 = vpack.c.b16 %v1813, %v1812
    %v1821 = vpack.c.b16 %v1815, %v1814
    %v1822 = vpack.c.b16 %v1817, %v1816
    %v1823 = vpack.c.b16 %v1819, %v1818
    %v1832 = vunpack.c.l.b16 %v1764
    %v1833 = vunpack.c.l.b16 %v1765
    %v1834 = vunpack.c.l.b16 %v1766
    %v1835 = vunpack.c.l.b16 %v1767
    %v1836 = vunpack.c.l.b16 %v1768
    %v1837 = vunpack.c.l.b16 %v1769
    %v1838 = vunpack.c.l.b16 %v1770
    %v1839 = vunpack.c.l.b16 %v1771
    %v1840 = vpack.c.b16 %v1833, %v1832
    %v1841 = vpack.c.b16 %v1835, %v1834
    %v1842 = vpack.c.b16 %v1837, %v1836
    %v1843 = vpack.c.b16 %v1839, %v1838
    %1844 = vrot.lane.b32.xlu0 %v1840, 32
    %v1845 = vpop.permute.xlu0 %1844
    %1846 = vrot.lane.b32.xlu0 %v1841, 32
    %v1847 = vpop.permute.xlu0 %1846
    %1848 = vrot.lane.b32.xlu0 %v1842, 32
    %v1849 = vpop.permute.xlu0 %1848
    %1850 = vrot.lane.b32.xlu0 %v1843, 32
    %v1851 = vpop.permute.xlu0 %1850
    %v1860 = vunpack.c.l.b16 %v1780
    %v1861 = vunpack.c.l.b16 %v1781
    %v1862 = vunpack.c.l.b16 %v1782
    %v1863 = vunpack.c.l.b16 %v1783
    %v1864 = vunpack.c.l.b16 %v1784
    %v1865 = vunpack.c.l.b16 %v1785
    %v1866 = vunpack.c.l.b16 %v1786
    %v1867 = vunpack.c.l.b16 %v1787
    %v1868 = vpack.c.b16 %v1861, %v1860
    %v1869 = vpack.c.b16 %v1863, %v1862
    %v1870 = vpack.c.b16 %v1865, %v1864
    %v1871 = vpack.c.b16 %v1867, %v1866
    %1872 = vrot.lane.b32.xlu0 %v1868, 64
    %v1873 = vpop.permute.xlu0 %1872
    %1874 = vrot.lane.b32.xlu0 %v1869, 64
    %v1875 = vpop.permute.xlu0 %1874
    %1876 = vrot.lane.b32.xlu0 %v1870, 64
    %v1877 = vpop.permute.xlu0 %1876
    %1878 = vrot.lane.b32.xlu0 %v1871, 64
    %v1879 = vpop.permute.xlu0 %1878
    %v1888 = vunpack.c.l.b16 %v1796
    %v1889 = vunpack.c.l.b16 %v1797
    %v1890 = vunpack.c.l.b16 %v1798
    %v1891 = vunpack.c.l.b16 %v1799
    %v1892 = vunpack.c.l.b16 %v1800
    %v1893 = vunpack.c.l.b16 %v1801
    %v1894 = vunpack.c.l.b16 %v1802
    %v1895 = vunpack.c.l.b16 %v1803
    %v1896 = vpack.c.b16 %v1889, %v1888
    %v1897 = vpack.c.b16 %v1891, %v1890
    %v1898 = vpack.c.b16 %v1893, %v1892
    %v1899 = vpack.c.b16 %v1895, %v1894
    %1900 = vrot.lane.b32.xlu0 %v1896, 96
    %v1901 = vpop.permute.xlu0 %1900
    %1902 = vrot.lane.b32.xlu0 %v1897, 96
    %v1903 = vpop.permute.xlu0 %1902
    %1904 = vrot.lane.b32.xlu0 %v1898, 96
    %v1905 = vpop.permute.xlu0 %1904
    %1906 = vrot.lane.b32.xlu0 %v1899, 96
    %v1907 = vpop.permute.xlu0 %1906
    %v1910 = vsel %vm302, %v1820, %v1845
    %v1913 = vsel %vm302, %v1821, %v1847
    %v1916 = vsel %vm302, %v1822, %v1849
    %v1919 = vsel %vm302, %v1823, %v1851
    %v1921 = vsel %vm985, %v1910, %v1873
    %v1923 = vsel %vm985, %v1913, %v1875
    %v1925 = vsel %vm985, %v1916, %v1877
    %v1927 = vsel %vm985, %v1919, %v1879
    %v1929 = vsel %vm994, %v1921, %v1901
    %v1931 = vsel %vm994, %v1923, %v1903
    %v1933 = vsel %vm994, %v1925, %v1905
    %v1935 = vsel %vm994, %v1927, %v1907
    %v1940 = vunpack.c.l.b16 %v1929
    %v1941 = vunpack.c.h.b16 %v1929
    %v1942 = vunpack.c.l.b16 %v1931
    %v1943 = vunpack.c.h.b16 %v1931
    %v1944 = vunpack.c.l.b16 %v1933
    %v1945 = vunpack.c.h.b16 %v1933
    %v1946 = vunpack.c.l.b16 %v1935
    %v1947 = vunpack.c.h.b16 %v1935
    %v1948 = vpack.c.b16 %v1940, %v1940
    %v1949 = vpack.c.b16 %v1941, %v1941
    %v1950 = vpack.c.b16 %v1942, %v1942
    %v1951 = vpack.c.b16 %v1943, %v1943
    %v1952 = vpack.c.b16 %v1944, %v1944
    %v1953 = vpack.c.b16 %v1945, %v1945
    %v1954 = vpack.c.b16 %v1946, %v1946
    %v1955 = vpack.c.b16 %v1947, %v1947
    %1964 = vst [vmem:[%s1035 + $0x10] sm:$0xf] %v1948
    %1965 = vst [vmem:[%s1035 + $0x2c] sm:$0xf] %v1949
    %1966 = vst [vmem:[%s1035 + $0x48] sm:$0xf] %v1950
    %1967 = vst [vmem:[%s1035 + $0x64] sm:$0xf] %v1951
    %1968 = vst [vmem:[%s1035 + $0x80] sm:$0xf] %v1952
    %1969 = vst [vmem:[%s1035 + $0x9c] sm:$0xf] %v1953
    %1970 = vst [vmem:[%s1035 + $0xb8] sm:$0xf] %v1954
    %1971 = vst [vmem:[%s1035 + $0xd4] sm:$0xf] %v1955
    %v1972 = vld [vmem:[%s766] sm:$0xff]
    %v1973 = vld [vmem:[%s766 + $0x10] sm:$0xff]
    %v1974 = vld [vmem:[%s766 + $0x20] sm:$0xff]
    %v1975 = vld [vmem:[%s766 + $0x30] sm:$0xff]
    %v1976 = vld [vmem:[%s766 + $0x40] sm:$0xff]
    %v1977 = vld [vmem:[%s766 + $0x50] sm:$0xff]
    %v1978 = vld [vmem:[%s766 + $0x60] sm:$0xff]
    %v1979 = vld [vmem:[%s766 + $0x70] sm:$0xff]
    %v1980 = vpack.c.bf16 %v1972, %v1972
    %v1981 = vpack.c.bf16 %v1973, %v1973
    %v1982 = vpack.c.bf16 %v1974, %v1974
    %v1983 = vpack.c.bf16 %v1975, %v1975
    %v1984 = vpack.c.bf16 %v1976, %v1976
    %v1985 = vpack.c.bf16 %v1977, %v1977
    %v1986 = vpack.c.bf16 %v1978, %v1978
    %v1987 = vpack.c.bf16 %v1979, %v1979
    %v1988 = vld [vmem:[%s766 + $0x1] sm:$0xff]
    %v1989 = vld [vmem:[%s766 + $0x11] sm:$0xff]
    %v1990 = vld [vmem:[%s766 + $0x21] sm:$0xff]
    %v1991 = vld [vmem:[%s766 + $0x31] sm:$0xff]
    %v1992 = vld [vmem:[%s766 + $0x41] sm:$0xff]
    %v1993 = vld [vmem:[%s766 + $0x51] sm:$0xff]
    %v1994 = vld [vmem:[%s766 + $0x61] sm:$0xff]
    %v1995 = vld [vmem:[%s766 + $0x71] sm:$0xff]
    %v1996 = vpack.c.bf16 %v1988, %v1988
    %v1997 = vpack.c.bf16 %v1989, %v1989
    %v1998 = vpack.c.bf16 %v1990, %v1990
    %v1999 = vpack.c.bf16 %v1991, %v1991
    %v2000 = vpack.c.bf16 %v1992, %v1992
    %v2001 = vpack.c.bf16 %v1993, %v1993
    %v2002 = vpack.c.bf16 %v1994, %v1994
    %v2003 = vpack.c.bf16 %v1995, %v1995
    %v2004 = vld [vmem:[%s766 + $0x2] sm:$0xff]
    %v2005 = vld [vmem:[%s766 + $0x12] sm:$0xff]
    %v2006 = vld [vmem:[%s766 + $0x22] sm:$0xff]
    %v2007 = vld [vmem:[%s766 + $0x32] sm:$0xff]
    %v2008 = vld [vmem:[%s766 + $0x42] sm:$0xff]
    %v2009 = vld [vmem:[%s766 + $0x52] sm:$0xff]
    %v2010 = vld [vmem:[%s766 + $0x62] sm:$0xff]
    %v2011 = vld [vmem:[%s766 + $0x72] sm:$0xff]
    %v2012 = vpack.c.bf16 %v2004, %v2004
    %v2013 = vpack.c.bf16 %v2005, %v2005
    %v2014 = vpack.c.bf16 %v2006, %v2006
    %v2015 = vpack.c.bf16 %v2007, %v2007
    %v2016 = vpack.c.bf16 %v2008, %v2008
    %v2017 = vpack.c.bf16 %v2009, %v2009
    %v2018 = vpack.c.bf16 %v2010, %v2010
    %v2019 = vpack.c.bf16 %v2011, %v2011
    %v2020 = vld [vmem:[%s766 + $0x3] sm:$0xff]
    %v2021 = vld [vmem:[%s766 + $0x13] sm:$0xff]
    %v2022 = vld [vmem:[%s766 + $0x23] sm:$0xff]
    %v2023 = vld [vmem:[%s766 + $0x33] sm:$0xff]
    %v2024 = vld [vmem:[%s766 + $0x43] sm:$0xff]
    %v2025 = vld [vmem:[%s766 + $0x53] sm:$0xff]
    %v2026 = vld [vmem:[%s766 + $0x63] sm:$0xff]
    %v2027 = vld [vmem:[%s766 + $0x73] sm:$0xff]
    %v2028 = vpack.c.bf16 %v2020, %v2020
    %v2029 = vpack.c.bf16 %v2021, %v2021
    %v2030 = vpack.c.bf16 %v2022, %v2022
    %v2031 = vpack.c.bf16 %v2023, %v2023
    %v2032 = vpack.c.bf16 %v2024, %v2024
    %v2033 = vpack.c.bf16 %v2025, %v2025
    %v2034 = vpack.c.bf16 %v2026, %v2026
    %v2035 = vpack.c.bf16 %v2027, %v2027
    %v2044 = vunpack.c.l.b16 %v1980
    %v2045 = vunpack.c.l.b16 %v1981
    %v2046 = vunpack.c.l.b16 %v1982
    %v2047 = vunpack.c.l.b16 %v1983
    %v2048 = vunpack.c.l.b16 %v1984
    %v2049 = vunpack.c.l.b16 %v1985
    %v2050 = vunpack.c.l.b16 %v1986
    %v2051 = vunpack.c.l.b16 %v1987
    %v2052 = vpack.c.b16 %v2045, %v2044
    %v2053 = vpack.c.b16 %v2047, %v2046
    %v2054 = vpack.c.b16 %v2049, %v2048
    %v2055 = vpack.c.b16 %v2051, %v2050
    %v2064 = vunpack.c.l.b16 %v1996
    %v2065 = vunpack.c.l.b16 %v1997
    %v2066 = vunpack.c.l.b16 %v1998
    %v2067 = vunpack.c.l.b16 %v1999
    %v2068 = vunpack.c.l.b16 %v2000
    %v2069 = vunpack.c.l.b16 %v2001
    %v2070 = vunpack.c.l.b16 %v2002
    %v2071 = vunpack.c.l.b16 %v2003
    %v2072 = vpack.c.b16 %v2065, %v2064
    %v2073 = vpack.c.b16 %v2067, %v2066
    %v2074 = vpack.c.b16 %v2069, %v2068
    %v2075 = vpack.c.b16 %v2071, %v2070
    %2076 = vrot.lane.b32.xlu0 %v2072, 32
    %v2077 = vpop.permute.xlu0 %2076
    %2078 = vrot.lane.b32.xlu0 %v2073, 32
    %v2079 = vpop.permute.xlu0 %2078
    %2080 = vrot.lane.b32.xlu0 %v2074, 32
    %v2081 = vpop.permute.xlu0 %2080
    %2082 = vrot.lane.b32.xlu0 %v2075, 32
    %v2083 = vpop.permute.xlu0 %2082
    %v2092 = vunpack.c.l.b16 %v2012
    %v2093 = vunpack.c.l.b16 %v2013
    %v2094 = vunpack.c.l.b16 %v2014
    %v2095 = vunpack.c.l.b16 %v2015
    %v2096 = vunpack.c.l.b16 %v2016
    %v2097 = vunpack.c.l.b16 %v2017
    %v2098 = vunpack.c.l.b16 %v2018
    %v2099 = vunpack.c.l.b16 %v2019
    %v2100 = vpack.c.b16 %v2093, %v2092
    %v2101 = vpack.c.b16 %v2095, %v2094
    %v2102 = vpack.c.b16 %v2097, %v2096
    %v2103 = vpack.c.b16 %v2099, %v2098
    %2104 = vrot.lane.b32.xlu0 %v2100, 64
    %v2105 = vpop.permute.xlu0 %2104
    %2106 = vrot.lane.b32.xlu0 %v2101, 64
    %v2107 = vpop.permute.xlu0 %2106
    %2108 = vrot.lane.b32.xlu0 %v2102, 64
    %v2109 = vpop.permute.xlu0 %2108
    %2110 = vrot.lane.b32.xlu0 %v2103, 64
    %v2111 = vpop.permute.xlu0 %2110
    %v2120 = vunpack.c.l.b16 %v2028
    %v2121 = vunpack.c.l.b16 %v2029
    %v2122 = vunpack.c.l.b16 %v2030
    %v2123 = vunpack.c.l.b16 %v2031
    %v2124 = vunpack.c.l.b16 %v2032
    %v2125 = vunpack.c.l.b16 %v2033
    %v2126 = vunpack.c.l.b16 %v2034
    %v2127 = vunpack.c.l.b16 %v2035
    %v2128 = vpack.c.b16 %v2121, %v2120
    %v2129 = vpack.c.b16 %v2123, %v2122
    %v2130 = vpack.c.b16 %v2125, %v2124
    %v2131 = vpack.c.b16 %v2127, %v2126
    %2132 = vrot.lane.b32.xlu0 %v2128, 96
    %v2133 = vpop.permute.xlu0 %2132
    %2134 = vrot.lane.b32.xlu0 %v2129, 96
    %v2135 = vpop.permute.xlu0 %2134
    %2136 = vrot.lane.b32.xlu0 %v2130, 96
    %v2137 = vpop.permute.xlu0 %2136
    %2138 = vrot.lane.b32.xlu0 %v2131, 96
    %v2139 = vpop.permute.xlu0 %2138
    %v2142 = vsel %vm302, %v2052, %v2077
    %v2145 = vsel %vm302, %v2053, %v2079
    %v2148 = vsel %vm302, %v2054, %v2081
    %v2151 = vsel %vm302, %v2055, %v2083
    %v2153 = vsel %vm985, %v2142, %v2105
    %v2155 = vsel %vm985, %v2145, %v2107
    %v2157 = vsel %vm985, %v2148, %v2109
    %v2159 = vsel %vm985, %v2151, %v2111
    %v2161 = vsel %vm994, %v2153, %v2133
    %v2163 = vsel %vm994, %v2155, %v2135
    %v2165 = vsel %vm994, %v2157, %v2137
    %v2167 = vsel %vm994, %v2159, %v2139
    %v2172 = vunpack.c.l.b16 %v2161
    %v2173 = vunpack.c.h.b16 %v2161
    %v2174 = vunpack.c.l.b16 %v2163
    %v2175 = vunpack.c.h.b16 %v2163
    %v2176 = vunpack.c.l.b16 %v2165
    %v2177 = vunpack.c.h.b16 %v2165
    %v2178 = vunpack.c.l.b16 %v2167
    %v2179 = vunpack.c.h.b16 %v2167
    %v2180 = vpack.c.b16 %v2172, %v2172
    %v2181 = vpack.c.b16 %v2173, %v2173
    %v2182 = vpack.c.b16 %v2174, %v2174
    %v2183 = vpack.c.b16 %v2175, %v2175
    %v2184 = vpack.c.b16 %v2176, %v2176
    %v2185 = vpack.c.b16 %v2177, %v2177
    %v2186 = vpack.c.b16 %v2178, %v2178
    %v2187 = vpack.c.b16 %v2179, %v2179
    %2196 = vst [vmem:[%s1035 + $0x14] sm:$0xf] %v2180
    %2197 = vst [vmem:[%s1035 + $0x30] sm:$0xf] %v2181
    %2198 = vst [vmem:[%s1035 + $0x4c] sm:$0xf] %v2182
    %2199 = vst [vmem:[%s1035 + $0x68] sm:$0xf] %v2183
    %2200 = vst [vmem:[%s1035 + $0x84] sm:$0xf] %v2184
    %2201 = vst [vmem:[%s1035 + $0xa0] sm:$0xf] %v2185
    %2202 = vst [vmem:[%s1035 + $0xbc] sm:$0xf] %v2186
    %2203 = vst [vmem:[%s1035 + $0xd8] sm:$0xf] %v2187
    %v2204 = vld [vmem:[%s766 + $0x4] sm:$0xff]
    %v2205 = vld [vmem:[%s766 + $0x14] sm:$0xff]
    %v2206 = vld [vmem:[%s766 + $0x24] sm:$0xff]
    %v2207 = vld [vmem:[%s766 + $0x34] sm:$0xff]
    %v2208 = vld [vmem:[%s766 + $0x44] sm:$0xff]
    %v2209 = vld [vmem:[%s766 + $0x54] sm:$0xff]
    %v2210 = vld [vmem:[%s766 + $0x64] sm:$0xff]
    %v2211 = vld [vmem:[%s766 + $0x74] sm:$0xff]
    %v2212 = vpack.c.bf16 %v2204, %v2204
    %v2213 = vpack.c.bf16 %v2205, %v2205
    %v2214 = vpack.c.bf16 %v2206, %v2206
    %v2215 = vpack.c.bf16 %v2207, %v2207
    %v2216 = vpack.c.bf16 %v2208, %v2208
    %v2217 = vpack.c.bf16 %v2209, %v2209
    %v2218 = vpack.c.bf16 %v2210, %v2210
    %v2219 = vpack.c.bf16 %v2211, %v2211
    %2220 = vst.msk [vmem:[%s1035 + $0x18] sm:$0xf] %vm747, %v2212
    %2221 = vst.msk [vmem:[%s1035 + $0x34] sm:$0xf] %vm747, %v2213
    %2222 = vst.msk [vmem:[%s1035 + $0x50] sm:$0xf] %vm747, %v2214
    %2223 = vst.msk [vmem:[%s1035 + $0x6c] sm:$0xf] %vm747, %v2215
    %2224 = vst.msk [vmem:[%s1035 + $0x88] sm:$0xf] %vm747, %v2216
    %2225 = vst.msk [vmem:[%s1035 + $0xa4] sm:$0xf] %vm747, %v2217
    %2226 = vst.msk [vmem:[%s1035 + $0xc0] sm:$0xf] %vm747, %v2218
    %2227 = vst.msk [vmem:[%s1035 + $0xdc] sm:$0xf] %vm747, %v2219
  $region26: #{net_forward.2} parent=0 // loop_footer
    %s26 = sadd.s32 1, %s22
  $region27: #{net_forward.2} parent=0 // loop_footer_branch
    %21 = sbr.rel target = $region23
  $region28: #{net_forward.2} parent=0 // loop_exit
    _
  %v2228 = vld [vmem:[#allocation4] sm:$0xff]
  %v2229 = vld [vmem:[#allocation4 + $0x8] sm:$0xff]
  %v2230 = vld [vmem:[#allocation4 + $0x10] sm:$0xff]
  %v2231 = vld [vmem:[#allocation4 + $0x18] sm:$0xf]
  %v2232 = vld [vmem:[#allocation4 + $0x1c] sm:$0xff]
  %v2233 = vld [vmem:[#allocation4 + $0x24] sm:$0xff]
  %v2234 = vld [vmem:[#allocation4 + $0x2c] sm:$0xff]
  %v2235 = vld [vmem:[#allocation4 + $0x34] sm:$0xf]
  %v2236 = vld [vmem:[#allocation4 + $0x38] sm:$0xff]
  %v2237 = vld [vmem:[#allocation4 + $0x40] sm:$0xff]
  %v2238 = vld [vmem:[#allocation4 + $0x48] sm:$0xff]
  %v2239 = vld [vmem:[#allocation4 + $0x50] sm:$0xf]
  %v2240 = vld [vmem:[#allocation4 + $0x54] sm:$0xff]
  %v2241 = vld [vmem:[#allocation4 + $0x5c] sm:$0xff]
  %v2242 = vld [vmem:[#allocation4 + $0x64] sm:$0xff]
  %v2243 = vld [vmem:[#allocation4 + $0x6c] sm:$0xf]
  %v2244 = vld [vmem:[#allocation4 + $0x70] sm:$0xff]
  %v2245 = vld [vmem:[#allocation4 + $0x78] sm:$0xff]
  %v2246 = vld [vmem:[#allocation4 + $0x80] sm:$0xff]
  %v2247 = vld [vmem:[#allocation4 + $0x88] sm:$0xf]
  %v2248 = vld [vmem:[#allocation4 + $0x8c] sm:$0xff]
  %v2249 = vld [vmem:[#allocation4 + $0x94] sm:$0xff]
  %v2250 = vld [vmem:[#allocation4 + $0x9c] sm:$0xff]
  %v2251 = vld [vmem:[#allocation4 + $0xa4] sm:$0xf]
  %v2252 = vld [vmem:[#allocation4 + $0xa8] sm:$0xff]
  %v2253 = vld [vmem:[#allocation4 + $0xb0] sm:$0xff]
  %v2254 = vld [vmem:[#allocation4 + $0xb8] sm:$0xff]
  %v2255 = vld [vmem:[#allocation4 + $0xc0] sm:$0xf]
  %v2256 = vld [vmem:[#allocation4 + $0xc4] sm:$0xff]
  %v2257 = vld [vmem:[#allocation4 + $0xcc] sm:$0xff]
  %v2258 = vld [vmem:[#allocation4 + $0xd4] sm:$0xff]
  %v2259 = vld [vmem:[#allocation4 + $0xdc] sm:$0xf]
  %v2260 = vld [vmem:[#allocation4 + $0xe0] sm:$0xff]
  %v2261 = vld [vmem:[#allocation4 + $0xe8] sm:$0xff]
  %v2262 = vld [vmem:[#allocation4 + $0xf0] sm:$0xff]
  %v2263 = vld [vmem:[#allocation4 + $0xf8] sm:$0xf]
  %v2264 = vld [vmem:[#allocation4 + $0xfc] sm:$0xff]
  %v2265 = vld [vmem:[#allocation4 + $0x104] sm:$0xff]
  %v2266 = vld [vmem:[#allocation4 + $0x10c] sm:$0xff]
  %v2267 = vld [vmem:[#allocation4 + $0x114] sm:$0xf]
  %v2268 = vld [vmem:[#allocation4 + $0x118] sm:$0xff]
  %v2269 = vld [vmem:[#allocation4 + $0x120] sm:$0xff]
  %v2270 = vld [vmem:[#allocation4 + $0x128] sm:$0xff]
  %v2271 = vld [vmem:[#allocation4 + $0x130] sm:$0xf]
  %v2272 = vld [vmem:[#allocation4 + $0x134] sm:$0xff]
  %v2273 = vld [vmem:[#allocation4 + $0x13c] sm:$0xff]
  %v2274 = vld [vmem:[#allocation4 + $0x144] sm:$0xff]
  %v2275 = vld [vmem:[#allocation4 + $0x14c] sm:$0xf]
  %v2276 = vld [vmem:[#allocation4 + $0x150] sm:$0xff]
  %v2277 = vld [vmem:[#allocation4 + $0x158] sm:$0xff]
  %v2278 = vld [vmem:[#allocation4 + $0x160] sm:$0xff]
  %v2279 = vld [vmem:[#allocation4 + $0x168] sm:$0xf]
  %v2280 = vld [vmem:[#allocation4 + $0x16c] sm:$0xff]
  %v2281 = vld [vmem:[#allocation4 + $0x174] sm:$0xff]
  %v2282 = vld [vmem:[#allocation4 + $0x17c] sm:$0xff]
  %v2283 = vld [vmem:[#allocation4 + $0x184] sm:$0xf]
  %v2284 = vld [vmem:[#allocation4 + $0x188] sm:$0xff]
  %v2285 = vld [vmem:[#allocation4 + $0x190] sm:$0xff]
  %v2286 = vld [vmem:[#allocation4 + $0x198] sm:$0xff]
  %v2287 = vld [vmem:[#allocation4 + $0x1a0] sm:$0xf]
  %v2288 = vld [vmem:[#allocation4 + $0x1a4] sm:$0xff]
  %v2289 = vld [vmem:[#allocation4 + $0x1ac] sm:$0xff]
  %v2290 = vld [vmem:[#allocation4 + $0x1b4] sm:$0xff]
  %v2291 = vld [vmem:[#allocation4 + $0x1bc] sm:$0xf]
  %v2292 = vld [vmem:[#allocation4 + $0x1c0] sm:$0xff]
  %v2293 = vld [vmem:[#allocation4 + $0x1c8] sm:$0xff]
  %v2294 = vld [vmem:[#allocation4 + $0x1d0] sm:$0xff]
  %v2295 = vld [vmem:[#allocation4 + $0x1d8] sm:$0xf]
  %v2296 = vld [vmem:[#allocation4 + $0x1dc] sm:$0xff]
  %v2297 = vld [vmem:[#allocation4 + $0x1e4] sm:$0xff]
  %v2298 = vld [vmem:[#allocation4 + $0x1ec] sm:$0xff]
  %v2299 = vld [vmem:[#allocation4 + $0x1f4] sm:$0xf]
  %v2300 = vld [vmem:[#allocation4 + $0x1f8] sm:$0xff]
  %v2301 = vld [vmem:[#allocation4 + $0x200] sm:$0xff]
  %v2302 = vld [vmem:[#allocation4 + $0x208] sm:$0xff]
  %v2303 = vld [vmem:[#allocation4 + $0x210] sm:$0xf]
  %v2304 = vld [vmem:[#allocation4 + $0x214] sm:$0xff]
  %v2305 = vld [vmem:[#allocation4 + $0x21c] sm:$0xff]
  %v2306 = vld [vmem:[#allocation4 + $0x224] sm:$0xff]
  %v2307 = vld [vmem:[#allocation4 + $0x22c] sm:$0xf]
  %v2308 = vld [vmem:[#allocation4 + $0x230] sm:$0xff]
  %v2309 = vld [vmem:[#allocation4 + $0x238] sm:$0xff]
  %v2310 = vld [vmem:[#allocation4 + $0x240] sm:$0xff]
  %v2311 = vld [vmem:[#allocation4 + $0x248] sm:$0xf]
  %v2312 = vld [vmem:[#allocation4 + $0x24c] sm:$0xff]
  %v2313 = vld [vmem:[#allocation4 + $0x254] sm:$0xff]
  %v2314 = vld [vmem:[#allocation4 + $0x25c] sm:$0xff]
  %v2315 = vld [vmem:[#allocation4 + $0x264] sm:$0xf]
  %v2316 = vld [vmem:[#allocation4 + $0x268] sm:$0xff]
  %v2317 = vld [vmem:[#allocation4 + $0x270] sm:$0xff]
  %v2318 = vld [vmem:[#allocation4 + $0x278] sm:$0xff]
  %v2319 = vld [vmem:[#allocation4 + $0x280] sm:$0xf]
  %v2320 = vld [vmem:[#allocation4 + $0x284] sm:$0xff]
  %v2321 = vld [vmem:[#allocation4 + $0x28c] sm:$0xff]
  %v2322 = vld [vmem:[#allocation4 + $0x294] sm:$0xff]
  %v2323 = vld [vmem:[#allocation4 + $0x29c] sm:$0xf]
  %v2324 = vld [vmem:[#allocation4 + $0x2a0] sm:$0xff]
  %v2325 = vld [vmem:[#allocation4 + $0x2a8] sm:$0xff]
  %v2326 = vld [vmem:[#allocation4 + $0x2b0] sm:$0xff]
  %v2327 = vld [vmem:[#allocation4 + $0x2b8] sm:$0xf]
  %v2328 = vld [vmem:[#allocation4 + $0x2bc] sm:$0xff]
  %v2329 = vld [vmem:[#allocation4 + $0x2c4] sm:$0xff]
  %v2330 = vld [vmem:[#allocation4 + $0x2cc] sm:$0xff]
  %v2331 = vld [vmem:[#allocation4 + $0x2d4] sm:$0xf]
  %v2332 = vld [vmem:[#allocation4 + $0x2d8] sm:$0xff]
  %v2333 = vld [vmem:[#allocation4 + $0x2e0] sm:$0xff]
  %v2334 = vld [vmem:[#allocation4 + $0x2e8] sm:$0xff]
  %v2335 = vld [vmem:[#allocation4 + $0x2f0] sm:$0xf]
  %v2336 = vld [vmem:[#allocation4 + $0x2f4] sm:$0xff]
  %v2337 = vld [vmem:[#allocation4 + $0x2fc] sm:$0xff]
  %v2338 = vld [vmem:[#allocation4 + $0x304] sm:$0xff]
  %v2339 = vld [vmem:[#allocation4 + $0x30c] sm:$0xf]
  %v2340 = vld [vmem:[#allocation4 + $0x310] sm:$0xff]
  %v2341 = vld [vmem:[#allocation4 + $0x318] sm:$0xff]
  %v2342 = vld [vmem:[#allocation4 + $0x320] sm:$0xff]
  %v2343 = vld [vmem:[#allocation4 + $0x328] sm:$0xf]
  %v2344 = vld [vmem:[#allocation4 + $0x32c] sm:$0xff]
  %v2345 = vld [vmem:[#allocation4 + $0x334] sm:$0xff]
  %v2346 = vld [vmem:[#allocation4 + $0x33c] sm:$0xff]
  %v2347 = vld [vmem:[#allocation4 + $0x344] sm:$0xf]
  %v2348 = vld [vmem:[#allocation4 + $0x348] sm:$0xff]
  %v2349 = vld [vmem:[#allocation4 + $0x350] sm:$0xff]
  %v2350 = vld [vmem:[#allocation4 + $0x358] sm:$0xff]
  %v2351 = vld [vmem:[#allocation4 + $0x360] sm:$0xf]
  %v2352 = vld [vmem:[#allocation4 + $0x364] sm:$0xff]
  %v2353 = vld [vmem:[#allocation4 + $0x36c] sm:$0xff]
  %v2354 = vld [vmem:[#allocation4 + $0x374] sm:$0xff]
  %v2355 = vld [vmem:[#allocation4 + $0x37c] sm:$0xf]
  %v2356 = vld [vmem:[#allocation4 + $0x380] sm:$0xff]
  %v2357 = vld [vmem:[#allocation4 + $0x388] sm:$0xff]
  %v2358 = vld [vmem:[#allocation4 + $0x390] sm:$0xff]
  %v2359 = vld [vmem:[#allocation4 + $0x398] sm:$0xf]
  %v2360 = vld [vmem:[#allocation4 + $0x39c] sm:$0xff]
  %v2361 = vld [vmem:[#allocation4 + $0x3a4] sm:$0xff]
  %v2362 = vld [vmem:[#allocation4 + $0x3ac] sm:$0xff]
  %v2363 = vld [vmem:[#allocation4 + $0x3b4] sm:$0xf]
  %v2364 = vld [vmem:[#allocation4 + $0x3b8] sm:$0xff]
  %v2365 = vld [vmem:[#allocation4 + $0x3c0] sm:$0xff]
  %v2366 = vld [vmem:[#allocation4 + $0x3c8] sm:$0xff]
  %v2367 = vld [vmem:[#allocation4 + $0x3d0] sm:$0xf]
  %v2368 = vld [vmem:[#allocation4 + $0x3d4] sm:$0xff]
  %v2369 = vld [vmem:[#allocation4 + $0x3dc] sm:$0xff]
  %v2370 = vld [vmem:[#allocation4 + $0x3e4] sm:$0xff]
  %v2371 = vld [vmem:[#allocation4 + $0x3ec] sm:$0xf]
  %v2372 = vld [vmem:[#allocation4 + $0x3f0] sm:$0xff]
  %v2373 = vld [vmem:[#allocation4 + $0x3f8] sm:$0xff]
  %v2374 = vld [vmem:[#allocation4 + $0x400] sm:$0xff]
  %v2375 = vld [vmem:[#allocation4 + $0x408] sm:$0xf]
  %v2376 = vld [vmem:[#allocation4 + $0x40c] sm:$0xff]
  %v2377 = vld [vmem:[#allocation4 + $0x414] sm:$0xff]
  %v2378 = vld [vmem:[#allocation4 + $0x41c] sm:$0xff]
  %v2379 = vld [vmem:[#allocation4 + $0x424] sm:$0xf]
  %v2380 = vld [vmem:[#allocation4 + $0x428] sm:$0xff]
  %v2381 = vld [vmem:[#allocation4 + $0x430] sm:$0xff]
  %v2382 = vld [vmem:[#allocation4 + $0x438] sm:$0xff]
  %v2383 = vld [vmem:[#allocation4 + $0x440] sm:$0xf]
  %v2384 = vld [vmem:[#allocation4 + $0x444] sm:$0xff]
  %v2385 = vld [vmem:[#allocation4 + $0x44c] sm:$0xff]
  %v2386 = vld [vmem:[#allocation4 + $0x454] sm:$0xff]
  %v2387 = vld [vmem:[#allocation4 + $0x45c] sm:$0xf]
  %v2388 = vld [vmem:[#allocation4 + $0x460] sm:$0xff]
  %v2389 = vld [vmem:[#allocation4 + $0x468] sm:$0xff]
  %v2390 = vld [vmem:[#allocation4 + $0x470] sm:$0xff]
  %v2391 = vld [vmem:[#allocation4 + $0x478] sm:$0xf]
  %v2392 = vld [vmem:[#allocation4 + $0x47c] sm:$0xff]
  %v2393 = vld [vmem:[#allocation4 + $0x484] sm:$0xff]
  %v2394 = vld [vmem:[#allocation4 + $0x48c] sm:$0xff]
  %v2395 = vld [vmem:[#allocation4 + $0x494] sm:$0xf]
  %v2396 = vld [vmem:[#allocation4 + $0x498] sm:$0xff]
  %v2397 = vld [vmem:[#allocation4 + $0x4a0] sm:$0xff]
  %v2398 = vld [vmem:[#allocation4 + $0x4a8] sm:$0xff]
  %v2399 = vld [vmem:[#allocation4 + $0x4b0] sm:$0xf]
  %v2400 = vld [vmem:[#allocation4 + $0x4b4] sm:$0xff]
  %v2401 = vld [vmem:[#allocation4 + $0x4bc] sm:$0xff]
  %v2402 = vld [vmem:[#allocation4 + $0x4c4] sm:$0xff]
  %v2403 = vld [vmem:[#allocation4 + $0x4cc] sm:$0xf]
  %v2404 = vld [vmem:[#allocation4 + $0x4d0] sm:$0xff]
  %v2405 = vld [vmem:[#allocation4 + $0x4d8] sm:$0xff]
  %v2406 = vld [vmem:[#allocation4 + $0x4e0] sm:$0xff]
  %v2407 = vld [vmem:[#allocation4 + $0x4e8] sm:$0xf]
  %v2408 = vld [vmem:[#allocation4 + $0x4ec] sm:$0xff]
  %v2409 = vld [vmem:[#allocation4 + $0x4f4] sm:$0xff]
  %v2410 = vld [vmem:[#allocation4 + $0x4fc] sm:$0xff]
  %v2411 = vld [vmem:[#allocation4 + $0x504] sm:$0xf]
  %v2412 = vld [vmem:[#allocation4 + $0x508] sm:$0xff]
  %v2413 = vld [vmem:[#allocation4 + $0x510] sm:$0xff]
  %v2414 = vld [vmem:[#allocation4 + $0x518] sm:$0xff]
  %v2415 = vld [vmem:[#allocation4 + $0x520] sm:$0xf]
  %v2416 = vld [vmem:[#allocation4 + $0x524] sm:$0xff]
  %v2417 = vld [vmem:[#allocation4 + $0x52c] sm:$0xff]
  %v2418 = vld [vmem:[#allocation4 + $0x534] sm:$0xff]
  %v2419 = vld [vmem:[#allocation4 + $0x53c] sm:$0xf]
  %v2420 = vld [vmem:[#allocation4 + $0x540] sm:$0xff]
  %v2421 = vld [vmem:[#allocation4 + $0x548] sm:$0xff]
  %v2422 = vld [vmem:[#allocation4 + $0x550] sm:$0xff]
  %v2423 = vld [vmem:[#allocation4 + $0x558] sm:$0xf]
  %v2424 = vld [vmem:[#allocation4 + $0x55c] sm:$0xff]
  %v2425 = vld [vmem:[#allocation4 + $0x564] sm:$0xff]
  %v2426 = vld [vmem:[#allocation4 + $0x56c] sm:$0xff]
  %v2427 = vld [vmem:[#allocation4 + $0x574] sm:$0xf]
  %v2428 = vld [vmem:[#allocation4 + $0x578] sm:$0xff]
  %v2429 = vld [vmem:[#allocation4 + $0x580] sm:$0xff]
  %v2430 = vld [vmem:[#allocation4 + $0x588] sm:$0xff]
  %v2431 = vld [vmem:[#allocation4 + $0x590] sm:$0xf]
  %v2432 = vld [vmem:[#allocation4 + $0x594] sm:$0xff]
  %v2433 = vld [vmem:[#allocation4 + $0x59c] sm:$0xff]
  %v2434 = vld [vmem:[#allocation4 + $0x5a4] sm:$0xff]
  %v2435 = vld [vmem:[#allocation4 + $0x5ac] sm:$0xf]
  %v2436 = vld [vmem:[#allocation4 + $0x5b0] sm:$0xff]
  %v2437 = vld [vmem:[#allocation4 + $0x5b8] sm:$0xff]
  %v2438 = vld [vmem:[#allocation4 + $0x5c0] sm:$0xff]
  %v2439 = vld [vmem:[#allocation4 + $0x5c8] sm:$0xf]
  %v2440 = vld [vmem:[#allocation4 + $0x5cc] sm:$0xff]
  %v2441 = vld [vmem:[#allocation4 + $0x5d4] sm:$0xff]
  %v2442 = vld [vmem:[#allocation4 + $0x5dc] sm:$0xff]
  %v2443 = vld [vmem:[#allocation4 + $0x5e4] sm:$0xf]
  %v2444 = vld [vmem:[#allocation4 + $0x5e8] sm:$0xff]
  %v2445 = vld [vmem:[#allocation4 + $0x5f0] sm:$0xff]
  %v2446 = vld [vmem:[#allocation4 + $0x5f8] sm:$0xff]
  %v2447 = vld [vmem:[#allocation4 + $0x600] sm:$0xf]
  %v2448 = vld [vmem:[#allocation4 + $0x604] sm:$0xff]
  %v2449 = vld [vmem:[#allocation4 + $0x60c] sm:$0xff]
  %v2450 = vld [vmem:[#allocation4 + $0x614] sm:$0xff]
  %v2451 = vld [vmem:[#allocation4 + $0x61c] sm:$0xf]
  %v2452 = vld [vmem:[#allocation4 + $0x620] sm:$0xff]
  %v2453 = vld [vmem:[#allocation4 + $0x628] sm:$0xff]
  %v2454 = vld [vmem:[#allocation4 + $0x630] sm:$0xff]
  %v2455 = vld [vmem:[#allocation4 + $0x638] sm:$0xf]
  %v2456 = vld [vmem:[#allocation4 + $0x63c] sm:$0xff]
  %v2457 = vld [vmem:[#allocation4 + $0x644] sm:$0xff]
  %v2458 = vld [vmem:[#allocation4 + $0x64c] sm:$0xff]
  %v2459 = vld [vmem:[#allocation4 + $0x654] sm:$0xf]
  %v2460 = vld [vmem:[#allocation4 + $0x658] sm:$0xff]
  %v2461 = vld [vmem:[#allocation4 + $0x660] sm:$0xff]
  %v2462 = vld [vmem:[#allocation4 + $0x668] sm:$0xff]
  %v2463 = vld [vmem:[#allocation4 + $0x670] sm:$0xf]
  %v2464 = vld [vmem:[#allocation4 + $0x674] sm:$0xff]
  %v2465 = vld [vmem:[#allocation4 + $0x67c] sm:$0xff]
  %v2466 = vld [vmem:[#allocation4 + $0x684] sm:$0xff]
  %v2467 = vld [vmem:[#allocation4 + $0x68c] sm:$0xf]
  %v2468 = vld [vmem:[#allocation4 + $0x690] sm:$0xff]
  %v2469 = vld [vmem:[#allocation4 + $0x698] sm:$0xff]
  %v2470 = vld [vmem:[#allocation4 + $0x6a0] sm:$0xff]
  %v2471 = vld [vmem:[#allocation4 + $0x6a8] sm:$0xf]
  %v2472 = vld [vmem:[#allocation4 + $0x6ac] sm:$0xff]
  %v2473 = vld [vmem:[#allocation4 + $0x6b4] sm:$0xff]
  %v2474 = vld [vmem:[#allocation4 + $0x6bc] sm:$0xff]
  %v2475 = vld [vmem:[#allocation4 + $0x6c4] sm:$0xf]
  %v2476 = vld [vmem:[#allocation4 + $0x6c8] sm:$0xff]
  %v2477 = vld [vmem:[#allocation4 + $0x6d0] sm:$0xff]
  %v2478 = vld [vmem:[#allocation4 + $0x6d8] sm:$0xff]
  %v2479 = vld [vmem:[#allocation4 + $0x6e0] sm:$0xf]
  %v2480 = vld [vmem:[#allocation4 + $0x6e4] sm:$0xff]
  %v2481 = vld [vmem:[#allocation4 + $0x6ec] sm:$0xff]
  %v2482 = vld [vmem:[#allocation4 + $0x6f4] sm:$0xff]
  %v2483 = vld [vmem:[#allocation4 + $0x6fc] sm:$0xf]
  %v2484 = vld [vmem:[%s3] sm:$0xf]
  %v2485 = vld [vmem:[%s3 + $0x4] sm:$0xf]
  %v2486 = vld [vmem:[%s3 + $0x8] sm:$0xf]
  %v2487 = vld [vmem:[%s3 + $0xc] sm:$0xf]
  %v2488 = vld [vmem:[%s3 + $0x10] sm:$0xf]
  %v2489 = vld [vmem:[%s3 + $0x14] sm:$0xf]
  %v2490 = vld [vmem:[%s3 + $0x18] sm:$0xf]
  %v2491 = vld [vmem:[%s3 + $0x1c] sm:$0xf]
  %v2492 = vld [vmem:[%s3 + $0x20] sm:$0xf]
  %v2493 = vld [vmem:[%s3 + $0x24] sm:$0xf]
  %v2494 = vld [vmem:[%s3 + $0x28] sm:$0xf]
  %v2495 = vld [vmem:[%s3 + $0x2c] sm:$0xf]
  %v2496 = vld [vmem:[%s3 + $0x30] sm:$0xf]
  %v2497 = vld [vmem:[%s3 + $0x34] sm:$0xf]
  %v2498 = vld [vmem:[%s3 + $0x38] sm:$0xf]
  %v2499 = vld [vmem:[%s3 + $0x3c] sm:$0xf]
  %v2500 = vld [vmem:[%s3 + $0x40] sm:$0xf]
  %v2501 = vld [vmem:[%s3 + $0x44] sm:$0xf]
  %v2502 = vld [vmem:[%s3 + $0x48] sm:$0xf]
  %v2503 = vld [vmem:[%s3 + $0x4c] sm:$0xf]
  %v2504 = vld [vmem:[%s3 + $0x50] sm:$0xf]
  %v2505 = vld [vmem:[%s3 + $0x54] sm:$0xf]
  %v2506 = vld [vmem:[%s3 + $0x58] sm:$0xf]
  %v2507 = vld [vmem:[%s3 + $0x5c] sm:$0xf]
  %v2508 = vld [vmem:[%s3 + $0x60] sm:$0xf]
  %v2509 = vld [vmem:[%s3 + $0x64] sm:$0xf]
  %v2510 = vld [vmem:[%s3 + $0x68] sm:$0xf]
  %v2511 = vld [vmem:[%s3 + $0x6c] sm:$0xf]
  %v2512 = vld [vmem:[%s3 + $0x70] sm:$0xf]
  %v2513 = vld [vmem:[%s3 + $0x74] sm:$0xf]
  %v2514 = vld [vmem:[%s3 + $0x78] sm:$0xf]
  %v2515 = vld [vmem:[%s3 + $0x7c] sm:$0xf]
  %v2516 = vld [vmem:[%s3 + $0x80] sm:$0xf]
  %v2517 = vld [vmem:[%s3 + $0x84] sm:$0xf]
  %v2518 = vld [vmem:[%s3 + $0x88] sm:$0xf]
  %v2519 = vld [vmem:[%s3 + $0x8c] sm:$0xf]
  %v2520 = vld [vmem:[%s3 + $0x90] sm:$0xf]
  %v2521 = vld [vmem:[%s3 + $0x94] sm:$0xf]
  %v2522 = vld [vmem:[%s3 + $0x98] sm:$0xf]
  %v2523 = vld [vmem:[%s3 + $0x9c] sm:$0xf]
  %v2524 = vld [vmem:[%s3 + $0xa0] sm:$0xf]
  %v2525 = vld [vmem:[%s3 + $0xa4] sm:$0xf]
  %v2526 = vld [vmem:[%s3 + $0xa8] sm:$0xf]
  %v2527 = vld [vmem:[%s3 + $0xac] sm:$0xf]
  %v2528 = vld [vmem:[%s3 + $0xb0] sm:$0xf]
  %v2529 = vld [vmem:[%s3 + $0xb4] sm:$0xf]
  %v2530 = vld [vmem:[%s3 + $0xb8] sm:$0xf]
  %v2531 = vld [vmem:[%s3 + $0xbc] sm:$0xf]
  %v2532 = vld [vmem:[%s3 + $0xc0] sm:$0xf]
  %v2533 = vld [vmem:[%s3 + $0xc4] sm:$0xf]
  %v2534 = vld [vmem:[%s3 + $0xc8] sm:$0xf]
  %v2535 = vld [vmem:[%s3 + $0xcc] sm:$0xf]
  %v2536 = vld [vmem:[%s3 + $0xd0] sm:$0xf]
  %v2537 = vld [vmem:[%s3 + $0xd4] sm:$0xf]
  %v2538 = vld [vmem:[%s3 + $0xd8] sm:$0xf]
  %v2539 = vld [vmem:[%s3 + $0xdc] sm:$0xf]
  %v2540 = vld [vmem:[%s3 + $0xe0] sm:$0xf]
  %v2541 = vld [vmem:[%s3 + $0xe4] sm:$0xf]
  %v2542 = vld [vmem:[%s3 + $0xe8] sm:$0xf]
  %v2543 = vld [vmem:[%s3 + $0xec] sm:$0xf]
  %v2544 = vld [vmem:[%s3 + $0xf0] sm:$0xf]
  %v2545 = vld [vmem:[%s3 + $0xf4] sm:$0xf]
  %v2546 = vld [vmem:[%s3 + $0xf8] sm:$0xf]
  %v2547 = vld [vmem:[%s3 + $0xfc] sm:$0xf]
  %v2548 = vld [vmem:[%s3 + $0x100] sm:$0xf]
  %v2549 = vld [vmem:[%s3 + $0x104] sm:$0xf]
  %v2550 = vld [vmem:[%s3 + $0x108] sm:$0xf]
  %v2551 = vld [vmem:[%s3 + $0x10c] sm:$0xf]
  %v2552 = vld [vmem:[%s3 + $0x110] sm:$0xf]
  %v2553 = vld [vmem:[%s3 + $0x114] sm:$0xf]
  %v2554 = vld [vmem:[%s3 + $0x118] sm:$0xf]
  %v2555 = vld [vmem:[%s3 + $0x11c] sm:$0xf]
  %v2556 = vld [vmem:[%s3 + $0x120] sm:$0xf]
  %v2557 = vld [vmem:[%s3 + $0x124] sm:$0xf]
  %v2558 = vld [vmem:[%s3 + $0x128] sm:$0xf]
  %v2559 = vld [vmem:[%s3 + $0x12c] sm:$0xf]
  %v2560 = vld [vmem:[%s3 + $0x130] sm:$0xf]
  %v2561 = vld [vmem:[%s3 + $0x134] sm:$0xf]
  %v2562 = vld [vmem:[%s3 + $0x138] sm:$0xf]
  %v2563 = vld [vmem:[%s3 + $0x13c] sm:$0xf]
  %v2564 = vld [vmem:[%s3 + $0x140] sm:$0xf]
  %v2565 = vld [vmem:[%s3 + $0x144] sm:$0xf]
  %v2566 = vld [vmem:[%s3 + $0x148] sm:$0xf]
  %v2567 = vld [vmem:[%s3 + $0x14c] sm:$0xf]
  %v2568 = vld [vmem:[%s3 + $0x150] sm:$0xf]
  %v2569 = vld [vmem:[%s3 + $0x154] sm:$0xf]
  %v2570 = vld [vmem:[%s3 + $0x158] sm:$0xf]
  %v2571 = vld [vmem:[%s3 + $0x15c] sm:$0xf]
  %v2572 = vld [vmem:[%s3 + $0x160] sm:$0xf]
  %v2573 = vld [vmem:[%s3 + $0x164] sm:$0xf]
  %v2574 = vld [vmem:[%s3 + $0x168] sm:$0xf]
  %v2575 = vld [vmem:[%s3 + $0x16c] sm:$0xf]
  %v2576 = vld [vmem:[%s3 + $0x170] sm:$0xf]
  %v2577 = vld [vmem:[%s3 + $0x174] sm:$0xf]
  %v2578 = vld [vmem:[%s3 + $0x178] sm:$0xf]
  %v2579 = vld [vmem:[%s3 + $0x17c] sm:$0xf]
  %v2580 = vld [vmem:[%s3 + $0x180] sm:$0xf]
  %v2581 = vld [vmem:[%s3 + $0x184] sm:$0xf]
  %v2582 = vld [vmem:[%s3 + $0x188] sm:$0xf]
  %v2583 = vld [vmem:[%s3 + $0x18c] sm:$0xf]
  %v2584 = vld [vmem:[%s4] sm:$0x1]
  %v2586 = vperm.slane %v2584, 0
  %v2844 = vunpack.c.l.b16 %v2228
  %v2845 = vunpack.c.h.b16 %v2228
  %v2846 = vunpack.c.l.b16 %v2229
  %v2847 = vunpack.c.h.b16 %v2229
  %v2848 = vunpack.c.l.b16 %v2230
  %v2849 = vunpack.c.h.b16 %v2230
  %v2850 = vunpack.c.l.b16 %v2231
  %v2851 = vunpack.c.l.b16 %v2232
  %v2852 = vunpack.c.h.b16 %v2232
  %v2853 = vunpack.c.l.b16 %v2233
  %v2854 = vunpack.c.h.b16 %v2233
  %v2855 = vunpack.c.l.b16 %v2234
  %v2856 = vunpack.c.h.b16 %v2234
  %v2857 = vunpack.c.l.b16 %v2235
  %v2858 = vunpack.c.l.b16 %v2236
  %v2859 = vunpack.c.h.b16 %v2236
  %v2860 = vunpack.c.l.b16 %v2237
  %v2861 = vunpack.c.h.b16 %v2237
  %v2862 = vunpack.c.l.b16 %v2238
  %v2863 = vunpack.c.h.b16 %v2238
  %v2864 = vunpack.c.l.b16 %v2239
  %v2865 = vunpack.c.l.b16 %v2240
  %v2866 = vunpack.c.h.b16 %v2240
  %v2867 = vunpack.c.l.b16 %v2241
  %v2868 = vunpack.c.h.b16 %v2241
  %v2869 = vunpack.c.l.b16 %v2242
  %v2870 = vunpack.c.h.b16 %v2242
  %v2871 = vunpack.c.l.b16 %v2243
  %v2872 = vunpack.c.l.b16 %v2244
  %v2873 = vunpack.c.h.b16 %v2244
  %v2874 = vunpack.c.l.b16 %v2245
  %v2875 = vunpack.c.h.b16 %v2245
  %v2876 = vunpack.c.l.b16 %v2246
  %v2877 = vunpack.c.h.b16 %v2246
  %v2878 = vunpack.c.l.b16 %v2247
  %v2879 = vunpack.c.l.b16 %v2248
  %v2880 = vunpack.c.h.b16 %v2248
  %v2881 = vunpack.c.l.b16 %v2249
  %v2882 = vunpack.c.h.b16 %v2249
  %v2883 = vunpack.c.l.b16 %v2250
  %v2884 = vunpack.c.h.b16 %v2250
  %v2885 = vunpack.c.l.b16 %v2251
  %v2886 = vunpack.c.l.b16 %v2252
  %v2887 = vunpack.c.h.b16 %v2252
  %v2888 = vunpack.c.l.b16 %v2253
  %v2889 = vunpack.c.h.b16 %v2253
  %v2890 = vunpack.c.l.b16 %v2254
  %v2891 = vunpack.c.h.b16 %v2254
  %v2892 = vunpack.c.l.b16 %v2255
  %v2893 = vunpack.c.l.b16 %v2256
  %v2894 = vunpack.c.h.b16 %v2256
  %v2895 = vunpack.c.l.b16 %v2257
  %v2896 = vunpack.c.h.b16 %v2257
  %v2897 = vunpack.c.l.b16 %v2258
  %v2898 = vunpack.c.h.b16 %v2258
  %v2899 = vunpack.c.l.b16 %v2259
  %v2900 = vunpack.c.l.b16 %v2260
  %v2901 = vunpack.c.h.b16 %v2260
  %v2902 = vunpack.c.l.b16 %v2261
  %v2903 = vunpack.c.h.b16 %v2261
  %v2904 = vunpack.c.l.b16 %v2262
  %v2905 = vunpack.c.h.b16 %v2262
  %v2906 = vunpack.c.l.b16 %v2263
  %v2907 = vunpack.c.l.b16 %v2264
  %v2908 = vunpack.c.h.b16 %v2264
  %v2909 = vunpack.c.l.b16 %v2265
  %v2910 = vunpack.c.h.b16 %v2265
  %v2911 = vunpack.c.l.b16 %v2266
  %v2912 = vunpack.c.h.b16 %v2266
  %v2913 = vunpack.c.l.b16 %v2267
  %v2914 = vunpack.c.l.b16 %v2268
  %v2915 = vunpack.c.h.b16 %v2268
  %v2916 = vunpack.c.l.b16 %v2269
  %v2917 = vunpack.c.h.b16 %v2269
  %v2918 = vunpack.c.l.b16 %v2270
  %v2919 = vunpack.c.h.b16 %v2270
  %v2920 = vunpack.c.l.b16 %v2271
  %v2921 = vunpack.c.l.b16 %v2272
  %v2922 = vunpack.c.h.b16 %v2272
  %v2923 = vunpack.c.l.b16 %v2273
  %v2924 = vunpack.c.h.b16 %v2273
  %v2925 = vunpack.c.l.b16 %v2274
  %v2926 = vunpack.c.h.b16 %v2274
  %v2927 = vunpack.c.l.b16 %v2275
  %v2928 = vunpack.c.l.b16 %v2276
  %v2929 = vunpack.c.h.b16 %v2276
  %v2930 = vunpack.c.l.b16 %v2277
  %v2931 = vunpack.c.h.b16 %v2277
  %v2932 = vunpack.c.l.b16 %v2278
  %v2933 = vunpack.c.h.b16 %v2278
  %v2934 = vunpack.c.l.b16 %v2279
  %v2935 = vunpack.c.l.b16 %v2280
  %v2936 = vunpack.c.h.b16 %v2280
  %v2937 = vunpack.c.l.b16 %v2281
  %v2938 = vunpack.c.h.b16 %v2281
  %v2939 = vunpack.c.l.b16 %v2282
  %v2940 = vunpack.c.h.b16 %v2282
  %v2941 = vunpack.c.l.b16 %v2283
  %v2942 = vunpack.c.l.b16 %v2284
  %v2943 = vunpack.c.h.b16 %v2284
  %v2944 = vunpack.c.l.b16 %v2285
  %v2945 = vunpack.c.h.b16 %v2285
  %v2946 = vunpack.c.l.b16 %v2286
  %v2947 = vunpack.c.h.b16 %v2286
  %v2948 = vunpack.c.l.b16 %v2287
  %v2949 = vunpack.c.l.b16 %v2288
  %v2950 = vunpack.c.h.b16 %v2288
  %v2951 = vunpack.c.l.b16 %v2289
  %v2952 = vunpack.c.h.b16 %v2289
  %v2953 = vunpack.c.l.b16 %v2290
  %v2954 = vunpack.c.h.b16 %v2290
  %v2955 = vunpack.c.l.b16 %v2291
  %v2956 = vunpack.c.l.b16 %v2292
  %v2957 = vunpack.c.h.b16 %v2292
  %v2958 = vunpack.c.l.b16 %v2293
  %v2959 = vunpack.c.h.b16 %v2293
  %v2960 = vunpack.c.l.b16 %v2294
  %v2961 = vunpack.c.h.b16 %v2294
  %v2962 = vunpack.c.l.b16 %v2295
  %v2963 = vunpack.c.l.b16 %v2296
  %v2964 = vunpack.c.h.b16 %v2296
  %v2965 = vunpack.c.l.b16 %v2297
  %v2966 = vunpack.c.h.b16 %v2297
  %v2967 = vunpack.c.l.b16 %v2298
  %v2968 = vunpack.c.h.b16 %v2298
  %v2969 = vunpack.c.l.b16 %v2299
  %v2970 = vunpack.c.l.b16 %v2300
  %v2971 = vunpack.c.h.b16 %v2300
  %v2972 = vunpack.c.l.b16 %v2301
  %v2973 = vunpack.c.h.b16 %v2301
  %v2974 = vunpack.c.l.b16 %v2302
  %v2975 = vunpack.c.h.b16 %v2302
  %v2976 = vunpack.c.l.b16 %v2303
  %v2977 = vunpack.c.l.b16 %v2304
  %v2978 = vunpack.c.h.b16 %v2304
  %v2979 = vunpack.c.l.b16 %v2305
  %v2980 = vunpack.c.h.b16 %v2305
  %v2981 = vunpack.c.l.b16 %v2306
  %v2982 = vunpack.c.h.b16 %v2306
  %v2983 = vunpack.c.l.b16 %v2307
  %v2984 = vunpack.c.l.b16 %v2308
  %v2985 = vunpack.c.h.b16 %v2308
  %v2986 = vunpack.c.l.b16 %v2309
  %v2987 = vunpack.c.h.b16 %v2309
  %v2988 = vunpack.c.l.b16 %v2310
  %v2989 = vunpack.c.h.b16 %v2310
  %v2990 = vunpack.c.l.b16 %v2311
  %v2991 = vunpack.c.l.b16 %v2312
  %v2992 = vunpack.c.h.b16 %v2312
  %v2993 = vunpack.c.l.b16 %v2313
  %v2994 = vunpack.c.h.b16 %v2313
  %v2995 = vunpack.c.l.b16 %v2314
  %v2996 = vunpack.c.h.b16 %v2314
  %v2997 = vunpack.c.l.b16 %v2315
  %v2998 = vunpack.c.l.b16 %v2316
  %v2999 = vunpack.c.h.b16 %v2316
  %v3000 = vunpack.c.l.b16 %v2317
  %v3001 = vunpack.c.h.b16 %v2317
  %v3002 = vunpack.c.l.b16 %v2318
  %v3003 = vunpack.c.h.b16 %v2318
  %v3004 = vunpack.c.l.b16 %v2319
  %v3005 = vunpack.c.l.b16 %v2320
  %v3006 = vunpack.c.h.b16 %v2320
  %v3007 = vunpack.c.l.b16 %v2321
  %v3008 = vunpack.c.h.b16 %v2321
  %v3009 = vunpack.c.l.b16 %v2322
  %v3010 = vunpack.c.h.b16 %v2322
  %v3011 = vunpack.c.l.b16 %v2323
  %v3012 = vunpack.c.l.b16 %v2324
  %v3013 = vunpack.c.h.b16 %v2324
  %v3014 = vunpack.c.l.b16 %v2325
  %v3015 = vunpack.c.h.b16 %v2325
  %v3016 = vunpack.c.l.b16 %v2326
  %v3017 = vunpack.c.h.b16 %v2326
  %v3018 = vunpack.c.l.b16 %v2327
  %v3019 = vunpack.c.l.b16 %v2328
  %v3020 = vunpack.c.h.b16 %v2328
  %v3021 = vunpack.c.l.b16 %v2329
  %v3022 = vunpack.c.h.b16 %v2329
  %v3023 = vunpack.c.l.b16 %v2330
  %v3024 = vunpack.c.h.b16 %v2330
  %v3025 = vunpack.c.l.b16 %v2331
  %v3026 = vunpack.c.l.b16 %v2332
  %v3027 = vunpack.c.h.b16 %v2332
  %v3028 = vunpack.c.l.b16 %v2333
  %v3029 = vunpack.c.h.b16 %v2333
  %v3030 = vunpack.c.l.b16 %v2334
  %v3031 = vunpack.c.h.b16 %v2334
  %v3032 = vunpack.c.l.b16 %v2335
  %v3033 = vunpack.c.l.b16 %v2336
  %v3034 = vunpack.c.h.b16 %v2336
  %v3035 = vunpack.c.l.b16 %v2337
  %v3036 = vunpack.c.h.b16 %v2337
  %v3037 = vunpack.c.l.b16 %v2338
  %v3038 = vunpack.c.h.b16 %v2338
  %v3039 = vunpack.c.l.b16 %v2339
  %v3040 = vunpack.c.l.b16 %v2340
  %v3041 = vunpack.c.h.b16 %v2340
  %v3042 = vunpack.c.l.b16 %v2341
  %v3043 = vunpack.c.h.b16 %v2341
  %v3044 = vunpack.c.l.b16 %v2342
  %v3045 = vunpack.c.h.b16 %v2342
  %v3046 = vunpack.c.l.b16 %v2343
  %v3047 = vunpack.c.l.b16 %v2344
  %v3048 = vunpack.c.h.b16 %v2344
  %v3049 = vunpack.c.l.b16 %v2345
  %v3050 = vunpack.c.h.b16 %v2345
  %v3051 = vunpack.c.l.b16 %v2346
  %v3052 = vunpack.c.h.b16 %v2346
  %v3053 = vunpack.c.l.b16 %v2347
  %v3054 = vunpack.c.l.b16 %v2348
  %v3055 = vunpack.c.h.b16 %v2348
  %v3056 = vunpack.c.l.b16 %v2349
  %v3057 = vunpack.c.h.b16 %v2349
  %v3058 = vunpack.c.l.b16 %v2350
  %v3059 = vunpack.c.h.b16 %v2350
  %v3060 = vunpack.c.l.b16 %v2351
  %v3061 = vunpack.c.l.b16 %v2352
  %v3062 = vunpack.c.h.b16 %v2352
  %v3063 = vunpack.c.l.b16 %v2353
  %v3064 = vunpack.c.h.b16 %v2353
  %v3065 = vunpack.c.l.b16 %v2354
  %v3066 = vunpack.c.h.b16 %v2354
  %v3067 = vunpack.c.l.b16 %v2355
  %v3068 = vunpack.c.l.b16 %v2356
  %v3069 = vunpack.c.h.b16 %v2356
  %v3070 = vunpack.c.l.b16 %v2357
  %v3071 = vunpack.c.h.b16 %v2357
  %v3072 = vunpack.c.l.b16 %v2358
  %v3073 = vunpack.c.h.b16 %v2358
  %v3074 = vunpack.c.l.b16 %v2359
  %v3075 = vunpack.c.l.b16 %v2360
  %v3076 = vunpack.c.h.b16 %v2360
  %v3077 = vunpack.c.l.b16 %v2361
  %v3078 = vunpack.c.h.b16 %v2361
  %v3079 = vunpack.c.l.b16 %v2362
  %v3080 = vunpack.c.h.b16 %v2362
  %v3081 = vunpack.c.l.b16 %v2363
  %v3082 = vunpack.c.l.b16 %v2364
  %v3083 = vunpack.c.h.b16 %v2364
  %v3084 = vunpack.c.l.b16 %v2365
  %v3085 = vunpack.c.h.b16 %v2365
  %v3086 = vunpack.c.l.b16 %v2366
  %v3087 = vunpack.c.h.b16 %v2366
  %v3088 = vunpack.c.l.b16 %v2367
  %v3089 = vunpack.c.l.b16 %v2368
  %v3090 = vunpack.c.h.b16 %v2368
  %v3091 = vunpack.c.l.b16 %v2369
  %v3092 = vunpack.c.h.b16 %v2369
  %v3093 = vunpack.c.l.b16 %v2370
  %v3094 = vunpack.c.h.b16 %v2370
  %v3095 = vunpack.c.l.b16 %v2371
  %v3096 = vunpack.c.l.b16 %v2372
  %v3097 = vunpack.c.h.b16 %v2372
  %v3098 = vunpack.c.l.b16 %v2373
  %v3099 = vunpack.c.h.b16 %v2373
  %v3100 = vunpack.c.l.b16 %v2374
  %v3101 = vunpack.c.h.b16 %v2374
  %v3102 = vunpack.c.l.b16 %v2375
  %v3103 = vunpack.c.l.b16 %v2376
  %v3104 = vunpack.c.h.b16 %v2376
  %v3105 = vunpack.c.l.b16 %v2377
  %v3106 = vunpack.c.h.b16 %v2377
  %v3107 = vunpack.c.l.b16 %v2378
  %v3108 = vunpack.c.h.b16 %v2378
  %v3109 = vunpack.c.l.b16 %v2379
  %v3110 = vunpack.c.l.b16 %v2380
  %v3111 = vunpack.c.h.b16 %v2380
  %v3112 = vunpack.c.l.b16 %v2381
  %v3113 = vunpack.c.h.b16 %v2381
  %v3114 = vunpack.c.l.b16 %v2382
  %v3115 = vunpack.c.h.b16 %v2382
  %v3116 = vunpack.c.l.b16 %v2383
  %v3117 = vunpack.c.l.b16 %v2384
  %v3118 = vunpack.c.h.b16 %v2384
  %v3119 = vunpack.c.l.b16 %v2385
  %v3120 = vunpack.c.h.b16 %v2385
  %v3121 = vunpack.c.l.b16 %v2386
  %v3122 = vunpack.c.h.b16 %v2386
  %v3123 = vunpack.c.l.b16 %v2387
  %v3124 = vunpack.c.l.b16 %v2388
  %v3125 = vunpack.c.h.b16 %v2388
  %v3126 = vunpack.c.l.b16 %v2389
  %v3127 = vunpack.c.h.b16 %v2389
  %v3128 = vunpack.c.l.b16 %v2390
  %v3129 = vunpack.c.h.b16 %v2390
  %v3130 = vunpack.c.l.b16 %v2391
  %v3131 = vunpack.c.l.b16 %v2392
  %v3132 = vunpack.c.h.b16 %v2392
  %v3133 = vunpack.c.l.b16 %v2393
  %v3134 = vunpack.c.h.b16 %v2393
  %v3135 = vunpack.c.l.b16 %v2394
  %v3136 = vunpack.c.h.b16 %v2394
  %v3137 = vunpack.c.l.b16 %v2395
  %v3138 = vunpack.c.l.b16 %v2396
  %v3139 = vunpack.c.h.b16 %v2396
  %v3140 = vunpack.c.l.b16 %v2397
  %v3141 = vunpack.c.h.b16 %v2397
  %v3142 = vunpack.c.l.b16 %v2398
  %v3143 = vunpack.c.h.b16 %v2398
  %v3144 = vunpack.c.l.b16 %v2399
  %v3145 = vunpack.c.l.b16 %v2400
  %v3146 = vunpack.c.h.b16 %v2400
  %v3147 = vunpack.c.l.b16 %v2401
  %v3148 = vunpack.c.h.b16 %v2401
  %v3149 = vunpack.c.l.b16 %v2402
  %v3150 = vunpack.c.h.b16 %v2402
  %v3151 = vunpack.c.l.b16 %v2403
  %v3152 = vunpack.c.l.b16 %v2404
  %v3153 = vunpack.c.h.b16 %v2404
  %v3154 = vunpack.c.l.b16 %v2405
  %v3155 = vunpack.c.h.b16 %v2405
  %v3156 = vunpack.c.l.b16 %v2406
  %v3157 = vunpack.c.h.b16 %v2406
  %v3158 = vunpack.c.l.b16 %v2407
  %v3159 = vunpack.c.l.b16 %v2408
  %v3160 = vunpack.c.h.b16 %v2408
  %v3161 = vunpack.c.l.b16 %v2409
  %v3162 = vunpack.c.h.b16 %v2409
  %v3163 = vunpack.c.l.b16 %v2410
  %v3164 = vunpack.c.h.b16 %v2410
  %v3165 = vunpack.c.l.b16 %v2411
  %v3166 = vunpack.c.l.b16 %v2412
  %v3167 = vunpack.c.h.b16 %v2412
  %v3168 = vunpack.c.l.b16 %v2413
  %v3169 = vunpack.c.h.b16 %v2413
  %v3170 = vunpack.c.l.b16 %v2414
  %v3171 = vunpack.c.h.b16 %v2414
  %v3172 = vunpack.c.l.b16 %v2415
  %v3173 = vunpack.c.l.b16 %v2416
  %v3174 = vunpack.c.h.b16 %v2416
  %v3175 = vunpack.c.l.b16 %v2417
  %v3176 = vunpack.c.h.b16 %v2417
  %v3177 = vunpack.c.l.b16 %v2418
  %v3178 = vunpack.c.h.b16 %v2418
  %v3179 = vunpack.c.l.b16 %v2419
  %v3180 = vunpack.c.l.b16 %v2420
  %v3181 = vunpack.c.h.b16 %v2420
  %v3182 = vunpack.c.l.b16 %v2421
  %v3183 = vunpack.c.h.b16 %v2421
  %v3184 = vunpack.c.l.b16 %v2422
  %v3185 = vunpack.c.h.b16 %v2422
  %v3186 = vunpack.c.l.b16 %v2423
  %v3187 = vunpack.c.l.b16 %v2424
  %v3188 = vunpack.c.h.b16 %v2424
  %v3189 = vunpack.c.l.b16 %v2425
  %v3190 = vunpack.c.h.b16 %v2425
  %v3191 = vunpack.c.l.b16 %v2426
  %v3192 = vunpack.c.h.b16 %v2426
  %v3193 = vunpack.c.l.b16 %v2427
  %v3194 = vunpack.c.l.b16 %v2428
  %v3195 = vunpack.c.h.b16 %v2428
  %v3196 = vunpack.c.l.b16 %v2429
  %v3197 = vunpack.c.h.b16 %v2429
  %v3198 = vunpack.c.l.b16 %v2430
  %v3199 = vunpack.c.h.b16 %v2430
  %v3200 = vunpack.c.l.b16 %v2431
  %v3201 = vunpack.c.l.b16 %v2432
  %v3202 = vunpack.c.h.b16 %v2432
  %v3203 = vunpack.c.l.b16 %v2433
  %v3204 = vunpack.c.h.b16 %v2433
  %v3205 = vunpack.c.l.b16 %v2434
  %v3206 = vunpack.c.h.b16 %v2434
  %v3207 = vunpack.c.l.b16 %v2435
  %v3208 = vunpack.c.l.b16 %v2436
  %v3209 = vunpack.c.h.b16 %v2436
  %v3210 = vunpack.c.l.b16 %v2437
  %v3211 = vunpack.c.h.b16 %v2437
  %v3212 = vunpack.c.l.b16 %v2438
  %v3213 = vunpack.c.h.b16 %v2438
  %v3214 = vunpack.c.l.b16 %v2439
  %v3215 = vunpack.c.l.b16 %v2440
  %v3216 = vunpack.c.h.b16 %v2440
  %v3217 = vunpack.c.l.b16 %v2441
  %v3218 = vunpack.c.h.b16 %v2441
  %v3219 = vunpack.c.l.b16 %v2442
  %v3220 = vunpack.c.h.b16 %v2442
  %v3221 = vunpack.c.l.b16 %v2443
  %v3222 = vunpack.c.l.b16 %v2444
  %v3223 = vunpack.c.h.b16 %v2444
  %v3224 = vunpack.c.l.b16 %v2445
  %v3225 = vunpack.c.h.b16 %v2445
  %v3226 = vunpack.c.l.b16 %v2446
  %v3227 = vunpack.c.h.b16 %v2446
  %v3228 = vunpack.c.l.b16 %v2447
  %v3229 = vunpack.c.l.b16 %v2448
  %v3230 = vunpack.c.h.b16 %v2448
  %v3231 = vunpack.c.l.b16 %v2449
  %v3232 = vunpack.c.h.b16 %v2449
  %v3233 = vunpack.c.l.b16 %v2450
  %v3234 = vunpack.c.h.b16 %v2450
  %v3235 = vunpack.c.l.b16 %v2451
  %v3236 = vunpack.c.l.b16 %v2452
  %v3237 = vunpack.c.h.b16 %v2452
  %v3238 = vunpack.c.l.b16 %v2453
  %v3239 = vunpack.c.h.b16 %v2453
  %v3240 = vunpack.c.l.b16 %v2454
  %v3241 = vunpack.c.h.b16 %v2454
  %v3242 = vunpack.c.l.b16 %v2455
  %v3243 = vunpack.c.l.b16 %v2456
  %v3244 = vunpack.c.h.b16 %v2456
  %v3245 = vunpack.c.l.b16 %v2457
  %v3246 = vunpack.c.h.b16 %v2457
  %v3247 = vunpack.c.l.b16 %v2458
  %v3248 = vunpack.c.h.b16 %v2458
  %v3249 = vunpack.c.l.b16 %v2459
  %v3250 = vunpack.c.l.b16 %v2460
  %v3251 = vunpack.c.h.b16 %v2460
  %v3252 = vunpack.c.l.b16 %v2461
  %v3253 = vunpack.c.h.b16 %v2461
  %v3254 = vunpack.c.l.b16 %v2462
  %v3255 = vunpack.c.h.b16 %v2462
  %v3256 = vunpack.c.l.b16 %v2463
  %v3257 = vunpack.c.l.b16 %v2464
  %v3258 = vunpack.c.h.b16 %v2464
  %v3259 = vunpack.c.l.b16 %v2465
  %v3260 = vunpack.c.h.b16 %v2465
  %v3261 = vunpack.c.l.b16 %v2466
  %v3262 = vunpack.c.h.b16 %v2466
  %v3263 = vunpack.c.l.b16 %v2467
  %v3264 = vunpack.c.l.b16 %v2468
  %v3265 = vunpack.c.h.b16 %v2468
  %v3266 = vunpack.c.l.b16 %v2469
  %v3267 = vunpack.c.h.b16 %v2469
  %v3268 = vunpack.c.l.b16 %v2470
  %v3269 = vunpack.c.h.b16 %v2470
  %v3270 = vunpack.c.l.b16 %v2471
  %v3271 = vunpack.c.l.b16 %v2472
  %v3272 = vunpack.c.h.b16 %v2472
  %v3273 = vunpack.c.l.b16 %v2473
  %v3274 = vunpack.c.h.b16 %v2473
  %v3275 = vunpack.c.l.b16 %v2474
  %v3276 = vunpack.c.h.b16 %v2474
  %v3277 = vunpack.c.l.b16 %v2475
  %v3278 = vunpack.c.l.b16 %v2476
  %v3279 = vunpack.c.h.b16 %v2476
  %v3280 = vunpack.c.l.b16 %v2477
  %v3281 = vunpack.c.h.b16 %v2477
  %v3282 = vunpack.c.l.b16 %v2478
  %v3283 = vunpack.c.h.b16 %v2478
  %v3284 = vunpack.c.l.b16 %v2479
  %v3285 = vunpack.c.l.b16 %v2480
  %v3286 = vunpack.c.h.b16 %v2480
  %v3287 = vunpack.c.l.b16 %v2481
  %v3288 = vunpack.c.h.b16 %v2481
  %v3289 = vunpack.c.l.b16 %v2482
  %v3290 = vunpack.c.h.b16 %v2482
  %v3291 = vunpack.c.l.b16 %v2483
  %v3292 = vpack.c.b16 %v2851, %v2844
  %v3293 = vpack.c.b16 %v2852, %v2845
  %v3294 = vpack.c.b16 %v2853, %v2846
  %v3295 = vpack.c.b16 %v2854, %v2847
  %v3296 = vpack.c.b16 %v2855, %v2848
  %v3297 = vpack.c.b16 %v2856, %v2849
  %v3298 = vpack.c.b16 %v2857, %v2850
  %v3299 = vpack.c.b16 %v2865, %v2858
  %v3300 = vpack.c.b16 %v2866, %v2859
  %v3301 = vpack.c.b16 %v2867, %v2860
  %v3302 = vpack.c.b16 %v2868, %v2861
  %v3303 = vpack.c.b16 %v2869, %v2862
  %v3304 = vpack.c.b16 %v2870, %v2863
  %v3305 = vpack.c.b16 %v2871, %v2864
  %v3306 = vpack.c.b16 %v2879, %v2872
  %v3307 = vpack.c.b16 %v2880, %v2873
  %v3308 = vpack.c.b16 %v2881, %v2874
  %v3309 = vpack.c.b16 %v2882, %v2875
  %v3310 = vpack.c.b16 %v2883, %v2876
  %v3311 = vpack.c.b16 %v2884, %v2877
  %v3312 = vpack.c.b16 %v2885, %v2878
  %v3313 = vpack.c.b16 %v2893, %v2886
  %v3314 = vpack.c.b16 %v2894, %v2887
  %v3315 = vpack.c.b16 %v2895, %v2888
  %v3316 = vpack.c.b16 %v2896, %v2889
  %v3317 = vpack.c.b16 %v2897, %v2890
  %v3318 = vpack.c.b16 %v2898, %v2891
  %v3319 = vpack.c.b16 %v2899, %v2892
  %v3320 = vpack.c.b16 %v2907, %v2900
  %v3321 = vpack.c.b16 %v2908, %v2901
  %v3322 = vpack.c.b16 %v2909, %v2902
  %v3323 = vpack.c.b16 %v2910, %v2903
  %v3324 = vpack.c.b16 %v2911, %v2904
  %v3325 = vpack.c.b16 %v2912, %v2905
  %v3326 = vpack.c.b16 %v2913, %v2906
  %v3327 = vpack.c.b16 %v2921, %v2914
  %v3328 = vpack.c.b16 %v2922, %v2915
  %v3329 = vpack.c.b16 %v2923, %v2916
  %v3330 = vpack.c.b16 %v2924, %v2917
  %v3331 = vpack.c.b16 %v2925, %v2918
  %v3332 = vpack.c.b16 %v2926, %v2919
  %v3333 = vpack.c.b16 %v2927, %v2920
  %v3334 = vpack.c.b16 %v2935, %v2928
  %v3335 = vpack.c.b16 %v2936, %v2929
  %v3336 = vpack.c.b16 %v2937, %v2930
  %v3337 = vpack.c.b16 %v2938, %v2931
  %v3338 = vpack.c.b16 %v2939, %v2932
  %v3339 = vpack.c.b16 %v2940, %v2933
  %v3340 = vpack.c.b16 %v2941, %v2934
  %v3341 = vpack.c.b16 %v2949, %v2942
  %v3342 = vpack.c.b16 %v2950, %v2943
  %v3343 = vpack.c.b16 %v2951, %v2944
  %v3344 = vpack.c.b16 %v2952, %v2945
  %v3345 = vpack.c.b16 %v2953, %v2946
  %v3346 = vpack.c.b16 %v2954, %v2947
  %v3347 = vpack.c.b16 %v2955, %v2948
  %v3348 = vpack.c.b16 %v2963, %v2956
  %v3349 = vpack.c.b16 %v2964, %v2957
  %v3350 = vpack.c.b16 %v2965, %v2958
  %v3351 = vpack.c.b16 %v2966, %v2959
  %v3352 = vpack.c.b16 %v2967, %v2960
  %v3353 = vpack.c.b16 %v2968, %v2961
  %v3354 = vpack.c.b16 %v2969, %v2962
  %v3355 = vpack.c.b16 %v2977, %v2970
  %v3356 = vpack.c.b16 %v2978, %v2971
  %v3357 = vpack.c.b16 %v2979, %v2972
  %v3358 = vpack.c.b16 %v2980, %v2973
  %v3359 = vpack.c.b16 %v2981, %v2974
  %v3360 = vpack.c.b16 %v2982, %v2975
  %v3361 = vpack.c.b16 %v2983, %v2976
  %v3362 = vpack.c.b16 %v2991, %v2984
  %v3363 = vpack.c.b16 %v2992, %v2985
  %v3364 = vpack.c.b16 %v2993, %v2986
  %v3365 = vpack.c.b16 %v2994, %v2987
  %v3366 = vpack.c.b16 %v2995, %v2988
  %v3367 = vpack.c.b16 %v2996, %v2989
  %v3368 = vpack.c.b16 %v2997, %v2990
  %v3369 = vpack.c.b16 %v3005, %v2998
  %v3370 = vpack.c.b16 %v3006, %v2999
  %v3371 = vpack.c.b16 %v3007, %v3000
  %v3372 = vpack.c.b16 %v3008, %v3001
  %v3373 = vpack.c.b16 %v3009, %v3002
  %v3374 = vpack.c.b16 %v3010, %v3003
  %v3375 = vpack.c.b16 %v3011, %v3004
  %v3376 = vpack.c.b16 %v3019, %v3012
  %v3377 = vpack.c.b16 %v3020, %v3013
  %v3378 = vpack.c.b16 %v3021, %v3014
  %v3379 = vpack.c.b16 %v3022, %v3015
  %v3380 = vpack.c.b16 %v3023, %v3016
  %v3381 = vpack.c.b16 %v3024, %v3017
  %v3382 = vpack.c.b16 %v3025, %v3018
  %v3383 = vpack.c.b16 %v3033, %v3026
  %v3384 = vpack.c.b16 %v3034, %v3027
  %v3385 = vpack.c.b16 %v3035, %v3028
  %v3386 = vpack.c.b16 %v3036, %v3029
  %v3387 = vpack.c.b16 %v3037, %v3030
  %v3388 = vpack.c.b16 %v3038, %v3031
  %v3389 = vpack.c.b16 %v3039, %v3032
  %v3390 = vpack.c.b16 %v3047, %v3040
  %v3391 = vpack.c.b16 %v3048, %v3041
  %v3392 = vpack.c.b16 %v3049, %v3042
  %v3393 = vpack.c.b16 %v3050, %v3043
  %v3394 = vpack.c.b16 %v3051, %v3044
  %v3395 = vpack.c.b16 %v3052, %v3045
  %v3396 = vpack.c.b16 %v3053, %v3046
  %v3397 = vpack.c.b16 %v3061, %v3054
  %v3398 = vpack.c.b16 %v3062, %v3055
  %v3399 = vpack.c.b16 %v3063, %v3056
  %v3400 = vpack.c.b16 %v3064, %v3057
  %v3401 = vpack.c.b16 %v3065, %v3058
  %v3402 = vpack.c.b16 %v3066, %v3059
  %v3403 = vpack.c.b16 %v3067, %v3060
  %v3404 = vpack.c.b16 %v3075, %v3068
  %v3405 = vpack.c.b16 %v3076, %v3069
  %v3406 = vpack.c.b16 %v3077, %v3070
  %v3407 = vpack.c.b16 %v3078, %v3071
  %v3408 = vpack.c.b16 %v3079, %v3072
  %v3409 = vpack.c.b16 %v3080, %v3073
  %v3410 = vpack.c.b16 %v3081, %v3074
  %v3411 = vpack.c.b16 %v3089, %v3082
  %v3412 = vpack.c.b16 %v3090, %v3083
  %v3413 = vpack.c.b16 %v3091, %v3084
  %v3414 = vpack.c.b16 %v3092, %v3085
  %v3415 = vpack.c.b16 %v3093, %v3086
  %v3416 = vpack.c.b16 %v3094, %v3087
  %v3417 = vpack.c.b16 %v3095, %v3088
  %v3418 = vpack.c.b16 %v3103, %v3096
  %v3419 = vpack.c.b16 %v3104, %v3097
  %v3420 = vpack.c.b16 %v3105, %v3098
  %v3421 = vpack.c.b16 %v3106, %v3099
  %v3422 = vpack.c.b16 %v3107, %v3100
  %v3423 = vpack.c.b16 %v3108, %v3101
  %v3424 = vpack.c.b16 %v3109, %v3102
  %v3425 = vpack.c.b16 %v3117, %v3110
  %v3426 = vpack.c.b16 %v3118, %v3111
  %v3427 = vpack.c.b16 %v3119, %v3112
  %v3428 = vpack.c.b16 %v3120, %v3113
  %v3429 = vpack.c.b16 %v3121, %v3114
  %v3430 = vpack.c.b16 %v3122, %v3115
  %v3431 = vpack.c.b16 %v3123, %v3116
  %v3432 = vpack.c.b16 %v3131, %v3124
  %v3433 = vpack.c.b16 %v3132, %v3125
  %v3434 = vpack.c.b16 %v3133, %v3126
  %v3435 = vpack.c.b16 %v3134, %v3127
  %v3436 = vpack.c.b16 %v3135, %v3128
  %v3437 = vpack.c.b16 %v3136, %v3129
  %v3438 = vpack.c.b16 %v3137, %v3130
  %v3439 = vpack.c.b16 %v3145, %v3138
  %v3440 = vpack.c.b16 %v3146, %v3139
  %v3441 = vpack.c.b16 %v3147, %v3140
  %v3442 = vpack.c.b16 %v3148, %v3141
  %v3443 = vpack.c.b16 %v3149, %v3142
  %v3444 = vpack.c.b16 %v3150, %v3143
  %v3445 = vpack.c.b16 %v3151, %v3144
  %v3446 = vpack.c.b16 %v3159, %v3152
  %v3447 = vpack.c.b16 %v3160, %v3153
  %v3448 = vpack.c.b16 %v3161, %v3154
  %v3449 = vpack.c.b16 %v3162, %v3155
  %v3450 = vpack.c.b16 %v3163, %v3156
  %v3451 = vpack.c.b16 %v3164, %v3157
  %v3452 = vpack.c.b16 %v3165, %v3158
  %v3453 = vpack.c.b16 %v3173, %v3166
  %v3454 = vpack.c.b16 %v3174, %v3167
  %v3455 = vpack.c.b16 %v3175, %v3168
  %v3456 = vpack.c.b16 %v3176, %v3169
  %v3457 = vpack.c.b16 %v3177, %v3170
  %v3458 = vpack.c.b16 %v3178, %v3171
  %v3459 = vpack.c.b16 %v3179, %v3172
  %v3460 = vpack.c.b16 %v3187, %v3180
  %v3461 = vpack.c.b16 %v3188, %v3181
  %v3462 = vpack.c.b16 %v3189, %v3182
  %v3463 = vpack.c.b16 %v3190, %v3183
  %v3464 = vpack.c.b16 %v3191, %v3184
  %v3465 = vpack.c.b16 %v3192, %v3185
  %v3466 = vpack.c.b16 %v3193, %v3186
  %v3467 = vpack.c.b16 %v3201, %v3194
  %v3468 = vpack.c.b16 %v3202, %v3195
  %v3469 = vpack.c.b16 %v3203, %v3196
  %v3470 = vpack.c.b16 %v3204, %v3197
  %v3471 = vpack.c.b16 %v3205, %v3198
  %v3472 = vpack.c.b16 %v3206, %v3199
  %v3473 = vpack.c.b16 %v3207, %v3200
  %v3474 = vpack.c.b16 %v3215, %v3208
  %v3475 = vpack.c.b16 %v3216, %v3209
  %v3476 = vpack.c.b16 %v3217, %v3210
  %v3477 = vpack.c.b16 %v3218, %v3211
  %v3478 = vpack.c.b16 %v3219, %v3212
  %v3479 = vpack.c.b16 %v3220, %v3213
  %v3480 = vpack.c.b16 %v3221, %v3214
  %v3481 = vpack.c.b16 %v3229, %v3222
  %v3482 = vpack.c.b16 %v3230, %v3223
  %v3483 = vpack.c.b16 %v3231, %v3224
  %v3484 = vpack.c.b16 %v3232, %v3225
  %v3485 = vpack.c.b16 %v3233, %v3226
  %v3486 = vpack.c.b16 %v3234, %v3227
  %v3487 = vpack.c.b16 %v3235, %v3228
  %v3488 = vpack.c.b16 %v3243, %v3236
  %v3489 = vpack.c.b16 %v3244, %v3237
  %v3490 = vpack.c.b16 %v3245, %v3238
  %v3491 = vpack.c.b16 %v3246, %v3239
  %v3492 = vpack.c.b16 %v3247, %v3240
  %v3493 = vpack.c.b16 %v3248, %v3241
  %v3494 = vpack.c.b16 %v3249, %v3242
  %v3495 = vpack.c.b16 %v3257, %v3250
  %v3496 = vpack.c.b16 %v3258, %v3251
  %v3497 = vpack.c.b16 %v3259, %v3252
  %v3498 = vpack.c.b16 %v3260, %v3253
  %v3499 = vpack.c.b16 %v3261, %v3254
  %v3500 = vpack.c.b16 %v3262, %v3255
  %v3501 = vpack.c.b16 %v3263, %v3256
  %v3502 = vpack.c.b16 %v3271, %v3264
  %v3503 = vpack.c.b16 %v3272, %v3265
  %v3504 = vpack.c.b16 %v3273, %v3266
  %v3505 = vpack.c.b16 %v3274, %v3267
  %v3506 = vpack.c.b16 %v3275, %v3268
  %v3507 = vpack.c.b16 %v3276, %v3269
  %v3508 = vpack.c.b16 %v3277, %v3270
  %v3509 = vpack.c.b16 %v3285, %v3278
  %v3510 = vpack.c.b16 %v3286, %v3279
  %v3511 = vpack.c.b16 %v3287, %v3280
  %v3512 = vpack.c.b16 %v3288, %v3281
  %v3513 = vpack.c.b16 %v3289, %v3282
  %v3514 = vpack.c.b16 %v3290, %v3283
  %v3515 = vpack.c.b16 %v3291, %v3284
  %v3808 = vunpack.c.l.b16 %v2484
  %v3809 = vunpack.c.l.b16 %v2485
  %v3810 = vunpack.c.l.b16 %v2486
  %v3811 = vunpack.c.l.b16 %v2487
  %v3812 = vunpack.c.l.b16 %v2488
  %v3813 = vunpack.c.l.b16 %v2489
  %v3814 = vunpack.c.l.b16 %v2490
  %v3815 = vunpack.c.l.b16 %v2491
  %v3816 = vunpack.c.l.b16 %v2492
  %v3817 = vunpack.c.l.b16 %v2493
  %v3818 = vunpack.c.l.b16 %v2494
  %v3819 = vunpack.c.l.b16 %v2495
  %v3820 = vunpack.c.l.b16 %v2496
  %v3821 = vunpack.c.l.b16 %v2497
  %v3822 = vunpack.c.l.b16 %v2498
  %v3823 = vunpack.c.l.b16 %v2499
  %v3824 = vunpack.c.l.b16 %v2500
  %v3825 = vunpack.c.l.b16 %v2501
  %v3826 = vunpack.c.l.b16 %v2502
  %v3827 = vunpack.c.l.b16 %v2503
  %v3828 = vunpack.c.l.b16 %v2504
  %v3829 = vunpack.c.l.b16 %v2505
  %v3830 = vunpack.c.l.b16 %v2506
  %v3831 = vunpack.c.l.b16 %v2507
  %v3832 = vunpack.c.l.b16 %v2508
  %v3833 = vunpack.c.l.b16 %v2509
  %v3834 = vunpack.c.l.b16 %v2510
  %v3835 = vunpack.c.l.b16 %v2511
  %v3836 = vunpack.c.l.b16 %v2512
  %v3837 = vunpack.c.l.b16 %v2513
  %v3838 = vunpack.c.l.b16 %v2514
  %v3839 = vunpack.c.l.b16 %v2515
  %v3840 = vunpack.c.l.b16 %v2516
  %v3841 = vunpack.c.l.b16 %v2517
  %v3842 = vunpack.c.l.b16 %v2518
  %v3843 = vunpack.c.l.b16 %v2519
  %v3844 = vunpack.c.l.b16 %v2520
  %v3845 = vunpack.c.l.b16 %v2521
  %v3846 = vunpack.c.l.b16 %v2522
  %v3847 = vunpack.c.l.b16 %v2523
  %v3848 = vunpack.c.l.b16 %v2524
  %v3849 = vunpack.c.l.b16 %v2525
  %v3850 = vunpack.c.l.b16 %v2526
  %v3851 = vunpack.c.l.b16 %v2527
  %v3852 = vunpack.c.l.b16 %v2528
  %v3853 = vunpack.c.l.b16 %v2529
  %v3854 = vunpack.c.l.b16 %v2530
  %v3855 = vunpack.c.l.b16 %v2531
  %v3856 = vunpack.c.l.b16 %v2532
  %v3857 = vunpack.c.l.b16 %v2533
  %v3858 = vunpack.c.l.b16 %v2534
  %v3859 = vunpack.c.l.b16 %v2535
  %v3860 = vunpack.c.l.b16 %v2536
  %v3861 = vunpack.c.l.b16 %v2537
  %v3862 = vunpack.c.l.b16 %v2538
  %v3863 = vunpack.c.l.b16 %v2539
  %v3864 = vunpack.c.l.b16 %v2540
  %v3865 = vunpack.c.l.b16 %v2541
  %v3866 = vunpack.c.l.b16 %v2542
  %v3867 = vunpack.c.l.b16 %v2543
  %v3868 = vunpack.c.l.b16 %v2544
  %v3869 = vunpack.c.l.b16 %v2545
  %v3870 = vunpack.c.l.b16 %v2546
  %v3871 = vunpack.c.l.b16 %v2547
  %v3872 = vunpack.c.l.b16 %v2548
  %v3873 = vunpack.c.l.b16 %v2549
  %v3874 = vunpack.c.l.b16 %v2550
  %v3875 = vunpack.c.l.b16 %v2551
  %v3876 = vunpack.c.l.b16 %v2552
  %v3877 = vunpack.c.l.b16 %v2553
  %v3878 = vunpack.c.l.b16 %v2554
  %v3879 = vunpack.c.l.b16 %v2555
  %v3880 = vunpack.c.l.b16 %v2556
  %v3881 = vunpack.c.l.b16 %v2557
  %v3882 = vunpack.c.l.b16 %v2558
  %v3883 = vunpack.c.l.b16 %v2559
  %v3884 = vunpack.c.l.b16 %v2560
  %v3885 = vunpack.c.l.b16 %v2561
  %v3886 = vunpack.c.l.b16 %v2562
  %v3887 = vunpack.c.l.b16 %v2563
  %v3888 = vunpack.c.l.b16 %v2564
  %v3889 = vunpack.c.l.b16 %v2565
  %v3890 = vunpack.c.l.b16 %v2566
  %v3891 = vunpack.c.l.b16 %v2567
  %v3892 = vunpack.c.l.b16 %v2568
  %v3893 = vunpack.c.l.b16 %v2569
  %v3894 = vunpack.c.l.b16 %v2570
  %v3895 = vunpack.c.l.b16 %v2571
  %v3896 = vunpack.c.l.b16 %v2572
  %v3897 = vunpack.c.l.b16 %v2573
  %v3898 = vunpack.c.l.b16 %v2574
  %v3899 = vunpack.c.l.b16 %v2575
  %v3900 = vunpack.c.l.b16 %v2576
  %v3901 = vunpack.c.l.b16 %v2577
  %v3902 = vunpack.c.l.b16 %v2578
  %v3903 = vunpack.c.l.b16 %v2579
  %v3904 = vunpack.c.l.b16 %v2580
  %v3905 = vunpack.c.l.b16 %v2581
  %v3906 = vunpack.c.l.b16 %v2582
  %v3907 = vunpack.c.l.b16 %v2583
  %v3908 = vpack.c.b16 %v3809, %v3808
  %v3909 = vpack.c.b16 %v3811, %v3810
  %v3910 = vpack.c.b16 %v3813, %v3812
  %v3911 = vpack.c.b16 %v3815, %v3814
  %v3912 = vpack.c.b16 %v3817, %v3816
  %v3913 = vpack.c.b16 %v3819, %v3818
  %v3914 = vpack.c.b16 %v3821, %v3820
  %v3915 = vpack.c.b16 %v3823, %v3822
  %v3916 = vpack.c.b16 %v3825, %v3824
  %v3917 = vpack.c.b16 %v3827, %v3826
  %v3918 = vpack.c.b16 %v3829, %v3828
  %v3919 = vpack.c.b16 %v3831, %v3830
  %v3920 = vpack.c.b16 %v3833, %v3832
  %v3921 = vpack.c.b16 %v3835, %v3834
  %v3922 = vpack.c.b16 %v3837, %v3836
  %v3923 = vpack.c.b16 %v3839, %v3838
  %v3924 = vpack.c.b16 %v3841, %v3840
  %v3925 = vpack.c.b16 %v3843, %v3842
  %v3926 = vpack.c.b16 %v3845, %v3844
  %v3927 = vpack.c.b16 %v3847, %v3846
  %v3928 = vpack.c.b16 %v3849, %v3848
  %v3929 = vpack.c.b16 %v3851, %v3850
  %v3930 = vpack.c.b16 %v3853, %v3852
  %v3931 = vpack.c.b16 %v3855, %v3854
  %v3932 = vpack.c.b16 %v3857, %v3856
  %v3933 = vpack.c.b16 %v3859, %v3858
  %v3934 = vpack.c.b16 %v3861, %v3860
  %v3935 = vpack.c.b16 %v3863, %v3862
  %v3936 = vpack.c.b16 %v3865, %v3864
  %v3937 = vpack.c.b16 %v3867, %v3866
  %v3938 = vpack.c.b16 %v3869, %v3868
  %v3939 = vpack.c.b16 %v3871, %v3870
  %v3940 = vpack.c.b16 %v3873, %v3872
  %v3941 = vpack.c.b16 %v3875, %v3874
  %v3942 = vpack.c.b16 %v3877, %v3876
  %v3943 = vpack.c.b16 %v3879, %v3878
  %v3944 = vpack.c.b16 %v3881, %v3880
  %v3945 = vpack.c.b16 %v3883, %v3882
  %v3946 = vpack.c.b16 %v3885, %v3884
  %v3947 = vpack.c.b16 %v3887, %v3886
  %v3948 = vpack.c.b16 %v3889, %v3888
  %v3949 = vpack.c.b16 %v3891, %v3890
  %v3950 = vpack.c.b16 %v3893, %v3892
  %v3951 = vpack.c.b16 %v3895, %v3894
  %v3952 = vpack.c.b16 %v3897, %v3896
  %v3953 = vpack.c.b16 %v3899, %v3898
  %v3954 = vpack.c.b16 %v3901, %v3900
  %v3955 = vpack.c.b16 %v3903, %v3902
  %v3956 = vpack.c.b16 %v3905, %v3904
  %v3957 = vpack.c.b16 %v3907, %v3906
  %vm4008 = vcmask 261120
  %v4010 = vsel %vm4008, %v3298, 0
  %v4013 = vsel %vm4008, %v3305, 0
  %v4016 = vsel %vm4008, %v3312, 0
  %v4019 = vsel %vm4008, %v3319, 0
  %v4022 = vsel %vm4008, %v3326, 0
  %v4025 = vsel %vm4008, %v3333, 0
  %v4028 = vsel %vm4008, %v3340, 0
  %v4031 = vsel %vm4008, %v3347, 0
  %v4034 = vsel %vm4008, %v3354, 0
  %v4037 = vsel %vm4008, %v3361, 0
  %v4040 = vsel %vm4008, %v3368, 0
  %v4043 = vsel %vm4008, %v3375, 0
  %v4046 = vsel %vm4008, %v3382, 0
  %v4049 = vsel %vm4008, %v3389, 0
  %v4052 = vsel %vm4008, %v3396, 0
  %v4055 = vsel %vm4008, %v3403, 0
  %v4058 = vsel %vm4008, %v3410, 0
  %v4061 = vsel %vm4008, %v3417, 0
  %v4064 = vsel %vm4008, %v3424, 0
  %v4067 = vsel %vm4008, %v3431, 0
  %v4070 = vsel %vm4008, %v3438, 0
  %v4073 = vsel %vm4008, %v3445, 0
  %v4076 = vsel %vm4008, %v3452, 0
  %v4079 = vsel %vm4008, %v3459, 0
  %v4082 = vsel %vm4008, %v3466, 0
  %v4085 = vsel %vm4008, %v3473, 0
  %v4088 = vsel %vm4008, %v3480, 0
  %v4091 = vsel %vm4008, %v3487, 0
  %v4094 = vsel %vm4008, %v3494, 0
  %v4097 = vsel %vm4008, %v3501, 0
  %v4100 = vsel %vm4008, %v3508, 0
  %v4103 = vsel %vm4008, %v3515, 0
  %4105 = vmatpush.bf16.msra.mxu0 %v3915
  %4106 = vmatpush.bf16.msra.mxu0 %v3914
  %4107 = vmatpush.bf16.msra.mxu0 %v3913
  %4108 = vmatpush.bf16.msra.mxu0 %v3912
  %4109 = vmatpush.bf16.msra.mxu0 %v3911
  %4110 = vmatpush.bf16.msra.mxu0 %v3910
  %4111 = vmatpush.bf16.msra.mxu0 %v3909
  %4112 = vmatpush.bf16.msra.mxu0 %v3908
  %4113 = vmatmul.bf16.gmra.mxu0 %v3292
  %v4114 = vpop.f32.mrf.mxu0
  %v4115 = vadd.f32 %v2586, %v4114
  %v4116 = vpop.f32.mrf.mxu0
  %v4117 = vadd.f32 %v2586, %v4116
  %4118 = vmatmul.bf16.gmra.mxu0 %v3299
  %v4119 = vpop.f32.mrf.mxu0
  %v4120 = vadd.f32 %v2586, %v4119
  %v4121 = vpop.f32.mrf.mxu0
  %v4122 = vadd.f32 %v2586, %v4121
  %4123 = vmatmul.bf16.gmra.mxu0 %v3306
  %v4124 = vpop.f32.mrf.mxu0
  %v4125 = vadd.f32 %v2586, %v4124
  %v4126 = vpop.f32.mrf.mxu0
  %v4127 = vadd.f32 %v2586, %v4126
  %4128 = vmatmul.bf16.gmra.mxu0 %v3313
  %v4129 = vpop.f32.mrf.mxu0
  %v4130 = vadd.f32 %v2586, %v4129
  %v4131 = vpop.f32.mrf.mxu0
  %v4132 = vadd.f32 %v2586, %v4131
  %4133 = vmatmul.bf16.gmra.mxu0 %v3320
  %v4134 = vpop.f32.mrf.mxu0
  %v4135 = vadd.f32 %v2586, %v4134
  %v4136 = vpop.f32.mrf.mxu0
  %v4137 = vadd.f32 %v2586, %v4136
  %4138 = vmatmul.bf16.gmra.mxu0 %v3327
  %v4139 = vpop.f32.mrf.mxu0
  %v4140 = vadd.f32 %v2586, %v4139
  %v4141 = vpop.f32.mrf.mxu0
  %v4142 = vadd.f32 %v2586, %v4141
  %4143 = vmatmul.bf16.gmra.mxu0 %v3334
  %v4144 = vpop.f32.mrf.mxu0
  %v4145 = vadd.f32 %v2586, %v4144
  %v4146 = vpop.f32.mrf.mxu0
  %v4147 = vadd.f32 %v2586, %v4146
  %4148 = vmatmul.bf16.gmra.mxu0 %v3341
  %v4149 = vpop.f32.mrf.mxu0
  %v4150 = vadd.f32 %v2586, %v4149
  %v4151 = vpop.f32.mrf.mxu0
  %v4152 = vadd.f32 %v2586, %v4151
  %4153 = vmatmul.bf16.gmra.mxu0 %v3348
  %v4154 = vpop.f32.mrf.mxu0
  %v4155 = vadd.f32 %v2586, %v4154
  %v4156 = vpop.f32.mrf.mxu0
  %v4157 = vadd.f32 %v2586, %v4156
  %4158 = vmatmul.bf16.gmra.mxu0 %v3355
  %v4159 = vpop.f32.mrf.mxu0
  %v4160 = vadd.f32 %v2586, %v4159
  %v4161 = vpop.f32.mrf.mxu0
  %v4162 = vadd.f32 %v2586, %v4161
  %4163 = vmatmul.bf16.gmra.mxu0 %v3362
  %v4164 = vpop.f32.mrf.mxu0
  %v4165 = vadd.f32 %v2586, %v4164
  %v4166 = vpop.f32.mrf.mxu0
  %v4167 = vadd.f32 %v2586, %v4166
  %4168 = vmatmul.bf16.gmra.mxu0 %v3369
  %v4169 = vpop.f32.mrf.mxu0
  %v4170 = vadd.f32 %v2586, %v4169
  %v4171 = vpop.f32.mrf.mxu0
  %v4172 = vadd.f32 %v2586, %v4171
  %4173 = vmatmul.bf16.gmra.mxu0 %v3376
  %v4174 = vpop.f32.mrf.mxu0
  %v4175 = vadd.f32 %v2586, %v4174
  %v4176 = vpop.f32.mrf.mxu0
  %v4177 = vadd.f32 %v2586, %v4176
  %4178 = vmatmul.bf16.gmra.mxu0 %v3383
  %v4179 = vpop.f32.mrf.mxu0
  %v4180 = vadd.f32 %v2586, %v4179
  %v4181 = vpop.f32.mrf.mxu0
  %v4182 = vadd.f32 %v2586, %v4181
  %4183 = vmatmul.bf16.gmra.mxu0 %v3390
  %v4184 = vpop.f32.mrf.mxu0
  %v4185 = vadd.f32 %v2586, %v4184
  %v4186 = vpop.f32.mrf.mxu0
  %v4187 = vadd.f32 %v2586, %v4186
  %4188 = vmatmul.bf16.gmra.mxu0 %v3397
  %v4189 = vpop.f32.mrf.mxu0
  %v4190 = vadd.f32 %v2586, %v4189
  %v4191 = vpop.f32.mrf.mxu0
  %v4192 = vadd.f32 %v2586, %v4191
  %4193 = vmatmul.bf16.gmra.mxu0 %v3404
  %v4194 = vpop.f32.mrf.mxu0
  %v4195 = vadd.f32 %v2586, %v4194
  %v4196 = vpop.f32.mrf.mxu0
  %v4197 = vadd.f32 %v2586, %v4196
  %4198 = vmatmul.bf16.gmra.mxu0 %v3411
  %v4199 = vpop.f32.mrf.mxu0
  %v4200 = vadd.f32 %v2586, %v4199
  %v4201 = vpop.f32.mrf.mxu0
  %v4202 = vadd.f32 %v2586, %v4201
  %4203 = vmatmul.bf16.gmra.mxu0 %v3418
  %v4204 = vpop.f32.mrf.mxu0
  %v4205 = vadd.f32 %v2586, %v4204
  %v4206 = vpop.f32.mrf.mxu0
  %v4207 = vadd.f32 %v2586, %v4206
  %4208 = vmatmul.bf16.gmra.mxu0 %v3425
  %v4209 = vpop.f32.mrf.mxu0
  %v4210 = vadd.f32 %v2586, %v4209
  %v4211 = vpop.f32.mrf.mxu0
  %v4212 = vadd.f32 %v2586, %v4211
  %4213 = vmatmul.bf16.gmra.mxu0 %v3432
  %v4214 = vpop.f32.mrf.mxu0
  %v4215 = vadd.f32 %v2586, %v4214
  %v4216 = vpop.f32.mrf.mxu0
  %v4217 = vadd.f32 %v2586, %v4216
  %4218 = vmatmul.bf16.gmra.mxu0 %v3439
  %v4219 = vpop.f32.mrf.mxu0
  %v4220 = vadd.f32 %v2586, %v4219
  %v4221 = vpop.f32.mrf.mxu0
  %v4222 = vadd.f32 %v2586, %v4221
  %4223 = vmatmul.bf16.gmra.mxu0 %v3446
  %v4224 = vpop.f32.mrf.mxu0
  %v4225 = vadd.f32 %v2586, %v4224
  %v4226 = vpop.f32.mrf.mxu0
  %v4227 = vadd.f32 %v2586, %v4226
  %4228 = vmatmul.bf16.gmra.mxu0 %v3453
  %v4229 = vpop.f32.mrf.mxu0
  %v4230 = vadd.f32 %v2586, %v4229
  %v4231 = vpop.f32.mrf.mxu0
  %v4232 = vadd.f32 %v2586, %v4231
  %4233 = vmatmul.bf16.gmra.mxu0 %v3460
  %v4234 = vpop.f32.mrf.mxu0
  %v4235 = vadd.f32 %v2586, %v4234
  %v4236 = vpop.f32.mrf.mxu0
  %v4237 = vadd.f32 %v2586, %v4236
  %4238 = vmatmul.bf16.gmra.mxu0 %v3467
  %v4239 = vpop.f32.mrf.mxu0
  %v4240 = vadd.f32 %v2586, %v4239
  %v4241 = vpop.f32.mrf.mxu0
  %v4242 = vadd.f32 %v2586, %v4241
  %4243 = vmatmul.bf16.gmra.mxu0 %v3474
  %v4244 = vpop.f32.mrf.mxu0
  %v4245 = vadd.f32 %v2586, %v4244
  %v4246 = vpop.f32.mrf.mxu0
  %v4247 = vadd.f32 %v2586, %v4246
  %4248 = vmatmul.bf16.gmra.mxu0 %v3481
  %v4249 = vpop.f32.mrf.mxu0
  %v4250 = vadd.f32 %v2586, %v4249
  %v4251 = vpop.f32.mrf.mxu0
  %v4252 = vadd.f32 %v2586, %v4251
  %4253 = vmatmul.bf16.gmra.mxu0 %v3488
  %v4254 = vpop.f32.mrf.mxu0
  %v4255 = vadd.f32 %v2586, %v4254
  %v4256 = vpop.f32.mrf.mxu0
  %v4257 = vadd.f32 %v2586, %v4256
  %4258 = vmatmul.bf16.gmra.mxu0 %v3495
  %v4259 = vpop.f32.mrf.mxu0
  %v4260 = vadd.f32 %v2586, %v4259
  %v4261 = vpop.f32.mrf.mxu0
  %v4262 = vadd.f32 %v2586, %v4261
  %4263 = vmatmul.bf16.gmra.mxu0 %v3502
  %v4264 = vpop.f32.mrf.mxu0
  %v4265 = vadd.f32 %v2586, %v4264
  %v4266 = vpop.f32.mrf.mxu0
  %v4267 = vadd.f32 %v2586, %v4266
  %4268 = vmatmul.bf16.gmra.mxu0 %v3509
  %v4269 = vpop.f32.mrf.mxu0
  %v4270 = vadd.f32 %v2586, %v4269
  %v4271 = vpop.f32.mrf.mxu0
  %v4272 = vadd.f32 %v2586, %v4271
  %4273 = vdwg.mxu0
  %4274 = vmatpush.bf16.msra.mxu0 %v3923
  %4275 = vmatpush.bf16.msra.mxu0 %v3922
  %4276 = vmatpush.bf16.msra.mxu0 %v3921
  %4277 = vmatpush.bf16.msra.mxu0 %v3920
  %4278 = vmatpush.bf16.msra.mxu0 %v3919
  %4279 = vmatpush.bf16.msra.mxu0 %v3918
  %4280 = vmatpush.bf16.msra.mxu0 %v3917
  %4281 = vmatpush.bf16.msra.mxu0 %v3916
  %4282 = vmatmul.bf16.gmra.mxu0 %v3293
  %v4283 = vpop.f32.mrf.mxu0
  %v4284 = vadd.f32 %v4115, %v4283
  %v4285 = vpop.f32.mrf.mxu0
  %v4286 = vadd.f32 %v4117, %v4285
  %4287 = vmatmul.bf16.gmra.mxu0 %v3300
  %v4288 = vpop.f32.mrf.mxu0
  %v4289 = vadd.f32 %v4120, %v4288
  %v4290 = vpop.f32.mrf.mxu0
  %v4291 = vadd.f32 %v4122, %v4290
  %4292 = vmatmul.bf16.gmra.mxu0 %v3307
  %v4293 = vpop.f32.mrf.mxu0
  %v4294 = vadd.f32 %v4125, %v4293
  %v4295 = vpop.f32.mrf.mxu0
  %v4296 = vadd.f32 %v4127, %v4295
  %4297 = vmatmul.bf16.gmra.mxu0 %v3314
  %v4298 = vpop.f32.mrf.mxu0
  %v4299 = vadd.f32 %v4130, %v4298
  %v4300 = vpop.f32.mrf.mxu0
  %v4301 = vadd.f32 %v4132, %v4300
  %4302 = vmatmul.bf16.gmra.mxu0 %v3321
  %v4303 = vpop.f32.mrf.mxu0
  %v4304 = vadd.f32 %v4135, %v4303
  %v4305 = vpop.f32.mrf.mxu0
  %v4306 = vadd.f32 %v4137, %v4305
  %4307 = vmatmul.bf16.gmra.mxu0 %v3328
  %v4308 = vpop.f32.mrf.mxu0
  %v4309 = vadd.f32 %v4140, %v4308
  %v4310 = vpop.f32.mrf.mxu0
  %v4311 = vadd.f32 %v4142, %v4310
  %4312 = vmatmul.bf16.gmra.mxu0 %v3335
  %v4313 = vpop.f32.mrf.mxu0
  %v4314 = vadd.f32 %v4145, %v4313
  %v4315 = vpop.f32.mrf.mxu0
  %v4316 = vadd.f32 %v4147, %v4315
  %4317 = vmatmul.bf16.gmra.mxu0 %v3342
  %v4318 = vpop.f32.mrf.mxu0
  %v4319 = vadd.f32 %v4150, %v4318
  %v4320 = vpop.f32.mrf.mxu0
  %v4321 = vadd.f32 %v4152, %v4320
  %4322 = vmatmul.bf16.gmra.mxu0 %v3349
  %v4323 = vpop.f32.mrf.mxu0
  %v4324 = vadd.f32 %v4155, %v4323
  %v4325 = vpop.f32.mrf.mxu0
  %v4326 = vadd.f32 %v4157, %v4325
  %4327 = vmatmul.bf16.gmra.mxu0 %v3356
  %v4328 = vpop.f32.mrf.mxu0
  %v4329 = vadd.f32 %v4160, %v4328
  %v4330 = vpop.f32.mrf.mxu0
  %v4331 = vadd.f32 %v4162, %v4330
  %4332 = vmatmul.bf16.gmra.mxu0 %v3363
  %v4333 = vpop.f32.mrf.mxu0
  %v4334 = vadd.f32 %v4165, %v4333
  %v4335 = vpop.f32.mrf.mxu0
  %v4336 = vadd.f32 %v4167, %v4335
  %4337 = vmatmul.bf16.gmra.mxu0 %v3370
  %v4338 = vpop.f32.mrf.mxu0
  %v4339 = vadd.f32 %v4170, %v4338
  %v4340 = vpop.f32.mrf.mxu0
  %v4341 = vadd.f32 %v4172, %v4340
  %4342 = vmatmul.bf16.gmra.mxu0 %v3377
  %v4343 = vpop.f32.mrf.mxu0
  %v4344 = vadd.f32 %v4175, %v4343
  %v4345 = vpop.f32.mrf.mxu0
  %v4346 = vadd.f32 %v4177, %v4345
  %4347 = vmatmul.bf16.gmra.mxu0 %v3384
  %v4348 = vpop.f32.mrf.mxu0
  %v4349 = vadd.f32 %v4180, %v4348
  %v4350 = vpop.f32.mrf.mxu0
  %v4351 = vadd.f32 %v4182, %v4350
  %4352 = vmatmul.bf16.gmra.mxu0 %v3391
  %v4353 = vpop.f32.mrf.mxu0
  %v4354 = vadd.f32 %v4185, %v4353
  %v4355 = vpop.f32.mrf.mxu0
  %v4356 = vadd.f32 %v4187, %v4355
  %4357 = vmatmul.bf16.gmra.mxu0 %v3398
  %v4358 = vpop.f32.mrf.mxu0
  %v4359 = vadd.f32 %v4190, %v4358
  %v4360 = vpop.f32.mrf.mxu0
  %v4361 = vadd.f32 %v4192, %v4360
  %4362 = vmatmul.bf16.gmra.mxu0 %v3405
  %v4363 = vpop.f32.mrf.mxu0
  %v4364 = vadd.f32 %v4195, %v4363
  %v4365 = vpop.f32.mrf.mxu0
  %v4366 = vadd.f32 %v4197, %v4365
  %4367 = vmatmul.bf16.gmra.mxu0 %v3412
  %v4368 = vpop.f32.mrf.mxu0
  %v4369 = vadd.f32 %v4200, %v4368
  %v4370 = vpop.f32.mrf.mxu0
  %v4371 = vadd.f32 %v4202, %v4370
  %4372 = vmatmul.bf16.gmra.mxu0 %v3419
  %v4373 = vpop.f32.mrf.mxu0
  %v4374 = vadd.f32 %v4205, %v4373
  %v4375 = vpop.f32.mrf.mxu0
  %v4376 = vadd.f32 %v4207, %v4375
  %4377 = vmatmul.bf16.gmra.mxu0 %v3426
  %v4378 = vpop.f32.mrf.mxu0
  %v4379 = vadd.f32 %v4210, %v4378
  %v4380 = vpop.f32.mrf.mxu0
  %v4381 = vadd.f32 %v4212, %v4380
  %4382 = vmatmul.bf16.gmra.mxu0 %v3433
  %v4383 = vpop.f32.mrf.mxu0
  %v4384 = vadd.f32 %v4215, %v4383
  %v4385 = vpop.f32.mrf.mxu0
  %v4386 = vadd.f32 %v4217, %v4385
  %4387 = vmatmul.bf16.gmra.mxu0 %v3440
  %v4388 = vpop.f32.mrf.mxu0
  %v4389 = vadd.f32 %v4220, %v4388
  %v4390 = vpop.f32.mrf.mxu0
  %v4391 = vadd.f32 %v4222, %v4390
  %4392 = vmatmul.bf16.gmra.mxu0 %v3447
  %v4393 = vpop.f32.mrf.mxu0
  %v4394 = vadd.f32 %v4225, %v4393
  %v4395 = vpop.f32.mrf.mxu0
  %v4396 = vadd.f32 %v4227, %v4395
  %4397 = vmatmul.bf16.gmra.mxu0 %v3454
  %v4398 = vpop.f32.mrf.mxu0
  %v4399 = vadd.f32 %v4230, %v4398
  %v4400 = vpop.f32.mrf.mxu0
  %v4401 = vadd.f32 %v4232, %v4400
  %4402 = vmatmul.bf16.gmra.mxu0 %v3461
  %v4403 = vpop.f32.mrf.mxu0
  %v4404 = vadd.f32 %v4235, %v4403
  %v4405 = vpop.f32.mrf.mxu0
  %v4406 = vadd.f32 %v4237, %v4405
  %4407 = vmatmul.bf16.gmra.mxu0 %v3468
  %v4408 = vpop.f32.mrf.mxu0
  %v4409 = vadd.f32 %v4240, %v4408
  %v4410 = vpop.f32.mrf.mxu0
  %v4411 = vadd.f32 %v4242, %v4410
  %4412 = vmatmul.bf16.gmra.mxu0 %v3475
  %v4413 = vpop.f32.mrf.mxu0
  %v4414 = vadd.f32 %v4245, %v4413
  %v4415 = vpop.f32.mrf.mxu0
  %v4416 = vadd.f32 %v4247, %v4415
  %4417 = vmatmul.bf16.gmra.mxu0 %v3482
  %v4418 = vpop.f32.mrf.mxu0
  %v4419 = vadd.f32 %v4250, %v4418
  %v4420 = vpop.f32.mrf.mxu0
  %v4421 = vadd.f32 %v4252, %v4420
  %4422 = vmatmul.bf16.gmra.mxu0 %v3489
  %v4423 = vpop.f32.mrf.mxu0
  %v4424 = vadd.f32 %v4255, %v4423
  %v4425 = vpop.f32.mrf.mxu0
  %v4426 = vadd.f32 %v4257, %v4425
  %4427 = vmatmul.bf16.gmra.mxu0 %v3496
  %v4428 = vpop.f32.mrf.mxu0
  %v4429 = vadd.f32 %v4260, %v4428
  %v4430 = vpop.f32.mrf.mxu0
  %v4431 = vadd.f32 %v4262, %v4430
  %4432 = vmatmul.bf16.gmra.mxu0 %v3503
  %v4433 = vpop.f32.mrf.mxu0
  %v4434 = vadd.f32 %v4265, %v4433
  %v4435 = vpop.f32.mrf.mxu0
  %v4436 = vadd.f32 %v4267, %v4435
  %4437 = vmatmul.bf16.gmra.mxu0 %v3510
  %v4438 = vpop.f32.mrf.mxu0
  %v4439 = vadd.f32 %v4270, %v4438
  %v4440 = vpop.f32.mrf.mxu0
  %v4441 = vadd.f32 %v4272, %v4440
  %4442 = vdwg.mxu0
  %4443 = vmatpush.bf16.msra.mxu0 %v3931
  %4444 = vmatpush.bf16.msra.mxu0 %v3930
  %4445 = vmatpush.bf16.msra.mxu0 %v3929
  %4446 = vmatpush.bf16.msra.mxu0 %v3928
  %4447 = vmatpush.bf16.msra.mxu0 %v3927
  %4448 = vmatpush.bf16.msra.mxu0 %v3926
  %4449 = vmatpush.bf16.msra.mxu0 %v3925
  %4450 = vmatpush.bf16.msra.mxu0 %v3924
  %4451 = vmatmul.bf16.gmra.mxu0 %v3294
  %v4452 = vpop.f32.mrf.mxu0
  %v4453 = vadd.f32 %v4284, %v4452
  %v4454 = vpop.f32.mrf.mxu0
  %v4455 = vadd.f32 %v4286, %v4454
  %4456 = vmatmul.bf16.gmra.mxu0 %v3301
  %v4457 = vpop.f32.mrf.mxu0
  %v4458 = vadd.f32 %v4289, %v4457
  %v4459 = vpop.f32.mrf.mxu0
  %v4460 = vadd.f32 %v4291, %v4459
  %4461 = vmatmul.bf16.gmra.mxu0 %v3308
  %v4462 = vpop.f32.mrf.mxu0
  %v4463 = vadd.f32 %v4294, %v4462
  %v4464 = vpop.f32.mrf.mxu0
  %v4465 = vadd.f32 %v4296, %v4464
  %4466 = vmatmul.bf16.gmra.mxu0 %v3315
  %v4467 = vpop.f32.mrf.mxu0
  %v4468 = vadd.f32 %v4299, %v4467
  %v4469 = vpop.f32.mrf.mxu0
  %v4470 = vadd.f32 %v4301, %v4469
  %4471 = vmatmul.bf16.gmra.mxu0 %v3322
  %v4472 = vpop.f32.mrf.mxu0
  %v4473 = vadd.f32 %v4304, %v4472
  %v4474 = vpop.f32.mrf.mxu0
  %v4475 = vadd.f32 %v4306, %v4474
  %4476 = vmatmul.bf16.gmra.mxu0 %v3329
  %v4477 = vpop.f32.mrf.mxu0
  %v4478 = vadd.f32 %v4309, %v4477
  %v4479 = vpop.f32.mrf.mxu0
  %v4480 = vadd.f32 %v4311, %v4479
  %4481 = vmatmul.bf16.gmra.mxu0 %v3336
  %v4482 = vpop.f32.mrf.mxu0
  %v4483 = vadd.f32 %v4314, %v4482
  %v4484 = vpop.f32.mrf.mxu0
  %v4485 = vadd.f32 %v4316, %v4484
  %4486 = vmatmul.bf16.gmra.mxu0 %v3343
  %v4487 = vpop.f32.mrf.mxu0
  %v4488 = vadd.f32 %v4319, %v4487
  %v4489 = vpop.f32.mrf.mxu0
  %v4490 = vadd.f32 %v4321, %v4489
  %4491 = vmatmul.bf16.gmra.mxu0 %v3350
  %v4492 = vpop.f32.mrf.mxu0
  %v4493 = vadd.f32 %v4324, %v4492
  %v4494 = vpop.f32.mrf.mxu0
  %v4495 = vadd.f32 %v4326, %v4494
  %4496 = vmatmul.bf16.gmra.mxu0 %v3357
  %v4497 = vpop.f32.mrf.mxu0
  %v4498 = vadd.f32 %v4329, %v4497
  %v4499 = vpop.f32.mrf.mxu0
  %v4500 = vadd.f32 %v4331, %v4499
  %4501 = vmatmul.bf16.gmra.mxu0 %v3364
  %v4502 = vpop.f32.mrf.mxu0
  %v4503 = vadd.f32 %v4334, %v4502
  %v4504 = vpop.f32.mrf.mxu0
  %v4505 = vadd.f32 %v4336, %v4504
  %4506 = vmatmul.bf16.gmra.mxu0 %v3371
  %v4507 = vpop.f32.mrf.mxu0
  %v4508 = vadd.f32 %v4339, %v4507
  %v4509 = vpop.f32.mrf.mxu0
  %v4510 = vadd.f32 %v4341, %v4509
  %4511 = vmatmul.bf16.gmra.mxu0 %v3378
  %v4512 = vpop.f32.mrf.mxu0
  %v4513 = vadd.f32 %v4344, %v4512
  %v4514 = vpop.f32.mrf.mxu0
  %v4515 = vadd.f32 %v4346, %v4514
  %4516 = vmatmul.bf16.gmra.mxu0 %v3385
  %v4517 = vpop.f32.mrf.mxu0
  %v4518 = vadd.f32 %v4349, %v4517
  %v4519 = vpop.f32.mrf.mxu0
  %v4520 = vadd.f32 %v4351, %v4519
  %4521 = vmatmul.bf16.gmra.mxu0 %v3392
  %v4522 = vpop.f32.mrf.mxu0
  %v4523 = vadd.f32 %v4354, %v4522
  %v4524 = vpop.f32.mrf.mxu0
  %v4525 = vadd.f32 %v4356, %v4524
  %4526 = vmatmul.bf16.gmra.mxu0 %v3399
  %v4527 = vpop.f32.mrf.mxu0
  %v4528 = vadd.f32 %v4359, %v4527
  %v4529 = vpop.f32.mrf.mxu0
  %v4530 = vadd.f32 %v4361, %v4529
  %4531 = vmatmul.bf16.gmra.mxu0 %v3406
  %v4532 = vpop.f32.mrf.mxu0
  %v4533 = vadd.f32 %v4364, %v4532
  %v4534 = vpop.f32.mrf.mxu0
  %v4535 = vadd.f32 %v4366, %v4534
  %4536 = vmatmul.bf16.gmra.mxu0 %v3413
  %v4537 = vpop.f32.mrf.mxu0
  %v4538 = vadd.f32 %v4369, %v4537
  %v4539 = vpop.f32.mrf.mxu0
  %v4540 = vadd.f32 %v4371, %v4539
  %4541 = vmatmul.bf16.gmra.mxu0 %v3420
  %v4542 = vpop.f32.mrf.mxu0
  %v4543 = vadd.f32 %v4374, %v4542
  %v4544 = vpop.f32.mrf.mxu0
  %v4545 = vadd.f32 %v4376, %v4544
  %4546 = vmatmul.bf16.gmra.mxu0 %v3427
  %v4547 = vpop.f32.mrf.mxu0
  %v4548 = vadd.f32 %v4379, %v4547
  %v4549 = vpop.f32.mrf.mxu0
  %v4550 = vadd.f32 %v4381, %v4549
  %4551 = vmatmul.bf16.gmra.mxu0 %v3434
  %v4552 = vpop.f32.mrf.mxu0
  %v4553 = vadd.f32 %v4384, %v4552
  %v4554 = vpop.f32.mrf.mxu0
  %v4555 = vadd.f32 %v4386, %v4554
  %4556 = vmatmul.bf16.gmra.mxu0 %v3441
  %v4557 = vpop.f32.mrf.mxu0
  %v4558 = vadd.f32 %v4389, %v4557
  %v4559 = vpop.f32.mrf.mxu0
  %v4560 = vadd.f32 %v4391, %v4559
  %4561 = vmatmul.bf16.gmra.mxu0 %v3448
  %v4562 = vpop.f32.mrf.mxu0
  %v4563 = vadd.f32 %v4394, %v4562
  %v4564 = vpop.f32.mrf.mxu0
  %v4565 = vadd.f32 %v4396, %v4564
  %4566 = vmatmul.bf16.gmra.mxu0 %v3455
  %v4567 = vpop.f32.mrf.mxu0
  %v4568 = vadd.f32 %v4399, %v4567
  %v4569 = vpop.f32.mrf.mxu0
  %v4570 = vadd.f32 %v4401, %v4569
  %4571 = vmatmul.bf16.gmra.mxu0 %v3462
  %v4572 = vpop.f32.mrf.mxu0
  %v4573 = vadd.f32 %v4404, %v4572
  %v4574 = vpop.f32.mrf.mxu0
  %v4575 = vadd.f32 %v4406, %v4574
  %4576 = vmatmul.bf16.gmra.mxu0 %v3469
  %v4577 = vpop.f32.mrf.mxu0
  %v4578 = vadd.f32 %v4409, %v4577
  %v4579 = vpop.f32.mrf.mxu0
  %v4580 = vadd.f32 %v4411, %v4579
  %4581 = vmatmul.bf16.gmra.mxu0 %v3476
  %v4582 = vpop.f32.mrf.mxu0
  %v4583 = vadd.f32 %v4414, %v4582
  %v4584 = vpop.f32.mrf.mxu0
  %v4585 = vadd.f32 %v4416, %v4584
  %4586 = vmatmul.bf16.gmra.mxu0 %v3483
  %v4587 = vpop.f32.mrf.mxu0
  %v4588 = vadd.f32 %v4419, %v4587
  %v4589 = vpop.f32.mrf.mxu0
  %v4590 = vadd.f32 %v4421, %v4589
  %4591 = vmatmul.bf16.gmra.mxu0 %v3490
  %v4592 = vpop.f32.mrf.mxu0
  %v4593 = vadd.f32 %v4424, %v4592
  %v4594 = vpop.f32.mrf.mxu0
  %v4595 = vadd.f32 %v4426, %v4594
  %4596 = vmatmul.bf16.gmra.mxu0 %v3497
  %v4597 = vpop.f32.mrf.mxu0
  %v4598 = vadd.f32 %v4429, %v4597
  %v4599 = vpop.f32.mrf.mxu0
  %v4600 = vadd.f32 %v4431, %v4599
  %4601 = vmatmul.bf16.gmra.mxu0 %v3504
  %v4602 = vpop.f32.mrf.mxu0
  %v4603 = vadd.f32 %v4434, %v4602
  %v4604 = vpop.f32.mrf.mxu0
  %v4605 = vadd.f32 %v4436, %v4604
  %4606 = vmatmul.bf16.gmra.mxu0 %v3511
  %v4607 = vpop.f32.mrf.mxu0
  %v4608 = vadd.f32 %v4439, %v4607
  %v4609 = vpop.f32.mrf.mxu0
  %v4610 = vadd.f32 %v4441, %v4609
  %4611 = vdwg.mxu0
  %4612 = vmatpush.bf16.msra.mxu0 %v3939
  %4613 = vmatpush.bf16.msra.mxu0 %v3938
  %4614 = vmatpush.bf16.msra.mxu0 %v3937
  %4615 = vmatpush.bf16.msra.mxu0 %v3936
  %4616 = vmatpush.bf16.msra.mxu0 %v3935
  %4617 = vmatpush.bf16.msra.mxu0 %v3934
  %4618 = vmatpush.bf16.msra.mxu0 %v3933
  %4619 = vmatpush.bf16.msra.mxu0 %v3932
  %4620 = vmatmul.bf16.gmra.mxu0 %v3295
  %v4621 = vpop.f32.mrf.mxu0
  %v4622 = vadd.f32 %v4453, %v4621
  %v4623 = vpop.f32.mrf.mxu0
  %v4624 = vadd.f32 %v4455, %v4623
  %4625 = vmatmul.bf16.gmra.mxu0 %v3302
  %v4626 = vpop.f32.mrf.mxu0
  %v4627 = vadd.f32 %v4458, %v4626
  %v4628 = vpop.f32.mrf.mxu0
  %v4629 = vadd.f32 %v4460, %v4628
  %4630 = vmatmul.bf16.gmra.mxu0 %v3309
  %v4631 = vpop.f32.mrf.mxu0
  %v4632 = vadd.f32 %v4463, %v4631
  %v4633 = vpop.f32.mrf.mxu0
  %v4634 = vadd.f32 %v4465, %v4633
  %4635 = vmatmul.bf16.gmra.mxu0 %v3316
  %v4636 = vpop.f32.mrf.mxu0
  %v4637 = vadd.f32 %v4468, %v4636
  %v4638 = vpop.f32.mrf.mxu0
  %v4639 = vadd.f32 %v4470, %v4638
  %4640 = vmatmul.bf16.gmra.mxu0 %v3323
  %v4641 = vpop.f32.mrf.mxu0
  %v4642 = vadd.f32 %v4473, %v4641
  %v4643 = vpop.f32.mrf.mxu0
  %v4644 = vadd.f32 %v4475, %v4643
  %4645 = vmatmul.bf16.gmra.mxu0 %v3330
  %v4646 = vpop.f32.mrf.mxu0
  %v4647 = vadd.f32 %v4478, %v4646
  %v4648 = vpop.f32.mrf.mxu0
  %v4649 = vadd.f32 %v4480, %v4648
  %4650 = vmatmul.bf16.gmra.mxu0 %v3337
  %v4651 = vpop.f32.mrf.mxu0
  %v4652 = vadd.f32 %v4483, %v4651
  %v4653 = vpop.f32.mrf.mxu0
  %v4654 = vadd.f32 %v4485, %v4653
  %4655 = vmatmul.bf16.gmra.mxu0 %v3344
  %v4656 = vpop.f32.mrf.mxu0
  %v4657 = vadd.f32 %v4488, %v4656
  %v4658 = vpop.f32.mrf.mxu0
  %v4659 = vadd.f32 %v4490, %v4658
  %4660 = vmatmul.bf16.gmra.mxu0 %v3351
  %v4661 = vpop.f32.mrf.mxu0
  %v4662 = vadd.f32 %v4493, %v4661
  %v4663 = vpop.f32.mrf.mxu0
  %v4664 = vadd.f32 %v4495, %v4663
  %4665 = vmatmul.bf16.gmra.mxu0 %v3358
  %v4666 = vpop.f32.mrf.mxu0
  %v4667 = vadd.f32 %v4498, %v4666
  %v4668 = vpop.f32.mrf.mxu0
  %v4669 = vadd.f32 %v4500, %v4668
  %4670 = vmatmul.bf16.gmra.mxu0 %v3365
  %v4671 = vpop.f32.mrf.mxu0
  %v4672 = vadd.f32 %v4503, %v4671
  %v4673 = vpop.f32.mrf.mxu0
  %v4674 = vadd.f32 %v4505, %v4673
  %4675 = vmatmul.bf16.gmra.mxu0 %v3372
  %v4676 = vpop.f32.mrf.mxu0
  %v4677 = vadd.f32 %v4508, %v4676
  %v4678 = vpop.f32.mrf.mxu0
  %v4679 = vadd.f32 %v4510, %v4678
  %4680 = vmatmul.bf16.gmra.mxu0 %v3379
  %v4681 = vpop.f32.mrf.mxu0
  %v4682 = vadd.f32 %v4513, %v4681
  %v4683 = vpop.f32.mrf.mxu0
  %v4684 = vadd.f32 %v4515, %v4683
  %4685 = vmatmul.bf16.gmra.mxu0 %v3386
  %v4686 = vpop.f32.mrf.mxu0
  %v4687 = vadd.f32 %v4518, %v4686
  %v4688 = vpop.f32.mrf.mxu0
  %v4689 = vadd.f32 %v4520, %v4688
  %4690 = vmatmul.bf16.gmra.mxu0 %v3393
  %v4691 = vpop.f32.mrf.mxu0
  %v4692 = vadd.f32 %v4523, %v4691
  %v4693 = vpop.f32.mrf.mxu0
  %v4694 = vadd.f32 %v4525, %v4693
  %4695 = vmatmul.bf16.gmra.mxu0 %v3400
  %v4696 = vpop.f32.mrf.mxu0
  %v4697 = vadd.f32 %v4528, %v4696
  %v4698 = vpop.f32.mrf.mxu0
  %v4699 = vadd.f32 %v4530, %v4698
  %4700 = vmatmul.bf16.gmra.mxu0 %v3407
  %v4701 = vpop.f32.mrf.mxu0
  %v4702 = vadd.f32 %v4533, %v4701
  %v4703 = vpop.f32.mrf.mxu0
  %v4704 = vadd.f32 %v4535, %v4703
  %4705 = vmatmul.bf16.gmra.mxu0 %v3414
  %v4706 = vpop.f32.mrf.mxu0
  %v4707 = vadd.f32 %v4538, %v4706
  %v4708 = vpop.f32.mrf.mxu0
  %v4709 = vadd.f32 %v4540, %v4708
  %4710 = vmatmul.bf16.gmra.mxu0 %v3421
  %v4711 = vpop.f32.mrf.mxu0
  %v4712 = vadd.f32 %v4543, %v4711
  %v4713 = vpop.f32.mrf.mxu0
  %v4714 = vadd.f32 %v4545, %v4713
  %4715 = vmatmul.bf16.gmra.mxu0 %v3428
  %v4716 = vpop.f32.mrf.mxu0
  %v4717 = vadd.f32 %v4548, %v4716
  %v4718 = vpop.f32.mrf.mxu0
  %v4719 = vadd.f32 %v4550, %v4718
  %4720 = vmatmul.bf16.gmra.mxu0 %v3435
  %v4721 = vpop.f32.mrf.mxu0
  %v4722 = vadd.f32 %v4553, %v4721
  %v4723 = vpop.f32.mrf.mxu0
  %v4724 = vadd.f32 %v4555, %v4723
  %4725 = vmatmul.bf16.gmra.mxu0 %v3442
  %v4726 = vpop.f32.mrf.mxu0
  %v4727 = vadd.f32 %v4558, %v4726
  %v4728 = vpop.f32.mrf.mxu0
  %v4729 = vadd.f32 %v4560, %v4728
  %4730 = vmatmul.bf16.gmra.mxu0 %v3449
  %v4731 = vpop.f32.mrf.mxu0
  %v4732 = vadd.f32 %v4563, %v4731
  %v4733 = vpop.f32.mrf.mxu0
  %v4734 = vadd.f32 %v4565, %v4733
  %4735 = vmatmul.bf16.gmra.mxu0 %v3456
  %v4736 = vpop.f32.mrf.mxu0
  %v4737 = vadd.f32 %v4568, %v4736
  %v4738 = vpop.f32.mrf.mxu0
  %v4739 = vadd.f32 %v4570, %v4738
  %4740 = vmatmul.bf16.gmra.mxu0 %v3463
  %v4741 = vpop.f32.mrf.mxu0
  %v4742 = vadd.f32 %v4573, %v4741
  %v4743 = vpop.f32.mrf.mxu0
  %v4744 = vadd.f32 %v4575, %v4743
  %4745 = vmatmul.bf16.gmra.mxu0 %v3470
  %v4746 = vpop.f32.mrf.mxu0
  %v4747 = vadd.f32 %v4578, %v4746
  %v4748 = vpop.f32.mrf.mxu0
  %v4749 = vadd.f32 %v4580, %v4748
  %4750 = vmatmul.bf16.gmra.mxu0 %v3477
  %v4751 = vpop.f32.mrf.mxu0
  %v4752 = vadd.f32 %v4583, %v4751
  %v4753 = vpop.f32.mrf.mxu0
  %v4754 = vadd.f32 %v4585, %v4753
  %4755 = vmatmul.bf16.gmra.mxu0 %v3484
  %v4756 = vpop.f32.mrf.mxu0
  %v4757 = vadd.f32 %v4588, %v4756
  %v4758 = vpop.f32.mrf.mxu0
  %v4759 = vadd.f32 %v4590, %v4758
  %4760 = vmatmul.bf16.gmra.mxu0 %v3491
  %v4761 = vpop.f32.mrf.mxu0
  %v4762 = vadd.f32 %v4593, %v4761
  %v4763 = vpop.f32.mrf.mxu0
  %v4764 = vadd.f32 %v4595, %v4763
  %4765 = vmatmul.bf16.gmra.mxu0 %v3498
  %v4766 = vpop.f32.mrf.mxu0
  %v4767 = vadd.f32 %v4598, %v4766
  %v4768 = vpop.f32.mrf.mxu0
  %v4769 = vadd.f32 %v4600, %v4768
  %4770 = vmatmul.bf16.gmra.mxu0 %v3505
  %v4771 = vpop.f32.mrf.mxu0
  %v4772 = vadd.f32 %v4603, %v4771
  %v4773 = vpop.f32.mrf.mxu0
  %v4774 = vadd.f32 %v4605, %v4773
  %4775 = vmatmul.bf16.gmra.mxu0 %v3512
  %v4776 = vpop.f32.mrf.mxu0
  %v4777 = vadd.f32 %v4608, %v4776
  %v4778 = vpop.f32.mrf.mxu0
  %v4779 = vadd.f32 %v4610, %v4778
  %4780 = vdwg.mxu0
  %4781 = vmatpush.bf16.msra.mxu0 %v3947
  %4782 = vmatpush.bf16.msra.mxu0 %v3946
  %4783 = vmatpush.bf16.msra.mxu0 %v3945
  %4784 = vmatpush.bf16.msra.mxu0 %v3944
  %4785 = vmatpush.bf16.msra.mxu0 %v3943
  %4786 = vmatpush.bf16.msra.mxu0 %v3942
  %4787 = vmatpush.bf16.msra.mxu0 %v3941
  %4788 = vmatpush.bf16.msra.mxu0 %v3940
  %4789 = vmatmul.bf16.gmra.mxu0 %v3296
  %v4790 = vpop.f32.mrf.mxu0
  %v4791 = vadd.f32 %v4622, %v4790
  %v4792 = vpop.f32.mrf.mxu0
  %v4793 = vadd.f32 %v4624, %v4792
  %4794 = vmatmul.bf16.gmra.mxu0 %v3303
  %v4795 = vpop.f32.mrf.mxu0
  %v4796 = vadd.f32 %v4627, %v4795
  %v4797 = vpop.f32.mrf.mxu0
  %v4798 = vadd.f32 %v4629, %v4797
  %4799 = vmatmul.bf16.gmra.mxu0 %v3310
  %v4800 = vpop.f32.mrf.mxu0
  %v4801 = vadd.f32 %v4632, %v4800
  %v4802 = vpop.f32.mrf.mxu0
  %v4803 = vadd.f32 %v4634, %v4802
  %4804 = vmatmul.bf16.gmra.mxu0 %v3317
  %v4805 = vpop.f32.mrf.mxu0
  %v4806 = vadd.f32 %v4637, %v4805
  %v4807 = vpop.f32.mrf.mxu0
  %v4808 = vadd.f32 %v4639, %v4807
  %4809 = vmatmul.bf16.gmra.mxu0 %v3324
  %v4810 = vpop.f32.mrf.mxu0
  %v4811 = vadd.f32 %v4642, %v4810
  %v4812 = vpop.f32.mrf.mxu0
  %v4813 = vadd.f32 %v4644, %v4812
  %4814 = vmatmul.bf16.gmra.mxu0 %v3331
  %v4815 = vpop.f32.mrf.mxu0
  %v4816 = vadd.f32 %v4647, %v4815
  %v4817 = vpop.f32.mrf.mxu0
  %v4818 = vadd.f32 %v4649, %v4817
  %4819 = vmatmul.bf16.gmra.mxu0 %v3338
  %v4820 = vpop.f32.mrf.mxu0
  %v4821 = vadd.f32 %v4652, %v4820
  %v4822 = vpop.f32.mrf.mxu0
  %v4823 = vadd.f32 %v4654, %v4822
  %4824 = vmatmul.bf16.gmra.mxu0 %v3345
  %v4825 = vpop.f32.mrf.mxu0
  %v4826 = vadd.f32 %v4657, %v4825
  %v4827 = vpop.f32.mrf.mxu0
  %v4828 = vadd.f32 %v4659, %v4827
  %4829 = vmatmul.bf16.gmra.mxu0 %v3352
  %v4830 = vpop.f32.mrf.mxu0
  %v4831 = vadd.f32 %v4662, %v4830
  %v4832 = vpop.f32.mrf.mxu0
  %v4833 = vadd.f32 %v4664, %v4832
  %4834 = vmatmul.bf16.gmra.mxu0 %v3359
  %v4835 = vpop.f32.mrf.mxu0
  %v4836 = vadd.f32 %v4667, %v4835
  %v4837 = vpop.f32.mrf.mxu0
  %v4838 = vadd.f32 %v4669, %v4837
  %4839 = vmatmul.bf16.gmra.mxu0 %v3366
  %v4840 = vpop.f32.mrf.mxu0
  %v4841 = vadd.f32 %v4672, %v4840
  %v4842 = vpop.f32.mrf.mxu0
  %v4843 = vadd.f32 %v4674, %v4842
  %4844 = vmatmul.bf16.gmra.mxu0 %v3373
  %v4845 = vpop.f32.mrf.mxu0
  %v4846 = vadd.f32 %v4677, %v4845
  %v4847 = vpop.f32.mrf.mxu0
  %v4848 = vadd.f32 %v4679, %v4847
  %4849 = vmatmul.bf16.gmra.mxu0 %v3380
  %v4850 = vpop.f32.mrf.mxu0
  %v4851 = vadd.f32 %v4682, %v4850
  %v4852 = vpop.f32.mrf.mxu0
  %v4853 = vadd.f32 %v4684, %v4852
  %4854 = vmatmul.bf16.gmra.mxu0 %v3387
  %v4855 = vpop.f32.mrf.mxu0
  %v4856 = vadd.f32 %v4687, %v4855
  %v4857 = vpop.f32.mrf.mxu0
  %v4858 = vadd.f32 %v4689, %v4857
  %4859 = vmatmul.bf16.gmra.mxu0 %v3394
  %v4860 = vpop.f32.mrf.mxu0
  %v4861 = vadd.f32 %v4692, %v4860
  %v4862 = vpop.f32.mrf.mxu0
  %v4863 = vadd.f32 %v4694, %v4862
  %4864 = vmatmul.bf16.gmra.mxu0 %v3401
  %v4865 = vpop.f32.mrf.mxu0
  %v4866 = vadd.f32 %v4697, %v4865
  %v4867 = vpop.f32.mrf.mxu0
  %v4868 = vadd.f32 %v4699, %v4867
  %4869 = vmatmul.bf16.gmra.mxu0 %v3408
  %v4870 = vpop.f32.mrf.mxu0
  %v4871 = vadd.f32 %v4702, %v4870
  %v4872 = vpop.f32.mrf.mxu0
  %v4873 = vadd.f32 %v4704, %v4872
  %4874 = vmatmul.bf16.gmra.mxu0 %v3415
  %v4875 = vpop.f32.mrf.mxu0
  %v4876 = vadd.f32 %v4707, %v4875
  %v4877 = vpop.f32.mrf.mxu0
  %v4878 = vadd.f32 %v4709, %v4877
  %4879 = vmatmul.bf16.gmra.mxu0 %v3422
  %v4880 = vpop.f32.mrf.mxu0
  %v4881 = vadd.f32 %v4712, %v4880
  %v4882 = vpop.f32.mrf.mxu0
  %v4883 = vadd.f32 %v4714, %v4882
  %4884 = vmatmul.bf16.gmra.mxu0 %v3429
  %v4885 = vpop.f32.mrf.mxu0
  %v4886 = vadd.f32 %v4717, %v4885
  %v4887 = vpop.f32.mrf.mxu0
  %v4888 = vadd.f32 %v4719, %v4887
  %4889 = vmatmul.bf16.gmra.mxu0 %v3436
  %v4890 = vpop.f32.mrf.mxu0
  %v4891 = vadd.f32 %v4722, %v4890
  %v4892 = vpop.f32.mrf.mxu0
  %v4893 = vadd.f32 %v4724, %v4892
  %4894 = vmatmul.bf16.gmra.mxu0 %v3443
  %v4895 = vpop.f32.mrf.mxu0
  %v4896 = vadd.f32 %v4727, %v4895
  %v4897 = vpop.f32.mrf.mxu0
  %v4898 = vadd.f32 %v4729, %v4897
  %4899 = vmatmul.bf16.gmra.mxu0 %v3450
  %v4900 = vpop.f32.mrf.mxu0
  %v4901 = vadd.f32 %v4732, %v4900
  %v4902 = vpop.f32.mrf.mxu0
  %v4903 = vadd.f32 %v4734, %v4902
  %4904 = vmatmul.bf16.gmra.mxu0 %v3457
  %v4905 = vpop.f32.mrf.mxu0
  %v4906 = vadd.f32 %v4737, %v4905
  %v4907 = vpop.f32.mrf.mxu0
  %v4908 = vadd.f32 %v4739, %v4907
  %4909 = vmatmul.bf16.gmra.mxu0 %v3464
  %v4910 = vpop.f32.mrf.mxu0
  %v4911 = vadd.f32 %v4742, %v4910
  %v4912 = vpop.f32.mrf.mxu0
  %v4913 = vadd.f32 %v4744, %v4912
  %4914 = vmatmul.bf16.gmra.mxu0 %v3471
  %v4915 = vpop.f32.mrf.mxu0
  %v4916 = vadd.f32 %v4747, %v4915
  %v4917 = vpop.f32.mrf.mxu0
  %v4918 = vadd.f32 %v4749, %v4917
  %4919 = vmatmul.bf16.gmra.mxu0 %v3478
  %v4920 = vpop.f32.mrf.mxu0
  %v4921 = vadd.f32 %v4752, %v4920
  %v4922 = vpop.f32.mrf.mxu0
  %v4923 = vadd.f32 %v4754, %v4922
  %4924 = vmatmul.bf16.gmra.mxu0 %v3485
  %v4925 = vpop.f32.mrf.mxu0
  %v4926 = vadd.f32 %v4757, %v4925
  %v4927 = vpop.f32.mrf.mxu0
  %v4928 = vadd.f32 %v4759, %v4927
  %4929 = vmatmul.bf16.gmra.mxu0 %v3492
  %v4930 = vpop.f32.mrf.mxu0
  %v4931 = vadd.f32 %v4762, %v4930
  %v4932 = vpop.f32.mrf.mxu0
  %v4933 = vadd.f32 %v4764, %v4932
  %4934 = vmatmul.bf16.gmra.mxu0 %v3499
  %v4935 = vpop.f32.mrf.mxu0
  %v4936 = vadd.f32 %v4767, %v4935
  %v4937 = vpop.f32.mrf.mxu0
  %v4938 = vadd.f32 %v4769, %v4937
  %4939 = vmatmul.bf16.gmra.mxu0 %v3506
  %v4940 = vpop.f32.mrf.mxu0
  %v4941 = vadd.f32 %v4772, %v4940
  %v4942 = vpop.f32.mrf.mxu0
  %v4943 = vadd.f32 %v4774, %v4942
  %4944 = vmatmul.bf16.gmra.mxu0 %v3513
  %v4945 = vpop.f32.mrf.mxu0
  %v4946 = vadd.f32 %v4777, %v4945
  %v4947 = vpop.f32.mrf.mxu0
  %v4948 = vadd.f32 %v4779, %v4947
  %4949 = vdwg.mxu0
  %4950 = vmatpush.bf16.msra.mxu0 %v3955
  %4951 = vmatpush.bf16.msra.mxu0 %v3954
  %4952 = vmatpush.bf16.msra.mxu0 %v3953
  %4953 = vmatpush.bf16.msra.mxu0 %v3952
  %4954 = vmatpush.bf16.msra.mxu0 %v3951
  %4955 = vmatpush.bf16.msra.mxu0 %v3950
  %4956 = vmatpush.bf16.msra.mxu0 %v3949
  %4957 = vmatpush.bf16.msra.mxu0 %v3948
  %4958 = vmatmul.bf16.gmra.mxu0 %v3297
  %v4959 = vpop.f32.mrf.mxu0
  %v4960 = vadd.f32 %v4791, %v4959
  %v4961 = vpop.f32.mrf.mxu0
  %v4962 = vadd.f32 %v4793, %v4961
  %4963 = vmatmul.bf16.gmra.mxu0 %v3304
  %v4964 = vpop.f32.mrf.mxu0
  %v4965 = vadd.f32 %v4796, %v4964
  %v4966 = vpop.f32.mrf.mxu0
  %v4967 = vadd.f32 %v4798, %v4966
  %4968 = vmatmul.bf16.gmra.mxu0 %v3311
  %v4969 = vpop.f32.mrf.mxu0
  %v4970 = vadd.f32 %v4801, %v4969
  %v4971 = vpop.f32.mrf.mxu0
  %v4972 = vadd.f32 %v4803, %v4971
  %4973 = vmatmul.bf16.gmra.mxu0 %v3318
  %v4974 = vpop.f32.mrf.mxu0
  %v4975 = vadd.f32 %v4806, %v4974
  %v4976 = vpop.f32.mrf.mxu0
  %v4977 = vadd.f32 %v4808, %v4976
  %4978 = vmatmul.bf16.gmra.mxu0 %v3325
  %v4979 = vpop.f32.mrf.mxu0
  %v4980 = vadd.f32 %v4811, %v4979
  %v4981 = vpop.f32.mrf.mxu0
  %v4982 = vadd.f32 %v4813, %v4981
  %4983 = vmatmul.bf16.gmra.mxu0 %v3332
  %v4984 = vpop.f32.mrf.mxu0
  %v4985 = vadd.f32 %v4816, %v4984
  %v4986 = vpop.f32.mrf.mxu0
  %v4987 = vadd.f32 %v4818, %v4986
  %4988 = vmatmul.bf16.gmra.mxu0 %v3339
  %v4989 = vpop.f32.mrf.mxu0
  %v4990 = vadd.f32 %v4821, %v4989
  %v4991 = vpop.f32.mrf.mxu0
  %v4992 = vadd.f32 %v4823, %v4991
  %4993 = vmatmul.bf16.gmra.mxu0 %v3346
  %v4994 = vpop.f32.mrf.mxu0
  %v4995 = vadd.f32 %v4826, %v4994
  %v4996 = vpop.f32.mrf.mxu0
  %v4997 = vadd.f32 %v4828, %v4996
  %4998 = vmatmul.bf16.gmra.mxu0 %v3353
  %v4999 = vpop.f32.mrf.mxu0
  %v5000 = vadd.f32 %v4831, %v4999
  %v5001 = vpop.f32.mrf.mxu0
  %v5002 = vadd.f32 %v4833, %v5001
  %5003 = vmatmul.bf16.gmra.mxu0 %v3360
  %v5004 = vpop.f32.mrf.mxu0
  %v5005 = vadd.f32 %v4836, %v5004
  %v5006 = vpop.f32.mrf.mxu0
  %v5007 = vadd.f32 %v4838, %v5006
  %5008 = vmatmul.bf16.gmra.mxu0 %v3367
  %v5009 = vpop.f32.mrf.mxu0
  %v5010 = vadd.f32 %v4841, %v5009
  %v5011 = vpop.f32.mrf.mxu0
  %v5012 = vadd.f32 %v4843, %v5011
  %5013 = vmatmul.bf16.gmra.mxu0 %v3374
  %v5014 = vpop.f32.mrf.mxu0
  %v5015 = vadd.f32 %v4846, %v5014
  %v5016 = vpop.f32.mrf.mxu0
  %v5017 = vadd.f32 %v4848, %v5016
  %5018 = vmatmul.bf16.gmra.mxu0 %v3381
  %v5019 = vpop.f32.mrf.mxu0
  %v5020 = vadd.f32 %v4851, %v5019
  %v5021 = vpop.f32.mrf.mxu0
  %v5022 = vadd.f32 %v4853, %v5021
  %5023 = vmatmul.bf16.gmra.mxu0 %v3388
  %v5024 = vpop.f32.mrf.mxu0
  %v5025 = vadd.f32 %v4856, %v5024
  %v5026 = vpop.f32.mrf.mxu0
  %v5027 = vadd.f32 %v4858, %v5026
  %5028 = vmatmul.bf16.gmra.mxu0 %v3395
  %v5029 = vpop.f32.mrf.mxu0
  %v5030 = vadd.f32 %v4861, %v5029
  %v5031 = vpop.f32.mrf.mxu0
  %v5032 = vadd.f32 %v4863, %v5031
  %5033 = vmatmul.bf16.gmra.mxu0 %v3402
  %v5034 = vpop.f32.mrf.mxu0
  %v5035 = vadd.f32 %v4866, %v5034
  %v5036 = vpop.f32.mrf.mxu0
  %v5037 = vadd.f32 %v4868, %v5036
  %5038 = vmatmul.bf16.gmra.mxu0 %v3409
  %v5039 = vpop.f32.mrf.mxu0
  %v5040 = vadd.f32 %v4871, %v5039
  %v5041 = vpop.f32.mrf.mxu0
  %v5042 = vadd.f32 %v4873, %v5041
  %5043 = vmatmul.bf16.gmra.mxu0 %v3416
  %v5044 = vpop.f32.mrf.mxu0
  %v5045 = vadd.f32 %v4876, %v5044
  %v5046 = vpop.f32.mrf.mxu0
  %v5047 = vadd.f32 %v4878, %v5046
  %5048 = vmatmul.bf16.gmra.mxu0 %v3423
  %v5049 = vpop.f32.mrf.mxu0
  %v5050 = vadd.f32 %v4881, %v5049
  %v5051 = vpop.f32.mrf.mxu0
  %v5052 = vadd.f32 %v4883, %v5051
  %5053 = vmatmul.bf16.gmra.mxu0 %v3430
  %v5054 = vpop.f32.mrf.mxu0
  %v5055 = vadd.f32 %v4886, %v5054
  %v5056 = vpop.f32.mrf.mxu0
  %v5057 = vadd.f32 %v4888, %v5056
  %5058 = vmatmul.bf16.gmra.mxu0 %v3437
  %v5059 = vpop.f32.mrf.mxu0
  %v5060 = vadd.f32 %v4891, %v5059
  %v5061 = vpop.f32.mrf.mxu0
  %v5062 = vadd.f32 %v4893, %v5061
  %5063 = vmatmul.bf16.gmra.mxu0 %v3444
  %v5064 = vpop.f32.mrf.mxu0
  %v5065 = vadd.f32 %v4896, %v5064
  %v5066 = vpop.f32.mrf.mxu0
  %v5067 = vadd.f32 %v4898, %v5066
  %5068 = vmatmul.bf16.gmra.mxu0 %v3451
  %v5069 = vpop.f32.mrf.mxu0
  %v5070 = vadd.f32 %v4901, %v5069
  %v5071 = vpop.f32.mrf.mxu0
  %v5072 = vadd.f32 %v4903, %v5071
  %5073 = vmatmul.bf16.gmra.mxu0 %v3458
  %v5074 = vpop.f32.mrf.mxu0
  %v5075 = vadd.f32 %v4906, %v5074
  %v5076 = vpop.f32.mrf.mxu0
  %v5077 = vadd.f32 %v4908, %v5076
  %5078 = vmatmul.bf16.gmra.mxu0 %v3465
  %v5079 = vpop.f32.mrf.mxu0
  %v5080 = vadd.f32 %v4911, %v5079
  %v5081 = vpop.f32.mrf.mxu0
  %v5082 = vadd.f32 %v4913, %v5081
  %5083 = vmatmul.bf16.gmra.mxu0 %v3472
  %v5084 = vpop.f32.mrf.mxu0
  %v5085 = vadd.f32 %v4916, %v5084
  %v5086 = vpop.f32.mrf.mxu0
  %v5087 = vadd.f32 %v4918, %v5086
  %5088 = vmatmul.bf16.gmra.mxu0 %v3479
  %v5089 = vpop.f32.mrf.mxu0
  %v5090 = vadd.f32 %v4921, %v5089
  %v5091 = vpop.f32.mrf.mxu0
  %v5092 = vadd.f32 %v4923, %v5091
  %5093 = vmatmul.bf16.gmra.mxu0 %v3486
  %v5094 = vpop.f32.mrf.mxu0
  %v5095 = vadd.f32 %v4926, %v5094
  %v5096 = vpop.f32.mrf.mxu0
  %v5097 = vadd.f32 %v4928, %v5096
  %5098 = vmatmul.bf16.gmra.mxu0 %v3493
  %v5099 = vpop.f32.mrf.mxu0
  %v5100 = vadd.f32 %v4931, %v5099
  %v5101 = vpop.f32.mrf.mxu0
  %v5102 = vadd.f32 %v4933, %v5101
  %5103 = vmatmul.bf16.gmra.mxu0 %v3500
  %v5104 = vpop.f32.mrf.mxu0
  %v5105 = vadd.f32 %v4936, %v5104
  %v5106 = vpop.f32.mrf.mxu0
  %v5107 = vadd.f32 %v4938, %v5106
  %5108 = vmatmul.bf16.gmra.mxu0 %v3507
  %v5109 = vpop.f32.mrf.mxu0
  %v5110 = vadd.f32 %v4941, %v5109
  %v5111 = vpop.f32.mrf.mxu0
  %v5112 = vadd.f32 %v4943, %v5111
  %5113 = vmatmul.bf16.gmra.mxu0 %v3514
  %v5114 = vpop.f32.mrf.mxu0
  %v5115 = vadd.f32 %v4946, %v5114
  %v5116 = vpop.f32.mrf.mxu0
  %v5117 = vadd.f32 %v4948, %v5116
  %5118 = vdwg.mxu0
  %5119 = vmatpush.bf16.msra.mxu0 0
  %5120 = vmatpush.bf16.msra.mxu0 0
  %5121 = vmatpush.bf16.msra.mxu0 0
  %5122 = vmatpush.bf16.msra.mxu0 0
  %5123 = vmatpush.bf16.msra.mxu0 0
  %5124 = vmatpush.bf16.msra.mxu0 0
  %5125 = vmatpush.bf16.msra.mxu0 %v3957
  %5126 = vmatpush.bf16.msra.mxu0 %v3956
  %5127 = vmatmul.bf16.gmra.mxu0 %v4010
  %v5128 = vpop.f32.mrf.mxu0
  %v5129 = vadd.f32 %v4960, %v5128
  %v5130 = vpop.f32.mrf.mxu0
  %v5131 = vadd.f32 %v4962, %v5130
  %5132 = vmatmul.bf16.gmra.mxu0 %v4013
  %v5133 = vpop.f32.mrf.mxu0
  %v5134 = vadd.f32 %v4965, %v5133
  %v5135 = vpop.f32.mrf.mxu0
  %v5136 = vadd.f32 %v4967, %v5135
  %5137 = vmatmul.bf16.gmra.mxu0 %v4016
  %v5138 = vpop.f32.mrf.mxu0
  %v5139 = vadd.f32 %v4970, %v5138
  %v5140 = vpop.f32.mrf.mxu0
  %v5141 = vadd.f32 %v4972, %v5140
  %5142 = vmatmul.bf16.gmra.mxu0 %v4019
  %v5143 = vpop.f32.mrf.mxu0
  %v5144 = vadd.f32 %v4975, %v5143
  %v5145 = vpop.f32.mrf.mxu0
  %v5146 = vadd.f32 %v4977, %v5145
  %5147 = vmatmul.bf16.gmra.mxu0 %v4022
  %v5148 = vpop.f32.mrf.mxu0
  %v5149 = vadd.f32 %v4980, %v5148
  %v5150 = vpop.f32.mrf.mxu0
  %v5151 = vadd.f32 %v4982, %v5150
  %5152 = vmatmul.bf16.gmra.mxu0 %v4025
  %v5153 = vpop.f32.mrf.mxu0
  %v5154 = vadd.f32 %v4985, %v5153
  %v5155 = vpop.f32.mrf.mxu0
  %v5156 = vadd.f32 %v4987, %v5155
  %5157 = vmatmul.bf16.gmra.mxu0 %v4028
  %v5158 = vpop.f32.mrf.mxu0
  %v5159 = vadd.f32 %v4990, %v5158
  %v5160 = vpop.f32.mrf.mxu0
  %v5161 = vadd.f32 %v4992, %v5160
  %5162 = vmatmul.bf16.gmra.mxu0 %v4031
  %v5163 = vpop.f32.mrf.mxu0
  %v5164 = vadd.f32 %v4995, %v5163
  %v5165 = vpop.f32.mrf.mxu0
  %v5166 = vadd.f32 %v4997, %v5165
  %5167 = vmatmul.bf16.gmra.mxu0 %v4034
  %v5168 = vpop.f32.mrf.mxu0
  %v5169 = vadd.f32 %v5000, %v5168
  %v5170 = vpop.f32.mrf.mxu0
  %v5171 = vadd.f32 %v5002, %v5170
  %5172 = vmatmul.bf16.gmra.mxu0 %v4037
  %v5173 = vpop.f32.mrf.mxu0
  %v5174 = vadd.f32 %v5005, %v5173
  %v5175 = vpop.f32.mrf.mxu0
  %v5176 = vadd.f32 %v5007, %v5175
  %5177 = vmatmul.bf16.gmra.mxu0 %v4040
  %v5178 = vpop.f32.mrf.mxu0
  %v5179 = vadd.f32 %v5010, %v5178
  %v5180 = vpop.f32.mrf.mxu0
  %v5181 = vadd.f32 %v5012, %v5180
  %5182 = vmatmul.bf16.gmra.mxu0 %v4043
  %v5183 = vpop.f32.mrf.mxu0
  %v5184 = vadd.f32 %v5015, %v5183
  %v5185 = vpop.f32.mrf.mxu0
  %v5186 = vadd.f32 %v5017, %v5185
  %5187 = vmatmul.bf16.gmra.mxu0 %v4046
  %v5188 = vpop.f32.mrf.mxu0
  %v5189 = vadd.f32 %v5020, %v5188
  %v5190 = vpop.f32.mrf.mxu0
  %v5191 = vadd.f32 %v5022, %v5190
  %5192 = vmatmul.bf16.gmra.mxu0 %v4049
  %v5193 = vpop.f32.mrf.mxu0
  %v5194 = vadd.f32 %v5025, %v5193
  %v5195 = vpop.f32.mrf.mxu0
  %v5196 = vadd.f32 %v5027, %v5195
  %5197 = vmatmul.bf16.gmra.mxu0 %v4052
  %v5198 = vpop.f32.mrf.mxu0
  %v5199 = vadd.f32 %v5030, %v5198
  %v5200 = vpop.f32.mrf.mxu0
  %v5201 = vadd.f32 %v5032, %v5200
  %5202 = vmatmul.bf16.gmra.mxu0 %v4055
  %v5203 = vpop.f32.mrf.mxu0
  %v5204 = vadd.f32 %v5035, %v5203
  %v5205 = vpop.f32.mrf.mxu0
  %v5206 = vadd.f32 %v5037, %v5205
  %5207 = vmatmul.bf16.gmra.mxu0 %v4058
  %v5208 = vpop.f32.mrf.mxu0
  %v5209 = vadd.f32 %v5040, %v5208
  %v5210 = vpop.f32.mrf.mxu0
  %v5211 = vadd.f32 %v5042, %v5210
  %5212 = vmatmul.bf16.gmra.mxu0 %v4061
  %v5213 = vpop.f32.mrf.mxu0
  %v5214 = vadd.f32 %v5045, %v5213
  %v5215 = vpop.f32.mrf.mxu0
  %v5216 = vadd.f32 %v5047, %v5215
  %5217 = vmatmul.bf16.gmra.mxu0 %v4064
  %v5218 = vpop.f32.mrf.mxu0
  %v5219 = vadd.f32 %v5050, %v5218
  %v5220 = vpop.f32.mrf.mxu0
  %v5221 = vadd.f32 %v5052, %v5220
  %5222 = vmatmul.bf16.gmra.mxu0 %v4067
  %v5223 = vpop.f32.mrf.mxu0
  %v5224 = vadd.f32 %v5055, %v5223
  %v5225 = vpop.f32.mrf.mxu0
  %v5226 = vadd.f32 %v5057, %v5225
  %5227 = vmatmul.bf16.gmra.mxu0 %v4070
  %v5228 = vpop.f32.mrf.mxu0
  %v5229 = vadd.f32 %v5060, %v5228
  %v5230 = vpop.f32.mrf.mxu0
  %v5231 = vadd.f32 %v5062, %v5230
  %5232 = vmatmul.bf16.gmra.mxu0 %v4073
  %v5233 = vpop.f32.mrf.mxu0
  %v5234 = vadd.f32 %v5065, %v5233
  %v5235 = vpop.f32.mrf.mxu0
  %v5236 = vadd.f32 %v5067, %v5235
  %5237 = vmatmul.bf16.gmra.mxu0 %v4076
  %v5238 = vpop.f32.mrf.mxu0
  %v5239 = vadd.f32 %v5070, %v5238
  %v5240 = vpop.f32.mrf.mxu0
  %v5241 = vadd.f32 %v5072, %v5240
  %5242 = vmatmul.bf16.gmra.mxu0 %v4079
  %v5243 = vpop.f32.mrf.mxu0
  %v5244 = vadd.f32 %v5075, %v5243
  %v5245 = vpop.f32.mrf.mxu0
  %v5246 = vadd.f32 %v5077, %v5245
  %5247 = vmatmul.bf16.gmra.mxu0 %v4082
  %v5248 = vpop.f32.mrf.mxu0
  %v5249 = vadd.f32 %v5080, %v5248
  %v5250 = vpop.f32.mrf.mxu0
  %v5251 = vadd.f32 %v5082, %v5250
  %5252 = vmatmul.bf16.gmra.mxu0 %v4085
  %v5253 = vpop.f32.mrf.mxu0
  %v5254 = vadd.f32 %v5085, %v5253
  %v5255 = vpop.f32.mrf.mxu0
  %v5256 = vadd.f32 %v5087, %v5255
  %5257 = vmatmul.bf16.gmra.mxu0 %v4088
  %v5258 = vpop.f32.mrf.mxu0
  %v5259 = vadd.f32 %v5090, %v5258
  %v5260 = vpop.f32.mrf.mxu0
  %v5261 = vadd.f32 %v5092, %v5260
  %5262 = vmatmul.bf16.gmra.mxu0 %v4091
  %v5263 = vpop.f32.mrf.mxu0
  %v5264 = vadd.f32 %v5095, %v5263
  %v5265 = vpop.f32.mrf.mxu0
  %v5266 = vadd.f32 %v5097, %v5265
  %5267 = vmatmul.bf16.gmra.mxu0 %v4094
  %v5268 = vpop.f32.mrf.mxu0
  %v5269 = vadd.f32 %v5100, %v5268
  %v5270 = vpop.f32.mrf.mxu0
  %v5271 = vadd.f32 %v5102, %v5270
  %5272 = vmatmul.bf16.gmra.mxu0 %v4097
  %v5273 = vpop.f32.mrf.mxu0
  %v5274 = vadd.f32 %v5105, %v5273
  %v5275 = vpop.f32.mrf.mxu0
  %v5276 = vadd.f32 %v5107, %v5275
  %5277 = vmatmul.bf16.gmra.mxu0 %v4100
  %v5278 = vpop.f32.mrf.mxu0
  %v5279 = vadd.f32 %v5110, %v5278
  %v5280 = vpop.f32.mrf.mxu0
  %v5281 = vadd.f32 %v5112, %v5280
  %5282 = vmatmul.bf16.gmra.mxu0 %v4103
  %v5283 = vpop.f32.mrf.mxu0
  %v5284 = vadd.f32 %v5115, %v5283
  %v5285 = vpop.f32.mrf.mxu0
  %v5286 = vadd.f32 %v5117, %v5285
  %5287 = vdwg.mxu0
  %v5288 = vmax.f32 %v5129, 0.0
  %v5289 = vmax.f32 %v5131, 0.0
  %v5290 = vmax.f32 %v5134, 0.0
  %v5291 = vmax.f32 %v5136, 0.0
  %v5292 = vmax.f32 %v5139, 0.0
  %v5293 = vmax.f32 %v5141, 0.0
  %v5294 = vmax.f32 %v5144, 0.0
  %v5295 = vmax.f32 %v5146, 0.0
  %v5296 = vmax.f32 %v5149, 0.0
  %v5297 = vmax.f32 %v5151, 0.0
  %v5298 = vmax.f32 %v5154, 0.0
  %v5299 = vmax.f32 %v5156, 0.0
  %v5300 = vmax.f32 %v5159, 0.0
  %v5301 = vmax.f32 %v5161, 0.0
  %v5302 = vmax.f32 %v5164, 0.0
  %v5303 = vmax.f32 %v5166, 0.0
  %v5304 = vmax.f32 %v5169, 0.0
  %v5305 = vmax.f32 %v5171, 0.0
  %v5306 = vmax.f32 %v5174, 0.0
  %v5307 = vmax.f32 %v5176, 0.0
  %v5308 = vmax.f32 %v5179, 0.0
  %v5309 = vmax.f32 %v5181, 0.0
  %v5310 = vmax.f32 %v5184, 0.0
  %v5311 = vmax.f32 %v5186, 0.0
  %v5312 = vmax.f32 %v5189, 0.0
  %v5313 = vmax.f32 %v5191, 0.0
  %v5314 = vmax.f32 %v5194, 0.0
  %v5315 = vmax.f32 %v5196, 0.0
  %v5316 = vmax.f32 %v5199, 0.0
  %v5317 = vmax.f32 %v5201, 0.0
  %v5318 = vmax.f32 %v5204, 0.0
  %v5319 = vmax.f32 %v5206, 0.0
  %v5320 = vmax.f32 %v5209, 0.0
  %v5321 = vmax.f32 %v5211, 0.0
  %v5322 = vmax.f32 %v5214, 0.0
  %v5323 = vmax.f32 %v5216, 0.0
  %v5324 = vmax.f32 %v5219, 0.0
  %v5325 = vmax.f32 %v5221, 0.0
  %v5326 = vmax.f32 %v5224, 0.0
  %v5327 = vmax.f32 %v5226, 0.0
  %v5328 = vmax.f32 %v5229, 0.0
  %v5329 = vmax.f32 %v5231, 0.0
  %v5330 = vmax.f32 %v5234, 0.0
  %v5331 = vmax.f32 %v5236, 0.0
  %v5332 = vmax.f32 %v5239, 0.0
  %v5333 = vmax.f32 %v5241, 0.0
  %v5334 = vmax.f32 %v5244, 0.0
  %v5335 = vmax.f32 %v5246, 0.0
  %v5336 = vmax.f32 %v5249, 0.0
  %v5337 = vmax.f32 %v5251, 0.0
  %v5338 = vmax.f32 %v5254, 0.0
  %v5339 = vmax.f32 %v5256, 0.0
  %v5340 = vmax.f32 %v5259, 0.0
  %v5341 = vmax.f32 %v5261, 0.0
  %v5342 = vmax.f32 %v5264, 0.0
  %v5343 = vmax.f32 %v5266, 0.0
  %v5344 = vmax.f32 %v5269, 0.0
  %v5345 = vmax.f32 %v5271, 0.0
  %v5346 = vmax.f32 %v5274, 0.0
  %v5347 = vmax.f32 %v5276, 0.0
  %v5348 = vmax.f32 %v5279, 0.0
  %v5349 = vmax.f32 %v5281, 0.0
  %v5350 = vmax.f32 %v5284, 0.0
  %v5351 = vmax.f32 %v5286, 0.0
  %v5352 = vmax.f32 %v5288, %v5289
  %v5353 = vmax.f32 %v5290, %v5291
  %v5354 = vmax.f32 %v5292, %v5293
  %v5355 = vmax.f32 %v5294, %v5295
  %v5356 = vmax.f32 %v5296, %v5297
  %v5357 = vmax.f32 %v5298, %v5299
  %v5358 = vmax.f32 %v5300, %v5301
  %v5359 = vmax.f32 %v5302, %v5303
  %v5360 = vmax.f32 %v5304, %v5305
  %v5361 = vmax.f32 %v5306, %v5307
  %v5362 = vmax.f32 %v5308, %v5309
  %v5363 = vmax.f32 %v5310, %v5311
  %v5364 = vmax.f32 %v5312, %v5313
  %v5365 = vmax.f32 %v5314, %v5315
  %v5366 = vmax.f32 %v5316, %v5317
  %v5367 = vmax.f32 %v5318, %v5319
  %v5368 = vmax.f32 %v5320, %v5321
  %v5369 = vmax.f32 %v5322, %v5323
  %v5370 = vmax.f32 %v5324, %v5325
  %v5371 = vmax.f32 %v5326, %v5327
  %v5372 = vmax.f32 %v5328, %v5329
  %v5373 = vmax.f32 %v5330, %v5331
  %v5374 = vmax.f32 %v5332, %v5333
  %v5375 = vmax.f32 %v5334, %v5335
  %v5376 = vmax.f32 %v5336, %v5337
  %v5377 = vmax.f32 %v5338, %v5339
  %v5378 = vmax.f32 %v5340, %v5341
  %v5379 = vmax.f32 %v5342, %v5343
  %v5380 = vmax.f32 %v5344, %v5345
  %v5381 = vmax.f32 %v5346, %v5347
  %v5382 = vmax.f32 %v5348, %v5349
  %v5383 = vmax.f32 %v5350, %v5351
  %vm5384 = vcmask 523264
  %5385 = vst.msk [vmem:[#allocation5] sm:$0xff] %vm5384, %v5352
  %5386 = vst.msk [vmem:[#allocation5 + $0x8] sm:$0xff] %vm5384, %v5353
  %5387 = vst.msk [vmem:[#allocation5 + $0x10] sm:$0xff] %vm5384, %v5354
  %5388 = vst.msk [vmem:[#allocation5 + $0x18] sm:$0xff] %vm5384, %v5355
  %5389 = vst.msk [vmem:[#allocation5 + $0x20] sm:$0xff] %vm5384, %v5356
  %5390 = vst.msk [vmem:[#allocation5 + $0x28] sm:$0xff] %vm5384, %v5357
  %5391 = vst.msk [vmem:[#allocation5 + $0x30] sm:$0xff] %vm5384, %v5358
  %5392 = vst.msk [vmem:[#allocation5 + $0x38] sm:$0xff] %vm5384, %v5359
  %5393 = vst.msk [vmem:[#allocation5 + $0x40] sm:$0xff] %vm5384, %v5360
  %5394 = vst.msk [vmem:[#allocation5 + $0x48] sm:$0xff] %vm5384, %v5361
  %5395 = vst.msk [vmem:[#allocation5 + $0x50] sm:$0xff] %vm5384, %v5362
  %5396 = vst.msk [vmem:[#allocation5 + $0x58] sm:$0xff] %vm5384, %v5363
  %5397 = vst.msk [vmem:[#allocation5 + $0x60] sm:$0xff] %vm5384, %v5364
  %5398 = vst.msk [vmem:[#allocation5 + $0x68] sm:$0xff] %vm5384, %v5365
  %5399 = vst.msk [vmem:[#allocation5 + $0x70] sm:$0xff] %vm5384, %v5366
  %5400 = vst.msk [vmem:[#allocation5 + $0x78] sm:$0xff] %vm5384, %v5367
  %5401 = vst.msk [vmem:[#allocation5 + $0x80] sm:$0xff] %vm5384, %v5368
  %5402 = vst.msk [vmem:[#allocation5 + $0x88] sm:$0xff] %vm5384, %v5369
  %5403 = vst.msk [vmem:[#allocation5 + $0x90] sm:$0xff] %vm5384, %v5370
  %5404 = vst.msk [vmem:[#allocation5 + $0x98] sm:$0xff] %vm5384, %v5371
  %5405 = vst.msk [vmem:[#allocation5 + $0xa0] sm:$0xff] %vm5384, %v5372
  %5406 = vst.msk [vmem:[#allocation5 + $0xa8] sm:$0xff] %vm5384, %v5373
  %5407 = vst.msk [vmem:[#allocation5 + $0xb0] sm:$0xff] %vm5384, %v5374
  %5408 = vst.msk [vmem:[#allocation5 + $0xb8] sm:$0xff] %vm5384, %v5375
  %5409 = vst.msk [vmem:[#allocation5 + $0xc0] sm:$0xff] %vm5384, %v5376
  %5410 = vst.msk [vmem:[#allocation5 + $0xc8] sm:$0xff] %vm5384, %v5377
  %5411 = vst.msk [vmem:[#allocation5 + $0xd0] sm:$0xff] %vm5384, %v5378
  %5412 = vst.msk [vmem:[#allocation5 + $0xd8] sm:$0xff] %vm5384, %v5379
  %5413 = vst.msk [vmem:[#allocation5 + $0xe0] sm:$0xff] %vm5384, %v5380
  %5414 = vst.msk [vmem:[#allocation5 + $0xe8] sm:$0xff] %vm5384, %v5381
  %5415 = vst.msk [vmem:[#allocation5 + $0xf0] sm:$0xff] %vm5384, %v5382
  %5416 = vst.msk [vmem:[#allocation5 + $0xf8] sm:$0xff] %vm5384, %v5383
  %v5417 = vld [vmem:[#allocation5] sm:$0x1]
  %v5418 = vld [vmem:[#allocation5 + $0x20] sm:$0x1]
  %v5419 = vld [vmem:[#allocation5 + $0x40] sm:$0x1]
  %v5420 = vld [vmem:[#allocation5 + $0x60] sm:$0x1]
  %v5421 = vld [vmem:[#allocation5 + $0x80] sm:$0x1]
  %v5422 = vld [vmem:[#allocation5 + $0xa0] sm:$0x1]
  %v5423 = vld [vmem:[#allocation5 + $0xc0] sm:$0x1]
  %v5424 = vld [vmem:[#allocation5 + $0xe0] sm:$0x1]
  %v5425 = vld [vmem:[#allocation5 + $0x1] sm:$0x1]
  %v5426 = vld [vmem:[#allocation5 + $0x21] sm:$0x1]
  %v5427 = vld [vmem:[#allocation5 + $0x41] sm:$0x1]
  %v5428 = vld [vmem:[#allocation5 + $0x61] sm:$0x1]
  %v5429 = vld [vmem:[#allocation5 + $0x81] sm:$0x1]
  %v5430 = vld [vmem:[#allocation5 + $0xa1] sm:$0x1]
  %v5431 = vld [vmem:[#allocation5 + $0xc1] sm:$0x1]
  %v5432 = vld [vmem:[#allocation5 + $0xe1] sm:$0x1]
  %v5433 = vmax.f32 %v5417, %v5425
  %v5434 = vmax.f32 %v5418, %v5426
  %v5435 = vmax.f32 %v5419, %v5427
  %v5436 = vmax.f32 %v5420, %v5428
  %v5437 = vmax.f32 %v5421, %v5429
  %v5438 = vmax.f32 %v5422, %v5430
  %v5439 = vmax.f32 %v5423, %v5431
  %v5440 = vmax.f32 %v5424, %v5432
  %v5441 = vpack.c.bf16 %v5433, %v5433
  %v5442 = vpack.c.bf16 %v5434, %v5434
  %v5443 = vpack.c.bf16 %v5435, %v5435
  %v5444 = vpack.c.bf16 %v5436, %v5436
  %v5445 = vpack.c.bf16 %v5437, %v5437
  %v5446 = vpack.c.bf16 %v5438, %v5438
  %v5447 = vpack.c.bf16 %v5439, %v5439
  %v5448 = vpack.c.bf16 %v5440, %v5440
  %v5457 = vunpack.c.l.b16 %v5441
  %v5458 = vunpack.c.l.b16 %v5442
  %v5459 = vunpack.c.l.b16 %v5443
  %v5460 = vunpack.c.l.b16 %v5444
  %v5461 = vunpack.c.l.b16 %v5445
  %v5462 = vunpack.c.l.b16 %v5446
  %v5463 = vunpack.c.l.b16 %v5447
  %v5464 = vunpack.c.l.b16 %v5448
  %v5465 = vrot.slane %v5458, 7
  %vm5466 = vcmask 1041409
  %v5467 = vsel %vm5466, %v5465, %v5457
  %v5468 = vrot.slane %v5459, 6
  %vm5469 = vcmask 1042434
  %v5470 = vsel %vm5469, %v5468, %v5467
  %v5471 = vrot.slane %v5460, 5
  %vm5472 = vcmask 1043459
  %v5473 = vsel %vm5472, %v5471, %v5470
  %v5474 = vrot.slane %v5461, 4
  %vm5475 = vcmask 1044484
  %v5476 = vsel %vm5475, %v5474, %v5473
  %v5477 = vrot.slane %v5462, 3
  %vm5478 = vcmask 1045509
  %v5479 = vsel %vm5478, %v5477, %v5476
  %v5480 = vrot.slane %v5463, 2
  %vm5481 = vcmask 1046534
  %v5482 = vsel %vm5481, %v5480, %v5479
  %v5483 = vrot.slane %v5464, 1
  %vm5484 = vcmask 1047559
  %v5485 = vsel %vm5484, %v5483, %v5482
  %v5486 = vpack.c.b16 %v5485, %v5485
  %vm5488 = vcmask 519168
  %5489 = vst.msk [vmem:[%s5] sm:$0xf] %vm5488, %v5486
  %v5490 = vld [vmem:[#allocation5 + $0x2] sm:$0x1]
  %v5491 = vld [vmem:[#allocation5 + $0x22] sm:$0x1]
  %v5492 = vld [vmem:[#allocation5 + $0x42] sm:$0x1]
  %v5493 = vld [vmem:[#allocation5 + $0x62] sm:$0x1]
  %v5494 = vld [vmem:[#allocation5 + $0x82] sm:$0x1]
  %v5495 = vld [vmem:[#allocation5 + $0xa2] sm:$0x1]
  %v5496 = vld [vmem:[#allocation5 + $0xc2] sm:$0x1]
  %v5497 = vld [vmem:[#allocation5 + $0xe2] sm:$0x1]
  %v5498 = vld [vmem:[#allocation5 + $0x3] sm:$0x1]
  %v5499 = vld [vmem:[#allocation5 + $0x23] sm:$0x1]
  %v5500 = vld [vmem:[#allocation5 + $0x43] sm:$0x1]
  %v5501 = vld [vmem:[#allocation5 + $0x63] sm:$0x1]
  %v5502 = vld [vmem:[#allocation5 + $0x83] sm:$0x1]
  %v5503 = vld [vmem:[#allocation5 + $0xa3] sm:$0x1]
  %v5504 = vld [vmem:[#allocation5 + $0xc3] sm:$0x1]
  %v5505 = vld [vmem:[#allocation5 + $0xe3] sm:$0x1]
  %v5506 = vmax.f32 %v5490, %v5498
  %v5507 = vmax.f32 %v5491, %v5499
  %v5508 = vmax.f32 %v5492, %v5500
  %v5509 = vmax.f32 %v5493, %v5501
  %v5510 = vmax.f32 %v5494, %v5502
  %v5511 = vmax.f32 %v5495, %v5503
  %v5512 = vmax.f32 %v5496, %v5504
  %v5513 = vmax.f32 %v5497, %v5505
  %v5514 = vpack.c.bf16 %v5506, %v5506
  %v5515 = vpack.c.bf16 %v5507, %v5507
  %v5516 = vpack.c.bf16 %v5508, %v5508
  %v5517 = vpack.c.bf16 %v5509, %v5509
  %v5518 = vpack.c.bf16 %v5510, %v5510
  %v5519 = vpack.c.bf16 %v5511, %v5511
  %v5520 = vpack.c.bf16 %v5512, %v5512
  %v5521 = vpack.c.bf16 %v5513, %v5513
  %v5530 = vunpack.c.l.b16 %v5514
  %v5531 = vunpack.c.l.b16 %v5515
  %v5532 = vunpack.c.l.b16 %v5516
  %v5533 = vunpack.c.l.b16 %v5517
  %v5534 = vunpack.c.l.b16 %v5518
  %v5535 = vunpack.c.l.b16 %v5519
  %v5536 = vunpack.c.l.b16 %v5520
  %v5537 = vunpack.c.l.b16 %v5521
  %v5538 = vrot.slane %v5531, 7
  %v5539 = vsel %vm5466, %v5538, %v5530
  %v5540 = vrot.slane %v5532, 6
  %v5541 = vsel %vm5469, %v5540, %v5539
  %v5542 = vrot.slane %v5533, 5
  %v5543 = vsel %vm5472, %v5542, %v5541
  %v5544 = vrot.slane %v5534, 4
  %v5545 = vsel %vm5475, %v5544, %v5543
  %v5546 = vrot.slane %v5535, 3
  %v5547 = vsel %vm5478, %v5546, %v5545
  %v5548 = vrot.slane %v5536, 2
  %v5549 = vsel %vm5481, %v5548, %v5547
  %v5550 = vrot.slane %v5537, 1
  %v5551 = vsel %vm5484, %v5550, %v5549
  %v5552 = vpack.c.b16 %v5551, %v5551
  %5553 = vrot.lane.b32.xlu0 %v5552, 64
  %v5554 = vpop.permute.xlu0 %5553
  %vm5556 = vcmask 1043968
  %5557 = vst.msk [vmem:[%s5] sm:$0xf] %vm5556, %v5554
  %v5558 = vld [vmem:[#allocation5 + $0x4] sm:$0x1]
  %v5559 = vld [vmem:[#allocation5 + $0x24] sm:$0x1]
  %v5560 = vld [vmem:[#allocation5 + $0x44] sm:$0x1]
  %v5561 = vld [vmem:[#allocation5 + $0x64] sm:$0x1]
  %v5562 = vld [vmem:[#allocation5 + $0x84] sm:$0x1]
  %v5563 = vld [vmem:[#allocation5 + $0xa4] sm:$0x1]
  %v5564 = vld [vmem:[#allocation5 + $0xc4] sm:$0x1]
  %v5565 = vld [vmem:[#allocation5 + $0xe4] sm:$0x1]
  %v5566 = vld [vmem:[#allocation5 + $0x5] sm:$0x1]
  %v5567 = vld [vmem:[#allocation5 + $0x25] sm:$0x1]
  %v5568 = vld [vmem:[#allocation5 + $0x45] sm:$0x1]
  %v5569 = vld [vmem:[#allocation5 + $0x65] sm:$0x1]
  %v5570 = vld [vmem:[#allocation5 + $0x85] sm:$0x1]
  %v5571 = vld [vmem:[#allocation5 + $0xa5] sm:$0x1]
  %v5572 = vld [vmem:[#allocation5 + $0xc5] sm:$0x1]
  %v5573 = vld [vmem:[#allocation5 + $0xe5] sm:$0x1]
  %v5574 = vmax.f32 %v5558, %v5566
  %v5575 = vmax.f32 %v5559, %v5567
  %v5576 = vmax.f32 %v5560, %v5568
  %v5577 = vmax.f32 %v5561, %v5569
  %v5578 = vmax.f32 %v5562, %v5570
  %v5579 = vmax.f32 %v5563, %v5571
  %v5580 = vmax.f32 %v5564, %v5572
  %v5581 = vmax.f32 %v5565, %v5573
  %v5582 = vpack.c.bf16 %v5574, %v5574
  %v5583 = vpack.c.bf16 %v5575, %v5575
  %v5584 = vpack.c.bf16 %v5576, %v5576
  %v5585 = vpack.c.bf16 %v5577, %v5577
  %v5586 = vpack.c.bf16 %v5578, %v5578
  %v5587 = vpack.c.bf16 %v5579, %v5579
  %v5588 = vpack.c.bf16 %v5580, %v5580
  %v5589 = vpack.c.bf16 %v5581, %v5581
  %v5598 = vunpack.c.l.b16 %v5582
  %v5599 = vunpack.c.l.b16 %v5583
  %v5600 = vunpack.c.l.b16 %v5584
  %v5601 = vunpack.c.l.b16 %v5585
  %v5602 = vunpack.c.l.b16 %v5586
  %v5603 = vunpack.c.l.b16 %v5587
  %v5604 = vunpack.c.l.b16 %v5588
  %v5605 = vunpack.c.l.b16 %v5589
  %v5606 = vrot.slane %v5599, 7
  %v5607 = vsel %vm5466, %v5606, %v5598
  %v5608 = vrot.slane %v5600, 6
  %v5609 = vsel %vm5469, %v5608, %v5607
  %v5610 = vrot.slane %v5601, 5
  %v5611 = vsel %vm5472, %v5610, %v5609
  %v5612 = vrot.slane %v5602, 4
  %v5613 = vsel %vm5475, %v5612, %v5611
  %v5614 = vrot.slane %v5603, 3
  %v5615 = vsel %vm5478, %v5614, %v5613
  %v5616 = vrot.slane %v5604, 2
  %v5617 = vsel %vm5481, %v5616, %v5615
  %v5618 = vrot.slane %v5605, 1
  %v5619 = vsel %vm5484, %v5618, %v5617
  %v5620 = vpack.c.b16 %v5619, %v5619
  %5622 = vst.msk [vmem:[%s5 + $0x4] sm:$0xf] %vm5488, %v5620
  %v5623 = vld [vmem:[#allocation5 + $0x6] sm:$0x1]
  %v5624 = vld [vmem:[#allocation5 + $0x26] sm:$0x1]
  %v5625 = vld [vmem:[#allocation5 + $0x46] sm:$0x1]
  %v5626 = vld [vmem:[#allocation5 + $0x66] sm:$0x1]
  %v5627 = vld [vmem:[#allocation5 + $0x86] sm:$0x1]
  %v5628 = vld [vmem:[#allocation5 + $0xa6] sm:$0x1]
  %v5629 = vld [vmem:[#allocation5 + $0xc6] sm:$0x1]
  %v5630 = vld [vmem:[#allocation5 + $0xe6] sm:$0x1]
  %v5631 = vld [vmem:[#allocation5 + $0x7] sm:$0x1]
  %v5632 = vld [vmem:[#allocation5 + $0x27] sm:$0x1]
  %v5633 = vld [vmem:[#allocation5 + $0x47] sm:$0x1]
  %v5634 = vld [vmem:[#allocation5 + $0x67] sm:$0x1]
  %v5635 = vld [vmem:[#allocation5 + $0x87] sm:$0x1]
  %v5636 = vld [vmem:[#allocation5 + $0xa7] sm:$0x1]
  %v5637 = vld [vmem:[#allocation5 + $0xc7] sm:$0x1]
  %v5638 = vld [vmem:[#allocation5 + $0xe7] sm:$0x1]
  %v5639 = vmax.f32 %v5623, %v5631
  %v5640 = vmax.f32 %v5624, %v5632
  %v5641 = vmax.f32 %v5625, %v5633
  %v5642 = vmax.f32 %v5626, %v5634
  %v5643 = vmax.f32 %v5627, %v5635
  %v5644 = vmax.f32 %v5628, %v5636
  %v5645 = vmax.f32 %v5629, %v5637
  %v5646 = vmax.f32 %v5630, %v5638
  %v5647 = vpack.c.bf16 %v5639, %v5639
  %v5648 = vpack.c.bf16 %v5640, %v5640
  %v5649 = vpack.c.bf16 %v5641, %v5641
  %v5650 = vpack.c.bf16 %v5642, %v5642
  %v5651 = vpack.c.bf16 %v5643, %v5643
  %v5652 = vpack.c.bf16 %v5644, %v5644
  %v5653 = vpack.c.bf16 %v5645, %v5645
  %v5654 = vpack.c.bf16 %v5646, %v5646
  %v5663 = vunpack.c.l.b16 %v5647
  %v5664 = vunpack.c.l.b16 %v5648
  %v5665 = vunpack.c.l.b16 %v5649
  %v5666 = vunpack.c.l.b16 %v5650
  %v5667 = vunpack.c.l.b16 %v5651
  %v5668 = vunpack.c.l.b16 %v5652
  %v5669 = vunpack.c.l.b16 %v5653
  %v5670 = vunpack.c.l.b16 %v5654
  %v5671 = vrot.slane %v5664, 7
  %v5672 = vsel %vm5466, %v5671, %v5663
  %v5673 = vrot.slane %v5665, 6
  %v5674 = vsel %vm5469, %v5673, %v5672
  %v5675 = vrot.slane %v5666, 5
  %v5676 = vsel %vm5472, %v5675, %v5674
  %v5677 = vrot.slane %v5667, 4
  %v5678 = vsel %vm5475, %v5677, %v5676
  %v5679 = vrot.slane %v5668, 3
  %v5680 = vsel %vm5478, %v5679, %v5678
  %v5681 = vrot.slane %v5669, 2
  %v5682 = vsel %vm5481, %v5681, %v5680
  %v5683 = vrot.slane %v5670, 1
  %v5684 = vsel %vm5484, %v5683, %v5682
  %v5685 = vpack.c.b16 %v5684, %v5684
  %5686 = vrot.lane.b32.xlu0 %v5685, 64
  %v5687 = vpop.permute.xlu0 %5686
  %5689 = vst.msk [vmem:[%s5 + $0x4] sm:$0xf] %vm5556, %v5687
  %v5690 = vld [vmem:[#allocation5 + $0x8] sm:$0x1]
  %v5691 = vld [vmem:[#allocation5 + $0x28] sm:$0x1]
  %v5692 = vld [vmem:[#allocation5 + $0x48] sm:$0x1]
  %v5693 = vld [vmem:[#allocation5 + $0x68] sm:$0x1]
  %v5694 = vld [vmem:[#allocation5 + $0x88] sm:$0x1]
  %v5695 = vld [vmem:[#allocation5 + $0xa8] sm:$0x1]
  %v5696 = vld [vmem:[#allocation5 + $0xc8] sm:$0x1]
  %v5697 = vld [vmem:[#allocation5 + $0xe8] sm:$0x1]
  %v5698 = vld [vmem:[#allocation5 + $0x9] sm:$0x1]
  %v5699 = vld [vmem:[#allocation5 + $0x29] sm:$0x1]
  %v5700 = vld [vmem:[#allocation5 + $0x49] sm:$0x1]
  %v5701 = vld [vmem:[#allocation5 + $0x69] sm:$0x1]
  %v5702 = vld [vmem:[#allocation5 + $0x89] sm:$0x1]
  %v5703 = vld [vmem:[#allocation5 + $0xa9] sm:$0x1]
  %v5704 = vld [vmem:[#allocation5 + $0xc9] sm:$0x1]
  %v5705 = vld [vmem:[#allocation5 + $0xe9] sm:$0x1]
  %v5706 = vmax.f32 %v5690, %v5698
  %v5707 = vmax.f32 %v5691, %v5699
  %v5708 = vmax.f32 %v5692, %v5700
  %v5709 = vmax.f32 %v5693, %v5701
  %v5710 = vmax.f32 %v5694, %v5702
  %v5711 = vmax.f32 %v5695, %v5703
  %v5712 = vmax.f32 %v5696, %v5704
  %v5713 = vmax.f32 %v5697, %v5705
  %v5714 = vpack.c.bf16 %v5706, %v5706
  %v5715 = vpack.c.bf16 %v5707, %v5707
  %v5716 = vpack.c.bf16 %v5708, %v5708
  %v5717 = vpack.c.bf16 %v5709, %v5709
  %v5718 = vpack.c.bf16 %v5710, %v5710
  %v5719 = vpack.c.bf16 %v5711, %v5711
  %v5720 = vpack.c.bf16 %v5712, %v5712
  %v5721 = vpack.c.bf16 %v5713, %v5713
  %v5730 = vunpack.c.l.b16 %v5714
  %v5731 = vunpack.c.l.b16 %v5715
  %v5732 = vunpack.c.l.b16 %v5716
  %v5733 = vunpack.c.l.b16 %v5717
  %v5734 = vunpack.c.l.b16 %v5718
  %v5735 = vunpack.c.l.b16 %v5719
  %v5736 = vunpack.c.l.b16 %v5720
  %v5737 = vunpack.c.l.b16 %v5721
  %v5738 = vrot.slane %v5731, 7
  %v5739 = vsel %vm5466, %v5738, %v5730
  %v5740 = vrot.slane %v5732, 6
  %v5741 = vsel %vm5469, %v5740, %v5739
  %v5742 = vrot.slane %v5733, 5
  %v5743 = vsel %vm5472, %v5742, %v5741
  %v5744 = vrot.slane %v5734, 4
  %v5745 = vsel %vm5475, %v5744, %v5743
  %v5746 = vrot.slane %v5735, 3
  %v5747 = vsel %vm5478, %v5746, %v5745
  %v5748 = vrot.slane %v5736, 2
  %v5749 = vsel %vm5481, %v5748, %v5747
  %v5750 = vrot.slane %v5737, 1
  %v5751 = vsel %vm5484, %v5750, %v5749
  %v5752 = vpack.c.b16 %v5751, %v5751
  %5754 = vst.msk [vmem:[%s5 + $0x8] sm:$0xf] %vm5488, %v5752
  %v5755 = vld [vmem:[#allocation5 + $0xa] sm:$0x1]
  %v5756 = vld [vmem:[#allocation5 + $0x2a] sm:$0x1]
  %v5757 = vld [vmem:[#allocation5 + $0x4a] sm:$0x1]
  %v5758 = vld [vmem:[#allocation5 + $0x6a] sm:$0x1]
  %v5759 = vld [vmem:[#allocation5 + $0x8a] sm:$0x1]
  %v5760 = vld [vmem:[#allocation5 + $0xaa] sm:$0x1]
  %v5761 = vld [vmem:[#allocation5 + $0xca] sm:$0x1]
  %v5762 = vld [vmem:[#allocation5 + $0xea] sm:$0x1]
  %v5763 = vld [vmem:[#allocation5 + $0xb] sm:$0x1]
  %v5764 = vld [vmem:[#allocation5 + $0x2b] sm:$0x1]
  %v5765 = vld [vmem:[#allocation5 + $0x4b] sm:$0x1]
  %v5766 = vld [vmem:[#allocation5 + $0x6b] sm:$0x1]
  %v5767 = vld [vmem:[#allocation5 + $0x8b] sm:$0x1]
  %v5768 = vld [vmem:[#allocation5 + $0xab] sm:$0x1]
  %v5769 = vld [vmem:[#allocation5 + $0xcb] sm:$0x1]
  %v5770 = vld [vmem:[#allocation5 + $0xeb] sm:$0x1]
  %v5771 = vmax.f32 %v5755, %v5763
  %v5772 = vmax.f32 %v5756, %v5764
  %v5773 = vmax.f32 %v5757, %v5765
  %v5774 = vmax.f32 %v5758, %v5766
  %v5775 = vmax.f32 %v5759, %v5767
  %v5776 = vmax.f32 %v5760, %v5768
  %v5777 = vmax.f32 %v5761, %v5769
  %v5778 = vmax.f32 %v5762, %v5770
  %v5779 = vpack.c.bf16 %v5771, %v5771
  %v5780 = vpack.c.bf16 %v5772, %v5772
  %v5781 = vpack.c.bf16 %v5773, %v5773
  %v5782 = vpack.c.bf16 %v5774, %v5774
  %v5783 = vpack.c.bf16 %v5775, %v5775
  %v5784 = vpack.c.bf16 %v5776, %v5776
  %v5785 = vpack.c.bf16 %v5777, %v5777
  %v5786 = vpack.c.bf16 %v5778, %v5778
  %v5795 = vunpack.c.l.b16 %v5779
  %v5796 = vunpack.c.l.b16 %v5780
  %v5797 = vunpack.c.l.b16 %v5781
  %v5798 = vunpack.c.l.b16 %v5782
  %v5799 = vunpack.c.l.b16 %v5783
  %v5800 = vunpack.c.l.b16 %v5784
  %v5801 = vunpack.c.l.b16 %v5785
  %v5802 = vunpack.c.l.b16 %v5786
  %v5803 = vrot.slane %v5796, 7
  %v5804 = vsel %vm5466, %v5803, %v5795
  %v5805 = vrot.slane %v5797, 6
  %v5806 = vsel %vm5469, %v5805, %v5804
  %v5807 = vrot.slane %v5798, 5
  %v5808 = vsel %vm5472, %v5807, %v5806
  %v5809 = vrot.slane %v5799, 4
  %v5810 = vsel %vm5475, %v5809, %v5808
  %v5811 = vrot.slane %v5800, 3
  %v5812 = vsel %vm5478, %v5811, %v5810
  %v5813 = vrot.slane %v5801, 2
  %v5814 = vsel %vm5481, %v5813, %v5812
  %v5815 = vrot.slane %v5802, 1
  %v5816 = vsel %vm5484, %v5815, %v5814
  %v5817 = vpack.c.b16 %v5816, %v5816
  %5818 = vrot.lane.b32.xlu0 %v5817, 64
  %v5819 = vpop.permute.xlu0 %5818
  %5821 = vst.msk [vmem:[%s5 + $0x8] sm:$0xf] %vm5556, %v5819
  %v5822 = vld [vmem:[#allocation5 + $0xc] sm:$0x1]
  %v5823 = vld [vmem:[#allocation5 + $0x2c] sm:$0x1]
  %v5824 = vld [vmem:[#allocation5 + $0x4c] sm:$0x1]
  %v5825 = vld [vmem:[#allocation5 + $0x6c] sm:$0x1]
  %v5826 = vld [vmem:[#allocation5 + $0x8c] sm:$0x1]
  %v5827 = vld [vmem:[#allocation5 + $0xac] sm:$0x1]
  %v5828 = vld [vmem:[#allocation5 + $0xcc] sm:$0x1]
  %v5829 = vld [vmem:[#allocation5 + $0xec] sm:$0x1]
  %v5830 = vld [vmem:[#allocation5 + $0xd] sm:$0x1]
  %v5831 = vld [vmem:[#allocation5 + $0x2d] sm:$0x1]
  %v5832 = vld [vmem:[#allocation5 + $0x4d] sm:$0x1]
  %v5833 = vld [vmem:[#allocation5 + $0x6d] sm:$0x1]
  %v5834 = vld [vmem:[#allocation5 + $0x8d] sm:$0x1]
  %v5835 = vld [vmem:[#allocation5 + $0xad] sm:$0x1]
  %v5836 = vld [vmem:[#allocation5 + $0xcd] sm:$0x1]
  %v5837 = vld [vmem:[#allocation5 + $0xed] sm:$0x1]
  %v5838 = vmax.f32 %v5822, %v5830
  %v5839 = vmax.f32 %v5823, %v5831
  %v5840 = vmax.f32 %v5824, %v5832
  %v5841 = vmax.f32 %v5825, %v5833
  %v5842 = vmax.f32 %v5826, %v5834
  %v5843 = vmax.f32 %v5827, %v5835
  %v5844 = vmax.f32 %v5828, %v5836
  %v5845 = vmax.f32 %v5829, %v5837
  %v5846 = vpack.c.bf16 %v5838, %v5838
  %v5847 = vpack.c.bf16 %v5839, %v5839
  %v5848 = vpack.c.bf16 %v5840, %v5840
  %v5849 = vpack.c.bf16 %v5841, %v5841
  %v5850 = vpack.c.bf16 %v5842, %v5842
  %v5851 = vpack.c.bf16 %v5843, %v5843
  %v5852 = vpack.c.bf16 %v5844, %v5844
  %v5853 = vpack.c.bf16 %v5845, %v5845
  %v5862 = vunpack.c.l.b16 %v5846
  %v5863 = vunpack.c.l.b16 %v5847
  %v5864 = vunpack.c.l.b16 %v5848
  %v5865 = vunpack.c.l.b16 %v5849
  %v5866 = vunpack.c.l.b16 %v5850
  %v5867 = vunpack.c.l.b16 %v5851
  %v5868 = vunpack.c.l.b16 %v5852
  %v5869 = vunpack.c.l.b16 %v5853
  %v5870 = vrot.slane %v5863, 7
  %v5871 = vsel %vm5466, %v5870, %v5862
  %v5872 = vrot.slane %v5864, 6
  %v5873 = vsel %vm5469, %v5872, %v5871
  %v5874 = vrot.slane %v5865, 5
  %v5875 = vsel %vm5472, %v5874, %v5873
  %v5876 = vrot.slane %v5866, 4
  %v5877 = vsel %vm5475, %v5876, %v5875
  %v5878 = vrot.slane %v5867, 3
  %v5879 = vsel %vm5478, %v5878, %v5877
  %v5880 = vrot.slane %v5868, 2
  %v5881 = vsel %vm5481, %v5880, %v5879
  %v5882 = vrot.slane %v5869, 1
  %v5883 = vsel %vm5484, %v5882, %v5881
  %v5884 = vpack.c.b16 %v5883, %v5883
  %5886 = vst.msk [vmem:[%s5 + $0xc] sm:$0xf] %vm5488, %v5884
  %v5887 = vld [vmem:[#allocation5 + $0xe] sm:$0x1]
  %v5888 = vld [vmem:[#allocation5 + $0x2e] sm:$0x1]
  %v5889 = vld [vmem:[#allocation5 + $0x4e] sm:$0x1]
  %v5890 = vld [vmem:[#allocation5 + $0x6e] sm:$0x1]
  %v5891 = vld [vmem:[#allocation5 + $0x8e] sm:$0x1]
  %v5892 = vld [vmem:[#allocation5 + $0xae] sm:$0x1]
  %v5893 = vld [vmem:[#allocation5 + $0xce] sm:$0x1]
  %v5894 = vld [vmem:[#allocation5 + $0xee] sm:$0x1]
  %v5895 = vld [vmem:[#allocation5 + $0xf] sm:$0x1]
  %v5896 = vld [vmem:[#allocation5 + $0x2f] sm:$0x1]
  %v5897 = vld [vmem:[#allocation5 + $0x4f] sm:$0x1]
  %v5898 = vld [vmem:[#allocation5 + $0x6f] sm:$0x1]
  %v5899 = vld [vmem:[#allocation5 + $0x8f] sm:$0x1]
  %v5900 = vld [vmem:[#allocation5 + $0xaf] sm:$0x1]
  %v5901 = vld [vmem:[#allocation5 + $0xcf] sm:$0x1]
  %v5902 = vld [vmem:[#allocation5 + $0xef] sm:$0x1]
  %v5903 = vmax.f32 %v5887, %v5895
  %v5904 = vmax.f32 %v5888, %v5896
  %v5905 = vmax.f32 %v5889, %v5897
  %v5906 = vmax.f32 %v5890, %v5898
  %v5907 = vmax.f32 %v5891, %v5899
  %v5908 = vmax.f32 %v5892, %v5900
  %v5909 = vmax.f32 %v5893, %v5901
  %v5910 = vmax.f32 %v5894, %v5902
  %v5911 = vpack.c.bf16 %v5903, %v5903
  %v5912 = vpack.c.bf16 %v5904, %v5904
  %v5913 = vpack.c.bf16 %v5905, %v5905
  %v5914 = vpack.c.bf16 %v5906, %v5906
  %v5915 = vpack.c.bf16 %v5907, %v5907
  %v5916 = vpack.c.bf16 %v5908, %v5908
  %v5917 = vpack.c.bf16 %v5909, %v5909
  %v5918 = vpack.c.bf16 %v5910, %v5910
  %v5927 = vunpack.c.l.b16 %v5911
  %v5928 = vunpack.c.l.b16 %v5912
  %v5929 = vunpack.c.l.b16 %v5913
  %v5930 = vunpack.c.l.b16 %v5914
  %v5931 = vunpack.c.l.b16 %v5915
  %v5932 = vunpack.c.l.b16 %v5916
  %v5933 = vunpack.c.l.b16 %v5917
  %v5934 = vunpack.c.l.b16 %v5918
  %v5935 = vrot.slane %v5928, 7
  %v5936 = vsel %vm5466, %v5935, %v5927
  %v5937 = vrot.slane %v5929, 6
  %v5938 = vsel %vm5469, %v5937, %v5936
  %v5939 = vrot.slane %v5930, 5
  %v5940 = vsel %vm5472, %v5939, %v5938
  %v5941 = vrot.slane %v5931, 4
  %v5942 = vsel %vm5475, %v5941, %v5940
  %v5943 = vrot.slane %v5932, 3
  %v5944 = vsel %vm5478, %v5943, %v5942
  %v5945 = vrot.slane %v5933, 2
  %v5946 = vsel %vm5481, %v5945, %v5944
  %v5947 = vrot.slane %v5934, 1
  %v5948 = vsel %vm5484, %v5947, %v5946
  %v5949 = vpack.c.b16 %v5948, %v5948
  %5950 = vrot.lane.b32.xlu0 %v5949, 64
  %v5951 = vpop.permute.xlu0 %5950
  %5953 = vst.msk [vmem:[%s5 + $0xc] sm:$0xf] %vm5556, %v5951
  %v5954 = vld [vmem:[#allocation5 + $0x10] sm:$0x1]
  %v5955 = vld [vmem:[#allocation5 + $0x30] sm:$0x1]
  %v5956 = vld [vmem:[#allocation5 + $0x50] sm:$0x1]
  %v5957 = vld [vmem:[#allocation5 + $0x70] sm:$0x1]
  %v5958 = vld [vmem:[#allocation5 + $0x90] sm:$0x1]
  %v5959 = vld [vmem:[#allocation5 + $0xb0] sm:$0x1]
  %v5960 = vld [vmem:[#allocation5 + $0xd0] sm:$0x1]
  %v5961 = vld [vmem:[#allocation5 + $0xf0] sm:$0x1]
  %v5962 = vld [vmem:[#allocation5 + $0x11] sm:$0x1]
  %v5963 = vld [vmem:[#allocation5 + $0x31] sm:$0x1]
  %v5964 = vld [vmem:[#allocation5 + $0x51] sm:$0x1]
  %v5965 = vld [vmem:[#allocation5 + $0x71] sm:$0x1]
  %v5966 = vld [vmem:[#allocation5 + $0x91] sm:$0x1]
  %v5967 = vld [vmem:[#allocation5 + $0xb1] sm:$0x1]
  %v5968 = vld [vmem:[#allocation5 + $0xd1] sm:$0x1]
  %v5969 = vld [vmem:[#allocation5 + $0xf1] sm:$0x1]
  %v5970 = vmax.f32 %v5954, %v5962
  %v5971 = vmax.f32 %v5955, %v5963
  %v5972 = vmax.f32 %v5956, %v5964
  %v5973 = vmax.f32 %v5957, %v5965
  %v5974 = vmax.f32 %v5958, %v5966
  %v5975 = vmax.f32 %v5959, %v5967
  %v5976 = vmax.f32 %v5960, %v5968
  %v5977 = vmax.f32 %v5961, %v5969
  %v5978 = vpack.c.bf16 %v5970, %v5970
  %v5979 = vpack.c.bf16 %v5971, %v5971
  %v5980 = vpack.c.bf16 %v5972, %v5972
  %v5981 = vpack.c.bf16 %v5973, %v5973
  %v5982 = vpack.c.bf16 %v5974, %v5974
  %v5983 = vpack.c.bf16 %v5975, %v5975
  %v5984 = vpack.c.bf16 %v5976, %v5976
  %v5985 = vpack.c.bf16 %v5977, %v5977
  %v5994 = vunpack.c.l.b16 %v5978
  %v5995 = vunpack.c.l.b16 %v5979
  %v5996 = vunpack.c.l.b16 %v5980
  %v5997 = vunpack.c.l.b16 %v5981
  %v5998 = vunpack.c.l.b16 %v5982
  %v5999 = vunpack.c.l.b16 %v5983
  %v6000 = vunpack.c.l.b16 %v5984
  %v6001 = vunpack.c.l.b16 %v5985
  %v6002 = vrot.slane %v5995, 7
  %v6003 = vsel %vm5466, %v6002, %v5994
  %v6004 = vrot.slane %v5996, 6
  %v6005 = vsel %vm5469, %v6004, %v6003
  %v6006 = vrot.slane %v5997, 5
  %v6007 = vsel %vm5472, %v6006, %v6005
  %v6008 = vrot.slane %v5998, 4
  %v6009 = vsel %vm5475, %v6008, %v6007
  %v6010 = vrot.slane %v5999, 3
  %v6011 = vsel %vm5478, %v6010, %v6009
  %v6012 = vrot.slane %v6000, 2
  %v6013 = vsel %vm5481, %v6012, %v6011
  %v6014 = vrot.slane %v6001, 1
  %v6015 = vsel %vm5484, %v6014, %v6013
  %v6016 = vpack.c.b16 %v6015, %v6015
  %6018 = vst.msk [vmem:[%s5 + $0x10] sm:$0xf] %vm5488, %v6016
  %v6019 = vld [vmem:[#allocation5 + $0x12] sm:$0x1]
  %v6020 = vld [vmem:[#allocation5 + $0x32] sm:$0x1]
  %v6021 = vld [vmem:[#allocation5 + $0x52] sm:$0x1]
  %v6022 = vld [vmem:[#allocation5 + $0x72] sm:$0x1]
  %v6023 = vld [vmem:[#allocation5 + $0x92] sm:$0x1]
  %v6024 = vld [vmem:[#allocation5 + $0xb2] sm:$0x1]
  %v6025 = vld [vmem:[#allocation5 + $0xd2] sm:$0x1]
  %v6026 = vld [vmem:[#allocation5 + $0xf2] sm:$0x1]
  %v6027 = vld [vmem:[#allocation5 + $0x13] sm:$0x1]
  %v6028 = vld [vmem:[#allocation5 + $0x33] sm:$0x1]
  %v6029 = vld [vmem:[#allocation5 + $0x53] sm:$0x1]
  %v6030 = vld [vmem:[#allocation5 + $0x73] sm:$0x1]
  %v6031 = vld [vmem:[#allocation5 + $0x93] sm:$0x1]
  %v6032 = vld [vmem:[#allocation5 + $0xb3] sm:$0x1]
  %v6033 = vld [vmem:[#allocation5 + $0xd3] sm:$0x1]
  %v6034 = vld [vmem:[#allocation5 + $0xf3] sm:$0x1]
  %v6035 = vmax.f32 %v6019, %v6027
  %v6036 = vmax.f32 %v6020, %v6028
  %v6037 = vmax.f32 %v6021, %v6029
  %v6038 = vmax.f32 %v6022, %v6030
  %v6039 = vmax.f32 %v6023, %v6031
  %v6040 = vmax.f32 %v6024, %v6032
  %v6041 = vmax.f32 %v6025, %v6033
  %v6042 = vmax.f32 %v6026, %v6034
  %v6043 = vpack.c.bf16 %v6035, %v6035
  %v6044 = vpack.c.bf16 %v6036, %v6036
  %v6045 = vpack.c.bf16 %v6037, %v6037
  %v6046 = vpack.c.bf16 %v6038, %v6038
  %v6047 = vpack.c.bf16 %v6039, %v6039
  %v6048 = vpack.c.bf16 %v6040, %v6040
  %v6049 = vpack.c.bf16 %v6041, %v6041
  %v6050 = vpack.c.bf16 %v6042, %v6042
  %v6059 = vunpack.c.l.b16 %v6043
  %v6060 = vunpack.c.l.b16 %v6044
  %v6061 = vunpack.c.l.b16 %v6045
  %v6062 = vunpack.c.l.b16 %v6046
  %v6063 = vunpack.c.l.b16 %v6047
  %v6064 = vunpack.c.l.b16 %v6048
  %v6065 = vunpack.c.l.b16 %v6049
  %v6066 = vunpack.c.l.b16 %v6050
  %v6067 = vrot.slane %v6060, 7
  %v6068 = vsel %vm5466, %v6067, %v6059
  %v6069 = vrot.slane %v6061, 6
  %v6070 = vsel %vm5469, %v6069, %v6068
  %v6071 = vrot.slane %v6062, 5
  %v6072 = vsel %vm5472, %v6071, %v6070
  %v6073 = vrot.slane %v6063, 4
  %v6074 = vsel %vm5475, %v6073, %v6072
  %v6075 = vrot.slane %v6064, 3
  %v6076 = vsel %vm5478, %v6075, %v6074
  %v6077 = vrot.slane %v6065, 2
  %v6078 = vsel %vm5481, %v6077, %v6076
  %v6079 = vrot.slane %v6066, 1
  %v6080 = vsel %vm5484, %v6079, %v6078
  %v6081 = vpack.c.b16 %v6080, %v6080
  %6082 = vrot.lane.b32.xlu0 %v6081, 64
  %v6083 = vpop.permute.xlu0 %6082
  %6085 = vst.msk [vmem:[%s5 + $0x10] sm:$0xf] %vm5556, %v6083
  %v6086 = vld [vmem:[#allocation5 + $0x14] sm:$0x1]
  %v6087 = vld [vmem:[#allocation5 + $0x34] sm:$0x1]
  %v6088 = vld [vmem:[#allocation5 + $0x54] sm:$0x1]
  %v6089 = vld [vmem:[#allocation5 + $0x74] sm:$0x1]
  %v6090 = vld [vmem:[#allocation5 + $0x94] sm:$0x1]
  %v6091 = vld [vmem:[#allocation5 + $0xb4] sm:$0x1]
  %v6092 = vld [vmem:[#allocation5 + $0xd4] sm:$0x1]
  %v6093 = vld [vmem:[#allocation5 + $0xf4] sm:$0x1]
  %v6094 = vld [vmem:[#allocation5 + $0x15] sm:$0x1]
  %v6095 = vld [vmem:[#allocation5 + $0x35] sm:$0x1]
  %v6096 = vld [vmem:[#allocation5 + $0x55] sm:$0x1]
  %v6097 = vld [vmem:[#allocation5 + $0x75] sm:$0x1]
  %v6098 = vld [vmem:[#allocation5 + $0x95] sm:$0x1]
  %v6099 = vld [vmem:[#allocation5 + $0xb5] sm:$0x1]
  %v6100 = vld [vmem:[#allocation5 + $0xd5] sm:$0x1]
  %v6101 = vld [vmem:[#allocation5 + $0xf5] sm:$0x1]
  %v6102 = vmax.f32 %v6086, %v6094
  %v6103 = vmax.f32 %v6087, %v6095
  %v6104 = vmax.f32 %v6088, %v6096
  %v6105 = vmax.f32 %v6089, %v6097
  %v6106 = vmax.f32 %v6090, %v6098
  %v6107 = vmax.f32 %v6091, %v6099
  %v6108 = vmax.f32 %v6092, %v6100
  %v6109 = vmax.f32 %v6093, %v6101
  %v6110 = vpack.c.bf16 %v6102, %v6102
  %v6111 = vpack.c.bf16 %v6103, %v6103
  %v6112 = vpack.c.bf16 %v6104, %v6104
  %v6113 = vpack.c.bf16 %v6105, %v6105
  %v6114 = vpack.c.bf16 %v6106, %v6106
  %v6115 = vpack.c.bf16 %v6107, %v6107
  %v6116 = vpack.c.bf16 %v6108, %v6108
  %v6117 = vpack.c.bf16 %v6109, %v6109
  %v6126 = vunpack.c.l.b16 %v6110
  %v6127 = vunpack.c.l.b16 %v6111
  %v6128 = vunpack.c.l.b16 %v6112
  %v6129 = vunpack.c.l.b16 %v6113
  %v6130 = vunpack.c.l.b16 %v6114
  %v6131 = vunpack.c.l.b16 %v6115
  %v6132 = vunpack.c.l.b16 %v6116
  %v6133 = vunpack.c.l.b16 %v6117
  %v6134 = vrot.slane %v6127, 7
  %v6135 = vsel %vm5466, %v6134, %v6126
  %v6136 = vrot.slane %v6128, 6
  %v6137 = vsel %vm5469, %v6136, %v6135
  %v6138 = vrot.slane %v6129, 5
  %v6139 = vsel %vm5472, %v6138, %v6137
  %v6140 = vrot.slane %v6130, 4
  %v6141 = vsel %vm5475, %v6140, %v6139
  %v6142 = vrot.slane %v6131, 3
  %v6143 = vsel %vm5478, %v6142, %v6141
  %v6144 = vrot.slane %v6132, 2
  %v6145 = vsel %vm5481, %v6144, %v6143
  %v6146 = vrot.slane %v6133, 1
  %v6147 = vsel %vm5484, %v6146, %v6145
  %v6148 = vpack.c.b16 %v6147, %v6147
  %6150 = vst.msk [vmem:[%s5 + $0x14] sm:$0xf] %vm5488, %v6148
  %v6151 = vld [vmem:[#allocation5 + $0x16] sm:$0x1]
  %v6152 = vld [vmem:[#allocation5 + $0x36] sm:$0x1]
  %v6153 = vld [vmem:[#allocation5 + $0x56] sm:$0x1]
  %v6154 = vld [vmem:[#allocation5 + $0x76] sm:$0x1]
  %v6155 = vld [vmem:[#allocation5 + $0x96] sm:$0x1]
  %v6156 = vld [vmem:[#allocation5 + $0xb6] sm:$0x1]
  %v6157 = vld [vmem:[#allocation5 + $0xd6] sm:$0x1]
  %v6158 = vld [vmem:[#allocation5 + $0xf6] sm:$0x1]
  %v6159 = vld [vmem:[#allocation5 + $0x17] sm:$0x1]
  %v6160 = vld [vmem:[#allocation5 + $0x37] sm:$0x1]
  %v6161 = vld [vmem:[#allocation5 + $0x57] sm:$0x1]
  %v6162 = vld [vmem:[#allocation5 + $0x77] sm:$0x1]
  %v6163 = vld [vmem:[#allocation5 + $0x97] sm:$0x1]
  %v6164 = vld [vmem:[#allocation5 + $0xb7] sm:$0x1]
  %v6165 = vld [vmem:[#allocation5 + $0xd7] sm:$0x1]
  %v6166 = vld [vmem:[#allocation5 + $0xf7] sm:$0x1]
  %v6167 = vmax.f32 %v6151, %v6159
  %v6168 = vmax.f32 %v6152, %v6160
  %v6169 = vmax.f32 %v6153, %v6161
  %v6170 = vmax.f32 %v6154, %v6162
  %v6171 = vmax.f32 %v6155, %v6163
  %v6172 = vmax.f32 %v6156, %v6164
  %v6173 = vmax.f32 %v6157, %v6165
  %v6174 = vmax.f32 %v6158, %v6166
  %v6175 = vpack.c.bf16 %v6167, %v6167
  %v6176 = vpack.c.bf16 %v6168, %v6168
  %v6177 = vpack.c.bf16 %v6169, %v6169
  %v6178 = vpack.c.bf16 %v6170, %v6170
  %v6179 = vpack.c.bf16 %v6171, %v6171
  %v6180 = vpack.c.bf16 %v6172, %v6172
  %v6181 = vpack.c.bf16 %v6173, %v6173
  %v6182 = vpack.c.bf16 %v6174, %v6174
  %v6191 = vunpack.c.l.b16 %v6175
  %v6192 = vunpack.c.l.b16 %v6176
  %v6193 = vunpack.c.l.b16 %v6177
  %v6194 = vunpack.c.l.b16 %v6178
  %v6195 = vunpack.c.l.b16 %v6179
  %v6196 = vunpack.c.l.b16 %v6180
  %v6197 = vunpack.c.l.b16 %v6181
  %v6198 = vunpack.c.l.b16 %v6182
  %v6199 = vrot.slane %v6192, 7
  %v6200 = vsel %vm5466, %v6199, %v6191
  %v6201 = vrot.slane %v6193, 6
  %v6202 = vsel %vm5469, %v6201, %v6200
  %v6203 = vrot.slane %v6194, 5
  %v6204 = vsel %vm5472, %v6203, %v6202
  %v6205 = vrot.slane %v6195, 4
  %v6206 = vsel %vm5475, %v6205, %v6204
  %v6207 = vrot.slane %v6196, 3
  %v6208 = vsel %vm5478, %v6207, %v6206
  %v6209 = vrot.slane %v6197, 2
  %v6210 = vsel %vm5481, %v6209, %v6208
  %v6211 = vrot.slane %v6198, 1
  %v6212 = vsel %vm5484, %v6211, %v6210
  %v6213 = vpack.c.b16 %v6212, %v6212
  %6214 = vrot.lane.b32.xlu0 %v6213, 64
  %v6215 = vpop.permute.xlu0 %6214
  %6217 = vst.msk [vmem:[%s5 + $0x14] sm:$0xf] %vm5556, %v6215
  %v6218 = vld [vmem:[#allocation5 + $0x18] sm:$0x1]
  %v6219 = vld [vmem:[#allocation5 + $0x38] sm:$0x1]
  %v6220 = vld [vmem:[#allocation5 + $0x58] sm:$0x1]
  %v6221 = vld [vmem:[#allocation5 + $0x78] sm:$0x1]
  %v6222 = vld [vmem:[#allocation5 + $0x98] sm:$0x1]
  %v6223 = vld [vmem:[#allocation5 + $0xb8] sm:$0x1]
  %v6224 = vld [vmem:[#allocation5 + $0xd8] sm:$0x1]
  %v6225 = vld [vmem:[#allocation5 + $0xf8] sm:$0x1]
  %v6226 = vld [vmem:[#allocation5 + $0x19] sm:$0x1]
  %v6227 = vld [vmem:[#allocation5 + $0x39] sm:$0x1]
  %v6228 = vld [vmem:[#allocation5 + $0x59] sm:$0x1]
  %v6229 = vld [vmem:[#allocation5 + $0x79] sm:$0x1]
  %v6230 = vld [vmem:[#allocation5 + $0x99] sm:$0x1]
  %v6231 = vld [vmem:[#allocation5 + $0xb9] sm:$0x1]
  %v6232 = vld [vmem:[#allocation5 + $0xd9] sm:$0x1]
  %v6233 = vld [vmem:[#allocation5 + $0xf9] sm:$0x1]
  %v6234 = vmax.f32 %v6218, %v6226
  %v6235 = vmax.f32 %v6219, %v6227
  %v6236 = vmax.f32 %v6220, %v6228
  %v6237 = vmax.f32 %v6221, %v6229
  %v6238 = vmax.f32 %v6222, %v6230
  %v6239 = vmax.f32 %v6223, %v6231
  %v6240 = vmax.f32 %v6224, %v6232
  %v6241 = vmax.f32 %v6225, %v6233
  %v6242 = vpack.c.bf16 %v6234, %v6234
  %v6243 = vpack.c.bf16 %v6235, %v6235
  %v6244 = vpack.c.bf16 %v6236, %v6236
  %v6245 = vpack.c.bf16 %v6237, %v6237
  %v6246 = vpack.c.bf16 %v6238, %v6238
  %v6247 = vpack.c.bf16 %v6239, %v6239
  %v6248 = vpack.c.bf16 %v6240, %v6240
  %v6249 = vpack.c.bf16 %v6241, %v6241
  %v6258 = vunpack.c.l.b16 %v6242
  %v6259 = vunpack.c.l.b16 %v6243
  %v6260 = vunpack.c.l.b16 %v6244
  %v6261 = vunpack.c.l.b16 %v6245
  %v6262 = vunpack.c.l.b16 %v6246
  %v6263 = vunpack.c.l.b16 %v6247
  %v6264 = vunpack.c.l.b16 %v6248
  %v6265 = vunpack.c.l.b16 %v6249
  %v6266 = vrot.slane %v6259, 7
  %v6267 = vsel %vm5466, %v6266, %v6258
  %v6268 = vrot.slane %v6260, 6
  %v6269 = vsel %vm5469, %v6268, %v6267
  %v6270 = vrot.slane %v6261, 5
  %v6271 = vsel %vm5472, %v6270, %v6269
  %v6272 = vrot.slane %v6262, 4
  %v6273 = vsel %vm5475, %v6272, %v6271
  %v6274 = vrot.slane %v6263, 3
  %v6275 = vsel %vm5478, %v6274, %v6273
  %v6276 = vrot.slane %v6264, 2
  %v6277 = vsel %vm5481, %v6276, %v6275
  %v6278 = vrot.slane %v6265, 1
  %v6279 = vsel %vm5484, %v6278, %v6277
  %v6280 = vpack.c.b16 %v6279, %v6279
  %6282 = vst.msk [vmem:[%s5 + $0x18] sm:$0xf] %vm5488, %v6280
  %v6283 = vld [vmem:[#allocation5 + $0x1a] sm:$0x1]
  %v6284 = vld [vmem:[#allocation5 + $0x3a] sm:$0x1]
  %v6285 = vld [vmem:[#allocation5 + $0x5a] sm:$0x1]
  %v6286 = vld [vmem:[#allocation5 + $0x7a] sm:$0x1]
  %v6287 = vld [vmem:[#allocation5 + $0x9a] sm:$0x1]
  %v6288 = vld [vmem:[#allocation5 + $0xba] sm:$0x1]
  %v6289 = vld [vmem:[#allocation5 + $0xda] sm:$0x1]
  %v6290 = vld [vmem:[#allocation5 + $0xfa] sm:$0x1]
  %v6291 = vld [vmem:[#allocation5 + $0x1b] sm:$0x1]
  %v6292 = vld [vmem:[#allocation5 + $0x3b] sm:$0x1]
  %v6293 = vld [vmem:[#allocation5 + $0x5b] sm:$0x1]
  %v6294 = vld [vmem:[#allocation5 + $0x7b] sm:$0x1]
  %v6295 = vld [vmem:[#allocation5 + $0x9b] sm:$0x1]
  %v6296 = vld [vmem:[#allocation5 + $0xbb] sm:$0x1]
  %v6297 = vld [vmem:[#allocation5 + $0xdb] sm:$0x1]
  %v6298 = vld [vmem:[#allocation5 + $0xfb] sm:$0x1]
  %v6299 = vmax.f32 %v6283, %v6291
  %v6300 = vmax.f32 %v6284, %v6292
  %v6301 = vmax.f32 %v6285, %v6293
  %v6302 = vmax.f32 %v6286, %v6294
  %v6303 = vmax.f32 %v6287, %v6295
  %v6304 = vmax.f32 %v6288, %v6296
  %v6305 = vmax.f32 %v6289, %v6297
  %v6306 = vmax.f32 %v6290, %v6298
  %v6307 = vpack.c.bf16 %v6299, %v6299
  %v6308 = vpack.c.bf16 %v6300, %v6300
  %v6309 = vpack.c.bf16 %v6301, %v6301
  %v6310 = vpack.c.bf16 %v6302, %v6302
  %v6311 = vpack.c.bf16 %v6303, %v6303
  %v6312 = vpack.c.bf16 %v6304, %v6304
  %v6313 = vpack.c.bf16 %v6305, %v6305
  %v6314 = vpack.c.bf16 %v6306, %v6306
  %v6323 = vunpack.c.l.b16 %v6307
  %v6324 = vunpack.c.l.b16 %v6308
  %v6325 = vunpack.c.l.b16 %v6309
  %v6326 = vunpack.c.l.b16 %v6310
  %v6327 = vunpack.c.l.b16 %v6311
  %v6328 = vunpack.c.l.b16 %v6312
  %v6329 = vunpack.c.l.b16 %v6313
  %v6330 = vunpack.c.l.b16 %v6314
  %v6331 = vrot.slane %v6324, 7
  %v6332 = vsel %vm5466, %v6331, %v6323
  %v6333 = vrot.slane %v6325, 6
  %v6334 = vsel %vm5469, %v6333, %v6332
  %v6335 = vrot.slane %v6326, 5
  %v6336 = vsel %vm5472, %v6335, %v6334
  %v6337 = vrot.slane %v6327, 4
  %v6338 = vsel %vm5475, %v6337, %v6336
  %v6339 = vrot.slane %v6328, 3
  %v6340 = vsel %vm5478, %v6339, %v6338
  %v6341 = vrot.slane %v6329, 2
  %v6342 = vsel %vm5481, %v6341, %v6340
  %v6343 = vrot.slane %v6330, 1
  %v6344 = vsel %vm5484, %v6343, %v6342
  %v6345 = vpack.c.b16 %v6344, %v6344
  %6346 = vrot.lane.b32.xlu0 %v6345, 64
  %v6347 = vpop.permute.xlu0 %6346
  %6349 = vst.msk [vmem:[%s5 + $0x18] sm:$0xf] %vm5556, %v6347
  %v6350 = vld [vmem:[#allocation5 + $0x1c] sm:$0x1]
  %v6351 = vld [vmem:[#allocation5 + $0x3c] sm:$0x1]
  %v6352 = vld [vmem:[#allocation5 + $0x5c] sm:$0x1]
  %v6353 = vld [vmem:[#allocation5 + $0x7c] sm:$0x1]
  %v6354 = vld [vmem:[#allocation5 + $0x9c] sm:$0x1]
  %v6355 = vld [vmem:[#allocation5 + $0xbc] sm:$0x1]
  %v6356 = vld [vmem:[#allocation5 + $0xdc] sm:$0x1]
  %v6357 = vld [vmem:[#allocation5 + $0xfc] sm:$0x1]
  %v6358 = vld [vmem:[#allocation5 + $0x1d] sm:$0x1]
  %v6359 = vld [vmem:[#allocation5 + $0x3d] sm:$0x1]
  %v6360 = vld [vmem:[#allocation5 + $0x5d] sm:$0x1]
  %v6361 = vld [vmem:[#allocation5 + $0x7d] sm:$0x1]
  %v6362 = vld [vmem:[#allocation5 + $0x9d] sm:$0x1]
  %v6363 = vld [vmem:[#allocation5 + $0xbd] sm:$0x1]
  %v6364 = vld [vmem:[#allocation5 + $0xdd] sm:$0x1]
  %v6365 = vld [vmem:[#allocation5 + $0xfd] sm:$0x1]
  %v6366 = vmax.f32 %v6350, %v6358
  %v6367 = vmax.f32 %v6351, %v6359
  %v6368 = vmax.f32 %v6352, %v6360
  %v6369 = vmax.f32 %v6353, %v6361
  %v6370 = vmax.f32 %v6354, %v6362
  %v6371 = vmax.f32 %v6355, %v6363
  %v6372 = vmax.f32 %v6356, %v6364
  %v6373 = vmax.f32 %v6357, %v6365
  %v6374 = vpack.c.bf16 %v6366, %v6366
  %v6375 = vpack.c.bf16 %v6367, %v6367
  %v6376 = vpack.c.bf16 %v6368, %v6368
  %v6377 = vpack.c.bf16 %v6369, %v6369
  %v6378 = vpack.c.bf16 %v6370, %v6370
  %v6379 = vpack.c.bf16 %v6371, %v6371
  %v6380 = vpack.c.bf16 %v6372, %v6372
  %v6381 = vpack.c.bf16 %v6373, %v6373
  %v6390 = vunpack.c.l.b16 %v6374
  %v6391 = vunpack.c.l.b16 %v6375
  %v6392 = vunpack.c.l.b16 %v6376
  %v6393 = vunpack.c.l.b16 %v6377
  %v6394 = vunpack.c.l.b16 %v6378
  %v6395 = vunpack.c.l.b16 %v6379
  %v6396 = vunpack.c.l.b16 %v6380
  %v6397 = vunpack.c.l.b16 %v6381
  %v6398 = vrot.slane %v6391, 7
  %v6399 = vsel %vm5466, %v6398, %v6390
  %v6400 = vrot.slane %v6392, 6
  %v6401 = vsel %vm5469, %v6400, %v6399
  %v6402 = vrot.slane %v6393, 5
  %v6403 = vsel %vm5472, %v6402, %v6401
  %v6404 = vrot.slane %v6394, 4
  %v6405 = vsel %vm5475, %v6404, %v6403
  %v6406 = vrot.slane %v6395, 3
  %v6407 = vsel %vm5478, %v6406, %v6405
  %v6408 = vrot.slane %v6396, 2
  %v6409 = vsel %vm5481, %v6408, %v6407
  %v6410 = vrot.slane %v6397, 1
  %v6411 = vsel %vm5484, %v6410, %v6409
  %v6412 = vpack.c.b16 %v6411, %v6411
  %6414 = vst.msk [vmem:[%s5 + $0x1c] sm:$0xf] %vm5488, %v6412
  %v6415 = vld [vmem:[#allocation5 + $0x1e] sm:$0x1]
  %v6416 = vld [vmem:[#allocation5 + $0x3e] sm:$0x1]
  %v6417 = vld [vmem:[#allocation5 + $0x5e] sm:$0x1]
  %v6418 = vld [vmem:[#allocation5 + $0x7e] sm:$0x1]
  %v6419 = vld [vmem:[#allocation5 + $0x9e] sm:$0x1]
  %v6420 = vld [vmem:[#allocation5 + $0xbe] sm:$0x1]
  %v6421 = vld [vmem:[#allocation5 + $0xde] sm:$0x1]
  %v6422 = vld [vmem:[#allocation5 + $0xfe] sm:$0x1]
  %v6423 = vld [vmem:[#allocation5 + $0x1f] sm:$0x1]
  %v6424 = vld [vmem:[#allocation5 + $0x3f] sm:$0x1]
  %v6425 = vld [vmem:[#allocation5 + $0x5f] sm:$0x1]
  %v6426 = vld [vmem:[#allocation5 + $0x7f] sm:$0x1]
  %v6427 = vld [vmem:[#allocation5 + $0x9f] sm:$0x1]
  %v6428 = vld [vmem:[#allocation5 + $0xbf] sm:$0x1]
  %v6429 = vld [vmem:[#allocation5 + $0xdf] sm:$0x1]
  %v6430 = vld [vmem:[#allocation5 + $0xff] sm:$0x1]
  %v6431 = vmax.f32 %v6415, %v6423
  %v6432 = vmax.f32 %v6416, %v6424
  %v6433 = vmax.f32 %v6417, %v6425
  %v6434 = vmax.f32 %v6418, %v6426
  %v6435 = vmax.f32 %v6419, %v6427
  %v6436 = vmax.f32 %v6420, %v6428
  %v6437 = vmax.f32 %v6421, %v6429
  %v6438 = vmax.f32 %v6422, %v6430
  %v6439 = vpack.c.bf16 %v6431, %v6431
  %v6440 = vpack.c.bf16 %v6432, %v6432
  %v6441 = vpack.c.bf16 %v6433, %v6433
  %v6442 = vpack.c.bf16 %v6434, %v6434
  %v6443 = vpack.c.bf16 %v6435, %v6435
  %v6444 = vpack.c.bf16 %v6436, %v6436
  %v6445 = vpack.c.bf16 %v6437, %v6437
  %v6446 = vpack.c.bf16 %v6438, %v6438
  %v6455 = vunpack.c.l.b16 %v6439
  %v6456 = vunpack.c.l.b16 %v6440
  %v6457 = vunpack.c.l.b16 %v6441
  %v6458 = vunpack.c.l.b16 %v6442
  %v6459 = vunpack.c.l.b16 %v6443
  %v6460 = vunpack.c.l.b16 %v6444
  %v6461 = vunpack.c.l.b16 %v6445
  %v6462 = vunpack.c.l.b16 %v6446
  %v6463 = vrot.slane %v6456, 7
  %v6464 = vsel %vm5466, %v6463, %v6455
  %v6465 = vrot.slane %v6457, 6
  %v6466 = vsel %vm5469, %v6465, %v6464
  %v6467 = vrot.slane %v6458, 5
  %v6468 = vsel %vm5472, %v6467, %v6466
  %v6469 = vrot.slane %v6459, 4
  %v6470 = vsel %vm5475, %v6469, %v6468
  %v6471 = vrot.slane %v6460, 3
  %v6472 = vsel %vm5478, %v6471, %v6470
  %v6473 = vrot.slane %v6461, 2
  %v6474 = vsel %vm5481, %v6473, %v6472
  %v6475 = vrot.slane %v6462, 1
  %v6476 = vsel %vm5484, %v6475, %v6474
  %v6477 = vpack.c.b16 %v6476, %v6476
  %6478 = vrot.lane.b32.xlu0 %v6477, 64
  %v6479 = vpop.permute.xlu0 %6478
  %6481 = vst.msk [vmem:[%s5 + $0x1c] sm:$0xf] %vm5556, %v6479
  // Predicated region
  $region29: #{net_forward.2} parent=0 // pred_check
    _
  $region30: #{net_forward.2} parent=0 // pred_check_branch
    %6483 = sbr.rel (0) target = $region32
  $region31: #{net_forward.2} parent=0 // pred_region
    _
  $region32: #{net_forward.2} parent=0 // pred_fallthru
    _
  // Predicated region
  $region33: #{net_forward.2} parent=0 // pred_check
    _
  $region34: #{net_forward.2} parent=0 // pred_check_branch
    %6485 = sbr.rel (0) target = $region36
  $region35: #{net_forward.2} parent=0 // pred_region
    _
  $region36: #{net_forward.2} parent=0 // pred_fallthru
    _

</llo_original>
